<compile_context>
chip_gen: v5e
topology: v5e:2x2
jax: 0.10.0
libtpu: 0.0.40
codegen_flags: <defaults>
</compile_context>

<pallas_src>
import functools

import jax
import jax.numpy as jnp
from jax import lax
from jax.experimental import pallas as pl
from jax.experimental.pallas import tpu as pltpu


# ----------------------------------------------------------------------------
# Fused kernel (one (batch, row-tile) grid step)
# ----------------------------------------------------------------------------
def _fused_vanila_conv_kernel(xt_ref, xc_ref, xb_ref, w1_ref, b1_ref, w2_ref,
                              wf_ref, bf_ref, o_ref, ypad_ref, zpi_ref,
                              *, th, wh, c1, c2, co, ksz):
    # xt_ref : (1, 4, 4,  wh, c1)  4 phase-split rows just ABOVE this tile
    # xc_ref : (1, 4, th, wh, c1)  the tile's own phase-split rows
    # xb_ref : (1, 4, 4,  wh, c1)  4 phase-split rows just BELOW this tile
    # w1_ref : (c1, c2)   b1_ref: (1, c2)      folded 1x1 conv + BN1
    # w2_ref : (ksz, ksz, c2)                  folded depthwise conv (BN2 scale)
    # wf_ref : (5*c2, co) bf_ref: (1, co)      folded fusion conv (+bias+BN2 shift+BN3)
    # o_ref  : (1, th, wh, co)
    # ypad_ref: (4, th+5, wh+3, c2)  phase-split ReLU(y) with zero halo
    # zpi_ref : (4, th+1, wh+1, c2)  z phases staged for the maxpool (-inf halo)
    t = pl.program_id(1)
    not_first = t > 0
    not_last = t < pl.num_programs(1) - 1

    w1 = w1_ref[...]
    b1 = b1_ref[0]
    wk = w2_ref[...]
    wf = wf_ref[...]
    bf = bf_ref[0]

    # ---- halo-only init (runs every grid step; interiors are overwritten) ---
    ypad_ref[:, :, 0:2, :] = jnp.zeros((4, th + 5, 2, c2), jnp.float32)
    ypad_ref[:, :, wh + 1:wh + 3, :] = jnp.zeros((4, th + 5, 2, c2),
                                                 jnp.float32)
    zpi_ref[:, :, 0:1, :] = jnp.full((4, th + 1, 1, c2), -jnp.inf, jnp.float32)

    # ---- stage 1: 1x1 conv + BN1 + ReLU, merged over the 4 spatial phases ---
    def conv1(x4):                                   # x4: (4, rows, wh, c1)
        rows = x4.shape[1]
        y = jnp.dot(x4.reshape(4 * rows * wh, c1), w1,
                    preferred_element_type=jnp.float32) + b1
        return jnp.maximum(y, 0.0).reshape(4, rows, wh, c2)

    y_top = conv1(xt_ref[0, :, 1:4, :, :])           # y phase rows R0-3..R0-1
    y_top = jnp.where(not_first, y_top, 0.0)         # zero halo above image
    y_core = conv1(xc_ref[0])                        # y phase rows R0..R1-1
    y_bot = conv1(xb_ref[0, :, 0:2, :, :])           # y phase rows R1, R1+1
    y_bot = jnp.where(not_last, y_bot, 0.0)          # zero halo below image

    # store phase-split with halo: y phase row g -> ypad row (g - R0 + 3)
    for kph in range(4):
        py, qy = kph // 2, kph % 2
        dst = 2 * (1 - py) + (1 - qy)
        cofs = 1 + qy
        ypad_ref[dst, 0:3, cofs:cofs + wh, :] = y_top[kph]
        ypad_ref[dst, 3:3 + th, cofs:cofs + wh, :] = y_core[kph]
        ypad_ref[dst, 3 + th:5 + th, cofs:cofs + wh, :] = y_bot[kph]

    # ---- stages 2-4: depthwise 7x7 per column-phase group, immediate fusion
    #      matmul, z staged in zpi only for the maxpool branch ----------------
    wrow = [[wk[i, j, :] for j in range(ksz)] for i in range(ksz)]  # hoisted
    out_acc = None

    for qq in range(2):                              # output column phase
        acc = [None, None]                           # one acc per row phase
        for kw in range(ksz):
            kwp = qq + kw
            cph = kwp % 2
            dw = kwp // 2
            # hoisted column (sublane) shifts — reused across pp and kh
            cols = [ypad_ref[2 * rph + cph, :, dw:dw + wh, :]
                    for rph in range(2)]
            for pp in range(2):                      # output row phase
                for kh in range(ksz):
                    khp = pp + kh
                    rph = khp % 2
                    dh = (khp + 1) // 2
                    prod = cols[rph][dh:dh + th + 1, :, :] * wrow[kh][kw]
                    acc[pp] = prod if acc[pp] is None else acc[pp] + prod
        for pp in range(2):
            a = acc[pp]                              # (th+1, wh, c2); row 0 is
            # z phase row R0-1 (maxpool top halo, -inf on the first tile)
            zpi_ref[2 * pp + qq, 0:1, 1:1 + wh, :] = jnp.where(
                not_first, a[0:1], -jnp.inf)
            zpi_ref[2 * pp + qq, 1:1 + th, 1:1 + wh, :] = a[1:1 + th]
            i = pp + 2 * qq                          # cat order x0,x1,x2,x3
            contrib = jnp.dot(a[1:1 + th].reshape(th * wh, c2),
                              wf[i * c2:(i + 1) * c2, :],
                              preferred_element_type=jnp.float32)
            out_acc = contrib if out_acc is None else out_acc + contrib

    # ---- MaxPool2d(3, 2, 1) from the staged z phases (-inf halo) ------------
    sel = ((1, 0), (0, 1), (1, 1))                   # (phase, slice start)
    mp = None
    for rph, rs in sel:
        for cph, cs in sel:
            v = zpi_ref[2 * rph + cph, rs:rs + th, cs:cs + wh, :]
            mp = v if mp is None else jnp.maximum(mp, v)
    out_acc = out_acc + jnp.dot(mp.reshape(th * wh, c2), wf[4 * c2:, :],
                                preferred_element_type=jnp.float32)

    out = jnp.maximum(out_acc + bf, 0.0)
    o_ref[0] = out.reshape(th, wh, co).astype(o_ref.dtype)


# ----------------------------------------------------------------------------
# Tiling helpers
# ----------------------------------------------------------------------------
def _vmem_estimate(th, wh, c1, c2, co):
    f = 4
    inp = 2 * 4 * (th + 8) * wh * c1 * f               # 3 input views, dbl-buf
    outp = 2 * th * wh * co * f
    ypad = 4 * (th + 5) * (wh + 3) * c2 * f
    zpi = 4 * (th + 1) * (wh + 1) * c2 * f
    live = (2 * (th + 1) * wh * c2 + th * wh * co
            + 4 * (th + 5) * wh * max(c1, c2)) * f
    return inp + outp + ypad + zpi + live


def _pick_row_tile(hh, wh, c1, c2, co, row_tile=None, budget_bytes=24 << 20):
    if row_tile is not None:
        th = int(row_tile)
        if th >= hh or hh % th != 0 or th % 4 != 0:
            return hh
        return th
    cands = [d for d in range(4, hh, 4) if hh % d == 0]
    if not cands or _vmem_estimate(hh, wh, c1, c2, co) <= budget_bytes:
        return hh
    best = cands[0]
    for th in cands:
        if _vmem_estimate(th, wh, c1, c2, co) <= budget_bytes:
            best = th
    return best


# ----------------------------------------------------------------------------
# Module wrapper
# ----------------------------------------------------------------------------
def vanila_conv_forward(x_nchw, params, *, row_tile=None):
    """x_nchw: (N, C1, H, W) float32 -> (N, C2, H/2, W/2) float32."""
    n, c1, h, w = x_nchw.shape
    assert h % 2 == 0 and w % 2 == 0, "Vanila_Conv downsample needs even H, W"
    hh, wh = h // 2, w // 2
    assert hh >= 4, "kernel requires H >= 8"
    c2 = params["conv_w"].shape[0]
    co = params["fusion_w"].shape[0]
    ksz = params["act_w"].shape[-1]
    assert ksz == 7, "halo sizes are derived for the 7x7 depthwise (act_num=3)"

    # fold eval-mode BatchNorms into the conv weights / biases (tiny arrays)
    s1 = params["bn1_gamma"] * lax.rsqrt(params["bn1_var"] + 1e-5)
    t1 = params["bn1_beta"] - params["bn1_mean"] * s1
    s2 = params["bn2_gamma"] * lax.rsqrt(params["bn2_var"] + 1e-6)
    t2 = params["bn2_beta"] - params["bn2_mean"] * s2
    s3 = params["bn3_gamma"] * lax.rsqrt(params["bn3_var"] + 1e-5)
    t3 = params["bn3_beta"] - params["bn3_mean"] * s3

    w1 = (params["conv_w"][:, :, 0, 0] * s1[:, None]).T             # (c1, c2)
    b1 = t1.reshape(1, c2)
    w2 = jnp.transpose(params["act_w"][:, 0], (1, 2, 0)) * s2        # (k,k,c2)
    wfe = (params["fusion_w"][:, :, 0, 0] * s3[:, None]).T           # (5c2,co)
    # fold the depthwise BN shift through the (linear) fusion conv into its bias
    bfe = (params["fusion_b"] * s3 + t3 + jnp.tile(t2, 5) @ wfe).reshape(1, co)

    # space-to-depth (factor 2) phase split; phase index = 2*row_par + col_par
    # TODO(synk): accept NHWC / phase-split input at the model boundary to drop
    #             this extra HBM pass (and the output transpose below).
    xs = x_nchw.reshape(n, c1, hh, 2, wh, 2)
    xs = jnp.transpose(xs, (0, 3, 5, 2, 4, 1)).reshape(n, 4, hh, wh, c1)

    th = _pick_row_tile(hh, wh, c1, c2, co, row_tile)
    n_t = hh // th
    if n_t > 1:
        rb = th // 4
        top_map = lambda b, t: (b, 0, jnp.maximum(t * rb - 1, 0), 0, 0)
        bot_map = lambda b, t: (b, 0, jnp.minimum((t + 1) * rb, hh // 4 - 1),
                                0, 0)
    else:
        top_map = lambda b, t: (b, 0, 0, 0, 0)
        bot_map = lambda b, t: (b, 0, 0, 0, 0)

    kernel = functools.partial(_fused_vanila_conv_kernel, th=th, wh=wh,
                               c1=c1, c2=c2, co=co, ksz=ksz)
    vmem_bytes = min(int(1.5 * _vmem_estimate(th, wh, c1, c2, co)) + (16 << 20),
                     128 << 20)

    out = pl.pallas_call(
        kernel,
        out_shape=jax.ShapeDtypeStruct((n, hh, wh, co), jnp.float32),
        grid=(n, n_t),
        in_specs=[
            pl.BlockSpec((1, 4, 4, wh, c1), top_map),                # top halo
            pl.BlockSpec((1, 4, th, wh, c1), lambda b, t: (b, 0, t, 0, 0)),
            pl.BlockSpec((1, 4, 4, wh, c1), bot_map),                # bottom halo
            pl.BlockSpec((c1, c2), lambda b, t: (0, 0)),
            pl.BlockSpec((1, c2), lambda b, t: (0, 0)),
            pl.BlockSpec((ksz, ksz, c2), lambda b, t: (0, 0, 0)),
            pl.BlockSpec((5 * c2, co), lambda b, t: (0, 0)),
            pl.BlockSpec((1, co), lambda b, t: (0, 0)),
        ],
        out_specs=pl.BlockSpec((1, th, wh, co), lambda b, t: (b, t, 0, 0)),
        scratch_shapes=[
            pltpu.VMEM((4, th + 5, wh + 3, c2), jnp.float32),
            pltpu.VMEM((4, th + 1, wh + 1, c2), jnp.float32),
        ],
        compiler_params=pltpu.CompilerParams(
            dimension_semantics=("parallel", "arbitrary"),
            vmem_limit_bytes=vmem_bytes),
    )(xs, xs, xs, w1, b1, w2, wfe, bfe)

    # (n, hh, wh, co) -> NCHW; only post-kernel layout op, on the small output
    return jnp.transpose(out, (0, 3, 1, 2))


# ----------------------------------------------------------------------------
# Plain-JAX reference for validation
# ----------------------------------------------------------------------------
def reference_forward(x, p):
    s1 = p["bn1_gamma"] * lax.rsqrt(p["bn1_var"] + 1e-5)
    t1 = p["bn1_beta"] - p["bn1_mean"] * s1
    s2 = p["bn2_gamma"] * lax.rsqrt(p["bn2_var"] + 1e-6)
    t2 = p["bn2_beta"] - p["bn2_mean"] * s2
    s3 = p["bn3_gamma"] * lax.rsqrt(p["bn3_var"] + 1e-5)
    t3 = p["bn3_beta"] - p["bn3_mean"] * s3

    dn = ("NCHW", "OIHW", "NCHW")
    y = lax.conv_general_dilated(x, p["conv_w"], (1, 1), "VALID",
                                 dimension_numbers=dn)
    y = y * s1[None, :, None, None] + t1[None, :, None, None]
    y = jnp.maximum(y, 0.0)
    c2 = p["act_w"].shape[0]
    pad = p["act_w"].shape[-1] // 2
    y = lax.conv_general_dilated(y, p["act_w"], (1, 1),
                                 [(pad, pad), (pad, pad)],
                                 dimension_numbers=dn, feature_group_count=c2)
    y = y * s2[None, :, None, None] + t2[None, :, None, None]

    x0 = y[:, :, 0::2, 0::2]
    x1 = y[:, :, 1::2, 0::2]
    x2 = y[:, :, 0::2, 1::2]
    x3 = y[:, :, 1::2, 1::2]
    mp = lax.reduce_window(y, -jnp.inf, lax.max, (1, 1, 3, 3), (1, 1, 2, 2),
                           ((0, 0), (0, 0), (1, 1), (1, 1)))
    cat = jnp.concatenate([x0, x1, x2, x3, mp], axis=1)
    z = lax.conv_general_dilated(cat, p["fusion_w"], (1, 1), "VALID",
                                 dimension_numbers=dn)
    z = z + p["fusion_b"][None, :, None, None]
    z = z * s3[None, :, None, None] + t3[None, :, None, None]
    return jnp.maximum(z, 0.0)


def init_params(key, c1, c2, act_num=3):
    k = act_num * 2 + 1
    ks = jax.random.split(key, 16)
    return {
        "conv_w": 0.1 * jax.random.normal(ks[0], (c2, c1, 1, 1), jnp.float32),
        "bn1_gamma": 1.0 + 0.1 * jax.random.normal(ks[1], (c2,), jnp.float32),
        "bn1_beta": 0.1 * jax.random.normal(ks[2], (c2,), jnp.float32),
        "bn1_mean": 0.1 * jax.random.normal(ks[3], (c2,), jnp.float32),
        "bn1_var": jax.random.uniform(ks[4], (c2,), jnp.float32, 0.5, 1.5),
        "act_w": 0.1 * jax.random.normal(ks[5], (c2, 1, k, k), jnp.float32),
        "bn2_gamma": 1.0 + 0.1 * jax.random.normal(ks[6], (c2,), jnp.float32),
        "bn2_beta": 0.1 * jax.random.normal(ks[7], (c2,), jnp.float32),
        "bn2_mean": 0.1 * jax.random.normal(ks[8], (c2,), jnp.float32),
        "bn2_var": jax.random.uniform(ks[9], (c2,), jnp.float32, 0.5, 1.5),
        "fusion_w": 0.1 * jax.random.normal(ks[10], (c2, 5 * c2, 1, 1),
                                            jnp.float32),
        "fusion_b": 0.1 * jax.random.normal(ks[11], (c2,), jnp.float32),
        "bn3_gamma": 1.0 + 0.1 * jax.random.normal(ks[12], (c2,), jnp.float32),
        "bn3_beta": 0.1 * jax.random.normal(ks[13], (c2,), jnp.float32),
        "bn3_mean": 0.1 * jax.random.normal(ks[14], (c2,), jnp.float32),
        "bn3_var": jax.random.uniform(ks[15], (c2,), jnp.float32, 0.5, 1.5),
    }


if __name__ == "__main__":
    key = jax.random.PRNGKey(0)
    k_x, k_p, k_x2, k_p2 = jax.random.split(key, 4)

    # config 1: two row tiles (exercises the halo-recompute / tiled path)
    N, C1, C2, H, W = 2, 4, 8, 16, 16
    x = jax.random.normal(k_x, (N, C1, H, W), jnp.float32)
    params = init_params(k_p, C1, C2)
    fwd = jax.jit(functools.partial(vanila_conv_forward, row_tile=4))
    out = jax.block_until_ready(fwd(x, params))
    ref = jax.block_until_ready(reference_forward(x, params))
    assert out.shape == (N, C2, H // 2, W // 2), out.shape
    diff = float(jnp.max(jnp.abs(out - ref)))
    assert jnp.allclose(out, ref, atol=3e-3, rtol=3e-3), diff

    # config 2: single tile, rectangular spatial, different channel counts
    N2, C12, H2, W2 = 1, 3, 8, 24
    x2 = jax.random.normal(k_x2, (N2, C12, H2, W2), jnp.float32)
    params2 = init_params(k_p2, C12, 8)
    out2 = jax.block_until_ready(jax.jit(vanila_conv_forward)(x2, params2))
    ref2 = jax.block_until_ready(reference_forward(x2, params2))
    assert out2.shape == (N2, 8, H2 // 2, W2 // 2), out2.shape
    diff2 = float(jnp.max(jnp.abs(out2 - ref2)))
    assert jnp.allclose(out2, ref2, atol=3e-3, rtol=3e-3), diff2

    print("KERNEL_OK")
</pallas_src>

<mosaic_0001>
module attributes {stable_mosaic.version = 11 : i64} {
  func.func @_fused_vanila_conv_kernel(%arg0: i32, %arg1: i32, %arg2: memref<1x4x4x8x4xf32, #tpu.memory_space<vmem>>, %arg3: memref<1x4x4x8x4xf32, #tpu.memory_space<vmem>>, %arg4: memref<1x4x4x8x4xf32, #tpu.memory_space<vmem>>, %arg5: memref<4x8xf32, #tpu.memory_space<vmem>>, %arg6: memref<1x8xf32, #tpu.memory_space<vmem>>, %arg7: memref<7x7x8xf32, #tpu.memory_space<vmem>>, %arg8: memref<40x8xf32, #tpu.memory_space<vmem>>, %arg9: memref<1x8xf32, #tpu.memory_space<vmem>>, %arg10: memref<1x4x8x8xf32, #tpu.memory_space<vmem>>, %arg11: memref<4x9x11x8xf32, #tpu.memory_space<vmem>>, %arg12: memref<4x5x9x8xf32, #tpu.memory_space<vmem>>) attributes {dimension_semantics = [#tpu.dimension_semantics<parallel>, #tpu.dimension_semantics<arbitrary>], iteration_bounds = array<i64: 2, 2>, scalar_prefetch = 0 : i64, scratch_operands = 2 : i64, tpu.core_type = #tpu.core_type<tc>, window_params = [{transform_indices = @transform_0, window_bounds = array<i64: 1, 4, 4, 8, 4>}, {transform_indices = @transform_1, window_bounds = array<i64: 1, 4, 4, 8, 4>}, {transform_indices = @transform_2, window_bounds = array<i64: 1, 4, 4, 8, 4>}, {pipeline_mode = #tpu.pipeline_mode<synchronous>, transform_indices = @transform_3, window_bounds = array<i64: 4, 8>}, {pipeline_mode = #tpu.pipeline_mode<synchronous>, transform_indices = @transform_4, window_bounds = array<i64: 1, 8>}, {pipeline_mode = #tpu.pipeline_mode<synchronous>, transform_indices = @transform_5, window_bounds = array<i64: 7, 7, 8>}, {pipeline_mode = #tpu.pipeline_mode<synchronous>, transform_indices = @transform_6, window_bounds = array<i64: 40, 8>}, {pipeline_mode = #tpu.pipeline_mode<synchronous>, transform_indices = @transform_7, window_bounds = array<i64: 1, 8>}, {transform_indices = @transform_8, window_bounds = array<i64: 1, 4, 8, 8>}]} {
    %c0_i32 = arith.constant 0 : i32
    %0 = arith.cmpi sgt, %arg1, %c0_i32 : i32
    %c1_i32 = arith.constant 1 : i32
    %1 = arith.cmpi slt, %arg1, %c1_i32 : i32
    %c0 = arith.constant 0 : index
    %c0_0 = arith.constant 0 : index
    %2 = vector.load %arg5[%c0, %c0_0] : memref<4x8xf32, #tpu.memory_space<vmem>>, vector<4x8xf32>
    %c0_1 = arith.constant 0 : index
    %c0_2 = arith.constant 0 : index
    %3 = vector.load %arg6[%c0_1, %c0_2] : memref<1x8xf32, #tpu.memory_space<vmem>>, vector<1x8xf32>
    %4 = vector.shape_cast %3 : vector<1x8xf32> to vector<8xf32>
    %c0_3 = arith.constant 0 : index
    %c0_4 = arith.constant 0 : index
    %c0_5 = arith.constant 0 : index
    %5 = vector.load %arg7[%c0_3, %c0_4, %c0_5] : memref<7x7x8xf32, #tpu.memory_space<vmem>>, vector<7x7x8xf32>
    %c0_6 = arith.constant 0 : index
    %c0_7 = arith.constant 0 : index
    %6 = vector.load %arg8[%c0_6, %c0_7] : memref<40x8xf32, #tpu.memory_space<vmem>>, vector<40x8xf32>
    %c0_8 = arith.constant 0 : index
    %c0_9 = arith.constant 0 : index
    %7 = vector.load %arg9[%c0_8, %c0_9] : memref<1x8xf32, #tpu.memory_space<vmem>>, vector<1x8xf32>
    %8 = vector.shape_cast %7 : vector<1x8xf32> to vector<8xf32>
    %cst = arith.constant 0.000000e+00 : f32
    %9 = vector.broadcast %cst : f32 to vector<4x9x2x8xf32>
    %c0_10 = arith.constant 0 : index
    %c0_11 = arith.constant 0 : index
    %c0_12 = arith.constant 0 : index
    %c0_13 = arith.constant 0 : index
    %10 = vector.load %arg11[%c0_10, %c0_11, %c0_12, %c0_13] : memref<4x9x11x8xf32, #tpu.memory_space<vmem>>, vector<4x9x2x8xf32>
    tpu.vector_store %arg11[%c0_10, %c0_11, %c0_12, %c0_13], %9 {strides = array<i32>} : memref<4x9x11x8xf32, #tpu.memory_space<vmem>>, vector<4x9x2x8xf32>,
    %cst_14 = arith.constant 0.000000e+00 : f32
    %11 = vector.broadcast %cst_14 : f32 to vector<4x9x2x8xf32>
    %c0_15 = arith.constant 0 : index
    %c0_16 = arith.constant 0 : index
    %c9 = arith.constant 9 : index
    %c0_17 = arith.constant 0 : index
    %12 = vector.load %arg11[%c0_15, %c0_16, %c9, %c0_17] : memref<4x9x11x8xf32, #tpu.memory_space<vmem>>, vector<4x9x2x8xf32>
    tpu.vector_store %arg11[%c0_15, %c0_16, %c9, %c0_17], %11 {strides = array<i32>} : memref<4x9x11x8xf32, #tpu.memory_space<vmem>>, vector<4x9x2x8xf32>,
    %cst_18 = arith.constant 0xFF800000 : f32
    %13 = vector.broadcast %cst_18 : f32 to vector<4x5x1x8xf32>
    %c0_19 = arith.constant 0 : index
    %c0_20 = arith.constant 0 : index
    %c0_21 = arith.constant 0 : index
    %c0_22 = arith.constant 0 : index
    %14 = vector.load %arg12[%c0_19, %c0_20, %c0_21, %c0_22] : memref<4x5x9x8xf32, #tpu.memory_space<vmem>>, vector<4x5x1x8xf32>
    tpu.vector_store %arg12[%c0_19, %c0_20, %c0_21, %c0_22], %13 {strides = array<i32>} : memref<4x5x9x8xf32, #tpu.memory_space<vmem>>, vector<4x5x1x8xf32>,
    %c0_23 = arith.constant 0 : index
    %c0_24 = arith.constant 0 : index
    %c1 = arith.constant 1 : index
    %c0_25 = arith.constant 0 : index
    %c0_26 = arith.constant 0 : index
    %15 = vector.load %arg2[%c0_23, %c0_24, %c1, %c0_25, %c0_26] : memref<1x4x4x8x4xf32, #tpu.memory_space<vmem>>, vector<1x4x3x8x4xf32>
    %16 = vector.shape_cast %15 : vector<1x4x3x8x4xf32> to vector<4x3x8x4xf32>
    %17 = vector.shape_cast %16 : vector<4x3x8x4xf32> to vector<96x4xf32>
    %cst_27 = arith.constant dense<0.000000e+00> : vector<96x8xf32>
    %18 = tpu.matmul %17, %2, %cst_27 {dimension_numbers = #tpu.dot_dimension_numbers<[1], [0], [0], [1], [0, 0, 1, 1], [], []>} : vector<96x4xf32>, vector<4x8xf32>, vector<96x8xf32> -> vector<96x8xf32>
    %19 = vector.shape_cast %4 : vector<8xf32> to vector<1x8xf32>
    %20 = vector.broadcast %19 : vector<1x8xf32> to vector<96x8xf32>
    %21 = arith.addf %18, %20 : vector<96x8xf32>
    %cst_28 = arith.constant 0.000000e+00 : f32
    %22 = vector.broadcast %cst_28 : f32 to vector<96x8xf32>
    %23 = arith.maximumf %21, %22 : vector<96x8xf32>
    %24 = vector.shape_cast %23 : vector<96x8xf32> to vector<4x3x8x8xf32>
    %cst_29 = arith.constant 0.000000e+00 : f32
    %25 = vector.broadcast %cst_29 : f32 to vector<4x3x8x8xf32>
    %26 = arith.select %0, %24, %25 : vector<4x3x8x8xf32>
    %c0_30 = arith.constant 0 : index
    %c0_31 = arith.constant 0 : index
    %c0_32 = arith.constant 0 : index
    %c0_33 = arith.constant 0 : index
    %c0_34 = arith.constant 0 : index
    %27 = vector.load %arg3[%c0_30, %c0_31, %c0_32, %c0_33, %c0_34] : memref<1x4x4x8x4xf32, #tpu.memory_space<vmem>>, vector<1x4x4x8x4xf32>
    %28 = vector.shape_cast %27 : vector<1x4x4x8x4xf32> to vector<4x4x8x4xf32>
    %29 = vector.shape_cast %28 : vector<4x4x8x4xf32> to vector<128x4xf32>
    %cst_35 = arith.constant dense<0.000000e+00> : vector<128x8xf32>
    %30 = tpu.matmul %29, %2, %cst_35 {dimension_numbers = #tpu.dot_dimension_numbers<[1], [0], [0], [1], [0, 0, 1, 1], [], []>} : vector<128x4xf32>, vector<4x8xf32>, vector<128x8xf32> -> vector<128x8xf32>
    %31 = vector.shape_cast %4 : vector<8xf32> to vector<1x8xf32>
    %32 = vector.broadcast %31 : vector<1x8xf32> to vector<128x8xf32>
    %33 = arith.addf %30, %32 : vector<128x8xf32>
    %cst_36 = arith.constant 0.000000e+00 : f32
    %34 = vector.broadcast %cst_36 : f32 to vector<128x8xf32>
    %35 = arith.maximumf %33, %34 : vector<128x8xf32>
    %36 = vector.shape_cast %35 : vector<128x8xf32> to vector<4x4x8x8xf32>
    %c0_37 = arith.constant 0 : index
    %c0_38 = arith.constant 0 : index
    %c0_39 = arith.constant 0 : index
    %c0_40 = arith.constant 0 : index
    %c0_41 = arith.constant 0 : index
    %37 = vector.load %arg4[%c0_37, %c0_38, %c0_39, %c0_40, %c0_41] : memref<1x4x4x8x4xf32, #tpu.memory_space<vmem>>, vector<1x4x2x8x4xf32>
    %38 = vector.shape_cast %37 : vector<1x4x2x8x4xf32> to vector<4x2x8x4xf32>
    %39 = vector.shape_cast %38 : vector<4x2x8x4xf32> to vector<64x4xf32>
    %cst_42 = arith.constant dense<0.000000e+00> : vector<64x8xf32>
    %40 = tpu.matmul %39, %2, %cst_42 {dimension_numbers = #tpu.dot_dimension_numbers<[1], [0], [0], [1], [0, 0, 1, 1], [], []>} : vector<64x4xf32>, vector<4x8xf32>, vector<64x8xf32> -> vector<64x8xf32>
    %41 = vector.shape_cast %4 : vector<8xf32> to vector<1x8xf32>
    %42 = vector.broadcast %41 : vector<1x8xf32> to vector<64x8xf32>
    %43 = arith.addf %40, %42 : vector<64x8xf32>
    %cst_43 = arith.constant 0.000000e+00 : f32
    %44 = vector.broadcast %cst_43 : f32 to vector<64x8xf32>
    %45 = arith.maximumf %43, %44 : vector<64x8xf32>
    %46 = vector.shape_cast %45 : vector<64x8xf32> to vector<4x2x8x8xf32>
    %cst_44 = arith.constant 0.000000e+00 : f32
    %47 = vector.broadcast %cst_44 : f32 to vector<4x2x8x8xf32>
    %48 = arith.select %1, %46, %47 : vector<4x2x8x8xf32>
    %49 = vector.extract_strided_slice %26 {offsets = [0, 0, 0, 0], sizes = [1, 3, 8, 8], strides = [1, 1, 1, 1]} : vector<4x3x8x8xf32> to vector<1x3x8x8xf32>
    %50 = vector.shape_cast %49 : vector<1x3x8x8xf32> to vector<3x8x8xf32>
    %c3 = arith.constant 3 : index
    %c0_45 = arith.constant 0 : index
    %c1_46 = arith.constant 1 : index
    %c0_47 = arith.constant 0 : index
    %51 = vector.load %arg11[%c3, %c0_45, %c1_46, %c0_47] : memref<4x9x11x8xf32, #tpu.memory_space<vmem>>, vector<1x3x8x8xf32>
    %52 = vector.shape_cast %51 : vector<1x3x8x8xf32> to vector<3x8x8xf32>
    %53 = vector.shape_cast %50 : vector<3x8x8xf32> to vector<1x3x8x8xf32>
    tpu.vector_store %arg11[%c3, %c0_45, %c1_46, %c0_47], %53 {strides = array<i32>} : memref<4x9x11x8xf32, #tpu.memory_space<vmem>>, vector<1x3x8x8xf32>,
    %54 = vector.extract_strided_slice %36 {offsets = [0, 0, 0, 0], sizes = [1, 4, 8, 8], strides = [1, 1, 1, 1]} : vector<4x4x8x8xf32> to vector<1x4x8x8xf32>
    %55 = vector.shape_cast %54 : vector<1x4x8x8xf32> to vector<4x8x8xf32>
    %c3_48 = arith.constant 3 : index
    %c3_49 = arith.constant 3 : index
    %c1_50 = arith.constant 1 : index
    %c0_51 = arith.constant 0 : index
    %56 = vector.load %arg11[%c3_48, %c3_49, %c1_50, %c0_51] : memref<4x9x11x8xf32, #tpu.memory_space<vmem>>, vector<1x4x8x8xf32>
    %57 = vector.shape_cast %56 : vector<1x4x8x8xf32> to vector<4x8x8xf32>
    %58 = vector.shape_cast %55 : vector<4x8x8xf32> to vector<1x4x8x8xf32>
    tpu.vector_store %arg11[%c3_48, %c3_49, %c1_50, %c0_51], %58 {strides = array<i32>} : memref<4x9x11x8xf32, #tpu.memory_space<vmem>>, vector<1x4x8x8xf32>,
    %59 = vector.extract_strided_slice %48 {offsets = [0, 0, 0, 0], sizes = [1, 2, 8, 8], strides = [1, 1, 1, 1]} : vector<4x2x8x8xf32> to vector<1x2x8x8xf32>
    %60 = vector.shape_cast %59 : vector<1x2x8x8xf32> to vector<2x8x8xf32>
    %c3_52 = arith.constant 3 : index
    %c7 = arith.constant 7 : index
    %c1_53 = arith.constant 1 : index
    %c0_54 = arith.constant 0 : index
    %61 = vector.load %arg11[%c3_52, %c7, %c1_53, %c0_54] : memref<4x9x11x8xf32, #tpu.memory_space<vmem>>, vector<1x2x8x8xf32>
    %62 = vector.shape_cast %61 : vector<1x2x8x8xf32> to vector<2x8x8xf32>
    %63 = vector.shape_cast %60 : vector<2x8x8xf32> to vector<1x2x8x8xf32>
    tpu.vector_store %arg11[%c3_52, %c7, %c1_53, %c0_54], %63 {strides = array<i32>} : memref<4x9x11x8xf32, #tpu.memory_space<vmem>>, vector<1x2x8x8xf32>,
    %64 = vector.extract_strided_slice %26 {offsets = [1, 0, 0, 0], sizes = [1, 3, 8, 8], strides = [1, 1, 1, 1]} : vector<4x3x8x8xf32> to vector<1x3x8x8xf32>
    %65 = vector.shape_cast %64 : vector<1x3x8x8xf32> to vector<3x8x8xf32>
    %c2 = arith.constant 2 : index
    %c0_55 = arith.constant 0 : index
    %c2_56 = arith.constant 2 : index
    %c0_57 = arith.constant 0 : index
    %66 = vector.load %arg11[%c2, %c0_55, %c2_56, %c0_57] : memref<4x9x11x8xf32, #tpu.memory_space<vmem>>, vector<1x3x8x8xf32>
    %67 = vector.shape_cast %66 : vector<1x3x8x8xf32> to vector<3x8x8xf32>
    %68 = vector.shape_cast %65 : vector<3x8x8xf32> to vector<1x3x8x8xf32>
    tpu.vector_store %arg11[%c2, %c0_55, %c2_56, %c0_57], %68 {strides = array<i32>} : memref<4x9x11x8xf32, #tpu.memory_space<vmem>>, vector<1x3x8x8xf32>,
    %69 = vector.extract_strided_slice %36 {offsets = [1, 0, 0, 0], sizes = [1, 4, 8, 8], strides = [1, 1, 1, 1]} : vector<4x4x8x8xf32> to vector<1x4x8x8xf32>
    %70 = vector.shape_cast %69 : vector<1x4x8x8xf32> to vector<4x8x8xf32>
    %c2_58 = arith.constant 2 : index
    %c3_59 = arith.constant 3 : index
    %c2_60 = arith.constant 2 : index
    %c0_61 = arith.constant 0 : index
    %71 = vector.load %arg11[%c2_58, %c3_59, %c2_60, %c0_61] : memref<4x9x11x8xf32, #tpu.memory_space<vmem>>, vector<1x4x8x8xf32>
    %72 = vector.shape_cast %71 : vector<1x4x8x8xf32> to vector<4x8x8xf32>
    %73 = vector.shape_cast %70 : vector<4x8x8xf32> to vector<1x4x8x8xf32>
    tpu.vector_store %arg11[%c2_58, %c3_59, %c2_60, %c0_61], %73 {strides = array<i32>} : memref<4x9x11x8xf32, #tpu.memory_space<vmem>>, vector<1x4x8x8xf32>,
    %74 = vector.extract_strided_slice %48 {offsets = [1, 0, 0, 0], sizes = [1, 2, 8, 8], strides = [1, 1, 1, 1]} : vector<4x2x8x8xf32> to vector<1x2x8x8xf32>
    %75 = vector.shape_cast %74 : vector<1x2x8x8xf32> to vector<2x8x8xf32>
    %c2_62 = arith.constant 2 : index
    %c7_63 = arith.constant 7 : index
    %c2_64 = arith.constant 2 : index
    %c0_65 = arith.constant 0 : index
    %76 = vector.load %arg11[%c2_62, %c7_63, %c2_64, %c0_65] : memref<4x9x11x8xf32, #tpu.memory_space<vmem>>, vector<1x2x8x8xf32>
    %77 = vector.shape_cast %76 : vector<1x2x8x8xf32> to vector<2x8x8xf32>
    %78 = vector.shape_cast %75 : vector<2x8x8xf32> to vector<1x2x8x8xf32>
    tpu.vector_store %arg11[%c2_62, %c7_63, %c2_64, %c0_65], %78 {strides = array<i32>} : memref<4x9x11x8xf32, #tpu.memory_space<vmem>>, vector<1x2x8x8xf32>,
    %79 = vector.extract_strided_slice %26 {offsets = [2, 0, 0, 0], sizes = [1, 3, 8, 8], strides = [1, 1, 1, 1]} : vector<4x3x8x8xf32> to vector<1x3x8x8xf32>
    %80 = vector.shape_cast %79 : vector<1x3x8x8xf32> to vector<3x8x8xf32>
    %c1_66 = arith.constant 1 : index
    %c0_67 = arith.constant 0 : index
    %c1_68 = arith.constant 1 : index
    %c0_69 = arith.constant 0 : index
    %81 = vector.load %arg11[%c1_66, %c0_67, %c1_68, %c0_69] : memref<4x9x11x8xf32, #tpu.memory_space<vmem>>, vector<1x3x8x8xf32>
    %82 = vector.shape_cast %81 : vector<1x3x8x8xf32> to vector<3x8x8xf32>
    %83 = vector.shape_cast %80 : vector<3x8x8xf32> to vector<1x3x8x8xf32>
    tpu.vector_store %arg11[%c1_66, %c0_67, %c1_68, %c0_69], %83 {strides = array<i32>} : memref<4x9x11x8xf32, #tpu.memory_space<vmem>>, vector<1x3x8x8xf32>,
    %84 = vector.extract_strided_slice %36 {offsets = [2, 0, 0, 0], sizes = [1, 4, 8, 8], strides = [1, 1, 1, 1]} : vector<4x4x8x8xf32> to vector<1x4x8x8xf32>
    %85 = vector.shape_cast %84 : vector<1x4x8x8xf32> to vector<4x8x8xf32>
    %c1_70 = arith.constant 1 : index
    %c3_71 = arith.constant 3 : index
    %c1_72 = arith.constant 1 : index
    %c0_73 = arith.constant 0 : index
    %86 = vector.load %arg11[%c1_70, %c3_71, %c1_72, %c0_73] : memref<4x9x11x8xf32, #tpu.memory_space<vmem>>, vector<1x4x8x8xf32>
    %87 = vector.shape_cast %86 : vector<1x4x8x8xf32> to vector<4x8x8xf32>
    %88 = vector.shape_cast %85 : vector<4x8x8xf32> to vector<1x4x8x8xf32>
    tpu.vector_store %arg11[%c1_70, %c3_71, %c1_72, %c0_73], %88 {strides = array<i32>} : memref<4x9x11x8xf32, #tpu.memory_space<vmem>>, vector<1x4x8x8xf32>,
    %89 = vector.extract_strided_slice %48 {offsets = [2, 0, 0, 0], sizes = [1, 2, 8, 8], strides = [1, 1, 1, 1]} : vector<4x2x8x8xf32> to vector<1x2x8x8xf32>
    %90 = vector.shape_cast %89 : vector<1x2x8x8xf32> to vector<2x8x8xf32>
    %c1_74 = arith.constant 1 : index
    %c7_75 = arith.constant 7 : index
    %c1_76 = arith.constant 1 : index
    %c0_77 = arith.constant 0 : index
    %91 = vector.load %arg11[%c1_74, %c7_75, %c1_76, %c0_77] : memref<4x9x11x8xf32, #tpu.memory_space<vmem>>, vector<1x2x8x8xf32>
    %92 = vector.shape_cast %91 : vector<1x2x8x8xf32> to vector<2x8x8xf32>
    %93 = vector.shape_cast %90 : vector<2x8x8xf32> to vector<1x2x8x8xf32>
    tpu.vector_store %arg11[%c1_74, %c7_75, %c1_76, %c0_77], %93 {strides = array<i32>} : memref<4x9x11x8xf32, #tpu.memory_space<vmem>>, vector<1x2x8x8xf32>,
    %94 = vector.extract_strided_slice %26 {offsets = [3, 0, 0, 0], sizes = [1, 3, 8, 8], strides = [1, 1, 1, 1]} : vector<4x3x8x8xf32> to vector<1x3x8x8xf32>
    %95 = vector.shape_cast %94 : vector<1x3x8x8xf32> to vector<3x8x8xf32>
    %c0_78 = arith.constant 0 : index
    %c0_79 = arith.constant 0 : index
    %c2_80 = arith.constant 2 : index
    %c0_81 = arith.constant 0 : index
    %96 = vector.load %arg11[%c0_78, %c0_79, %c2_80, %c0_81] : memref<4x9x11x8xf32, #tpu.memory_space<vmem>>, vector<1x3x8x8xf32>
    %97 = vector.shape_cast %96 : vector<1x3x8x8xf32> to vector<3x8x8xf32>
    %98 = vector.shape_cast %95 : vector<3x8x8xf32> to vector<1x3x8x8xf32>
    tpu.vector_store %arg11[%c0_78, %c0_79, %c2_80, %c0_81], %98 {strides = array<i32>} : memref<4x9x11x8xf32, #tpu.memory_space<vmem>>, vector<1x3x8x8xf32>,
    %99 = vector.extract_strided_slice %36 {offsets = [3, 0, 0, 0], sizes = [1, 4, 8, 8], strides = [1, 1, 1, 1]} : vector<4x4x8x8xf32> to vector<1x4x8x8xf32>
    %100 = vector.shape_cast %99 : vector<1x4x8x8xf32> to vector<4x8x8xf32>
    %c0_82 = arith.constant 0 : index
    %c3_83 = arith.constant 3 : index
    %c2_84 = arith.constant 2 : index
    %c0_85 = arith.constant 0 : index
    %101 = vector.load %arg11[%c0_82, %c3_83, %c2_84, %c0_85] : memref<4x9x11x8xf32, #tpu.memory_space<vmem>>, vector<1x4x8x8xf32>
    %102 = vector.shape_cast %101 : vector<1x4x8x8xf32> to vector<4x8x8xf32>
    %103 = vector.shape_cast %100 : vector<4x8x8xf32> to vector<1x4x8x8xf32>
    tpu.vector_store %arg11[%c0_82, %c3_83, %c2_84, %c0_85], %103 {strides = array<i32>} : memref<4x9x11x8xf32, #tpu.memory_space<vmem>>, vector<1x4x8x8xf32>,
    %104 = vector.extract_strided_slice %48 {offsets = [3, 0, 0, 0], sizes = [1, 2, 8, 8], strides = [1, 1, 1, 1]} : vector<4x2x8x8xf32> to vector<1x2x8x8xf32>
    %105 = vector.shape_cast %104 : vector<1x2x8x8xf32> to vector<2x8x8xf32>
    %c0_86 = arith.constant 0 : index
    %c7_87 = arith.constant 7 : index
    %c2_88 = arith.constant 2 : index
    %c0_89 = arith.constant 0 : index
    %106 = vector.load %arg11[%c0_86, %c7_87, %c2_88, %c0_89] : memref<4x9x11x8xf32, #tpu.memory_space<vmem>>, vector<1x2x8x8xf32>
    %107 = vector.shape_cast %106 : vector<1x2x8x8xf32> to vector<2x8x8xf32>
    %108 = vector.shape_cast %105 : vector<2x8x8xf32> to vector<1x2x8x8xf32>
    tpu.vector_store %arg11[%c0_86, %c7_87, %c2_88, %c0_89], %108 {strides = array<i32>} : memref<4x9x11x8xf32, #tpu.memory_space<vmem>>, vector<1x2x8x8xf32>,
    %109 = vector.extract_strided_slice %5 {offsets = [0, 0, 0], sizes = [1, 1, 8], strides = [1, 1, 1]} : vector<7x7x8xf32> to vector<1x1x8xf32>
    %110 = vector.shape_cast %109 : vector<1x1x8xf32> to vector<8xf32>
    %111 = vector.extract_strided_slice %5 {offsets = [0, 1, 0], sizes = [1, 1, 8], strides = [1, 1, 1]} : vector<7x7x8xf32> to vector<1x1x8xf32>
    %112 = vector.shape_cast %111 : vector<1x1x8xf32> to vector<8xf32>
    %113 = vector.extract_strided_slice %5 {offsets = [0, 2, 0], sizes = [1, 1, 8], strides = [1, 1, 1]} : vector<7x7x8xf32> to vector<1x1x8xf32>
    %114 = vector.shape_cast %113 : vector<1x1x8xf32> to vector<8xf32>
    %115 = vector.extract_strided_slice %5 {offsets = [0, 3, 0], sizes = [1, 1, 8], strides = [1, 1, 1]} : vector<7x7x8xf32> to vector<1x1x8xf32>
    %116 = vector.shape_cast %115 : vector<1x1x8xf32> to vector<8xf32>
    %117 = vector.extract_strided_slice %5 {offsets = [0, 4, 0], sizes = [1, 1, 8], strides = [1, 1, 1]} : vector<7x7x8xf32> to vector<1x1x8xf32>
    %118 = vector.shape_cast %117 : vector<1x1x8xf32> to vector<8xf32>
    %119 = vector.extract_strided_slice %5 {offsets = [0, 5, 0], sizes = [1, 1, 8], strides = [1, 1, 1]} : vector<7x7x8xf32> to vector<1x1x8xf32>
    %120 = vector.shape_cast %119 : vector<1x1x8xf32> to vector<8xf32>
    %121 = vector.extract_strided_slice %5 {offsets = [0, 6, 0], sizes = [1, 1, 8], strides = [1, 1, 1]} : vector<7x7x8xf32> to vector<1x1x8xf32>
    %122 = vector.shape_cast %121 : vector<1x1x8xf32> to vector<8xf32>
    %123 = vector.extract_strided_slice %5 {offsets = [1, 0, 0], sizes = [1, 1, 8], strides = [1, 1, 1]} : vector<7x7x8xf32> to vector<1x1x8xf32>
    %124 = vector.shape_cast %123 : vector<1x1x8xf32> to vector<8xf32>
    %125 = vector.extract_strided_slice %5 {offsets = [1, 1, 0], sizes = [1, 1, 8], strides = [1, 1, 1]} : vector<7x7x8xf32> to vector<1x1x8xf32>
    %126 = vector.shape_cast %125 : vector<1x1x8xf32> to vector<8xf32>
    %127 = vector.extract_strided_slice %5 {offsets = [1, 2, 0], sizes = [1, 1, 8], strides = [1, 1, 1]} : vector<7x7x8xf32> to vector<1x1x8xf32>
    %128 = vector.shape_cast %127 : vector<1x1x8xf32> to vector<8xf32>
    %129 = vector.extract_strided_slice %5 {offsets = [1, 3, 0], sizes = [1, 1, 8], strides = [1, 1, 1]} : vector<7x7x8xf32> to vector<1x1x8xf32>
    %130 = vector.shape_cast %129 : vector<1x1x8xf32> to vector<8xf32>
    %131 = vector.extract_strided_slice %5 {offsets = [1, 4, 0], sizes = [1, 1, 8], strides = [1, 1, 1]} : vector<7x7x8xf32> to vector<1x1x8xf32>
    %132 = vector.shape_cast %131 : vector<1x1x8xf32> to vector<8xf32>
    %133 = vector.extract_strided_slice %5 {offsets = [1, 5, 0], sizes = [1, 1, 8], strides = [1, 1, 1]} : vector<7x7x8xf32> to vector<1x1x8xf32>
    %134 = vector.shape_cast %133 : vector<1x1x8xf32> to vector<8xf32>
    %135 = vector.extract_strided_slice %5 {offsets = [1, 6, 0], sizes = [1, 1, 8], strides = [1, 1, 1]} : vector<7x7x8xf32> to vector<1x1x8xf32>
    %136 = vector.shape_cast %135 : vector<1x1x8xf32> to vector<8xf32>
    %137 = vector.extract_strided_slice %5 {offsets = [2, 0, 0], sizes = [1, 1, 8], strides = [1, 1, 1]} : vector<7x7x8xf32> to vector<1x1x8xf32>
    %138 = vector.shape_cast %137 : vector<1x1x8xf32> to vector<8xf32>
    %139 = vector.extract_strided_slice %5 {offsets = [2, 1, 0], sizes = [1, 1, 8], strides = [1, 1, 1]} : vector<7x7x8xf32> to vector<1x1x8xf32>
    %140 = vector.shape_cast %139 : vector<1x1x8xf32> to vector<8xf32>
    %141 = vector.extract_strided_slice %5 {offsets = [2, 2, 0], sizes = [1, 1, 8], strides = [1, 1, 1]} : vector<7x7x8xf32> to vector<1x1x8xf32>
    %142 = vector.shape_cast %141 : vector<1x1x8xf32> to vector<8xf32>
    %143 = vector.extract_strided_slice %5 {offsets = [2, 3, 0], sizes = [1, 1, 8], strides = [1, 1, 1]} : vector<7x7x8xf32> to vector<1x1x8xf32>
    %144 = vector.shape_cast %143 : vector<1x1x8xf32> to vector<8xf32>
    %145 = vector.extract_strided_slice %5 {offsets = [2, 4, 0], sizes = [1, 1, 8], strides = [1, 1, 1]} : vector<7x7x8xf32> to vector<1x1x8xf32>
    %146 = vector.shape_cast %145 : vector<1x1x8xf32> to vector<8xf32>
    %147 = vector.extract_strided_slice %5 {offsets = [2, 5, 0], sizes = [1, 1, 8], strides = [1, 1, 1]} : vector<7x7x8xf32> to vector<1x1x8xf32>
    %148 = vector.shape_cast %147 : vector<1x1x8xf32> to vector<8xf32>
    %149 = vector.extract_strided_slice %5 {offsets = [2, 6, 0], sizes = [1, 1, 8], strides = [1, 1, 1]} : vector<7x7x8xf32> to vector<1x1x8xf32>
    %150 = vector.shape_cast %149 : vector<1x1x8xf32> to vector<8xf32>
    %151 = vector.extract_strided_slice %5 {offsets = [3, 0, 0], sizes = [1, 1, 8], strides = [1, 1, 1]} : vector<7x7x8xf32> to vector<1x1x8xf32>
    %152 = vector.shape_cast %151 : vector<1x1x8xf32> to vector<8xf32>
    %153 = vector.extract_strided_slice %5 {offsets = [3, 1, 0], sizes = [1, 1, 8], strides = [1, 1, 1]} : vector<7x7x8xf32> to vector<1x1x8xf32>
    %154 = vector.shape_cast %153 : vector<1x1x8xf32> to vector<8xf32>
    %155 = vector.extract_strided_slice %5 {offsets = [3, 2, 0], sizes = [1, 1, 8], strides = [1, 1, 1]} : vector<7x7x8xf32> to vector<1x1x8xf32>
    %156 = vector.shape_cast %155 : vector<1x1x8xf32> to vector<8xf32>
    %157 = vector.extract_strided_slice %5 {offsets = [3, 3, 0], sizes = [1, 1, 8], strides = [1, 1, 1]} : vector<7x7x8xf32> to vector<1x1x8xf32>
    %158 = vector.shape_cast %157 : vector<1x1x8xf32> to vector<8xf32>
    %159 = vector.extract_strided_slice %5 {offsets = [3, 4, 0], sizes = [1, 1, 8], strides = [1, 1, 1]} : vector<7x7x8xf32> to vector<1x1x8xf32>
    %160 = vector.shape_cast %159 : vector<1x1x8xf32> to vector<8xf32>
    %161 = vector.extract_strided_slice %5 {offsets = [3, 5, 0], sizes = [1, 1, 8], strides = [1, 1, 1]} : vector<7x7x8xf32> to vector<1x1x8xf32>
    %162 = vector.shape_cast %161 : vector<1x1x8xf32> to vector<8xf32>
    %163 = vector.extract_strided_slice %5 {offsets = [3, 6, 0], sizes = [1, 1, 8], strides = [1, 1, 1]} : vector<7x7x8xf32> to vector<1x1x8xf32>
    %164 = vector.shape_cast %163 : vector<1x1x8xf32> to vector<8xf32>
    %165 = vector.extract_strided_slice %5 {offsets = [4, 0, 0], sizes = [1, 1, 8], strides = [1, 1, 1]} : vector<7x7x8xf32> to vector<1x1x8xf32>
    %166 = vector.shape_cast %165 : vector<1x1x8xf32> to vector<8xf32>
    %167 = vector.extract_strided_slice %5 {offsets = [4, 1, 0], sizes = [1, 1, 8], strides = [1, 1, 1]} : vector<7x7x8xf32> to vector<1x1x8xf32>
    %168 = vector.shape_cast %167 : vector<1x1x8xf32> to vector<8xf32>
    %169 = vector.extract_strided_slice %5 {offsets = [4, 2, 0], sizes = [1, 1, 8], strides = [1, 1, 1]} : vector<7x7x8xf32> to vector<1x1x8xf32>
    %170 = vector.shape_cast %169 : vector<1x1x8xf32> to vector<8xf32>
    %171 = vector.extract_strided_slice %5 {offsets = [4, 3, 0], sizes = [1, 1, 8], strides = [1, 1, 1]} : vector<7x7x8xf32> to vector<1x1x8xf32>
    %172 = vector.shape_cast %171 : vector<1x1x8xf32> to vector<8xf32>
    %173 = vector.extract_strided_slice %5 {offsets = [4, 4, 0], sizes = [1, 1, 8], strides = [1, 1, 1]} : vector<7x7x8xf32> to vector<1x1x8xf32>
    %174 = vector.shape_cast %173 : vector<1x1x8xf32> to vector<8xf32>
    %175 = vector.extract_strided_slice %5 {offsets = [4, 5, 0], sizes = [1, 1, 8], strides = [1, 1, 1]} : vector<7x7x8xf32> to vector<1x1x8xf32>
    %176 = vector.shape_cast %175 : vector<1x1x8xf32> to vector<8xf32>
    %177 = vector.extract_strided_slice %5 {offsets = [4, 6, 0], sizes = [1, 1, 8], strides = [1, 1, 1]} : vector<7x7x8xf32> to vector<1x1x8xf32>
    %178 = vector.shape_cast %177 : vector<1x1x8xf32> to vector<8xf32>
    %179 = vector.extract_strided_slice %5 {offsets = [5, 0, 0], sizes = [1, 1, 8], strides = [1, 1, 1]} : vector<7x7x8xf32> to vector<1x1x8xf32>
    %180 = vector.shape_cast %179 : vector<1x1x8xf32> to vector<8xf32>
    %181 = vector.extract_strided_slice %5 {offsets = [5, 1, 0], sizes = [1, 1, 8], strides = [1, 1, 1]} : vector<7x7x8xf32> to vector<1x1x8xf32>
    %182 = vector.shape_cast %181 : vector<1x1x8xf32> to vector<8xf32>
    %183 = vector.extract_strided_slice %5 {offsets = [5, 2, 0], sizes = [1, 1, 8], strides = [1, 1, 1]} : vector<7x7x8xf32> to vector<1x1x8xf32>
    %184 = vector.shape_cast %183 : vector<1x1x8xf32> to vector<8xf32>
    %185 = vector.extract_strided_slice %5 {offsets = [5, 3, 0], sizes = [1, 1, 8], strides = [1, 1, 1]} : vector<7x7x8xf32> to vector<1x1x8xf32>
    %186 = vector.shape_cast %185 : vector<1x1x8xf32> to vector<8xf32>
    %187 = vector.extract_strided_slice %5 {offsets = [5, 4, 0], sizes = [1, 1, 8], strides = [1, 1, 1]} : vector<7x7x8xf32> to vector<1x1x8xf32>
    %188 = vector.shape_cast %187 : vector<1x1x8xf32> to vector<8xf32>
    %189 = vector.extract_strided_slice %5 {offsets = [5, 5, 0], sizes = [1, 1, 8], strides = [1, 1, 1]} : vector<7x7x8xf32> to vector<1x1x8xf32>
    %190 = vector.shape_cast %189 : vector<1x1x8xf32> to vector<8xf32>
    %191 = vector.extract_strided_slice %5 {offsets = [5, 6, 0], sizes = [1, 1, 8], strides = [1, 1, 1]} : vector<7x7x8xf32> to vector<1x1x8xf32>
    %192 = vector.shape_cast %191 : vector<1x1x8xf32> to vector<8xf32>
    %193 = vector.extract_strided_slice %5 {offsets = [6, 0, 0], sizes = [1, 1, 8], strides = [1, 1, 1]} : vector<7x7x8xf32> to vector<1x1x8xf32>
    %194 = vector.shape_cast %193 : vector<1x1x8xf32> to vector<8xf32>
    %195 = vector.extract_strided_slice %5 {offsets = [6, 1, 0], sizes = [1, 1, 8], strides = [1, 1, 1]} : vector<7x7x8xf32> to vector<1x1x8xf32>
    %196 = vector.shape_cast %195 : vector<1x1x8xf32> to vector<8xf32>
    %197 = vector.extract_strided_slice %5 {offsets = [6, 2, 0], sizes = [1, 1, 8], strides = [1, 1, 1]} : vector<7x7x8xf32> to vector<1x1x8xf32>
    %198 = vector.shape_cast %197 : vector<1x1x8xf32> to vector<8xf32>
    %199 = vector.extract_strided_slice %5 {offsets = [6, 3, 0], sizes = [1, 1, 8], strides = [1, 1, 1]} : vector<7x7x8xf32> to vector<1x1x8xf32>
    %200 = vector.shape_cast %199 : vector<1x1x8xf32> to vector<8xf32>
    %201 = vector.extract_strided_slice %5 {offsets = [6, 4, 0], sizes = [1, 1, 8], strides = [1, 1, 1]} : vector<7x7x8xf32> to vector<1x1x8xf32>
    %202 = vector.shape_cast %201 : vector<1x1x8xf32> to vector<8xf32>
    %203 = vector.extract_strided_slice %5 {offsets = [6, 5, 0], sizes = [1, 1, 8], strides = [1, 1, 1]} : vector<7x7x8xf32> to vector<1x1x8xf32>
    %204 = vector.shape_cast %203 : vector<1x1x8xf32> to vector<8xf32>
    %205 = vector.extract_strided_slice %5 {offsets = [6, 6, 0], sizes = [1, 1, 8], strides = [1, 1, 1]} : vector<7x7x8xf32> to vector<1x1x8xf32>
    %206 = vector.shape_cast %205 : vector<1x1x8xf32> to vector<8xf32>
    %c0_90 = arith.constant 0 : index
    %c0_91 = arith.constant 0 : index
    %c0_92 = arith.constant 0 : index
    %c0_93 = arith.constant 0 : index
    %207 = vector.load %arg11[%c0_90, %c0_91, %c0_92, %c0_93] : memref<4x9x11x8xf32, #tpu.memory_space<vmem>>, vector<1x9x8x8xf32>
    %208 = vector.shape_cast %207 : vector<1x9x8x8xf32> to vector<9x8x8xf32>
    %c2_94 = arith.constant 2 : index
    %c0_95 = arith.constant 0 : index
    %c0_96 = arith.constant 0 : index
    %c0_97 = arith.constant 0 : index
    %209 = vector.load %arg11[%c2_94, %c0_95, %c0_96, %c0_97] : memref<4x9x11x8xf32, #tpu.memory_space<vmem>>, vector<1x9x8x8xf32>
    %210 = vector.shape_cast %209 : vector<1x9x8x8xf32> to vector<9x8x8xf32>
    %211 = vector.extract_strided_slice %208 {offsets = [0, 0, 0], sizes = [5, 8, 8], strides = [1, 1, 1]} : vector<9x8x8xf32> to vector<5x8x8xf32>
    %212 = vector.shape_cast %110 : vector<8xf32> to vector<1x1x8xf32>
    %213 = vector.broadcast %212 : vector<1x1x8xf32> to vector<5x8x8xf32>
    %214 = arith.mulf %211, %213 : vector<5x8x8xf32>
    %215 = vector.extract_strided_slice %210 {offsets = [1, 0, 0], sizes = [5, 8, 8], strides = [1, 1, 1]} : vector<9x8x8xf32> to vector<5x8x8xf32>
    %216 = vector.shape_cast %124 : vector<8xf32> to vector<1x1x8xf32>
    %217 = vector.broadcast %216 : vector<1x1x8xf32> to vector<5x8x8xf32>
    %218 = arith.mulf %215, %217 : vector<5x8x8xf32>
    %219 = arith.addf %214, %218 : vector<5x8x8xf32>
    %220 = vector.extract_strided_slice %208 {offsets = [1, 0, 0], sizes = [5, 8, 8], strides = [1, 1, 1]} : vector<9x8x8xf32> to vector<5x8x8xf32>
    %221 = vector.shape_cast %138 : vector<8xf32> to vector<1x1x8xf32>
    %222 = vector.broadcast %221 : vector<1x1x8xf32> to vector<5x8x8xf32>
    %223 = arith.mulf %220, %222 : vector<5x8x8xf32>
    %224 = arith.addf %219, %223 : vector<5x8x8xf32>
    %225 = vector.extract_strided_slice %210 {offsets = [2, 0, 0], sizes = [5, 8, 8], strides = [1, 1, 1]} : vector<9x8x8xf32> to vector<5x8x8xf32>
    %226 = vector.shape_cast %152 : vector<8xf32> to vector<1x1x8xf32>
    %227 = vector.broadcast %226 : vector<1x1x8xf32> to vector<5x8x8xf32>
    %228 = arith.mulf %225, %227 : vector<5x8x8xf32>
    %229 = arith.addf %224, %228 : vector<5x8x8xf32>
    %230 = vector.extract_strided_slice %208 {offsets = [2, 0, 0], sizes = [5, 8, 8], strides = [1, 1, 1]} : vector<9x8x8xf32> to vector<5x8x8xf32>
    %231 = vector.shape_cast %166 : vector<8xf32> to vector<1x1x8xf32>
    %232 = vector.broadcast %231 : vector<1x1x8xf32> to vector<5x8x8xf32>
    %233 = arith.mulf %230, %232 : vector<5x8x8xf32>
    %234 = arith.addf %229, %233 : vector<5x8x8xf32>
    %235 = vector.extract_strided_slice %210 {offsets = [3, 0, 0], sizes = [5, 8, 8], strides = [1, 1, 1]} : vector<9x8x8xf32> to vector<5x8x8xf32>
    %236 = vector.shape_cast %180 : vector<8xf32> to vector<1x1x8xf32>
    %237 = vector.broadcast %236 : vector<1x1x8xf32> to vector<5x8x8xf32>
    %238 = arith.mulf %235, %237 : vector<5x8x8xf32>
    %239 = arith.addf %234, %238 : vector<5x8x8xf32>
    %240 = vector.extract_strided_slice %208 {offsets = [3, 0, 0], sizes = [5, 8, 8], strides = [1, 1, 1]} : vector<9x8x8xf32> to vector<5x8x8xf32>
    %241 = vector.shape_cast %194 : vector<8xf32> to vector<1x1x8xf32>
    %242 = vector.broadcast %241 : vector<1x1x8xf32> to vector<5x8x8xf32>
    %243 = arith.mulf %240, %242 : vector<5x8x8xf32>
    %244 = arith.addf %239, %243 : vector<5x8x8xf32>
    %245 = vector.extract_strided_slice %210 {offsets = [1, 0, 0], sizes = [5, 8, 8], strides = [1, 1, 1]} : vector<9x8x8xf32> to vector<5x8x8xf32>
    %246 = vector.shape_cast %110 : vector<8xf32> to vector<1x1x8xf32>
    %247 = vector.broadcast %246 : vector<1x1x8xf32> to vector<5x8x8xf32>
    %248 = arith.mulf %245, %247 : vector<5x8x8xf32>
    %249 = vector.extract_strided_slice %208 {offsets = [1, 0, 0], sizes = [5, 8, 8], strides = [1, 1, 1]} : vector<9x8x8xf32> to vector<5x8x8xf32>
    %250 = vector.shape_cast %124 : vector<8xf32> to vector<1x1x8xf32>
    %251 = vector.broadcast %250 : vector<1x1x8xf32> to vector<5x8x8xf32>
    %252 = arith.mulf %249, %251 : vector<5x8x8xf32>
    %253 = arith.addf %248, %252 : vector<5x8x8xf32>
    %254 = vector.extract_strided_slice %210 {offsets = [2, 0, 0], sizes = [5, 8, 8], strides = [1, 1, 1]} : vector<9x8x8xf32> to vector<5x8x8xf32>
    %255 = vector.shape_cast %138 : vector<8xf32> to vector<1x1x8xf32>
    %256 = vector.broadcast %255 : vector<1x1x8xf32> to vector<5x8x8xf32>
    %257 = arith.mulf %254, %256 : vector<5x8x8xf32>
    %258 = arith.addf %253, %257 : vector<5x8x8xf32>
    %259 = vector.extract_strided_slice %208 {offsets = [2, 0, 0], sizes = [5, 8, 8], strides = [1, 1, 1]} : vector<9x8x8xf32> to vector<5x8x8xf32>
    %260 = vector.shape_cast %152 : vector<8xf32> to vector<1x1x8xf32>
    %261 = vector.broadcast %260 : vector<1x1x8xf32> to vector<5x8x8xf32>
    %262 = arith.mulf %259, %261 : vector<5x8x8xf32>
    %263 = arith.addf %258, %262 : vector<5x8x8xf32>
    %264 = vector.extract_strided_slice %210 {offsets = [3, 0, 0], sizes = [5, 8, 8], strides = [1, 1, 1]} : vector<9x8x8xf32> to vector<5x8x8xf32>
    %265 = vector.shape_cast %166 : vector<8xf32> to vector<1x1x8xf32>
    %266 = vector.broadcast %265 : vector<1x1x8xf32> to vector<5x8x8xf32>
    %267 = arith.mulf %264, %266 : vector<5x8x8xf32>
    %268 = arith.addf %263, %267 : vector<5x8x8xf32>
    %269 = vector.extract_strided_slice %208 {offsets = [3, 0, 0], sizes = [5, 8, 8], strides = [1, 1, 1]} : vector<9x8x8xf32> to vector<5x8x8xf32>
    %270 = vector.shape_cast %180 : vector<8xf32> to vector<1x1x8xf32>
    %271 = vector.broadcast %270 : vector<1x1x8xf32> to vector<5x8x8xf32>
    %272 = arith.mulf %269, %271 : vector<5x8x8xf32>
    %273 = arith.addf %268, %272 : vector<5x8x8xf32>
    %274 = vector.extract_strided_slice %210 {offsets = [4, 0, 0], sizes = [5, 8, 8], strides = [1, 1, 1]} : vector<9x8x8xf32> to vector<5x8x8xf32>
    %275 = vector.shape_cast %194 : vector<8xf32> to vector<1x1x8xf32>
    %276 = vector.broadcast %275 : vector<1x1x8xf32> to vector<5x8x8xf32>
    %277 = arith.mulf %274, %276 : vector<5x8x8xf32>
    %278 = arith.addf %273, %277 : vector<5x8x8xf32>
    %c1_98 = arith.constant 1 : index
    %c0_99 = arith.constant 0 : index
    %c0_100 = arith.constant 0 : index
    %c0_101 = arith.constant 0 : index
    %279 = vector.load %arg11[%c1_98, %c0_99, %c0_100, %c0_101] : memref<4x9x11x8xf32, #tpu.memory_space<vmem>>, vector<1x9x8x8xf32>
    %280 = vector.shape_cast %279 : vector<1x9x8x8xf32> to vector<9x8x8xf32>
    %c3_102 = arith.constant 3 : index
    %c0_103 = arith.constant 0 : index
    %c0_104 = arith.constant 0 : index
    %c0_105 = arith.constant 0 : index
    %281 = vector.load %arg11[%c3_102, %c0_103, %c0_104, %c0_105] : memref<4x9x11x8xf32, #tpu.memory_space<vmem>>, vector<1x9x8x8xf32>
    %282 = vector.shape_cast %281 : vector<1x9x8x8xf32> to vector<9x8x8xf32>
    %283 = vector.extract_strided_slice %280 {offsets = [0, 0, 0], sizes = [5, 8, 8], strides = [1, 1, 1]} : vector<9x8x8xf32> to vector<5x8x8xf32>
    %284 = vector.shape_cast %112 : vector<8xf32> to vector<1x1x8xf32>
    %285 = vector.broadcast %284 : vector<1x1x8xf32> to vector<5x8x8xf32>
    %286 = arith.mulf %283, %285 : vector<5x8x8xf32>
    %287 = arith.addf %244, %286 : vector<5x8x8xf32>
    %288 = vector.extract_strided_slice %282 {offsets = [1, 0, 0], sizes = [5, 8, 8], strides = [1, 1, 1]} : vector<9x8x8xf32> to vector<5x8x8xf32>
    %289 = vector.shape_cast %126 : vector<8xf32> to vector<1x1x8xf32>
    %290 = vector.broadcast %289 : vector<1x1x8xf32> to vector<5x8x8xf32>
    %291 = arith.mulf %288, %290 : vector<5x8x8xf32>
    %292 = arith.addf %287, %291 : vector<5x8x8xf32>
    %293 = vector.extract_strided_slice %280 {offsets = [1, 0, 0], sizes = [5, 8, 8], strides = [1, 1, 1]} : vector<9x8x8xf32> to vector<5x8x8xf32>
    %294 = vector.shape_cast %140 : vector<8xf32> to vector<1x1x8xf32>
    %295 = vector.broadcast %294 : vector<1x1x8xf32> to vector<5x8x8xf32>
    %296 = arith.mulf %293, %295 : vector<5x8x8xf32>
    %297 = arith.addf %292, %296 : vector<5x8x8xf32>
    %298 = vector.extract_strided_slice %282 {offsets = [2, 0, 0], sizes = [5, 8, 8], strides = [1, 1, 1]} : vector<9x8x8xf32> to vector<5x8x8xf32>
    %299 = vector.shape_cast %154 : vector<8xf32> to vector<1x1x8xf32>
    %300 = vector.broadcast %299 : vector<1x1x8xf32> to vector<5x8x8xf32>
    %301 = arith.mulf %298, %300 : vector<5x8x8xf32>
    %302 = arith.addf %297, %301 : vector<5x8x8xf32>
    %303 = vector.extract_strided_slice %280 {offsets = [2, 0, 0], sizes = [5, 8, 8], strides = [1, 1, 1]} : vector<9x8x8xf32> to vector<5x8x8xf32>
    %304 = vector.shape_cast %168 : vector<8xf32> to vector<1x1x8xf32>
    %305 = vector.broadcast %304 : vector<1x1x8xf32> to vector<5x8x8xf32>
    %306 = arith.mulf %303, %305 : vector<5x8x8xf32>
    %307 = arith.addf %302, %306 : vector<5x8x8xf32>
    %308 = vector.extract_strided_slice %282 {offsets = [3, 0, 0], sizes = [5, 8, 8], strides = [1, 1, 1]} : vector<9x8x8xf32> to vector<5x8x8xf32>
    %309 = vector.shape_cast %182 : vector<8xf32> to vector<1x1x8xf32>
    %310 = vector.broadcast %309 : vector<1x1x8xf32> to vector<5x8x8xf32>
    %311 = arith.mulf %308, %310 : vector<5x8x8xf32>
    %312 = arith.addf %307, %311 : vector<5x8x8xf32>
    %313 = vector.extract_strided_slice %280 {offsets = [3, 0, 0], sizes = [5, 8, 8], strides = [1, 1, 1]} : vector<9x8x8xf32> to vector<5x8x8xf32>
    %314 = vector.shape_cast %196 : vector<8xf32> to vector<1x1x8xf32>
    %315 = vector.broadcast %314 : vector<1x1x8xf32> to vector<5x8x8xf32>
    %316 = arith.mulf %313, %315 : vector<5x8x8xf32>
    %317 = arith.addf %312, %316 : vector<5x8x8xf32>
    %318 = vector.extract_strided_slice %282 {offsets = [1, 0, 0], sizes = [5, 8, 8], strides = [1, 1, 1]} : vector<9x8x8xf32> to vector<5x8x8xf32>
    %319 = vector.shape_cast %112 : vector<8xf32> to vector<1x1x8xf32>
    %320 = vector.broadcast %319 : vector<1x1x8xf32> to vector<5x8x8xf32>
    %321 = arith.mulf %318, %320 : vector<5x8x8xf32>
    %322 = arith.addf %278, %321 : vector<5x8x8xf32>
    %323 = vector.extract_strided_slice %280 {offsets = [1, 0, 0], sizes = [5, 8, 8], strides = [1, 1, 1]} : vector<9x8x8xf32> to vector<5x8x8xf32>
    %324 = vector.shape_cast %126 : vector<8xf32> to vector<1x1x8xf32>
    %325 = vector.broadcast %324 : vector<1x1x8xf32> to vector<5x8x8xf32>
    %326 = arith.mulf %323, %325 : vector<5x8x8xf32>
    %327 = arith.addf %322, %326 : vector<5x8x8xf32>
    %328 = vector.extract_strided_slice %282 {offsets = [2, 0, 0], sizes = [5, 8, 8], strides = [1, 1, 1]} : vector<9x8x8xf32> to vector<5x8x8xf32>
    %329 = vector.shape_cast %140 : vector<8xf32> to vector<1x1x8xf32>
    %330 = vector.broadcast %329 : vector<1x1x8xf32> to vector<5x8x8xf32>
    %331 = arith.mulf %328, %330 : vector<5x8x8xf32>
    %332 = arith.addf %327, %331 : vector<5x8x8xf32>
    %333 = vector.extract_strided_slice %280 {offsets = [2, 0, 0], sizes = [5, 8, 8], strides = [1, 1, 1]} : vector<9x8x8xf32> to vector<5x8x8xf32>
    %334 = vector.shape_cast %154 : vector<8xf32> to vector<1x1x8xf32>
    %335 = vector.broadcast %334 : vector<1x1x8xf32> to vector<5x8x8xf32>
    %336 = arith.mulf %333, %335 : vector<5x8x8xf32>
    %337 = arith.addf %332, %336 : vector<5x8x8xf32>
    %338 = vector.extract_strided_slice %282 {offsets = [3, 0, 0], sizes = [5, 8, 8], strides = [1, 1, 1]} : vector<9x8x8xf32> to vector<5x8x8xf32>
    %339 = vector.shape_cast %168 : vector<8xf32> to vector<1x1x8xf32>
    %340 = vector.broadcast %339 : vector<1x1x8xf32> to vector<5x8x8xf32>
    %341 = arith.mulf %338, %340 : vector<5x8x8xf32>
    %342 = arith.addf %337, %341 : vector<5x8x8xf32>
    %343 = vector.extract_strided_slice %280 {offsets = [3, 0, 0], sizes = [5, 8, 8], strides = [1, 1, 1]} : vector<9x8x8xf32> to vector<5x8x8xf32>
    %344 = vector.shape_cast %182 : vector<8xf32> to vector<1x1x8xf32>
    %345 = vector.broadcast %344 : vector<1x1x8xf32> to vector<5x8x8xf32>
    %346 = arith.mulf %343, %345 : vector<5x8x8xf32>
    %347 = arith.addf %342, %346 : vector<5x8x8xf32>
    %348 = vector.extract_strided_slice %282 {offsets = [4, 0, 0], sizes = [5, 8, 8], strides = [1, 1, 1]} : vector<9x8x8xf32> to vector<5x8x8xf32>
    %349 = vector.shape_cast %196 : vector<8xf32> to vector<1x1x8xf32>
    %350 = vector.broadcast %349 : vector<1x1x8xf32> to vector<5x8x8xf32>
    %351 = arith.mulf %348, %350 : vector<5x8x8xf32>
    %352 = arith.addf %347, %351 : vector<5x8x8xf32>
    %c0_106 = arith.constant 0 : index
    %c0_107 = arith.constant 0 : index
    %c1_108 = arith.constant 1 : index
    %c0_109 = arith.constant 0 : index
    %353 = vector.load %arg11[%c0_106, %c0_107, %c1_108, %c0_109] : memref<4x9x11x8xf32, #tpu.memory_space<vmem>>, vector<1x9x8x8xf32>
    %354 = vector.shape_cast %353 : vector<1x9x8x8xf32> to vector<9x8x8xf32>
    %c2_110 = arith.constant 2 : index
    %c0_111 = arith.constant 0 : index
    %c1_112 = arith.constant 1 : index
    %c0_113 = arith.constant 0 : index
    %355 = vector.load %arg11[%c2_110, %c0_111, %c1_112, %c0_113] : memref<4x9x11x8xf32, #tpu.memory_space<vmem>>, vector<1x9x8x8xf32>
    %356 = vector.shape_cast %355 : vector<1x9x8x8xf32> to vector<9x8x8xf32>
    %357 = vector.extract_strided_slice %354 {offsets = [0, 0, 0], sizes = [5, 8, 8], strides = [1, 1, 1]} : vector<9x8x8xf32> to vector<5x8x8xf32>
    %358 = vector.shape_cast %114 : vector<8xf32> to vector<1x1x8xf32>
    %359 = vector.broadcast %358 : vector<1x1x8xf32> to vector<5x8x8xf32>
    %360 = arith.mulf %357, %359 : vector<5x8x8xf32>
    %361 = arith.addf %317, %360 : vector<5x8x8xf32>
    %362 = vector.extract_strided_slice %356 {offsets = [1, 0, 0], sizes = [5, 8, 8], strides = [1, 1, 1]} : vector<9x8x8xf32> to vector<5x8x8xf32>
    %363 = vector.shape_cast %128 : vector<8xf32> to vector<1x1x8xf32>
    %364 = vector.broadcast %363 : vector<1x1x8xf32> to vector<5x8x8xf32>
    %365 = arith.mulf %362, %364 : vector<5x8x8xf32>
    %366 = arith.addf %361, %365 : vector<5x8x8xf32>
    %367 = vector.extract_strided_slice %354 {offsets = [1, 0, 0], sizes = [5, 8, 8], strides = [1, 1, 1]} : vector<9x8x8xf32> to vector<5x8x8xf32>
    %368 = vector.shape_cast %142 : vector<8xf32> to vector<1x1x8xf32>
    %369 = vector.broadcast %368 : vector<1x1x8xf32> to vector<5x8x8xf32>
    %370 = arith.mulf %367, %369 : vector<5x8x8xf32>
    %371 = arith.addf %366, %370 : vector<5x8x8xf32>
    %372 = vector.extract_strided_slice %356 {offsets = [2, 0, 0], sizes = [5, 8, 8], strides = [1, 1, 1]} : vector<9x8x8xf32> to vector<5x8x8xf32>
    %373 = vector.shape_cast %156 : vector<8xf32> to vector<1x1x8xf32>
    %374 = vector.broadcast %373 : vector<1x1x8xf32> to vector<5x8x8xf32>
    %375 = arith.mulf %372, %374 : vector<5x8x8xf32>
    %376 = arith.addf %371, %375 : vector<5x8x8xf32>
    %377 = vector.extract_strided_slice %354 {offsets = [2, 0, 0], sizes = [5, 8, 8], strides = [1, 1, 1]} : vector<9x8x8xf32> to vector<5x8x8xf32>
    %378 = vector.shape_cast %170 : vector<8xf32> to vector<1x1x8xf32>
    %379 = vector.broadcast %378 : vector<1x1x8xf32> to vector<5x8x8xf32>
    %380 = arith.mulf %377, %379 : vector<5x8x8xf32>
    %381 = arith.addf %376, %380 : vector<5x8x8xf32>
    %382 = vector.extract_strided_slice %356 {offsets = [3, 0, 0], sizes = [5, 8, 8], strides = [1, 1, 1]} : vector<9x8x8xf32> to vector<5x8x8xf32>
    %383 = vector.shape_cast %184 : vector<8xf32> to vector<1x1x8xf32>
    %384 = vector.broadcast %383 : vector<1x1x8xf32> to vector<5x8x8xf32>
    %385 = arith.mulf %382, %384 : vector<5x8x8xf32>
    %386 = arith.addf %381, %385 : vector<5x8x8xf32>
    %387 = vector.extract_strided_slice %354 {offsets = [3, 0, 0], sizes = [5, 8, 8], strides = [1, 1, 1]} : vector<9x8x8xf32> to vector<5x8x8xf32>
    %388 = vector.shape_cast %198 : vector<8xf32> to vector<1x1x8xf32>
    %389 = vector.broadcast %388 : vector<1x1x8xf32> to vector<5x8x8xf32>
    %390 = arith.mulf %387, %389 : vector<5x8x8xf32>
    %391 = arith.addf %386, %390 : vector<5x8x8xf32>
    %392 = vector.extract_strided_slice %356 {offsets = [1, 0, 0], sizes = [5, 8, 8], strides = [1, 1, 1]} : vector<9x8x8xf32> to vector<5x8x8xf32>
    %393 = vector.shape_cast %114 : vector<8xf32> to vector<1x1x8xf32>
    %394 = vector.broadcast %393 : vector<1x1x8xf32> to vector<5x8x8xf32>
    %395 = arith.mulf %392, %394 : vector<5x8x8xf32>
    %396 = arith.addf %352, %395 : vector<5x8x8xf32>
    %397 = vector.extract_strided_slice %354 {offsets = [1, 0, 0], sizes = [5, 8, 8], strides = [1, 1, 1]} : vector<9x8x8xf32> to vector<5x8x8xf32>
    %398 = vector.shape_cast %128 : vector<8xf32> to vector<1x1x8xf32>
    %399 = vector.broadcast %398 : vector<1x1x8xf32> to vector<5x8x8xf32>
    %400 = arith.mulf %397, %399 : vector<5x8x8xf32>
    %401 = arith.addf %396, %400 : vector<5x8x8xf32>
    %402 = vector.extract_strided_slice %356 {offsets = [2, 0, 0], sizes = [5, 8, 8], strides = [1, 1, 1]} : vector<9x8x8xf32> to vector<5x8x8xf32>
    %403 = vector.shape_cast %142 : vector<8xf32> to vector<1x1x8xf32>
    %404 = vector.broadcast %403 : vector<1x1x8xf32> to vector<5x8x8xf32>
    %405 = arith.mulf %402, %404 : vector<5x8x8xf32>
    %406 = arith.addf %401, %405 : vector<5x8x8xf32>
    %407 = vector.extract_strided_slice %354 {offsets = [2, 0, 0], sizes = [5, 8, 8], strides = [1, 1, 1]} : vector<9x8x8xf32> to vector<5x8x8xf32>
    %408 = vector.shape_cast %156 : vector<8xf32> to vector<1x1x8xf32>
    %409 = vector.broadcast %408 : vector<1x1x8xf32> to vector<5x8x8xf32>
    %410 = arith.mulf %407, %409 : vector<5x8x8xf32>
    %411 = arith.addf %406, %410 : vector<5x8x8xf32>
    %412 = vector.extract_strided_slice %356 {offsets = [3, 0, 0], sizes = [5, 8, 8], strides = [1, 1, 1]} : vector<9x8x8xf32> to vector<5x8x8xf32>
    %413 = vector.shape_cast %170 : vector<8xf32> to vector<1x1x8xf32>
    %414 = vector.broadcast %413 : vector<1x1x8xf32> to vector<5x8x8xf32>
    %415 = arith.mulf %412, %414 : vector<5x8x8xf32>
    %416 = arith.addf %411, %415 : vector<5x8x8xf32>
    %417 = vector.extract_strided_slice %354 {offsets = [3, 0, 0], sizes = [5, 8, 8], strides = [1, 1, 1]} : vector<9x8x8xf32> to vector<5x8x8xf32>
    %418 = vector.shape_cast %184 : vector<8xf32> to vector<1x1x8xf32>
    %419 = vector.broadcast %418 : vector<1x1x8xf32> to vector<5x8x8xf32>
    %420 = arith.mulf %417, %419 : vector<5x8x8xf32>
    %421 = arith.addf %416, %420 : vector<5x8x8xf32>
    %422 = vector.extract_strided_slice %356 {offsets = [4, 0, 0], sizes = [5, 8, 8], strides = [1, 1, 1]} : vector<9x8x8xf32> to vector<5x8x8xf32>
    %423 = vector.shape_cast %198 : vector<8xf32> to vector<1x1x8xf32>
    %424 = vector.broadcast %423 : vector<1x1x8xf32> to vector<5x8x8xf32>
    %425 = arith.mulf %422, %424 : vector<5x8x8xf32>
    %426 = arith.addf %421, %425 : vector<5x8x8xf32>
    %c1_114 = arith.constant 1 : index
    %c0_115 = arith.constant 0 : index
    %c1_116 = arith.constant 1 : index
    %c0_117 = arith.constant 0 : index
    %427 = vector.load %arg11[%c1_114, %c0_115, %c1_116, %c0_117] : memref<4x9x11x8xf32, #tpu.memory_space<vmem>>, vector<1x9x8x8xf32>
    %428 = vector.shape_cast %427 : vector<1x9x8x8xf32> to vector<9x8x8xf32>
    %c3_118 = arith.constant 3 : index
    %c0_119 = arith.constant 0 : index
    %c1_120 = arith.constant 1 : index
    %c0_121 = arith.constant 0 : index
    %429 = vector.load %arg11[%c3_118, %c0_119, %c1_120, %c0_121] : memref<4x9x11x8xf32, #tpu.memory_space<vmem>>, vector<1x9x8x8xf32>
    %430 = vector.shape_cast %429 : vector<1x9x8x8xf32> to vector<9x8x8xf32>
    %431 = vector.extract_strided_slice %428 {offsets = [0, 0, 0], sizes = [5, 8, 8], strides = [1, 1, 1]} : vector<9x8x8xf32> to vector<5x8x8xf32>
    %432 = vector.shape_cast %116 : vector<8xf32> to vector<1x1x8xf32>
    %433 = vector.broadcast %432 : vector<1x1x8xf32> to vector<5x8x8xf32>
    %434 = arith.mulf %431, %433 : vector<5x8x8xf32>
    %435 = arith.addf %391, %434 : vector<5x8x8xf32>
    %436 = vector.extract_strided_slice %430 {offsets = [1, 0, 0], sizes = [5, 8, 8], strides = [1, 1, 1]} : vector<9x8x8xf32> to vector<5x8x8xf32>
    %437 = vector.shape_cast %130 : vector<8xf32> to vector<1x1x8xf32>
    %438 = vector.broadcast %437 : vector<1x1x8xf32> to vector<5x8x8xf32>
    %439 = arith.mulf %436, %438 : vector<5x8x8xf32>
    %440 = arith.addf %435, %439 : vector<5x8x8xf32>
    %441 = vector.extract_strided_slice %428 {offsets = [1, 0, 0], sizes = [5, 8, 8], strides = [1, 1, 1]} : vector<9x8x8xf32> to vector<5x8x8xf32>
    %442 = vector.shape_cast %144 : vector<8xf32> to vector<1x1x8xf32>
    %443 = vector.broadcast %442 : vector<1x1x8xf32> to vector<5x8x8xf32>
    %444 = arith.mulf %441, %443 : vector<5x8x8xf32>
    %445 = arith.addf %440, %444 : vector<5x8x8xf32>
    %446 = vector.extract_strided_slice %430 {offsets = [2, 0, 0], sizes = [5, 8, 8], strides = [1, 1, 1]} : vector<9x8x8xf32> to vector<5x8x8xf32>
    %447 = vector.shape_cast %158 : vector<8xf32> to vector<1x1x8xf32>
    %448 = vector.broadcast %447 : vector<1x1x8xf32> to vector<5x8x8xf32>
    %449 = arith.mulf %446, %448 : vector<5x8x8xf32>
    %450 = arith.addf %445, %449 : vector<5x8x8xf32>
    %451 = vector.extract_strided_slice %428 {offsets = [2, 0, 0], sizes = [5, 8, 8], strides = [1, 1, 1]} : vector<9x8x8xf32> to vector<5x8x8xf32>
    %452 = vector.shape_cast %172 : vector<8xf32> to vector<1x1x8xf32>
    %453 = vector.broadcast %452 : vector<1x1x8xf32> to vector<5x8x8xf32>
    %454 = arith.mulf %451, %453 : vector<5x8x8xf32>
    %455 = arith.addf %450, %454 : vector<5x8x8xf32>
    %456 = vector.extract_strided_slice %430 {offsets = [3, 0, 0], sizes = [5, 8, 8], strides = [1, 1, 1]} : vector<9x8x8xf32> to vector<5x8x8xf32>
    %457 = vector.shape_cast %186 : vector<8xf32> to vector<1x1x8xf32>
    %458 = vector.broadcast %457 : vector<1x1x8xf32> to vector<5x8x8xf32>
    %459 = arith.mulf %456, %458 : vector<5x8x8xf32>
    %460 = arith.addf %455, %459 : vector<5x8x8xf32>
    %461 = vector.extract_strided_slice %428 {offsets = [3, 0, 0], sizes = [5, 8, 8], strides = [1, 1, 1]} : vector<9x8x8xf32> to vector<5x8x8xf32>
    %462 = vector.shape_cast %200 : vector<8xf32> to vector<1x1x8xf32>
    %463 = vector.broadcast %462 : vector<1x1x8xf32> to vector<5x8x8xf32>
    %464 = arith.mulf %461, %463 : vector<5x8x8xf32>
    %465 = arith.addf %460, %464 : vector<5x8x8xf32>
    %466 = vector.extract_strided_slice %430 {offsets = [1, 0, 0], sizes = [5, 8, 8], strides = [1, 1, 1]} : vector<9x8x8xf32> to vector<5x8x8xf32>
    %467 = vector.shape_cast %116 : vector<8xf32> to vector<1x1x8xf32>
    %468 = vector.broadcast %467 : vector<1x1x8xf32> to vector<5x8x8xf32>
    %469 = arith.mulf %466, %468 : vector<5x8x8xf32>
    %470 = arith.addf %426, %469 : vector<5x8x8xf32>
    %471 = vector.extract_strided_slice %428 {offsets = [1, 0, 0], sizes = [5, 8, 8], strides = [1, 1, 1]} : vector<9x8x8xf32> to vector<5x8x8xf32>
    %472 = vector.shape_cast %130 : vector<8xf32> to vector<1x1x8xf32>
    %473 = vector.broadcast %472 : vector<1x1x8xf32> to vector<5x8x8xf32>
    %474 = arith.mulf %471, %473 : vector<5x8x8xf32>
    %475 = arith.addf %470, %474 : vector<5x8x8xf32>
    %476 = vector.extract_strided_slice %430 {offsets = [2, 0, 0], sizes = [5, 8, 8], strides = [1, 1, 1]} : vector<9x8x8xf32> to vector<5x8x8xf32>
    %477 = vector.shape_cast %144 : vector<8xf32> to vector<1x1x8xf32>
    %478 = vector.broadcast %477 : vector<1x1x8xf32> to vector<5x8x8xf32>
    %479 = arith.mulf %476, %478 : vector<5x8x8xf32>
    %480 = arith.addf %475, %479 : vector<5x8x8xf32>
    %481 = vector.extract_strided_slice %428 {offsets = [2, 0, 0], sizes = [5, 8, 8], strides = [1, 1, 1]} : vector<9x8x8xf32> to vector<5x8x8xf32>
    %482 = vector.shape_cast %158 : vector<8xf32> to vector<1x1x8xf32>
    %483 = vector.broadcast %482 : vector<1x1x8xf32> to vector<5x8x8xf32>
    %484 = arith.mulf %481, %483 : vector<5x8x8xf32>
    %485 = arith.addf %480, %484 : vector<5x8x8xf32>
    %486 = vector.extract_strided_slice %430 {offsets = [3, 0, 0], sizes = [5, 8, 8], strides = [1, 1, 1]} : vector<9x8x8xf32> to vector<5x8x8xf32>
    %487 = vector.shape_cast %172 : vector<8xf32> to vector<1x1x8xf32>
    %488 = vector.broadcast %487 : vector<1x1x8xf32> to vector<5x8x8xf32>
    %489 = arith.mulf %486, %488 : vector<5x8x8xf32>
    %490 = arith.addf %485, %489 : vector<5x8x8xf32>
    %491 = vector.extract_strided_slice %428 {offsets = [3, 0, 0], sizes = [5, 8, 8], strides = [1, 1, 1]} : vector<9x8x8xf32> to vector<5x8x8xf32>
    %492 = vector.shape_cast %186 : vector<8xf32> to vector<1x1x8xf32>
    %493 = vector.broadcast %492 : vector<1x1x8xf32> to vector<5x8x8xf32>
    %494 = arith.mulf %491, %493 : vector<5x8x8xf32>
    %495 = arith.addf %490, %494 : vector<5x8x8xf32>
    %496 = vector.extract_strided_slice %430 {offsets = [4, 0, 0], sizes = [5, 8, 8], strides = [1, 1, 1]} : vector<9x8x8xf32> to vector<5x8x8xf32>
    %497 = vector.shape_cast %200 : vector<8xf32> to vector<1x1x8xf32>
    %498 = vector.broadcast %497 : vector<1x1x8xf32> to vector<5x8x8xf32>
    %499 = arith.mulf %496, %498 : vector<5x8x8xf32>
    %500 = arith.addf %495, %499 : vector<5x8x8xf32>
    %c0_122 = arith.constant 0 : index
    %c0_123 = arith.constant 0 : index
    %c2_124 = arith.constant 2 : index
    %c0_125 = arith.constant 0 : index
    %501 = vector.load %arg11[%c0_122, %c0_123, %c2_124, %c0_125] : memref<4x9x11x8xf32, #tpu.memory_space<vmem>>, vector<1x9x8x8xf32>
    %502 = vector.shape_cast %501 : vector<1x9x8x8xf32> to vector<9x8x8xf32>
    %c2_126 = arith.constant 2 : index
    %c0_127 = arith.constant 0 : index
    %c2_128 = arith.constant 2 : index
    %c0_129 = arith.constant 0 : index
    %503 = vector.load %arg11[%c2_126, %c0_127, %c2_128, %c0_129] : memref<4x9x11x8xf32, #tpu.memory_space<vmem>>, vector<1x9x8x8xf32>
    %504 = vector.shape_cast %503 : vector<1x9x8x8xf32> to vector<9x8x8xf32>
    %505 = vector.extract_strided_slice %502 {offsets = [0, 0, 0], sizes = [5, 8, 8], strides = [1, 1, 1]} : vector<9x8x8xf32> to vector<5x8x8xf32>
    %506 = vector.shape_cast %118 : vector<8xf32> to vector<1x1x8xf32>
    %507 = vector.broadcast %506 : vector<1x1x8xf32> to vector<5x8x8xf32>
    %508 = arith.mulf %505, %507 : vector<5x8x8xf32>
    %509 = arith.addf %465, %508 : vector<5x8x8xf32>
    %510 = vector.extract_strided_slice %504 {offsets = [1, 0, 0], sizes = [5, 8, 8], strides = [1, 1, 1]} : vector<9x8x8xf32> to vector<5x8x8xf32>
    %511 = vector.shape_cast %132 : vector<8xf32> to vector<1x1x8xf32>
    %512 = vector.broadcast %511 : vector<1x1x8xf32> to vector<5x8x8xf32>
    %513 = arith.mulf %510, %512 : vector<5x8x8xf32>
    %514 = arith.addf %509, %513 : vector<5x8x8xf32>
    %515 = vector.extract_strided_slice %502 {offsets = [1, 0, 0], sizes = [5, 8, 8], strides = [1, 1, 1]} : vector<9x8x8xf32> to vector<5x8x8xf32>
    %516 = vector.shape_cast %146 : vector<8xf32> to vector<1x1x8xf32>
    %517 = vector.broadcast %516 : vector<1x1x8xf32> to vector<5x8x8xf32>
    %518 = arith.mulf %515, %517 : vector<5x8x8xf32>
    %519 = arith.addf %514, %518 : vector<5x8x8xf32>
    %520 = vector.extract_strided_slice %504 {offsets = [2, 0, 0], sizes = [5, 8, 8], strides = [1, 1, 1]} : vector<9x8x8xf32> to vector<5x8x8xf32>
    %521 = vector.shape_cast %160 : vector<8xf32> to vector<1x1x8xf32>
    %522 = vector.broadcast %521 : vector<1x1x8xf32> to vector<5x8x8xf32>
    %523 = arith.mulf %520, %522 : vector<5x8x8xf32>
    %524 = arith.addf %519, %523 : vector<5x8x8xf32>
    %525 = vector.extract_strided_slice %502 {offsets = [2, 0, 0], sizes = [5, 8, 8], strides = [1, 1, 1]} : vector<9x8x8xf32> to vector<5x8x8xf32>
    %526 = vector.shape_cast %174 : vector<8xf32> to vector<1x1x8xf32>
    %527 = vector.broadcast %526 : vector<1x1x8xf32> to vector<5x8x8xf32>
    %528 = arith.mulf %525, %527 : vector<5x8x8xf32>
    %529 = arith.addf %524, %528 : vector<5x8x8xf32>
    %530 = vector.extract_strided_slice %504 {offsets = [3, 0, 0], sizes = [5, 8, 8], strides = [1, 1, 1]} : vector<9x8x8xf32> to vector<5x8x8xf32>
    %531 = vector.shape_cast %188 : vector<8xf32> to vector<1x1x8xf32>
    %532 = vector.broadcast %531 : vector<1x1x8xf32> to vector<5x8x8xf32>
    %533 = arith.mulf %530, %532 : vector<5x8x8xf32>
    %534 = arith.addf %529, %533 : vector<5x8x8xf32>
    %535 = vector.extract_strided_slice %502 {offsets = [3, 0, 0], sizes = [5, 8, 8], strides = [1, 1, 1]} : vector<9x8x8xf32> to vector<5x8x8xf32>
    %536 = vector.shape_cast %202 : vector<8xf32> to vector<1x1x8xf32>
    %537 = vector.broadcast %536 : vector<1x1x8xf32> to vector<5x8x8xf32>
    %538 = arith.mulf %535, %537 : vector<5x8x8xf32>
    %539 = arith.addf %534, %538 : vector<5x8x8xf32>
    %540 = vector.extract_strided_slice %504 {offsets = [1, 0, 0], sizes = [5, 8, 8], strides = [1, 1, 1]} : vector<9x8x8xf32> to vector<5x8x8xf32>
    %541 = vector.shape_cast %118 : vector<8xf32> to vector<1x1x8xf32>
    %542 = vector.broadcast %541 : vector<1x1x8xf32> to vector<5x8x8xf32>
    %543 = arith.mulf %540, %542 : vector<5x8x8xf32>
    %544 = arith.addf %500, %543 : vector<5x8x8xf32>
    %545 = vector.extract_strided_slice %502 {offsets = [1, 0, 0], sizes = [5, 8, 8], strides = [1, 1, 1]} : vector<9x8x8xf32> to vector<5x8x8xf32>
    %546 = vector.shape_cast %132 : vector<8xf32> to vector<1x1x8xf32>
    %547 = vector.broadcast %546 : vector<1x1x8xf32> to vector<5x8x8xf32>
    %548 = arith.mulf %545, %547 : vector<5x8x8xf32>
    %549 = arith.addf %544, %548 : vector<5x8x8xf32>
    %550 = vector.extract_strided_slice %504 {offsets = [2, 0, 0], sizes = [5, 8, 8], strides = [1, 1, 1]} : vector<9x8x8xf32> to vector<5x8x8xf32>
    %551 = vector.shape_cast %146 : vector<8xf32> to vector<1x1x8xf32>
    %552 = vector.broadcast %551 : vector<1x1x8xf32> to vector<5x8x8xf32>
    %553 = arith.mulf %550, %552 : vector<5x8x8xf32>
    %554 = arith.addf %549, %553 : vector<5x8x8xf32>
    %555 = vector.extract_strided_slice %502 {offsets = [2, 0, 0], sizes = [5, 8, 8], strides = [1, 1, 1]} : vector<9x8x8xf32> to vector<5x8x8xf32>
    %556 = vector.shape_cast %160 : vector<8xf32> to vector<1x1x8xf32>
    %557 = vector.broadcast %556 : vector<1x1x8xf32> to vector<5x8x8xf32>
    %558 = arith.mulf %555, %557 : vector<5x8x8xf32>
    %559 = arith.addf %554, %558 : vector<5x8x8xf32>
    %560 = vector.extract_strided_slice %504 {offsets = [3, 0, 0], sizes = [5, 8, 8], strides = [1, 1, 1]} : vector<9x8x8xf32> to vector<5x8x8xf32>
    %561 = vector.shape_cast %174 : vector<8xf32> to vector<1x1x8xf32>
    %562 = vector.broadcast %561 : vector<1x1x8xf32> to vector<5x8x8xf32>
    %563 = arith.mulf %560, %562 : vector<5x8x8xf32>
    %564 = arith.addf %559, %563 : vector<5x8x8xf32>
    %565 = vector.extract_strided_slice %502 {offsets = [3, 0, 0], sizes = [5, 8, 8], strides = [1, 1, 1]} : vector<9x8x8xf32> to vector<5x8x8xf32>
    %566 = vector.shape_cast %188 : vector<8xf32> to vector<1x1x8xf32>
    %567 = vector.broadcast %566 : vector<1x1x8xf32> to vector<5x8x8xf32>
    %568 = arith.mulf %565, %567 : vector<5x8x8xf32>
    %569 = arith.addf %564, %568 : vector<5x8x8xf32>
    %570 = vector.extract_strided_slice %504 {offsets = [4, 0, 0], sizes = [5, 8, 8], strides = [1, 1, 1]} : vector<9x8x8xf32> to vector<5x8x8xf32>
    %571 = vector.shape_cast %202 : vector<8xf32> to vector<1x1x8xf32>
    %572 = vector.broadcast %571 : vector<1x1x8xf32> to vector<5x8x8xf32>
    %573 = arith.mulf %570, %572 : vector<5x8x8xf32>
    %574 = arith.addf %569, %573 : vector<5x8x8xf32>
    %c1_130 = arith.constant 1 : index
    %c0_131 = arith.constant 0 : index
    %c2_132 = arith.constant 2 : index
    %c0_133 = arith.constant 0 : index
    %575 = vector.load %arg11[%c1_130, %c0_131, %c2_132, %c0_133] : memref<4x9x11x8xf32, #tpu.memory_space<vmem>>, vector<1x9x8x8xf32>
    %576 = vector.shape_cast %575 : vector<1x9x8x8xf32> to vector<9x8x8xf32>
    %c3_134 = arith.constant 3 : index
    %c0_135 = arith.constant 0 : index
    %c2_136 = arith.constant 2 : index
    %c0_137 = arith.constant 0 : index
    %577 = vector.load %arg11[%c3_134, %c0_135, %c2_136, %c0_137] : memref<4x9x11x8xf32, #tpu.memory_space<vmem>>, vector<1x9x8x8xf32>
    %578 = vector.shape_cast %577 : vector<1x9x8x8xf32> to vector<9x8x8xf32>
    %579 = vector.extract_strided_slice %576 {offsets = [0, 0, 0], sizes = [5, 8, 8], strides = [1, 1, 1]} : vector<9x8x8xf32> to vector<5x8x8xf32>
    %580 = vector.shape_cast %120 : vector<8xf32> to vector<1x1x8xf32>
    %581 = vector.broadcast %580 : vector<1x1x8xf32> to vector<5x8x8xf32>
    %582 = arith.mulf %579, %581 : vector<5x8x8xf32>
    %583 = arith.addf %539, %582 : vector<5x8x8xf32>
    %584 = vector.extract_strided_slice %578 {offsets = [1, 0, 0], sizes = [5, 8, 8], strides = [1, 1, 1]} : vector<9x8x8xf32> to vector<5x8x8xf32>
    %585 = vector.shape_cast %134 : vector<8xf32> to vector<1x1x8xf32>
    %586 = vector.broadcast %585 : vector<1x1x8xf32> to vector<5x8x8xf32>
    %587 = arith.mulf %584, %586 : vector<5x8x8xf32>
    %588 = arith.addf %583, %587 : vector<5x8x8xf32>
    %589 = vector.extract_strided_slice %576 {offsets = [1, 0, 0], sizes = [5, 8, 8], strides = [1, 1, 1]} : vector<9x8x8xf32> to vector<5x8x8xf32>
    %590 = vector.shape_cast %148 : vector<8xf32> to vector<1x1x8xf32>
    %591 = vector.broadcast %590 : vector<1x1x8xf32> to vector<5x8x8xf32>
    %592 = arith.mulf %589, %591 : vector<5x8x8xf32>
    %593 = arith.addf %588, %592 : vector<5x8x8xf32>
    %594 = vector.extract_strided_slice %578 {offsets = [2, 0, 0], sizes = [5, 8, 8], strides = [1, 1, 1]} : vector<9x8x8xf32> to vector<5x8x8xf32>
    %595 = vector.shape_cast %162 : vector<8xf32> to vector<1x1x8xf32>
    %596 = vector.broadcast %595 : vector<1x1x8xf32> to vector<5x8x8xf32>
    %597 = arith.mulf %594, %596 : vector<5x8x8xf32>
    %598 = arith.addf %593, %597 : vector<5x8x8xf32>
    %599 = vector.extract_strided_slice %576 {offsets = [2, 0, 0], sizes = [5, 8, 8], strides = [1, 1, 1]} : vector<9x8x8xf32> to vector<5x8x8xf32>
    %600 = vector.shape_cast %176 : vector<8xf32> to vector<1x1x8xf32>
    %601 = vector.broadcast %600 : vector<1x1x8xf32> to vector<5x8x8xf32>
    %602 = arith.mulf %599, %601 : vector<5x8x8xf32>
    %603 = arith.addf %598, %602 : vector<5x8x8xf32>
    %604 = vector.extract_strided_slice %578 {offsets = [3, 0, 0], sizes = [5, 8, 8], strides = [1, 1, 1]} : vector<9x8x8xf32> to vector<5x8x8xf32>
    %605 = vector.shape_cast %190 : vector<8xf32> to vector<1x1x8xf32>
    %606 = vector.broadcast %605 : vector<1x1x8xf32> to vector<5x8x8xf32>
    %607 = arith.mulf %604, %606 : vector<5x8x8xf32>
    %608 = arith.addf %603, %607 : vector<5x8x8xf32>
    %609 = vector.extract_strided_slice %576 {offsets = [3, 0, 0], sizes = [5, 8, 8], strides = [1, 1, 1]} : vector<9x8x8xf32> to vector<5x8x8xf32>
    %610 = vector.shape_cast %204 : vector<8xf32> to vector<1x1x8xf32>
    %611 = vector.broadcast %610 : vector<1x1x8xf32> to vector<5x8x8xf32>
    %612 = arith.mulf %609, %611 : vector<5x8x8xf32>
    %613 = arith.addf %608, %612 : vector<5x8x8xf32>
    %614 = vector.extract_strided_slice %578 {offsets = [1, 0, 0], sizes = [5, 8, 8], strides = [1, 1, 1]} : vector<9x8x8xf32> to vector<5x8x8xf32>
    %615 = vector.shape_cast %120 : vector<8xf32> to vector<1x1x8xf32>
    %616 = vector.broadcast %615 : vector<1x1x8xf32> to vector<5x8x8xf32>
    %617 = arith.mulf %614, %616 : vector<5x8x8xf32>
    %618 = arith.addf %574, %617 : vector<5x8x8xf32>
    %619 = vector.extract_strided_slice %576 {offsets = [1, 0, 0], sizes = [5, 8, 8], strides = [1, 1, 1]} : vector<9x8x8xf32> to vector<5x8x8xf32>
    %620 = vector.shape_cast %134 : vector<8xf32> to vector<1x1x8xf32>
    %621 = vector.broadcast %620 : vector<1x1x8xf32> to vector<5x8x8xf32>
    %622 = arith.mulf %619, %621 : vector<5x8x8xf32>
    %623 = arith.addf %618, %622 : vector<5x8x8xf32>
    %624 = vector.extract_strided_slice %578 {offsets = [2, 0, 0], sizes = [5, 8, 8], strides = [1, 1, 1]} : vector<9x8x8xf32> to vector<5x8x8xf32>
    %625 = vector.shape_cast %148 : vector<8xf32> to vector<1x1x8xf32>
    %626 = vector.broadcast %625 : vector<1x1x8xf32> to vector<5x8x8xf32>
    %627 = arith.mulf %624, %626 : vector<5x8x8xf32>
    %628 = arith.addf %623, %627 : vector<5x8x8xf32>
    %629 = vector.extract_strided_slice %576 {offsets = [2, 0, 0], sizes = [5, 8, 8], strides = [1, 1, 1]} : vector<9x8x8xf32> to vector<5x8x8xf32>
    %630 = vector.shape_cast %162 : vector<8xf32> to vector<1x1x8xf32>
    %631 = vector.broadcast %630 : vector<1x1x8xf32> to vector<5x8x8xf32>
    %632 = arith.mulf %629, %631 : vector<5x8x8xf32>
    %633 = arith.addf %628, %632 : vector<5x8x8xf32>
    %634 = vector.extract_strided_slice %578 {offsets = [3, 0, 0], sizes = [5, 8, 8], strides = [1, 1, 1]} : vector<9x8x8xf32> to vector<5x8x8xf32>
    %635 = vector.shape_cast %176 : vector<8xf32> to vector<1x1x8xf32>
    %636 = vector.broadcast %635 : vector<1x1x8xf32> to vector<5x8x8xf32>
    %637 = arith.mulf %634, %636 : vector<5x8x8xf32>
    %638 = arith.addf %633, %637 : vector<5x8x8xf32>
    %639 = vector.extract_strided_slice %576 {offsets = [3, 0, 0], sizes = [5, 8, 8], strides = [1, 1, 1]} : vector<9x8x8xf32> to vector<5x8x8xf32>
    %640 = vector.shape_cast %190 : vector<8xf32> to vector<1x1x8xf32>
    %641 = vector.broadcast %640 : vector<1x1x8xf32> to vector<5x8x8xf32>
    %642 = arith.mulf %639, %641 : vector<5x8x8xf32>
    %643 = arith.addf %638, %642 : vector<5x8x8xf32>
    %644 = vector.extract_strided_slice %578 {offsets = [4, 0, 0], sizes = [5, 8, 8], strides = [1, 1, 1]} : vector<9x8x8xf32> to vector<5x8x8xf32>
    %645 = vector.shape_cast %204 : vector<8xf32> to vector<1x1x8xf32>
    %646 = vector.broadcast %645 : vector<1x1x8xf32> to vector<5x8x8xf32>
    %647 = arith.mulf %644, %646 : vector<5x8x8xf32>
    %648 = arith.addf %643, %647 : vector<5x8x8xf32>
    %c0_138 = arith.constant 0 : index
    %c0_139 = arith.constant 0 : index
    %c3_140 = arith.constant 3 : index
    %c0_141 = arith.constant 0 : index
    %649 = vector.load %arg11[%c0_138, %c0_139, %c3_140, %c0_141] : memref<4x9x11x8xf32, #tpu.memory_space<vmem>>, vector<1x9x8x8xf32>
    %650 = vector.shape_cast %649 : vector<1x9x8x8xf32> to vector<9x8x8xf32>
    %c2_142 = arith.constant 2 : index
    %c0_143 = arith.constant 0 : index
    %c3_144 = arith.constant 3 : index
    %c0_145 = arith.constant 0 : index
    %651 = vector.load %arg11[%c2_142, %c0_143, %c3_144, %c0_145] : memref<4x9x11x8xf32, #tpu.memory_space<vmem>>, vector<1x9x8x8xf32>
    %652 = vector.shape_cast %651 : vector<1x9x8x8xf32> to vector<9x8x8xf32>
    %653 = vector.extract_strided_slice %650 {offsets = [0, 0, 0], sizes = [5, 8, 8], strides = [1, 1, 1]} : vector<9x8x8xf32> to vector<5x8x8xf32>
    %654 = vector.shape_cast %122 : vector<8xf32> to vector<1x1x8xf32>
    %655 = vector.broadcast %654 : vector<1x1x8xf32> to vector<5x8x8xf32>
    %656 = arith.mulf %653, %655 : vector<5x8x8xf32>
    %657 = arith.addf %613, %656 : vector<5x8x8xf32>
    %658 = vector.extract_strided_slice %652 {offsets = [1, 0, 0], sizes = [5, 8, 8], strides = [1, 1, 1]} : vector<9x8x8xf32> to vector<5x8x8xf32>
    %659 = vector.shape_cast %136 : vector<8xf32> to vector<1x1x8xf32>
    %660 = vector.broadcast %659 : vector<1x1x8xf32> to vector<5x8x8xf32>
    %661 = arith.mulf %658, %660 : vector<5x8x8xf32>
    %662 = arith.addf %657, %661 : vector<5x8x8xf32>
    %663 = vector.extract_strided_slice %650 {offsets = [1, 0, 0], sizes = [5, 8, 8], strides = [1, 1, 1]} : vector<9x8x8xf32> to vector<5x8x8xf32>
    %664 = vector.shape_cast %150 : vector<8xf32> to vector<1x1x8xf32>
    %665 = vector.broadcast %664 : vector<1x1x8xf32> to vector<5x8x8xf32>
    %666 = arith.mulf %663, %665 : vector<5x8x8xf32>
    %667 = arith.addf %662, %666 : vector<5x8x8xf32>
    %668 = vector.extract_strided_slice %652 {offsets = [2, 0, 0], sizes = [5, 8, 8], strides = [1, 1, 1]} : vector<9x8x8xf32> to vector<5x8x8xf32>
    %669 = vector.shape_cast %164 : vector<8xf32> to vector<1x1x8xf32>
    %670 = vector.broadcast %669 : vector<1x1x8xf32> to vector<5x8x8xf32>
    %671 = arith.mulf %668, %670 : vector<5x8x8xf32>
    %672 = arith.addf %667, %671 : vector<5x8x8xf32>
    %673 = vector.extract_strided_slice %650 {offsets = [2, 0, 0], sizes = [5, 8, 8], strides = [1, 1, 1]} : vector<9x8x8xf32> to vector<5x8x8xf32>
    %674 = vector.shape_cast %178 : vector<8xf32> to vector<1x1x8xf32>
    %675 = vector.broadcast %674 : vector<1x1x8xf32> to vector<5x8x8xf32>
    %676 = arith.mulf %673, %675 : vector<5x8x8xf32>
    %677 = arith.addf %672, %676 : vector<5x8x8xf32>
    %678 = vector.extract_strided_slice %652 {offsets = [3, 0, 0], sizes = [5, 8, 8], strides = [1, 1, 1]} : vector<9x8x8xf32> to vector<5x8x8xf32>
    %679 = vector.shape_cast %192 : vector<8xf32> to vector<1x1x8xf32>
    %680 = vector.broadcast %679 : vector<1x1x8xf32> to vector<5x8x8xf32>
    %681 = arith.mulf %678, %680 : vector<5x8x8xf32>
    %682 = arith.addf %677, %681 : vector<5x8x8xf32>
    %683 = vector.extract_strided_slice %650 {offsets = [3, 0, 0], sizes = [5, 8, 8], strides = [1, 1, 1]} : vector<9x8x8xf32> to vector<5x8x8xf32>
    %684 = vector.shape_cast %206 : vector<8xf32> to vector<1x1x8xf32>
    %685 = vector.broadcast %684 : vector<1x1x8xf32> to vector<5x8x8xf32>
    %686 = arith.mulf %683, %685 : vector<5x8x8xf32>
    %687 = arith.addf %682, %686 : vector<5x8x8xf32>
    %688 = vector.extract_strided_slice %652 {offsets = [1, 0, 0], sizes = [5, 8, 8], strides = [1, 1, 1]} : vector<9x8x8xf32> to vector<5x8x8xf32>
    %689 = vector.shape_cast %122 : vector<8xf32> to vector<1x1x8xf32>
    %690 = vector.broadcast %689 : vector<1x1x8xf32> to vector<5x8x8xf32>
    %691 = arith.mulf %688, %690 : vector<5x8x8xf32>
    %692 = arith.addf %648, %691 : vector<5x8x8xf32>
    %693 = vector.extract_strided_slice %650 {offsets = [1, 0, 0], sizes = [5, 8, 8], strides = [1, 1, 1]} : vector<9x8x8xf32> to vector<5x8x8xf32>
    %694 = vector.shape_cast %136 : vector<8xf32> to vector<1x1x8xf32>
    %695 = vector.broadcast %694 : vector<1x1x8xf32> to vector<5x8x8xf32>
    %696 = arith.mulf %693, %695 : vector<5x8x8xf32>
    %697 = arith.addf %692, %696 : vector<5x8x8xf32>
    %698 = vector.extract_strided_slice %652 {offsets = [2, 0, 0], sizes = [5, 8, 8], strides = [1, 1, 1]} : vector<9x8x8xf32> to vector<5x8x8xf32>
    %699 = vector.shape_cast %150 : vector<8xf32> to vector<1x1x8xf32>
    %700 = vector.broadcast %699 : vector<1x1x8xf32> to vector<5x8x8xf32>
    %701 = arith.mulf %698, %700 : vector<5x8x8xf32>
    %702 = arith.addf %697, %701 : vector<5x8x8xf32>
    %703 = vector.extract_strided_slice %650 {offsets = [2, 0, 0], sizes = [5, 8, 8], strides = [1, 1, 1]} : vector<9x8x8xf32> to vector<5x8x8xf32>
    %704 = vector.shape_cast %164 : vector<8xf32> to vector<1x1x8xf32>
    %705 = vector.broadcast %704 : vector<1x1x8xf32> to vector<5x8x8xf32>
    %706 = arith.mulf %703, %705 : vector<5x8x8xf32>
    %707 = arith.addf %702, %706 : vector<5x8x8xf32>
    %708 = vector.extract_strided_slice %652 {offsets = [3, 0, 0], sizes = [5, 8, 8], strides = [1, 1, 1]} : vector<9x8x8xf32> to vector<5x8x8xf32>
    %709 = vector.shape_cast %178 : vector<8xf32> to vector<1x1x8xf32>
    %710 = vector.broadcast %709 : vector<1x1x8xf32> to vector<5x8x8xf32>
    %711 = arith.mulf %708, %710 : vector<5x8x8xf32>
    %712 = arith.addf %707, %711 : vector<5x8x8xf32>
    %713 = vector.extract_strided_slice %650 {offsets = [3, 0, 0], sizes = [5, 8, 8], strides = [1, 1, 1]} : vector<9x8x8xf32> to vector<5x8x8xf32>
    %714 = vector.shape_cast %192 : vector<8xf32> to vector<1x1x8xf32>
    %715 = vector.broadcast %714 : vector<1x1x8xf32> to vector<5x8x8xf32>
    %716 = arith.mulf %713, %715 : vector<5x8x8xf32>
    %717 = arith.addf %712, %716 : vector<5x8x8xf32>
    %718 = vector.extract_strided_slice %652 {offsets = [4, 0, 0], sizes = [5, 8, 8], strides = [1, 1, 1]} : vector<9x8x8xf32> to vector<5x8x8xf32>
    %719 = vector.shape_cast %206 : vector<8xf32> to vector<1x1x8xf32>
    %720 = vector.broadcast %719 : vector<1x1x8xf32> to vector<5x8x8xf32>
    %721 = arith.mulf %718, %720 : vector<5x8x8xf32>
    %722 = arith.addf %717, %721 : vector<5x8x8xf32>
    %723 = vector.extract_strided_slice %687 {offsets = [0, 0, 0], sizes = [1, 8, 8], strides = [1, 1, 1]} : vector<5x8x8xf32> to vector<1x8x8xf32>
    %cst_146 = arith.constant 0xFF800000 : f32
    %724 = vector.broadcast %cst_146 : f32 to vector<1x8x8xf32>
    %725 = arith.select %0, %723, %724 : vector<1x8x8xf32>
    %c0_147 = arith.constant 0 : index
    %c0_148 = arith.constant 0 : index
    %c1_149 = arith.constant 1 : index
    %c0_150 = arith.constant 0 : index
    %726 = vector.load %arg12[%c0_147, %c0_148, %c1_149, %c0_150] : memref<4x5x9x8xf32, #tpu.memory_space<vmem>>, vector<1x1x8x8xf32>
    %727 = vector.shape_cast %726 : vector<1x1x8x8xf32> to vector<1x8x8xf32>
    %728 = vector.shape_cast %725 : vector<1x8x8xf32> to vector<1x1x8x8xf32>
    tpu.vector_store %arg12[%c0_147, %c0_148, %c1_149, %c0_150], %728 {strides = array<i32>} : memref<4x5x9x8xf32, #tpu.memory_space<vmem>>, vector<1x1x8x8xf32>,
    %729 = vector.extract_strided_slice %687 {offsets = [1, 0, 0], sizes = [4, 8, 8], strides = [1, 1, 1]} : vector<5x8x8xf32> to vector<4x8x8xf32>
    %c0_151 = arith.constant 0 : index
    %c1_152 = arith.constant 1 : index
    %c1_153 = arith.constant 1 : index
    %c0_154 = arith.constant 0 : index
    %730 = vector.load %arg12[%c0_151, %c1_152, %c1_153, %c0_154] : memref<4x5x9x8xf32, #tpu.memory_space<vmem>>, vector<1x4x8x8xf32>
    %731 = vector.shape_cast %730 : vector<1x4x8x8xf32> to vector<4x8x8xf32>
    %732 = vector.shape_cast %729 : vector<4x8x8xf32> to vector<1x4x8x8xf32>
    tpu.vector_store %arg12[%c0_151, %c1_152, %c1_153, %c0_154], %732 {strides = array<i32>} : memref<4x5x9x8xf32, #tpu.memory_space<vmem>>, vector<1x4x8x8xf32>,
    %733 = vector.extract_strided_slice %687 {offsets = [1, 0, 0], sizes = [4, 8, 8], strides = [1, 1, 1]} : vector<5x8x8xf32> to vector<4x8x8xf32>
    %734 = vector.shape_cast %733 : vector<4x8x8xf32> to vector<32x8xf32>
    %735 = vector.extract_strided_slice %6 {offsets = [0, 0], sizes = [8, 8], strides = [1, 1]} : vector<40x8xf32> to vector<8x8xf32>
    %cst_155 = arith.constant dense<0.000000e+00> : vector<32x8xf32>
    %736 = tpu.matmul %734, %735, %cst_155 {dimension_numbers = #tpu.dot_dimension_numbers<[1], [0], [0], [1], [0, 0, 1, 1], [], []>} : vector<32x8xf32>, vector<8x8xf32>, vector<32x8xf32> -> vector<32x8xf32>
    %737 = vector.extract_strided_slice %722 {offsets = [0, 0, 0], sizes = [1, 8, 8], strides = [1, 1, 1]} : vector<5x8x8xf32> to vector<1x8x8xf32>
    %cst_156 = arith.constant 0xFF800000 : f32
    %738 = vector.broadcast %cst_156 : f32 to vector<1x8x8xf32>
    %739 = arith.select %0, %737, %738 : vector<1x8x8xf32>
    %c2_157 = arith.constant 2 : index
    %c0_158 = arith.constant 0 : index
    %c1_159 = arith.constant 1 : index
    %c0_160 = arith.constant 0 : index
    %740 = vector.load %arg12[%c2_157, %c0_158, %c1_159, %c0_160] : memref<4x5x9x8xf32, #tpu.memory_space<vmem>>, vector<1x1x8x8xf32>
    %741 = vector.shape_cast %740 : vector<1x1x8x8xf32> to vector<1x8x8xf32>
    %742 = vector.shape_cast %739 : vector<1x8x8xf32> to vector<1x1x8x8xf32>
    tpu.vector_store %arg12[%c2_157, %c0_158, %c1_159, %c0_160], %742 {strides = array<i32>} : memref<4x5x9x8xf32, #tpu.memory_space<vmem>>, vector<1x1x8x8xf32>,
    %743 = vector.extract_strided_slice %722 {offsets = [1, 0, 0], sizes = [4, 8, 8], strides = [1, 1, 1]} : vector<5x8x8xf32> to vector<4x8x8xf32>
    %c2_161 = arith.constant 2 : index
    %c1_162 = arith.constant 1 : index
    %c1_163 = arith.constant 1 : index
    %c0_164 = arith.constant 0 : index
    %744 = vector.load %arg12[%c2_161, %c1_162, %c1_163, %c0_164] : memref<4x5x9x8xf32, #tpu.memory_space<vmem>>, vector<1x4x8x8xf32>
    %745 = vector.shape_cast %744 : vector<1x4x8x8xf32> to vector<4x8x8xf32>
    %746 = vector.shape_cast %743 : vector<4x8x8xf32> to vector<1x4x8x8xf32>
    tpu.vector_store %arg12[%c2_161, %c1_162, %c1_163, %c0_164], %746 {strides = array<i32>} : memref<4x5x9x8xf32, #tpu.memory_space<vmem>>, vector<1x4x8x8xf32>,
    %747 = vector.extract_strided_slice %722 {offsets = [1, 0, 0], sizes = [4, 8, 8], strides = [1, 1, 1]} : vector<5x8x8xf32> to vector<4x8x8xf32>
    %748 = vector.shape_cast %747 : vector<4x8x8xf32> to vector<32x8xf32>
    %749 = vector.extract_strided_slice %6 {offsets = [8, 0], sizes = [8, 8], strides = [1, 1]} : vector<40x8xf32> to vector<8x8xf32>
    %cst_165 = arith.constant dense<0.000000e+00> : vector<32x8xf32>
    %750 = tpu.matmul %748, %749, %cst_165 {dimension_numbers = #tpu.dot_dimension_numbers<[1], [0], [0], [1], [0, 0, 1, 1], [], []>} : vector<32x8xf32>, vector<8x8xf32>, vector<32x8xf32> -> vector<32x8xf32>
    %751 = arith.addf %736, %750 : vector<32x8xf32>
    %c1_166 = arith.constant 1 : index
    %c0_167 = arith.constant 0 : index
    %c0_168 = arith.constant 0 : index
    %c0_169 = arith.constant 0 : index
    %752 = vector.load %arg11[%c1_166, %c0_167, %c0_168, %c0_169] : memref<4x9x11x8xf32, #tpu.memory_space<vmem>>, vector<1x9x8x8xf32>
    %753 = vector.shape_cast %752 : vector<1x9x8x8xf32> to vector<9x8x8xf32>
    %c3_170 = arith.constant 3 : index
    %c0_171 = arith.constant 0 : index
    %c0_172 = arith.constant 0 : index
    %c0_173 = arith.constant 0 : index
    %754 = vector.load %arg11[%c3_170, %c0_171, %c0_172, %c0_173] : memref<4x9x11x8xf32, #tpu.memory_space<vmem>>, vector<1x9x8x8xf32>
    %755 = vector.shape_cast %754 : vector<1x9x8x8xf32> to vector<9x8x8xf32>
    %756 = vector.extract_strided_slice %753 {offsets = [0, 0, 0], sizes = [5, 8, 8], strides = [1, 1, 1]} : vector<9x8x8xf32> to vector<5x8x8xf32>
    %757 = vector.shape_cast %110 : vector<8xf32> to vector<1x1x8xf32>
    %758 = vector.broadcast %757 : vector<1x1x8xf32> to vector<5x8x8xf32>
    %759 = arith.mulf %756, %758 : vector<5x8x8xf32>
    %760 = vector.extract_strided_slice %755 {offsets = [1, 0, 0], sizes = [5, 8, 8], strides = [1, 1, 1]} : vector<9x8x8xf32> to vector<5x8x8xf32>
    %761 = vector.shape_cast %124 : vector<8xf32> to vector<1x1x8xf32>
    %762 = vector.broadcast %761 : vector<1x1x8xf32> to vector<5x8x8xf32>
    %763 = arith.mulf %760, %762 : vector<5x8x8xf32>
    %764 = arith.addf %759, %763 : vector<5x8x8xf32>
    %765 = vector.extract_strided_slice %753 {offsets = [1, 0, 0], sizes = [5, 8, 8], strides = [1, 1, 1]} : vector<9x8x8xf32> to vector<5x8x8xf32>
    %766 = vector.shape_cast %138 : vector<8xf32> to vector<1x1x8xf32>
    %767 = vector.broadcast %766 : vector<1x1x8xf32> to vector<5x8x8xf32>
    %768 = arith.mulf %765, %767 : vector<5x8x8xf32>
    %769 = arith.addf %764, %768 : vector<5x8x8xf32>
    %770 = vector.extract_strided_slice %755 {offsets = [2, 0, 0], sizes = [5, 8, 8], strides = [1, 1, 1]} : vector<9x8x8xf32> to vector<5x8x8xf32>
    %771 = vector.shape_cast %152 : vector<8xf32> to vector<1x1x8xf32>
    %772 = vector.broadcast %771 : vector<1x1x8xf32> to vector<5x8x8xf32>
    %773 = arith.mulf %770, %772 : vector<5x8x8xf32>
    %774 = arith.addf %769, %773 : vector<5x8x8xf32>
    %775 = vector.extract_strided_slice %753 {offsets = [2, 0, 0], sizes = [5, 8, 8], strides = [1, 1, 1]} : vector<9x8x8xf32> to vector<5x8x8xf32>
    %776 = vector.shape_cast %166 : vector<8xf32> to vector<1x1x8xf32>
    %777 = vector.broadcast %776 : vector<1x1x8xf32> to vector<5x8x8xf32>
    %778 = arith.mulf %775, %777 : vector<5x8x8xf32>
    %779 = arith.addf %774, %778 : vector<5x8x8xf32>
    %780 = vector.extract_strided_slice %755 {offsets = [3, 0, 0], sizes = [5, 8, 8], strides = [1, 1, 1]} : vector<9x8x8xf32> to vector<5x8x8xf32>
    %781 = vector.shape_cast %180 : vector<8xf32> to vector<1x1x8xf32>
    %782 = vector.broadcast %781 : vector<1x1x8xf32> to vector<5x8x8xf32>
    %783 = arith.mulf %780, %782 : vector<5x8x8xf32>
    %784 = arith.addf %779, %783 : vector<5x8x8xf32>
    %785 = vector.extract_strided_slice %753 {offsets = [3, 0, 0], sizes = [5, 8, 8], strides = [1, 1, 1]} : vector<9x8x8xf32> to vector<5x8x8xf32>
    %786 = vector.shape_cast %194 : vector<8xf32> to vector<1x1x8xf32>
    %787 = vector.broadcast %786 : vector<1x1x8xf32> to vector<5x8x8xf32>
    %788 = arith.mulf %785, %787 : vector<5x8x8xf32>
    %789 = arith.addf %784, %788 : vector<5x8x8xf32>
    %790 = vector.extract_strided_slice %755 {offsets = [1, 0, 0], sizes = [5, 8, 8], strides = [1, 1, 1]} : vector<9x8x8xf32> to vector<5x8x8xf32>
    %791 = vector.shape_cast %110 : vector<8xf32> to vector<1x1x8xf32>
    %792 = vector.broadcast %791 : vector<1x1x8xf32> to vector<5x8x8xf32>
    %793 = arith.mulf %790, %792 : vector<5x8x8xf32>
    %794 = vector.extract_strided_slice %753 {offsets = [1, 0, 0], sizes = [5, 8, 8], strides = [1, 1, 1]} : vector<9x8x8xf32> to vector<5x8x8xf32>
    %795 = vector.shape_cast %124 : vector<8xf32> to vector<1x1x8xf32>
    %796 = vector.broadcast %795 : vector<1x1x8xf32> to vector<5x8x8xf32>
    %797 = arith.mulf %794, %796 : vector<5x8x8xf32>
    %798 = arith.addf %793, %797 : vector<5x8x8xf32>
    %799 = vector.extract_strided_slice %755 {offsets = [2, 0, 0], sizes = [5, 8, 8], strides = [1, 1, 1]} : vector<9x8x8xf32> to vector<5x8x8xf32>
    %800 = vector.shape_cast %138 : vector<8xf32> to vector<1x1x8xf32>
    %801 = vector.broadcast %800 : vector<1x1x8xf32> to vector<5x8x8xf32>
    %802 = arith.mulf %799, %801 : vector<5x8x8xf32>
    %803 = arith.addf %798, %802 : vector<5x8x8xf32>
    %804 = vector.extract_strided_slice %753 {offsets = [2, 0, 0], sizes = [5, 8, 8], strides = [1, 1, 1]} : vector<9x8x8xf32> to vector<5x8x8xf32>
    %805 = vector.shape_cast %152 : vector<8xf32> to vector<1x1x8xf32>
    %806 = vector.broadcast %805 : vector<1x1x8xf32> to vector<5x8x8xf32>
    %807 = arith.mulf %804, %806 : vector<5x8x8xf32>
    %808 = arith.addf %803, %807 : vector<5x8x8xf32>
    %809 = vector.extract_strided_slice %755 {offsets = [3, 0, 0], sizes = [5, 8, 8], strides = [1, 1, 1]} : vector<9x8x8xf32> to vector<5x8x8xf32>
    %810 = vector.shape_cast %166 : vector<8xf32> to vector<1x1x8xf32>
    %811 = vector.broadcast %810 : vector<1x1x8xf32> to vector<5x8x8xf32>
    %812 = arith.mulf %809, %811 : vector<5x8x8xf32>
    %813 = arith.addf %808, %812 : vector<5x8x8xf32>
    %814 = vector.extract_strided_slice %753 {offsets = [3, 0, 0], sizes = [5, 8, 8], strides = [1, 1, 1]} : vector<9x8x8xf32> to vector<5x8x8xf32>
    %815 = vector.shape_cast %180 : vector<8xf32> to vector<1x1x8xf32>
    %816 = vector.broadcast %815 : vector<1x1x8xf32> to vector<5x8x8xf32>
    %817 = arith.mulf %814, %816 : vector<5x8x8xf32>
    %818 = arith.addf %813, %817 : vector<5x8x8xf32>
    %819 = vector.extract_strided_slice %755 {offsets = [4, 0, 0], sizes = [5, 8, 8], strides = [1, 1, 1]} : vector<9x8x8xf32> to vector<5x8x8xf32>
    %820 = vector.shape_cast %194 : vector<8xf32> to vector<1x1x8xf32>
    %821 = vector.broadcast %820 : vector<1x1x8xf32> to vector<5x8x8xf32>
    %822 = arith.mulf %819, %821 : vector<5x8x8xf32>
    %823 = arith.addf %818, %822 : vector<5x8x8xf32>
    %c0_174 = arith.constant 0 : index
    %c0_175 = arith.constant 0 : index
    %c1_176 = arith.constant 1 : index
    %c0_177 = arith.constant 0 : index
    %824 = vector.load %arg11[%c0_174, %c0_175, %c1_176, %c0_177] : memref<4x9x11x8xf32, #tpu.memory_space<vmem>>, vector<1x9x8x8xf32>
    %825 = vector.shape_cast %824 : vector<1x9x8x8xf32> to vector<9x8x8xf32>
    %c2_178 = arith.constant 2 : index
    %c0_179 = arith.constant 0 : index
    %c1_180 = arith.constant 1 : index
    %c0_181 = arith.constant 0 : index
    %826 = vector.load %arg11[%c2_178, %c0_179, %c1_180, %c0_181] : memref<4x9x11x8xf32, #tpu.memory_space<vmem>>, vector<1x9x8x8xf32>
    %827 = vector.shape_cast %826 : vector<1x9x8x8xf32> to vector<9x8x8xf32>
    %828 = vector.extract_strided_slice %825 {offsets = [0, 0, 0], sizes = [5, 8, 8], strides = [1, 1, 1]} : vector<9x8x8xf32> to vector<5x8x8xf32>
    %829 = vector.shape_cast %112 : vector<8xf32> to vector<1x1x8xf32>
    %830 = vector.broadcast %829 : vector<1x1x8xf32> to vector<5x8x8xf32>
    %831 = arith.mulf %828, %830 : vector<5x8x8xf32>
    %832 = arith.addf %789, %831 : vector<5x8x8xf32>
    %833 = vector.extract_strided_slice %827 {offsets = [1, 0, 0], sizes = [5, 8, 8], strides = [1, 1, 1]} : vector<9x8x8xf32> to vector<5x8x8xf32>
    %834 = vector.shape_cast %126 : vector<8xf32> to vector<1x1x8xf32>
    %835 = vector.broadcast %834 : vector<1x1x8xf32> to vector<5x8x8xf32>
    %836 = arith.mulf %833, %835 : vector<5x8x8xf32>
    %837 = arith.addf %832, %836 : vector<5x8x8xf32>
    %838 = vector.extract_strided_slice %825 {offsets = [1, 0, 0], sizes = [5, 8, 8], strides = [1, 1, 1]} : vector<9x8x8xf32> to vector<5x8x8xf32>
    %839 = vector.shape_cast %140 : vector<8xf32> to vector<1x1x8xf32>
    %840 = vector.broadcast %839 : vector<1x1x8xf32> to vector<5x8x8xf32>
    %841 = arith.mulf %838, %840 : vector<5x8x8xf32>
    %842 = arith.addf %837, %841 : vector<5x8x8xf32>
    %843 = vector.extract_strided_slice %827 {offsets = [2, 0, 0], sizes = [5, 8, 8], strides = [1, 1, 1]} : vector<9x8x8xf32> to vector<5x8x8xf32>
    %844 = vector.shape_cast %154 : vector<8xf32> to vector<1x1x8xf32>
    %845 = vector.broadcast %844 : vector<1x1x8xf32> to vector<5x8x8xf32>
    %846 = arith.mulf %843, %845 : vector<5x8x8xf32>
    %847 = arith.addf %842, %846 : vector<5x8x8xf32>
    %848 = vector.extract_strided_slice %825 {offsets = [2, 0, 0], sizes = [5, 8, 8], strides = [1, 1, 1]} : vector<9x8x8xf32> to vector<5x8x8xf32>
    %849 = vector.shape_cast %168 : vector<8xf32> to vector<1x1x8xf32>
    %850 = vector.broadcast %849 : vector<1x1x8xf32> to vector<5x8x8xf32>
    %851 = arith.mulf %848, %850 : vector<5x8x8xf32>
    %852 = arith.addf %847, %851 : vector<5x8x8xf32>
    %853 = vector.extract_strided_slice %827 {offsets = [3, 0, 0], sizes = [5, 8, 8], strides = [1, 1, 1]} : vector<9x8x8xf32> to vector<5x8x8xf32>
    %854 = vector.shape_cast %182 : vector<8xf32> to vector<1x1x8xf32>
    %855 = vector.broadcast %854 : vector<1x1x8xf32> to vector<5x8x8xf32>
    %856 = arith.mulf %853, %855 : vector<5x8x8xf32>
    %857 = arith.addf %852, %856 : vector<5x8x8xf32>
    %858 = vector.extract_strided_slice %825 {offsets = [3, 0, 0], sizes = [5, 8, 8], strides = [1, 1, 1]} : vector<9x8x8xf32> to vector<5x8x8xf32>
    %859 = vector.shape_cast %196 : vector<8xf32> to vector<1x1x8xf32>
    %860 = vector.broadcast %859 : vector<1x1x8xf32> to vector<5x8x8xf32>
    %861 = arith.mulf %858, %860 : vector<5x8x8xf32>
    %862 = arith.addf %857, %861 : vector<5x8x8xf32>
    %863 = vector.extract_strided_slice %827 {offsets = [1, 0, 0], sizes = [5, 8, 8], strides = [1, 1, 1]} : vector<9x8x8xf32> to vector<5x8x8xf32>
    %864 = vector.shape_cast %112 : vector<8xf32> to vector<1x1x8xf32>
    %865 = vector.broadcast %864 : vector<1x1x8xf32> to vector<5x8x8xf32>
    %866 = arith.mulf %863, %865 : vector<5x8x8xf32>
    %867 = arith.addf %823, %866 : vector<5x8x8xf32>
    %868 = vector.extract_strided_slice %825 {offsets = [1, 0, 0], sizes = [5, 8, 8], strides = [1, 1, 1]} : vector<9x8x8xf32> to vector<5x8x8xf32>
    %869 = vector.shape_cast %126 : vector<8xf32> to vector<1x1x8xf32>
    %870 = vector.broadcast %869 : vector<1x1x8xf32> to vector<5x8x8xf32>
    %871 = arith.mulf %868, %870 : vector<5x8x8xf32>
    %872 = arith.addf %867, %871 : vector<5x8x8xf32>
    %873 = vector.extract_strided_slice %827 {offsets = [2, 0, 0], sizes = [5, 8, 8], strides = [1, 1, 1]} : vector<9x8x8xf32> to vector<5x8x8xf32>
    %874 = vector.shape_cast %140 : vector<8xf32> to vector<1x1x8xf32>
    %875 = vector.broadcast %874 : vector<1x1x8xf32> to vector<5x8x8xf32>
    %876 = arith.mulf %873, %875 : vector<5x8x8xf32>
    %877 = arith.addf %872, %876 : vector<5x8x8xf32>
    %878 = vector.extract_strided_slice %825 {offsets = [2, 0, 0], sizes = [5, 8, 8], strides = [1, 1, 1]} : vector<9x8x8xf32> to vector<5x8x8xf32>
    %879 = vector.shape_cast %154 : vector<8xf32> to vector<1x1x8xf32>
    %880 = vector.broadcast %879 : vector<1x1x8xf32> to vector<5x8x8xf32>
    %881 = arith.mulf %878, %880 : vector<5x8x8xf32>
    %882 = arith.addf %877, %881 : vector<5x8x8xf32>
    %883 = vector.extract_strided_slice %827 {offsets = [3, 0, 0], sizes = [5, 8, 8], strides = [1, 1, 1]} : vector<9x8x8xf32> to vector<5x8x8xf32>
    %884 = vector.shape_cast %168 : vector<8xf32> to vector<1x1x8xf32>
    %885 = vector.broadcast %884 : vector<1x1x8xf32> to vector<5x8x8xf32>
    %886 = arith.mulf %883, %885 : vector<5x8x8xf32>
    %887 = arith.addf %882, %886 : vector<5x8x8xf32>
    %888 = vector.extract_strided_slice %825 {offsets = [3, 0, 0], sizes = [5, 8, 8], strides = [1, 1, 1]} : vector<9x8x8xf32> to vector<5x8x8xf32>
    %889 = vector.shape_cast %182 : vector<8xf32> to vector<1x1x8xf32>
    %890 = vector.broadcast %889 : vector<1x1x8xf32> to vector<5x8x8xf32>
    %891 = arith.mulf %888, %890 : vector<5x8x8xf32>
    %892 = arith.addf %887, %891 : vector<5x8x8xf32>
    %893 = vector.extract_strided_slice %827 {offsets = [4, 0, 0], sizes = [5, 8, 8], strides = [1, 1, 1]} : vector<9x8x8xf32> to vector<5x8x8xf32>
    %894 = vector.shape_cast %196 : vector<8xf32> to vector<1x1x8xf32>
    %895 = vector.broadcast %894 : vector<1x1x8xf32> to vector<5x8x8xf32>
    %896 = arith.mulf %893, %895 : vector<5x8x8xf32>
    %897 = arith.addf %892, %896 : vector<5x8x8xf32>
    %c1_182 = arith.constant 1 : index
    %c0_183 = arith.constant 0 : index
    %c1_184 = arith.constant 1 : index
    %c0_185 = arith.constant 0 : index
    %898 = vector.load %arg11[%c1_182, %c0_183, %c1_184, %c0_185] : memref<4x9x11x8xf32, #tpu.memory_space<vmem>>, vector<1x9x8x8xf32>
    %899 = vector.shape_cast %898 : vector<1x9x8x8xf32> to vector<9x8x8xf32>
    %c3_186 = arith.constant 3 : index
    %c0_187 = arith.constant 0 : index
    %c1_188 = arith.constant 1 : index
    %c0_189 = arith.constant 0 : index
    %900 = vector.load %arg11[%c3_186, %c0_187, %c1_188, %c0_189] : memref<4x9x11x8xf32, #tpu.memory_space<vmem>>, vector<1x9x8x8xf32>
    %901 = vector.shape_cast %900 : vector<1x9x8x8xf32> to vector<9x8x8xf32>
    %902 = vector.extract_strided_slice %899 {offsets = [0, 0, 0], sizes = [5, 8, 8], strides = [1, 1, 1]} : vector<9x8x8xf32> to vector<5x8x8xf32>
    %903 = vector.shape_cast %114 : vector<8xf32> to vector<1x1x8xf32>
    %904 = vector.broadcast %903 : vector<1x1x8xf32> to vector<5x8x8xf32>
    %905 = arith.mulf %902, %904 : vector<5x8x8xf32>
    %906 = arith.addf %862, %905 : vector<5x8x8xf32>
    %907 = vector.extract_strided_slice %901 {offsets = [1, 0, 0], sizes = [5, 8, 8], strides = [1, 1, 1]} : vector<9x8x8xf32> to vector<5x8x8xf32>
    %908 = vector.shape_cast %128 : vector<8xf32> to vector<1x1x8xf32>
    %909 = vector.broadcast %908 : vector<1x1x8xf32> to vector<5x8x8xf32>
    %910 = arith.mulf %907, %909 : vector<5x8x8xf32>
    %911 = arith.addf %906, %910 : vector<5x8x8xf32>
    %912 = vector.extract_strided_slice %899 {offsets = [1, 0, 0], sizes = [5, 8, 8], strides = [1, 1, 1]} : vector<9x8x8xf32> to vector<5x8x8xf32>
    %913 = vector.shape_cast %142 : vector<8xf32> to vector<1x1x8xf32>
    %914 = vector.broadcast %913 : vector<1x1x8xf32> to vector<5x8x8xf32>
    %915 = arith.mulf %912, %914 : vector<5x8x8xf32>
    %916 = arith.addf %911, %915 : vector<5x8x8xf32>
    %917 = vector.extract_strided_slice %901 {offsets = [2, 0, 0], sizes = [5, 8, 8], strides = [1, 1, 1]} : vector<9x8x8xf32> to vector<5x8x8xf32>
    %918 = vector.shape_cast %156 : vector<8xf32> to vector<1x1x8xf32>
    %919 = vector.broadcast %918 : vector<1x1x8xf32> to vector<5x8x8xf32>
    %920 = arith.mulf %917, %919 : vector<5x8x8xf32>
    %921 = arith.addf %916, %920 : vector<5x8x8xf32>
    %922 = vector.extract_strided_slice %899 {offsets = [2, 0, 0], sizes = [5, 8, 8], strides = [1, 1, 1]} : vector<9x8x8xf32> to vector<5x8x8xf32>
    %923 = vector.shape_cast %170 : vector<8xf32> to vector<1x1x8xf32>
    %924 = vector.broadcast %923 : vector<1x1x8xf32> to vector<5x8x8xf32>
    %925 = arith.mulf %922, %924 : vector<5x8x8xf32>
    %926 = arith.addf %921, %925 : vector<5x8x8xf32>
    %927 = vector.extract_strided_slice %901 {offsets = [3, 0, 0], sizes = [5, 8, 8], strides = [1, 1, 1]} : vector<9x8x8xf32> to vector<5x8x8xf32>
    %928 = vector.shape_cast %184 : vector<8xf32> to vector<1x1x8xf32>
    %929 = vector.broadcast %928 : vector<1x1x8xf32> to vector<5x8x8xf32>
    %930 = arith.mulf %927, %929 : vector<5x8x8xf32>
    %931 = arith.addf %926, %930 : vector<5x8x8xf32>
    %932 = vector.extract_strided_slice %899 {offsets = [3, 0, 0], sizes = [5, 8, 8], strides = [1, 1, 1]} : vector<9x8x8xf32> to vector<5x8x8xf32>
    %933 = vector.shape_cast %198 : vector<8xf32> to vector<1x1x8xf32>
    %934 = vector.broadcast %933 : vector<1x1x8xf32> to vector<5x8x8xf32>
    %935 = arith.mulf %932, %934 : vector<5x8x8xf32>
    %936 = arith.addf %931, %935 : vector<5x8x8xf32>
    %937 = vector.extract_strided_slice %901 {offsets = [1, 0, 0], sizes = [5, 8, 8], strides = [1, 1, 1]} : vector<9x8x8xf32> to vector<5x8x8xf32>
    %938 = vector.shape_cast %114 : vector<8xf32> to vector<1x1x8xf32>
    %939 = vector.broadcast %938 : vector<1x1x8xf32> to vector<5x8x8xf32>
    %940 = arith.mulf %937, %939 : vector<5x8x8xf32>
    %941 = arith.addf %897, %940 : vector<5x8x8xf32>
    %942 = vector.extract_strided_slice %899 {offsets = [1, 0, 0], sizes = [5, 8, 8], strides = [1, 1, 1]} : vector<9x8x8xf32> to vector<5x8x8xf32>
    %943 = vector.shape_cast %128 : vector<8xf32> to vector<1x1x8xf32>
    %944 = vector.broadcast %943 : vector<1x1x8xf32> to vector<5x8x8xf32>
    %945 = arith.mulf %942, %944 : vector<5x8x8xf32>
    %946 = arith.addf %941, %945 : vector<5x8x8xf32>
    %947 = vector.extract_strided_slice %901 {offsets = [2, 0, 0], sizes = [5, 8, 8], strides = [1, 1, 1]} : vector<9x8x8xf32> to vector<5x8x8xf32>
    %948 = vector.shape_cast %142 : vector<8xf32> to vector<1x1x8xf32>
    %949 = vector.broadcast %948 : vector<1x1x8xf32> to vector<5x8x8xf32>
    %950 = arith.mulf %947, %949 : vector<5x8x8xf32>
    %951 = arith.addf %946, %950 : vector<5x8x8xf32>
    %952 = vector.extract_strided_slice %899 {offsets = [2, 0, 0], sizes = [5, 8, 8], strides = [1, 1, 1]} : vector<9x8x8xf32> to vector<5x8x8xf32>
    %953 = vector.shape_cast %156 : vector<8xf32> to vector<1x1x8xf32>
    %954 = vector.broadcast %953 : vector<1x1x8xf32> to vector<5x8x8xf32>
    %955 = arith.mulf %952, %954 : vector<5x8x8xf32>
    %956 = arith.addf %951, %955 : vector<5x8x8xf32>
    %957 = vector.extract_strided_slice %901 {offsets = [3, 0, 0], sizes = [5, 8, 8], strides = [1, 1, 1]} : vector<9x8x8xf32> to vector<5x8x8xf32>
    %958 = vector.shape_cast %170 : vector<8xf32> to vector<1x1x8xf32>
    %959 = vector.broadcast %958 : vector<1x1x8xf32> to vector<5x8x8xf32>
    %960 = arith.mulf %957, %959 : vector<5x8x8xf32>
    %961 = arith.addf %956, %960 : vector<5x8x8xf32>
    %962 = vector.extract_strided_slice %899 {offsets = [3, 0, 0], sizes = [5, 8, 8], strides = [1, 1, 1]} : vector<9x8x8xf32> to vector<5x8x8xf32>
    %963 = vector.shape_cast %184 : vector<8xf32> to vector<1x1x8xf32>
    %964 = vector.broadcast %963 : vector<1x1x8xf32> to vector<5x8x8xf32>
    %965 = arith.mulf %962, %964 : vector<5x8x8xf32>
    %966 = arith.addf %961, %965 : vector<5x8x8xf32>
    %967 = vector.extract_strided_slice %901 {offsets = [4, 0, 0], sizes = [5, 8, 8], strides = [1, 1, 1]} : vector<9x8x8xf32> to vector<5x8x8xf32>
    %968 = vector.shape_cast %198 : vector<8xf32> to vector<1x1x8xf32>
    %969 = vector.broadcast %968 : vector<1x1x8xf32> to vector<5x8x8xf32>
    %970 = arith.mulf %967, %969 : vector<5x8x8xf32>
    %971 = arith.addf %966, %970 : vector<5x8x8xf32>
    %c0_190 = arith.constant 0 : index
    %c0_191 = arith.constant 0 : index
    %c2_192 = arith.constant 2 : index
    %c0_193 = arith.constant 0 : index
    %972 = vector.load %arg11[%c0_190, %c0_191, %c2_192, %c0_193] : memref<4x9x11x8xf32, #tpu.memory_space<vmem>>, vector<1x9x8x8xf32>
    %973 = vector.shape_cast %972 : vector<1x9x8x8xf32> to vector<9x8x8xf32>
    %c2_194 = arith.constant 2 : index
    %c0_195 = arith.constant 0 : index
    %c2_196 = arith.constant 2 : index
    %c0_197 = arith.constant 0 : index
    %974 = vector.load %arg11[%c2_194, %c0_195, %c2_196, %c0_197] : memref<4x9x11x8xf32, #tpu.memory_space<vmem>>, vector<1x9x8x8xf32>
    %975 = vector.shape_cast %974 : vector<1x9x8x8xf32> to vector<9x8x8xf32>
    %976 = vector.extract_strided_slice %973 {offsets = [0, 0, 0], sizes = [5, 8, 8], strides = [1, 1, 1]} : vector<9x8x8xf32> to vector<5x8x8xf32>
    %977 = vector.shape_cast %116 : vector<8xf32> to vector<1x1x8xf32>
    %978 = vector.broadcast %977 : vector<1x1x8xf32> to vector<5x8x8xf32>
    %979 = arith.mulf %976, %978 : vector<5x8x8xf32>
    %980 = arith.addf %936, %979 : vector<5x8x8xf32>
    %981 = vector.extract_strided_slice %975 {offsets = [1, 0, 0], sizes = [5, 8, 8], strides = [1, 1, 1]} : vector<9x8x8xf32> to vector<5x8x8xf32>
    %982 = vector.shape_cast %130 : vector<8xf32> to vector<1x1x8xf32>
    %983 = vector.broadcast %982 : vector<1x1x8xf32> to vector<5x8x8xf32>
    %984 = arith.mulf %981, %983 : vector<5x8x8xf32>
    %985 = arith.addf %980, %984 : vector<5x8x8xf32>
    %986 = vector.extract_strided_slice %973 {offsets = [1, 0, 0], sizes = [5, 8, 8], strides = [1, 1, 1]} : vector<9x8x8xf32> to vector<5x8x8xf32>
    %987 = vector.shape_cast %144 : vector<8xf32> to vector<1x1x8xf32>
    %988 = vector.broadcast %987 : vector<1x1x8xf32> to vector<5x8x8xf32>
    %989 = arith.mulf %986, %988 : vector<5x8x8xf32>
    %990 = arith.addf %985, %989 : vector<5x8x8xf32>
    %991 = vector.extract_strided_slice %975 {offsets = [2, 0, 0], sizes = [5, 8, 8], strides = [1, 1, 1]} : vector<9x8x8xf32> to vector<5x8x8xf32>
    %992 = vector.shape_cast %158 : vector<8xf32> to vector<1x1x8xf32>
    %993 = vector.broadcast %992 : vector<1x1x8xf32> to vector<5x8x8xf32>
    %994 = arith.mulf %991, %993 : vector<5x8x8xf32>
    %995 = arith.addf %990, %994 : vector<5x8x8xf32>
    %996 = vector.extract_strided_slice %973 {offsets = [2, 0, 0], sizes = [5, 8, 8], strides = [1, 1, 1]} : vector<9x8x8xf32> to vector<5x8x8xf32>
    %997 = vector.shape_cast %172 : vector<8xf32> to vector<1x1x8xf32>
    %998 = vector.broadcast %997 : vector<1x1x8xf32> to vector<5x8x8xf32>
    %999 = arith.mulf %996, %998 : vector<5x8x8xf32>
    %1000 = arith.addf %995, %999 : vector<5x8x8xf32>
    %1001 = vector.extract_strided_slice %975 {offsets = [3, 0, 0], sizes = [5, 8, 8], strides = [1, 1, 1]} : vector<9x8x8xf32> to vector<5x8x8xf32>
    %1002 = vector.shape_cast %186 : vector<8xf32> to vector<1x1x8xf32>
    %1003 = vector.broadcast %1002 : vector<1x1x8xf32> to vector<5x8x8xf32>
    %1004 = arith.mulf %1001, %1003 : vector<5x8x8xf32>
    %1005 = arith.addf %1000, %1004 : vector<5x8x8xf32>
    %1006 = vector.extract_strided_slice %973 {offsets = [3, 0, 0], sizes = [5, 8, 8], strides = [1, 1, 1]} : vector<9x8x8xf32> to vector<5x8x8xf32>
    %1007 = vector.shape_cast %200 : vector<8xf32> to vector<1x1x8xf32>
    %1008 = vector.broadcast %1007 : vector<1x1x8xf32> to vector<5x8x8xf32>
    %1009 = arith.mulf %1006, %1008 : vector<5x8x8xf32>
    %1010 = arith.addf %1005, %1009 : vector<5x8x8xf32>
    %1011 = vector.extract_strided_slice %975 {offsets = [1, 0, 0], sizes = [5, 8, 8], strides = [1, 1, 1]} : vector<9x8x8xf32> to vector<5x8x8xf32>
    %1012 = vector.shape_cast %116 : vector<8xf32> to vector<1x1x8xf32>
    %1013 = vector.broadcast %1012 : vector<1x1x8xf32> to vector<5x8x8xf32>
    %1014 = arith.mulf %1011, %1013 : vector<5x8x8xf32>
    %1015 = arith.addf %971, %1014 : vector<5x8x8xf32>
    %1016 = vector.extract_strided_slice %973 {offsets = [1, 0, 0], sizes = [5, 8, 8], strides = [1, 1, 1]} : vector<9x8x8xf32> to vector<5x8x8xf32>
    %1017 = vector.shape_cast %130 : vector<8xf32> to vector<1x1x8xf32>
    %1018 = vector.broadcast %1017 : vector<1x1x8xf32> to vector<5x8x8xf32>
    %1019 = arith.mulf %1016, %1018 : vector<5x8x8xf32>
    %1020 = arith.addf %1015, %1019 : vector<5x8x8xf32>
    %1021 = vector.extract_strided_slice %975 {offsets = [2, 0, 0], sizes = [5, 8, 8], strides = [1, 1, 1]} : vector<9x8x8xf32> to vector<5x8x8xf32>
    %1022 = vector.shape_cast %144 : vector<8xf32> to vector<1x1x8xf32>
    %1023 = vector.broadcast %1022 : vector<1x1x8xf32> to vector<5x8x8xf32>
    %1024 = arith.mulf %1021, %1023 : vector<5x8x8xf32>
    %1025 = arith.addf %1020, %1024 : vector<5x8x8xf32>
    %1026 = vector.extract_strided_slice %973 {offsets = [2, 0, 0], sizes = [5, 8, 8], strides = [1, 1, 1]} : vector<9x8x8xf32> to vector<5x8x8xf32>
    %1027 = vector.shape_cast %158 : vector<8xf32> to vector<1x1x8xf32>
    %1028 = vector.broadcast %1027 : vector<1x1x8xf32> to vector<5x8x8xf32>
    %1029 = arith.mulf %1026, %1028 : vector<5x8x8xf32>
    %1030 = arith.addf %1025, %1029 : vector<5x8x8xf32>
    %1031 = vector.extract_strided_slice %975 {offsets = [3, 0, 0], sizes = [5, 8, 8], strides = [1, 1, 1]} : vector<9x8x8xf32> to vector<5x8x8xf32>
    %1032 = vector.shape_cast %172 : vector<8xf32> to vector<1x1x8xf32>
    %1033 = vector.broadcast %1032 : vector<1x1x8xf32> to vector<5x8x8xf32>
    %1034 = arith.mulf %1031, %1033 : vector<5x8x8xf32>
    %1035 = arith.addf %1030, %1034 : vector<5x8x8xf32>
    %1036 = vector.extract_strided_slice %973 {offsets = [3, 0, 0], sizes = [5, 8, 8], strides = [1, 1, 1]} : vector<9x8x8xf32> to vector<5x8x8xf32>
    %1037 = vector.shape_cast %186 : vector<8xf32> to vector<1x1x8xf32>
    %1038 = vector.broadcast %1037 : vector<1x1x8xf32> to vector<5x8x8xf32>
    %1039 = arith.mulf %1036, %1038 : vector<5x8x8xf32>
    %1040 = arith.addf %1035, %1039 : vector<5x8x8xf32>
    %1041 = vector.extract_strided_slice %975 {offsets = [4, 0, 0], sizes = [5, 8, 8], strides = [1, 1, 1]} : vector<9x8x8xf32> to vector<5x8x8xf32>
    %1042 = vector.shape_cast %200 : vector<8xf32> to vector<1x1x8xf32>
    %1043 = vector.broadcast %1042 : vector<1x1x8xf32> to vector<5x8x8xf32>
    %1044 = arith.mulf %1041, %1043 : vector<5x8x8xf32>
    %1045 = arith.addf %1040, %1044 : vector<5x8x8xf32>
    %c1_198 = arith.constant 1 : index
    %c0_199 = arith.constant 0 : index
    %c2_200 = arith.constant 2 : index
    %c0_201 = arith.constant 0 : index
    %1046 = vector.load %arg11[%c1_198, %c0_199, %c2_200, %c0_201] : memref<4x9x11x8xf32, #tpu.memory_space<vmem>>, vector<1x9x8x8xf32>
    %1047 = vector.shape_cast %1046 : vector<1x9x8x8xf32> to vector<9x8x8xf32>
    %c3_202 = arith.constant 3 : index
    %c0_203 = arith.constant 0 : index
    %c2_204 = arith.constant 2 : index
    %c0_205 = arith.constant 0 : index
    %1048 = vector.load %arg11[%c3_202, %c0_203, %c2_204, %c0_205] : memref<4x9x11x8xf32, #tpu.memory_space<vmem>>, vector<1x9x8x8xf32>
    %1049 = vector.shape_cast %1048 : vector<1x9x8x8xf32> to vector<9x8x8xf32>
    %1050 = vector.extract_strided_slice %1047 {offsets = [0, 0, 0], sizes = [5, 8, 8], strides = [1, 1, 1]} : vector<9x8x8xf32> to vector<5x8x8xf32>
    %1051 = vector.shape_cast %118 : vector<8xf32> to vector<1x1x8xf32>
    %1052 = vector.broadcast %1051 : vector<1x1x8xf32> to vector<5x8x8xf32>
    %1053 = arith.mulf %1050, %1052 : vector<5x8x8xf32>
    %1054 = arith.addf %1010, %1053 : vector<5x8x8xf32>
    %1055 = vector.extract_strided_slice %1049 {offsets = [1, 0, 0], sizes = [5, 8, 8], strides = [1, 1, 1]} : vector<9x8x8xf32> to vector<5x8x8xf32>
    %1056 = vector.shape_cast %132 : vector<8xf32> to vector<1x1x8xf32>
    %1057 = vector.broadcast %1056 : vector<1x1x8xf32> to vector<5x8x8xf32>
    %1058 = arith.mulf %1055, %1057 : vector<5x8x8xf32>
    %1059 = arith.addf %1054, %1058 : vector<5x8x8xf32>
    %1060 = vector.extract_strided_slice %1047 {offsets = [1, 0, 0], sizes = [5, 8, 8], strides = [1, 1, 1]} : vector<9x8x8xf32> to vector<5x8x8xf32>
    %1061 = vector.shape_cast %146 : vector<8xf32> to vector<1x1x8xf32>
    %1062 = vector.broadcast %1061 : vector<1x1x8xf32> to vector<5x8x8xf32>
    %1063 = arith.mulf %1060, %1062 : vector<5x8x8xf32>
    %1064 = arith.addf %1059, %1063 : vector<5x8x8xf32>
    %1065 = vector.extract_strided_slice %1049 {offsets = [2, 0, 0], sizes = [5, 8, 8], strides = [1, 1, 1]} : vector<9x8x8xf32> to vector<5x8x8xf32>
    %1066 = vector.shape_cast %160 : vector<8xf32> to vector<1x1x8xf32>
    %1067 = vector.broadcast %1066 : vector<1x1x8xf32> to vector<5x8x8xf32>
    %1068 = arith.mulf %1065, %1067 : vector<5x8x8xf32>
    %1069 = arith.addf %1064, %1068 : vector<5x8x8xf32>
    %1070 = vector.extract_strided_slice %1047 {offsets = [2, 0, 0], sizes = [5, 8, 8], strides = [1, 1, 1]} : vector<9x8x8xf32> to vector<5x8x8xf32>
    %1071 = vector.shape_cast %174 : vector<8xf32> to vector<1x1x8xf32>
    %1072 = vector.broadcast %1071 : vector<1x1x8xf32> to vector<5x8x8xf32>
    %1073 = arith.mulf %1070, %1072 : vector<5x8x8xf32>
    %1074 = arith.addf %1069, %1073 : vector<5x8x8xf32>
    %1075 = vector.extract_strided_slice %1049 {offsets = [3, 0, 0], sizes = [5, 8, 8], strides = [1, 1, 1]} : vector<9x8x8xf32> to vector<5x8x8xf32>
    %1076 = vector.shape_cast %188 : vector<8xf32> to vector<1x1x8xf32>
    %1077 = vector.broadcast %1076 : vector<1x1x8xf32> to vector<5x8x8xf32>
    %1078 = arith.mulf %1075, %1077 : vector<5x8x8xf32>
    %1079 = arith.addf %1074, %1078 : vector<5x8x8xf32>
    %1080 = vector.extract_strided_slice %1047 {offsets = [3, 0, 0], sizes = [5, 8, 8], strides = [1, 1, 1]} : vector<9x8x8xf32> to vector<5x8x8xf32>
    %1081 = vector.shape_cast %202 : vector<8xf32> to vector<1x1x8xf32>
    %1082 = vector.broadcast %1081 : vector<1x1x8xf32> to vector<5x8x8xf32>
    %1083 = arith.mulf %1080, %1082 : vector<5x8x8xf32>
    %1084 = arith.addf %1079, %1083 : vector<5x8x8xf32>
    %1085 = vector.extract_strided_slice %1049 {offsets = [1, 0, 0], sizes = [5, 8, 8], strides = [1, 1, 1]} : vector<9x8x8xf32> to vector<5x8x8xf32>
    %1086 = vector.shape_cast %118 : vector<8xf32> to vector<1x1x8xf32>
    %1087 = vector.broadcast %1086 : vector<1x1x8xf32> to vector<5x8x8xf32>
    %1088 = arith.mulf %1085, %1087 : vector<5x8x8xf32>
    %1089 = arith.addf %1045, %1088 : vector<5x8x8xf32>
    %1090 = vector.extract_strided_slice %1047 {offsets = [1, 0, 0], sizes = [5, 8, 8], strides = [1, 1, 1]} : vector<9x8x8xf32> to vector<5x8x8xf32>
    %1091 = vector.shape_cast %132 : vector<8xf32> to vector<1x1x8xf32>
    %1092 = vector.broadcast %1091 : vector<1x1x8xf32> to vector<5x8x8xf32>
    %1093 = arith.mulf %1090, %1092 : vector<5x8x8xf32>
    %1094 = arith.addf %1089, %1093 : vector<5x8x8xf32>
    %1095 = vector.extract_strided_slice %1049 {offsets = [2, 0, 0], sizes = [5, 8, 8], strides = [1, 1, 1]} : vector<9x8x8xf32> to vector<5x8x8xf32>
    %1096 = vector.shape_cast %146 : vector<8xf32> to vector<1x1x8xf32>
    %1097 = vector.broadcast %1096 : vector<1x1x8xf32> to vector<5x8x8xf32>
    %1098 = arith.mulf %1095, %1097 : vector<5x8x8xf32>
    %1099 = arith.addf %1094, %1098 : vector<5x8x8xf32>
    %1100 = vector.extract_strided_slice %1047 {offsets = [2, 0, 0], sizes = [5, 8, 8], strides = [1, 1, 1]} : vector<9x8x8xf32> to vector<5x8x8xf32>
    %1101 = vector.shape_cast %160 : vector<8xf32> to vector<1x1x8xf32>
    %1102 = vector.broadcast %1101 : vector<1x1x8xf32> to vector<5x8x8xf32>
    %1103 = arith.mulf %1100, %1102 : vector<5x8x8xf32>
    %1104 = arith.addf %1099, %1103 : vector<5x8x8xf32>
    %1105 = vector.extract_strided_slice %1049 {offsets = [3, 0, 0], sizes = [5, 8, 8], strides = [1, 1, 1]} : vector<9x8x8xf32> to vector<5x8x8xf32>
    %1106 = vector.shape_cast %174 : vector<8xf32> to vector<1x1x8xf32>
    %1107 = vector.broadcast %1106 : vector<1x1x8xf32> to vector<5x8x8xf32>
    %1108 = arith.mulf %1105, %1107 : vector<5x8x8xf32>
    %1109 = arith.addf %1104, %1108 : vector<5x8x8xf32>
    %1110 = vector.extract_strided_slice %1047 {offsets = [3, 0, 0], sizes = [5, 8, 8], strides = [1, 1, 1]} : vector<9x8x8xf32> to vector<5x8x8xf32>
    %1111 = vector.shape_cast %188 : vector<8xf32> to vector<1x1x8xf32>
    %1112 = vector.broadcast %1111 : vector<1x1x8xf32> to vector<5x8x8xf32>
    %1113 = arith.mulf %1110, %1112 : vector<5x8x8xf32>
    %1114 = arith.addf %1109, %1113 : vector<5x8x8xf32>
    %1115 = vector.extract_strided_slice %1049 {offsets = [4, 0, 0], sizes = [5, 8, 8], strides = [1, 1, 1]} : vector<9x8x8xf32> to vector<5x8x8xf32>
    %1116 = vector.shape_cast %202 : vector<8xf32> to vector<1x1x8xf32>
    %1117 = vector.broadcast %1116 : vector<1x1x8xf32> to vector<5x8x8xf32>
    %1118 = arith.mulf %1115, %1117 : vector<5x8x8xf32>
    %1119 = arith.addf %1114, %1118 : vector<5x8x8xf32>
    %c0_206 = arith.constant 0 : index
    %c0_207 = arith.constant 0 : index
    %c3_208 = arith.constant 3 : index
    %c0_209 = arith.constant 0 : index
    %1120 = vector.load %arg11[%c0_206, %c0_207, %c3_208, %c0_209] : memref<4x9x11x8xf32, #tpu.memory_space<vmem>>, vector<1x9x8x8xf32>
    %1121 = vector.shape_cast %1120 : vector<1x9x8x8xf32> to vector<9x8x8xf32>
    %c2_210 = arith.constant 2 : index
    %c0_211 = arith.constant 0 : index
    %c3_212 = arith.constant 3 : index
    %c0_213 = arith.constant 0 : index
    %1122 = vector.load %arg11[%c2_210, %c0_211, %c3_212, %c0_213] : memref<4x9x11x8xf32, #tpu.memory_space<vmem>>, vector<1x9x8x8xf32>
    %1123 = vector.shape_cast %1122 : vector<1x9x8x8xf32> to vector<9x8x8xf32>
    %1124 = vector.extract_strided_slice %1121 {offsets = [0, 0, 0], sizes = [5, 8, 8], strides = [1, 1, 1]} : vector<9x8x8xf32> to vector<5x8x8xf32>
    %1125 = vector.shape_cast %120 : vector<8xf32> to vector<1x1x8xf32>
    %1126 = vector.broadcast %1125 : vector<1x1x8xf32> to vector<5x8x8xf32>
    %1127 = arith.mulf %1124, %1126 : vector<5x8x8xf32>
    %1128 = arith.addf %1084, %1127 : vector<5x8x8xf32>
    %1129 = vector.extract_strided_slice %1123 {offsets = [1, 0, 0], sizes = [5, 8, 8], strides = [1, 1, 1]} : vector<9x8x8xf32> to vector<5x8x8xf32>
    %1130 = vector.shape_cast %134 : vector<8xf32> to vector<1x1x8xf32>
    %1131 = vector.broadcast %1130 : vector<1x1x8xf32> to vector<5x8x8xf32>
    %1132 = arith.mulf %1129, %1131 : vector<5x8x8xf32>
    %1133 = arith.addf %1128, %1132 : vector<5x8x8xf32>
    %1134 = vector.extract_strided_slice %1121 {offsets = [1, 0, 0], sizes = [5, 8, 8], strides = [1, 1, 1]} : vector<9x8x8xf32> to vector<5x8x8xf32>
    %1135 = vector.shape_cast %148 : vector<8xf32> to vector<1x1x8xf32>
    %1136 = vector.broadcast %1135 : vector<1x1x8xf32> to vector<5x8x8xf32>
    %1137 = arith.mulf %1134, %1136 : vector<5x8x8xf32>
    %1138 = arith.addf %1133, %1137 : vector<5x8x8xf32>
    %1139 = vector.extract_strided_slice %1123 {offsets = [2, 0, 0], sizes = [5, 8, 8], strides = [1, 1, 1]} : vector<9x8x8xf32> to vector<5x8x8xf32>
    %1140 = vector.shape_cast %162 : vector<8xf32> to vector<1x1x8xf32>
    %1141 = vector.broadcast %1140 : vector<1x1x8xf32> to vector<5x8x8xf32>
    %1142 = arith.mulf %1139, %1141 : vector<5x8x8xf32>
    %1143 = arith.addf %1138, %1142 : vector<5x8x8xf32>
    %1144 = vector.extract_strided_slice %1121 {offsets = [2, 0, 0], sizes = [5, 8, 8], strides = [1, 1, 1]} : vector<9x8x8xf32> to vector<5x8x8xf32>
    %1145 = vector.shape_cast %176 : vector<8xf32> to vector<1x1x8xf32>
    %1146 = vector.broadcast %1145 : vector<1x1x8xf32> to vector<5x8x8xf32>
    %1147 = arith.mulf %1144, %1146 : vector<5x8x8xf32>
    %1148 = arith.addf %1143, %1147 : vector<5x8x8xf32>
    %1149 = vector.extract_strided_slice %1123 {offsets = [3, 0, 0], sizes = [5, 8, 8], strides = [1, 1, 1]} : vector<9x8x8xf32> to vector<5x8x8xf32>
    %1150 = vector.shape_cast %190 : vector<8xf32> to vector<1x1x8xf32>
    %1151 = vector.broadcast %1150 : vector<1x1x8xf32> to vector<5x8x8xf32>
    %1152 = arith.mulf %1149, %1151 : vector<5x8x8xf32>
    %1153 = arith.addf %1148, %1152 : vector<5x8x8xf32>
    %1154 = vector.extract_strided_slice %1121 {offsets = [3, 0, 0], sizes = [5, 8, 8], strides = [1, 1, 1]} : vector<9x8x8xf32> to vector<5x8x8xf32>
    %1155 = vector.shape_cast %204 : vector<8xf32> to vector<1x1x8xf32>
    %1156 = vector.broadcast %1155 : vector<1x1x8xf32> to vector<5x8x8xf32>
    %1157 = arith.mulf %1154, %1156 : vector<5x8x8xf32>
    %1158 = arith.addf %1153, %1157 : vector<5x8x8xf32>
    %1159 = vector.extract_strided_slice %1123 {offsets = [1, 0, 0], sizes = [5, 8, 8], strides = [1, 1, 1]} : vector<9x8x8xf32> to vector<5x8x8xf32>
    %1160 = vector.shape_cast %120 : vector<8xf32> to vector<1x1x8xf32>
    %1161 = vector.broadcast %1160 : vector<1x1x8xf32> to vector<5x8x8xf32>
    %1162 = arith.mulf %1159, %1161 : vector<5x8x8xf32>
    %1163 = arith.addf %1119, %1162 : vector<5x8x8xf32>
    %1164 = vector.extract_strided_slice %1121 {offsets = [1, 0, 0], sizes = [5, 8, 8], strides = [1, 1, 1]} : vector<9x8x8xf32> to vector<5x8x8xf32>
    %1165 = vector.shape_cast %134 : vector<8xf32> to vector<1x1x8xf32>
    %1166 = vector.broadcast %1165 : vector<1x1x8xf32> to vector<5x8x8xf32>
    %1167 = arith.mulf %1164, %1166 : vector<5x8x8xf32>
    %1168 = arith.addf %1163, %1167 : vector<5x8x8xf32>
    %1169 = vector.extract_strided_slice %1123 {offsets = [2, 0, 0], sizes = [5, 8, 8], strides = [1, 1, 1]} : vector<9x8x8xf32> to vector<5x8x8xf32>
    %1170 = vector.shape_cast %148 : vector<8xf32> to vector<1x1x8xf32>
    %1171 = vector.broadcast %1170 : vector<1x1x8xf32> to vector<5x8x8xf32>
    %1172 = arith.mulf %1169, %1171 : vector<5x8x8xf32>
    %1173 = arith.addf %1168, %1172 : vector<5x8x8xf32>
    %1174 = vector.extract_strided_slice %1121 {offsets = [2, 0, 0], sizes = [5, 8, 8], strides = [1, 1, 1]} : vector<9x8x8xf32> to vector<5x8x8xf32>
    %1175 = vector.shape_cast %162 : vector<8xf32> to vector<1x1x8xf32>
    %1176 = vector.broadcast %1175 : vector<1x1x8xf32> to vector<5x8x8xf32>
    %1177 = arith.mulf %1174, %1176 : vector<5x8x8xf32>
    %1178 = arith.addf %1173, %1177 : vector<5x8x8xf32>
    %1179 = vector.extract_strided_slice %1123 {offsets = [3, 0, 0], sizes = [5, 8, 8], strides = [1, 1, 1]} : vector<9x8x8xf32> to vector<5x8x8xf32>
    %1180 = vector.shape_cast %176 : vector<8xf32> to vector<1x1x8xf32>
    %1181 = vector.broadcast %1180 : vector<1x1x8xf32> to vector<5x8x8xf32>
    %1182 = arith.mulf %1179, %1181 : vector<5x8x8xf32>
    %1183 = arith.addf %1178, %1182 : vector<5x8x8xf32>
    %1184 = vector.extract_strided_slice %1121 {offsets = [3, 0, 0], sizes = [5, 8, 8], strides = [1, 1, 1]} : vector<9x8x8xf32> to vector<5x8x8xf32>
    %1185 = vector.shape_cast %190 : vector<8xf32> to vector<1x1x8xf32>
    %1186 = vector.broadcast %1185 : vector<1x1x8xf32> to vector<5x8x8xf32>
    %1187 = arith.mulf %1184, %1186 : vector<5x8x8xf32>
    %1188 = arith.addf %1183, %1187 : vector<5x8x8xf32>
    %1189 = vector.extract_strided_slice %1123 {offsets = [4, 0, 0], sizes = [5, 8, 8], strides = [1, 1, 1]} : vector<9x8x8xf32> to vector<5x8x8xf32>
    %1190 = vector.shape_cast %204 : vector<8xf32> to vector<1x1x8xf32>
    %1191 = vector.broadcast %1190 : vector<1x1x8xf32> to vector<5x8x8xf32>
    %1192 = arith.mulf %1189, %1191 : vector<5x8x8xf32>
    %1193 = arith.addf %1188, %1192 : vector<5x8x8xf32>
    %c1_214 = arith.constant 1 : index
    %c0_215 = arith.constant 0 : index
    %c3_216 = arith.constant 3 : index
    %c0_217 = arith.constant 0 : index
    %1194 = vector.load %arg11[%c1_214, %c0_215, %c3_216, %c0_217] : memref<4x9x11x8xf32, #tpu.memory_space<vmem>>, vector<1x9x8x8xf32>
    %1195 = vector.shape_cast %1194 : vector<1x9x8x8xf32> to vector<9x8x8xf32>
    %c3_218 = arith.constant 3 : index
    %c0_219 = arith.constant 0 : index
    %c3_220 = arith.constant 3 : index
    %c0_221 = arith.constant 0 : index
    %1196 = vector.load %arg11[%c3_218, %c0_219, %c3_220, %c0_221] : memref<4x9x11x8xf32, #tpu.memory_space<vmem>>, vector<1x9x8x8xf32>
    %1197 = vector.shape_cast %1196 : vector<1x9x8x8xf32> to vector<9x8x8xf32>
    %1198 = vector.extract_strided_slice %1195 {offsets = [0, 0, 0], sizes = [5, 8, 8], strides = [1, 1, 1]} : vector<9x8x8xf32> to vector<5x8x8xf32>
    %1199 = vector.shape_cast %122 : vector<8xf32> to vector<1x1x8xf32>
    %1200 = vector.broadcast %1199 : vector<1x1x8xf32> to vector<5x8x8xf32>
    %1201 = arith.mulf %1198, %1200 : vector<5x8x8xf32>
    %1202 = arith.addf %1158, %1201 : vector<5x8x8xf32>
    %1203 = vector.extract_strided_slice %1197 {offsets = [1, 0, 0], sizes = [5, 8, 8], strides = [1, 1, 1]} : vector<9x8x8xf32> to vector<5x8x8xf32>
    %1204 = vector.shape_cast %136 : vector<8xf32> to vector<1x1x8xf32>
    %1205 = vector.broadcast %1204 : vector<1x1x8xf32> to vector<5x8x8xf32>
    %1206 = arith.mulf %1203, %1205 : vector<5x8x8xf32>
    %1207 = arith.addf %1202, %1206 : vector<5x8x8xf32>
    %1208 = vector.extract_strided_slice %1195 {offsets = [1, 0, 0], sizes = [5, 8, 8], strides = [1, 1, 1]} : vector<9x8x8xf32> to vector<5x8x8xf32>
    %1209 = vector.shape_cast %150 : vector<8xf32> to vector<1x1x8xf32>
    %1210 = vector.broadcast %1209 : vector<1x1x8xf32> to vector<5x8x8xf32>
    %1211 = arith.mulf %1208, %1210 : vector<5x8x8xf32>
    %1212 = arith.addf %1207, %1211 : vector<5x8x8xf32>
    %1213 = vector.extract_strided_slice %1197 {offsets = [2, 0, 0], sizes = [5, 8, 8], strides = [1, 1, 1]} : vector<9x8x8xf32> to vector<5x8x8xf32>
    %1214 = vector.shape_cast %164 : vector<8xf32> to vector<1x1x8xf32>
    %1215 = vector.broadcast %1214 : vector<1x1x8xf32> to vector<5x8x8xf32>
    %1216 = arith.mulf %1213, %1215 : vector<5x8x8xf32>
    %1217 = arith.addf %1212, %1216 : vector<5x8x8xf32>
    %1218 = vector.extract_strided_slice %1195 {offsets = [2, 0, 0], sizes = [5, 8, 8], strides = [1, 1, 1]} : vector<9x8x8xf32> to vector<5x8x8xf32>
    %1219 = vector.shape_cast %178 : vector<8xf32> to vector<1x1x8xf32>
    %1220 = vector.broadcast %1219 : vector<1x1x8xf32> to vector<5x8x8xf32>
    %1221 = arith.mulf %1218, %1220 : vector<5x8x8xf32>
    %1222 = arith.addf %1217, %1221 : vector<5x8x8xf32>
    %1223 = vector.extract_strided_slice %1197 {offsets = [3, 0, 0], sizes = [5, 8, 8], strides = [1, 1, 1]} : vector<9x8x8xf32> to vector<5x8x8xf32>
    %1224 = vector.shape_cast %192 : vector<8xf32> to vector<1x1x8xf32>
    %1225 = vector.broadcast %1224 : vector<1x1x8xf32> to vector<5x8x8xf32>
    %1226 = arith.mulf %1223, %1225 : vector<5x8x8xf32>
    %1227 = arith.addf %1222, %1226 : vector<5x8x8xf32>
    %1228 = vector.extract_strided_slice %1195 {offsets = [3, 0, 0], sizes = [5, 8, 8], strides = [1, 1, 1]} : vector<9x8x8xf32> to vector<5x8x8xf32>
    %1229 = vector.shape_cast %206 : vector<8xf32> to vector<1x1x8xf32>
    %1230 = vector.broadcast %1229 : vector<1x1x8xf32> to vector<5x8x8xf32>
    %1231 = arith.mulf %1228, %1230 : vector<5x8x8xf32>
    %1232 = arith.addf %1227, %1231 : vector<5x8x8xf32>
    %1233 = vector.extract_strided_slice %1197 {offsets = [1, 0, 0], sizes = [5, 8, 8], strides = [1, 1, 1]} : vector<9x8x8xf32> to vector<5x8x8xf32>
    %1234 = vector.shape_cast %122 : vector<8xf32> to vector<1x1x8xf32>
    %1235 = vector.broadcast %1234 : vector<1x1x8xf32> to vector<5x8x8xf32>
    %1236 = arith.mulf %1233, %1235 : vector<5x8x8xf32>
    %1237 = arith.addf %1193, %1236 : vector<5x8x8xf32>
    %1238 = vector.extract_strided_slice %1195 {offsets = [1, 0, 0], sizes = [5, 8, 8], strides = [1, 1, 1]} : vector<9x8x8xf32> to vector<5x8x8xf32>
    %1239 = vector.shape_cast %136 : vector<8xf32> to vector<1x1x8xf32>
    %1240 = vector.broadcast %1239 : vector<1x1x8xf32> to vector<5x8x8xf32>
    %1241 = arith.mulf %1238, %1240 : vector<5x8x8xf32>
    %1242 = arith.addf %1237, %1241 : vector<5x8x8xf32>
    %1243 = vector.extract_strided_slice %1197 {offsets = [2, 0, 0], sizes = [5, 8, 8], strides = [1, 1, 1]} : vector<9x8x8xf32> to vector<5x8x8xf32>
    %1244 = vector.shape_cast %150 : vector<8xf32> to vector<1x1x8xf32>
    %1245 = vector.broadcast %1244 : vector<1x1x8xf32> to vector<5x8x8xf32>
    %1246 = arith.mulf %1243, %1245 : vector<5x8x8xf32>
    %1247 = arith.addf %1242, %1246 : vector<5x8x8xf32>
    %1248 = vector.extract_strided_slice %1195 {offsets = [2, 0, 0], sizes = [5, 8, 8], strides = [1, 1, 1]} : vector<9x8x8xf32> to vector<5x8x8xf32>
    %1249 = vector.shape_cast %164 : vector<8xf32> to vector<1x1x8xf32>
    %1250 = vector.broadcast %1249 : vector<1x1x8xf32> to vector<5x8x8xf32>
    %1251 = arith.mulf %1248, %1250 : vector<5x8x8xf32>
    %1252 = arith.addf %1247, %1251 : vector<5x8x8xf32>
    %1253 = vector.extract_strided_slice %1197 {offsets = [3, 0, 0], sizes = [5, 8, 8], strides = [1, 1, 1]} : vector<9x8x8xf32> to vector<5x8x8xf32>
    %1254 = vector.shape_cast %178 : vector<8xf32> to vector<1x1x8xf32>
    %1255 = vector.broadcast %1254 : vector<1x1x8xf32> to vector<5x8x8xf32>
    %1256 = arith.mulf %1253, %1255 : vector<5x8x8xf32>
    %1257 = arith.addf %1252, %1256 : vector<5x8x8xf32>
    %1258 = vector.extract_strided_slice %1195 {offsets = [3, 0, 0], sizes = [5, 8, 8], strides = [1, 1, 1]} : vector<9x8x8xf32> to vector<5x8x8xf32>
    %1259 = vector.shape_cast %192 : vector<8xf32> to vector<1x1x8xf32>
    %1260 = vector.broadcast %1259 : vector<1x1x8xf32> to vector<5x8x8xf32>
    %1261 = arith.mulf %1258, %1260 : vector<5x8x8xf32>
    %1262 = arith.addf %1257, %1261 : vector<5x8x8xf32>
    %1263 = vector.extract_strided_slice %1197 {offsets = [4, 0, 0], sizes = [5, 8, 8], strides = [1, 1, 1]} : vector<9x8x8xf32> to vector<5x8x8xf32>
    %1264 = vector.shape_cast %206 : vector<8xf32> to vector<1x1x8xf32>
    %1265 = vector.broadcast %1264 : vector<1x1x8xf32> to vector<5x8x8xf32>
    %1266 = arith.mulf %1263, %1265 : vector<5x8x8xf32>
    %1267 = arith.addf %1262, %1266 : vector<5x8x8xf32>
    %1268 = vector.extract_strided_slice %1232 {offsets = [0, 0, 0], sizes = [1, 8, 8], strides = [1, 1, 1]} : vector<5x8x8xf32> to vector<1x8x8xf32>
    %cst_222 = arith.constant 0xFF800000 : f32
    %1269 = vector.broadcast %cst_222 : f32 to vector<1x8x8xf32>
    %1270 = arith.select %0, %1268, %1269 : vector<1x8x8xf32>
    %c1_223 = arith.constant 1 : index
    %c0_224 = arith.constant 0 : index
    %c1_225 = arith.constant 1 : index
    %c0_226 = arith.constant 0 : index
    %1271 = vector.load %arg12[%c1_223, %c0_224, %c1_225, %c0_226] : memref<4x5x9x8xf32, #tpu.memory_space<vmem>>, vector<1x1x8x8xf32>
    %1272 = vector.shape_cast %1271 : vector<1x1x8x8xf32> to vector<1x8x8xf32>
    %1273 = vector.shape_cast %1270 : vector<1x8x8xf32> to vector<1x1x8x8xf32>
    tpu.vector_store %arg12[%c1_223, %c0_224, %c1_225, %c0_226], %1273 {strides = array<i32>} : memref<4x5x9x8xf32, #tpu.memory_space<vmem>>, vector<1x1x8x8xf32>,
    %1274 = vector.extract_strided_slice %1232 {offsets = [1, 0, 0], sizes = [4, 8, 8], strides = [1, 1, 1]} : vector<5x8x8xf32> to vector<4x8x8xf32>
    %c1_227 = arith.constant 1 : index
    %c1_228 = arith.constant 1 : index
    %c1_229 = arith.constant 1 : index
    %c0_230 = arith.constant 0 : index
    %1275 = vector.load %arg12[%c1_227, %c1_228, %c1_229, %c0_230] : memref<4x5x9x8xf32, #tpu.memory_space<vmem>>, vector<1x4x8x8xf32>
    %1276 = vector.shape_cast %1275 : vector<1x4x8x8xf32> to vector<4x8x8xf32>
    %1277 = vector.shape_cast %1274 : vector<4x8x8xf32> to vector<1x4x8x8xf32>
    tpu.vector_store %arg12[%c1_227, %c1_228, %c1_229, %c0_230], %1277 {strides = array<i32>} : memref<4x5x9x8xf32, #tpu.memory_space<vmem>>, vector<1x4x8x8xf32>,
    %1278 = vector.extract_strided_slice %1232 {offsets = [1, 0, 0], sizes = [4, 8, 8], strides = [1, 1, 1]} : vector<5x8x8xf32> to vector<4x8x8xf32>
    %1279 = vector.shape_cast %1278 : vector<4x8x8xf32> to vector<32x8xf32>
    %1280 = vector.extract_strided_slice %6 {offsets = [16, 0], sizes = [8, 8], strides = [1, 1]} : vector<40x8xf32> to vector<8x8xf32>
    %cst_231 = arith.constant dense<0.000000e+00> : vector<32x8xf32>
    %1281 = tpu.matmul %1279, %1280, %cst_231 {dimension_numbers = #tpu.dot_dimension_numbers<[1], [0], [0], [1], [0, 0, 1, 1], [], []>} : vector<32x8xf32>, vector<8x8xf32>, vector<32x8xf32> -> vector<32x8xf32>
    %1282 = arith.addf %751, %1281 : vector<32x8xf32>
    %1283 = vector.extract_strided_slice %1267 {offsets = [0, 0, 0], sizes = [1, 8, 8], strides = [1, 1, 1]} : vector<5x8x8xf32> to vector<1x8x8xf32>
    %cst_232 = arith.constant 0xFF800000 : f32
    %1284 = vector.broadcast %cst_232 : f32 to vector<1x8x8xf32>
    %1285 = arith.select %0, %1283, %1284 : vector<1x8x8xf32>
    %c3_233 = arith.constant 3 : index
    %c0_234 = arith.constant 0 : index
    %c1_235 = arith.constant 1 : index
    %c0_236 = arith.constant 0 : index
    %1286 = vector.load %arg12[%c3_233, %c0_234, %c1_235, %c0_236] : memref<4x5x9x8xf32, #tpu.memory_space<vmem>>, vector<1x1x8x8xf32>
    %1287 = vector.shape_cast %1286 : vector<1x1x8x8xf32> to vector<1x8x8xf32>
    %1288 = vector.shape_cast %1285 : vector<1x8x8xf32> to vector<1x1x8x8xf32>
    tpu.vector_store %arg12[%c3_233, %c0_234, %c1_235, %c0_236], %1288 {strides = array<i32>} : memref<4x5x9x8xf32, #tpu.memory_space<vmem>>, vector<1x1x8x8xf32>,
    %1289 = vector.extract_strided_slice %1267 {offsets = [1, 0, 0], sizes = [4, 8, 8], strides = [1, 1, 1]} : vector<5x8x8xf32> to vector<4x8x8xf32>
    %c3_237 = arith.constant 3 : index
    %c1_238 = arith.constant 1 : index
    %c1_239 = arith.constant 1 : index
    %c0_240 = arith.constant 0 : index
    %1290 = vector.load %arg12[%c3_237, %c1_238, %c1_239, %c0_240] : memref<4x5x9x8xf32, #tpu.memory_space<vmem>>, vector<1x4x8x8xf32>
    %1291 = vector.shape_cast %1290 : vector<1x4x8x8xf32> to vector<4x8x8xf32>
    %1292 = vector.shape_cast %1289 : vector<4x8x8xf32> to vector<1x4x8x8xf32>
    tpu.vector_store %arg12[%c3_237, %c1_238, %c1_239, %c0_240], %1292 {strides = array<i32>} : memref<4x5x9x8xf32, #tpu.memory_space<vmem>>, vector<1x4x8x8xf32>,
    %1293 = vector.extract_strided_slice %1267 {offsets = [1, 0, 0], sizes = [4, 8, 8], strides = [1, 1, 1]} : vector<5x8x8xf32> to vector<4x8x8xf32>
    %1294 = vector.shape_cast %1293 : vector<4x8x8xf32> to vector<32x8xf32>
    %1295 = vector.extract_strided_slice %6 {offsets = [24, 0], sizes = [8, 8], strides = [1, 1]} : vector<40x8xf32> to vector<8x8xf32>
    %cst_241 = arith.constant dense<0.000000e+00> : vector<32x8xf32>
    %1296 = tpu.matmul %1294, %1295, %cst_241 {dimension_numbers = #tpu.dot_dimension_numbers<[1], [0], [0], [1], [0, 0, 1, 1], [], []>} : vector<32x8xf32>, vector<8x8xf32>, vector<32x8xf32> -> vector<32x8xf32>
    %1297 = arith.addf %1282, %1296 : vector<32x8xf32>
    %c3_242 = arith.constant 3 : index
    %c0_243 = arith.constant 0 : index
    %c0_244 = arith.constant 0 : index
    %c0_245 = arith.constant 0 : index
    %1298 = vector.load %arg12[%c3_242, %c0_243, %c0_244, %c0_245] : memref<4x5x9x8xf32, #tpu.memory_space<vmem>>, vector<1x4x8x8xf32>
    %1299 = vector.shape_cast %1298 : vector<1x4x8x8xf32> to vector<4x8x8xf32>
    %c2_246 = arith.constant 2 : index
    %c0_247 = arith.constant 0 : index
    %c1_248 = arith.constant 1 : index
    %c0_249 = arith.constant 0 : index
    %1300 = vector.load %arg12[%c2_246, %c0_247, %c1_248, %c0_249] : memref<4x5x9x8xf32, #tpu.memory_space<vmem>>, vector<1x4x8x8xf32>
    %1301 = vector.shape_cast %1300 : vector<1x4x8x8xf32> to vector<4x8x8xf32>
    %1302 = arith.maximumf %1299, %1301 : vector<4x8x8xf32>
    %c3_250 = arith.constant 3 : index
    %c0_251 = arith.constant 0 : index
    %c1_252 = arith.constant 1 : index
    %c0_253 = arith.constant 0 : index
    %1303 = vector.load %arg12[%c3_250, %c0_251, %c1_252, %c0_253] : memref<4x5x9x8xf32, #tpu.memory_space<vmem>>, vector<1x4x8x8xf32>
    %1304 = vector.shape_cast %1303 : vector<1x4x8x8xf32> to vector<4x8x8xf32>
    %1305 = arith.maximumf %1302, %1304 : vector<4x8x8xf32>
    %c1_254 = arith.constant 1 : index
    %c1_255 = arith.constant 1 : index
    %c0_256 = arith.constant 0 : index
    %c0_257 = arith.constant 0 : index
    %1306 = vector.load %arg12[%c1_254, %c1_255, %c0_256, %c0_257] : memref<4x5x9x8xf32, #tpu.memory_space<vmem>>, vector<1x4x8x8xf32>
    %1307 = vector.shape_cast %1306 : vector<1x4x8x8xf32> to vector<4x8x8xf32>
    %1308 = arith.maximumf %1305, %1307 : vector<4x8x8xf32>
    %c0_258 = arith.constant 0 : index
    %c1_259 = arith.constant 1 : index
    %c1_260 = arith.constant 1 : index
    %c0_261 = arith.constant 0 : index
    %1309 = vector.load %arg12[%c0_258, %c1_259, %c1_260, %c0_261] : memref<4x5x9x8xf32, #tpu.memory_space<vmem>>, vector<1x4x8x8xf32>
    %1310 = vector.shape_cast %1309 : vector<1x4x8x8xf32> to vector<4x8x8xf32>
    %1311 = arith.maximumf %1308, %1310 : vector<4x8x8xf32>
    %c1_262 = arith.constant 1 : index
    %c1_263 = arith.constant 1 : index
    %c1_264 = arith.constant 1 : index
    %c0_265 = arith.constant 0 : index
    %1312 = vector.load %arg12[%c1_262, %c1_263, %c1_264, %c0_265] : memref<4x5x9x8xf32, #tpu.memory_space<vmem>>, vector<1x4x8x8xf32>
    %1313 = vector.shape_cast %1312 : vector<1x4x8x8xf32> to vector<4x8x8xf32>
    %1314 = arith.maximumf %1311, %1313 : vector<4x8x8xf32>
    %c3_266 = arith.constant 3 : index
    %c1_267 = arith.constant 1 : index
    %c0_268 = arith.constant 0 : index
    %c0_269 = arith.constant 0 : index
    %1315 = vector.load %arg12[%c3_266, %c1_267, %c0_268, %c0_269] : memref<4x5x9x8xf32, #tpu.memory_space<vmem>>, vector<1x4x8x8xf32>
    %1316 = vector.shape_cast %1315 : vector<1x4x8x8xf32> to vector<4x8x8xf32>
    %1317 = arith.maximumf %1314, %1316 : vector<4x8x8xf32>
    %c2_270 = arith.constant 2 : index
    %c1_271 = arith.constant 1 : index
    %c1_272 = arith.constant 1 : index
    %c0_273 = arith.constant 0 : index
    %1318 = vector.load %arg12[%c2_270, %c1_271, %c1_272, %c0_273] : memref<4x5x9x8xf32, #tpu.memory_space<vmem>>, vector<1x4x8x8xf32>
    %1319 = vector.shape_cast %1318 : vector<1x4x8x8xf32> to vector<4x8x8xf32>
    %1320 = arith.maximumf %1317, %1319 : vector<4x8x8xf32>
    %c3_274 = arith.constant 3 : index
    %c1_275 = arith.constant 1 : index
    %c1_276 = arith.constant 1 : index
    %c0_277 = arith.constant 0 : index
    %1321 = vector.load %arg12[%c3_274, %c1_275, %c1_276, %c0_277] : memref<4x5x9x8xf32, #tpu.memory_space<vmem>>, vector<1x4x8x8xf32>
    %1322 = vector.shape_cast %1321 : vector<1x4x8x8xf32> to vector<4x8x8xf32>
    %1323 = arith.maximumf %1320, %1322 : vector<4x8x8xf32>
    %1324 = vector.shape_cast %1323 : vector<4x8x8xf32> to vector<32x8xf32>
    %1325 = vector.extract_strided_slice %6 {offsets = [32, 0], sizes = [8, 8], strides = [1, 1]} : vector<40x8xf32> to vector<8x8xf32>
    %cst_278 = arith.constant dense<0.000000e+00> : vector<32x8xf32>
    %1326 = tpu.matmul %1324, %1325, %cst_278 {dimension_numbers = #tpu.dot_dimension_numbers<[1], [0], [0], [1], [0, 0, 1, 1], [], []>} : vector<32x8xf32>, vector<8x8xf32>, vector<32x8xf32> -> vector<32x8xf32>
    %1327 = arith.addf %1297, %1326 : vector<32x8xf32>
    %1328 = vector.shape_cast %8 : vector<8xf32> to vector<1x8xf32>
    %1329 = vector.broadcast %1328 : vector<1x8xf32> to vector<32x8xf32>
    %1330 = arith.addf %1327, %1329 : vector<32x8xf32>
    %cst_279 = arith.constant 0.000000e+00 : f32
    %1331 = vector.broadcast %cst_279 : f32 to vector<32x8xf32>
    %1332 = arith.maximumf %1330, %1331 : vector<32x8xf32>
    %1333 = vector.shape_cast %1332 : vector<32x8xf32> to vector<4x8x8xf32>
    %c0_280 = arith.constant 0 : index
    %c0_281 = arith.constant 0 : index
    %c0_282 = arith.constant 0 : index
    %c0_283 = arith.constant 0 : index
    %1334 = vector.load %arg10[%c0_280, %c0_281, %c0_282, %c0_283] : memref<1x4x8x8xf32, #tpu.memory_space<vmem>>, vector<1x4x8x8xf32>
    %1335 = vector.shape_cast %1334 : vector<1x4x8x8xf32> to vector<4x8x8xf32>
    %1336 = vector.shape_cast %1333 : vector<4x8x8xf32> to vector<1x4x8x8xf32>
    tpu.vector_store %arg10[%c0_280, %c0_281, %c0_282, %c0_283], %1336 {strides = array<i32>} : memref<1x4x8x8xf32, #tpu.memory_space<vmem>>, vector<1x4x8x8xf32>,
    return
  }
  func.func @transform_0(%arg0: i32, %arg1: i32) -> (i32, i32, i32, i32, i32) {
    %c1_i32 = arith.constant 1 : i32
    %0 = arith.muli %arg1, %c1_i32 : i32
    %c1_i32_0 = arith.constant 1 : i32
    %1 = arith.subi %0, %c1_i32_0 : i32
    %c0_i32 = arith.constant 0 : i32
    %2 = arith.maxsi %1, %c0_i32 : i32
    %c0_i32_1 = arith.constant 0 : i32
    %c0_i32_2 = arith.constant 0 : i32
    %c0_i32_3 = arith.constant 0 : i32
    %c0_i32_4 = arith.constant 0 : i32
    return %arg0, %c0_i32_1, %2, %c0_i32_2, %c0_i32_3 : i32, i32, i32, i32, i32
  }
  func.func @transform_1(%arg0: i32, %arg1: i32) -> (i32, i32, i32, i32, i32) {
    %c0_i32 = arith.constant 0 : i32
    %c0_i32_0 = arith.constant 0 : i32
    %c0_i32_1 = arith.constant 0 : i32
    %c0_i32_2 = arith.constant 0 : i32
    return %arg0, %c0_i32, %arg1, %c0_i32_0, %c0_i32_1 : i32, i32, i32, i32, i32
  }
  func.func @transform_2(%arg0: i32, %arg1: i32) -> (i32, i32, i32, i32, i32) {
    %c1_i32 = arith.constant 1 : i32
    %0 = arith.addi %arg1, %c1_i32 : i32
    %c1_i32_0 = arith.constant 1 : i32
    %1 = arith.muli %0, %c1_i32_0 : i32
    %c1_i32_1 = arith.constant 1 : i32
    %2 = arith.minsi %1, %c1_i32_1 : i32
    %c0_i32 = arith.constant 0 : i32
    %c0_i32_2 = arith.constant 0 : i32
    %c0_i32_3 = arith.constant 0 : i32
    %c0_i32_4 = arith.constant 0 : i32
    return %arg0, %c0_i32, %2, %c0_i32_2, %c0_i32_3 : i32, i32, i32, i32, i32
  }
  func.func @transform_3(%arg0: i32, %arg1: i32) -> (i32, i32) {
    %c0_i32 = arith.constant 0 : i32
    %c0_i32_0 = arith.constant 0 : i32
    %c0_i32_1 = arith.constant 0 : i32
    return %c0_i32, %c0_i32_0 : i32, i32
  }
  func.func @transform_4(%arg0: i32, %arg1: i32) -> (i32, i32) {
    %c0_i32 = arith.constant 0 : i32
    %c0_i32_0 = arith.constant 0 : i32
    %c0_i32_1 = arith.constant 0 : i32
    return %c0_i32, %c0_i32_0 : i32, i32
  }
  func.func @transform_5(%arg0: i32, %arg1: i32) -> (i32, i32, i32) {
    %c0_i32 = arith.constant 0 : i32
    %c0_i32_0 = arith.constant 0 : i32
    %c0_i32_1 = arith.constant 0 : i32
    %c0_i32_2 = arith.constant 0 : i32
    return %c0_i32, %c0_i32_0, %c0_i32_1 : i32, i32, i32
  }
  func.func @transform_6(%arg0: i32, %arg1: i32) -> (i32, i32) {
    %c0_i32 = arith.constant 0 : i32
    %c0_i32_0 = arith.constant 0 : i32
    %c0_i32_1 = arith.constant 0 : i32
    return %c0_i32, %c0_i32_0 : i32, i32
  }
  func.func @transform_7(%arg0: i32, %arg1: i32) -> (i32, i32) {
    %c0_i32 = arith.constant 0 : i32
    %c0_i32_0 = arith.constant 0 : i32
    %c0_i32_1 = arith.constant 0 : i32
    return %c0_i32, %c0_i32_0 : i32, i32
  }
  func.func @transform_8(%arg0: i32, %arg1: i32) -> (i32, i32, i32, i32) {
    %c0_i32 = arith.constant 0 : i32
    %c0_i32_0 = arith.constant 0 : i32
    %c0_i32_1 = arith.constant 0 : i32
    return %arg0, %arg1, %c0_i32, %c0_i32_0 : i32, i32, i32, i32
  }
}

</mosaic_0001>

<llo_original>
// kernel: tile.8
$region0: #{tile.8}
  #allocation0 [shape = 's32[1]{0}', space=sflag, size = 0x4, scoped, tag = 'scoped memory for tile.8']
  %s0 = inlined_call_operand.vmem [shape: f32[8], index: 0, kind: input, shape index: {}]
  %s1 = inlined_call_operand.vmem [shape: f32[5,8], index: 1, kind: output, shape index: {}]
  // Predicated region
  $region2: #{tile.8} parent=0 // pred_check
    _
  $region3: #{tile.8} parent=0 // pred_check_branch
    %3 = sbr.rel (0) target = $region5
  $region4: #{tile.8} parent=0 // pred_region
    _
  $region5: #{tile.8} parent=0 // pred_fallthru
    _
  %v4 = vld [vmem:[%s0] ss:$0 sm:$0xff]
  %5 = vst [vmem:[%s1] sm:$0xff] %v4

// kernel: tile.9
$region0: #{tile.9}
  %s0 = inlined_call_operand.vmem [shape: f32[5,8], index: 0, kind: input, shape index: {}]
  %s1 = inlined_call_operand.vmem [shape: f32[40], index: 1, kind: output, shape index: {}]
  $region1: #{tile.9} parent=0
    #allocation0 [shape = 'u8[4096]{0}', space=vmem, size = 0x1000, scoped, tag = 'scoped mem for output reshape']
    %v2 = vld [vmem:[%s0] sm:$0x1]
    %vm3 = vcmask 64512
    %4 = vst.msk [vmem:[#allocation0] sm:$0x1] %vm3, %v2
    %s5 = scalar_lea.vmem %s0, 4
    %v6 = vld [vmem:[%s5] sm:$0x1]
    %7 = vrot.lane.b32.xlu0 %v6, 32
    %v8 = vpop.permute.xlu0 %7
    %vm9 = vcmask 326912
    %10 = vst.msk [vmem:[#allocation0] sm:$0x1] %vm9, %v8
    %s11 = scalar_lea.vmem %s0, 3
    %v12 = vld [vmem:[%s11] sm:$0x1]
    %13 = vrot.lane.b32.xlu0 %v12, 24
    %v14 = vpop.permute.xlu0 %13
    %vm15 = vcmask 261312
    %16 = vst.msk [vmem:[#allocation0] sm:$0x1] %vm15, %v14
    %s17 = scalar_lea.vmem %s0, 2
    %v18 = vld [vmem:[%s17] sm:$0x1]
    %19 = vrot.lane.b32.xlu0 %v18, 16
    %v20 = vpop.permute.xlu0 %19
    %vm21 = vcmask 195712
    %22 = vst.msk [vmem:[#allocation0] sm:$0x1] %vm21, %v20
    %s23 = scalar_lea.vmem %s0, 1
    %v24 = vld [vmem:[%s23] sm:$0x1]
    %25 = vrot.lane.b32.xlu0 %v24, 8
    %v26 = vpop.permute.xlu0 %25
    %vm27 = vcmask 130112
    %28 = vst.msk [vmem:[#allocation0] sm:$0x1] %vm27, %v26
    %s30 = ssub.s32 2, 1
    %v31 = vld [vmem:[#allocation0] sm:%s30]
    %s33 = ssub.s32 2, 1
    %34 = vst [vmem:[%s1] sm:%s33] %v31

// kernel: vanila_conv_forward.1
$region0: #{vanila_conv_forward.1}
  #allocation0 [shape = 'u32[]', space=smem, size = 0x4, offset = 0x4, fixed_abs, tag = 'smem constant byte address 0x4 - core index']
  #allocation1 [shape = 'u32[72,128]{1,0:T(1,128)}', space=vmem, size = 0x9000, scoped, tag = 'internal scratch']
  #allocation2 [shape = 'f32[4,9,11,8]{3,2,1,0:T(8,128)}', space=vmem, size = 0x48000, scoped, tag = 'scratch operand']
  #allocation3 [shape = 'f32[4,5,9,8]{3,2,1,0:T(8,128)}', space=vmem, size = 0x28000, scoped, tag = 'scratch operand']
  %s0 = inlined_call_operand.vmem [shape: f32[2,4,8,8,4], index: 0, kind: input, shape index: {}, may-alias: {0,1,2}]
  %s1 = inlined_call_operand.vmem [shape: f32[2,4,8,8,4], index: 1, kind: input, shape index: {}, may-alias: {0,1,2}]
  %s2 = inlined_call_operand.vmem [shape: f32[2,4,8,8,4], index: 2, kind: input, shape index: {}, may-alias: {0,1,2}]
  %s3 = inlined_call_operand.vmem [shape: f32[4,8], index: 3, kind: input, shape index: {}]
  %s4 = inlined_call_operand.vmem [shape: f32[1,8], index: 4, kind: input, shape index: {}]
  %s5 = inlined_call_operand.vmem [shape: f32[7,7,8], index: 5, kind: input, shape index: {}]
  %s6 = inlined_call_operand.vmem [shape: f32[40,8], index: 6, kind: input, shape index: {}]
  %s7 = inlined_call_operand.vmem [shape: f32[1,8], index: 7, kind: input, shape index: {}]
  %s8 = inlined_call_operand.vmem [shape: f32[2,8,8,8], index: 8, kind: output, shape index: {}]
  %s9 = sld [smem:[#allocation0]]
  $region179: #{vanila_conv_forward.1} parent=0
    _
  %s11 = ssub.s32 1, %s9
  %s12 = scalar_select 0, %s11, %s9
  $region1: #{vanila_conv_forward.1} parent=0
    #allocation4 [shape = 'u8[131072]{0}', space=vmem, size = 0x20000, scoped, tag = 'input window, operand 0']
    #allocation5 [shape = 'u8[131072]{0}', space=vmem, size = 0x20000, scoped, tag = 'input window, operand 1']
    #allocation6 [shape = 'u8[131072]{0}', space=vmem, size = 0x20000, scoped, tag = 'input window, operand 2']
    loop: start=0, step=1, limit=6
    $region2: #{vanila_conv_forward.1} parent=1 // loop_pre_header
      _
    $region3: #{vanila_conv_forward.1} parent=1 // loop_header
      %s14 = sphi 0, %s18
      %p15 = scmp.ge.s32.totalorder %s14, 6
      %s21 = sphi 0, %s33
      %s22 = sphi 0, %s29
      %s23 = sphi 0, %s21
      %s24 = sphi 0, %s22
      %s25 = sphi 0, %s23
      %s26 = sphi 0, %s24
      %s44 = sphi 0, %s46
      %s47 = sphi 0, %s44
      %s48 = sphi 0, %s47
      %s64 = sphi 0, %s48
      %s72 = sphi 0, %s74
      %s75 = sphi 0, %s72
      %s76 = sphi 0, %s75
      %s92 = sphi 0, %s76
      %s106 = sphi 0, %s108
      %s109 = sphi 0, %s106
      %s110 = sphi 0, %s109
      %s126 = sphi 0, %s110
      %s130 = sphi 0, %s130
      %s132 = sphi 0, %s130
      %s133 = sphi 0, %s132
      %s147 = sphi 0, %s133
      %s151 = sphi 0, %s151
      %s153 = sphi 0, %s151
      %s154 = sphi 0, %s153
      %s168 = sphi 0, %s154
      %s172 = sphi 0, %s172
      %s174 = sphi 0, %s172
      %s175 = sphi 0, %s174
      %s189 = sphi 0, %s175
      %s193 = sphi 0, %s193
      %s195 = sphi 0, %s193
      %s196 = sphi 0, %s195
      %s210 = sphi 0, %s196
      %s214 = sphi 0, %s214
      %s216 = sphi 0, %s214
      %s217 = sphi 0, %s216
      %s231 = sphi 0, %s217
      %s239 = sphi 0, %s241
      %s242 = sphi 0, %s239
      %s243 = sphi 0, %s242
      %s259 = sphi 0, %s243
    $region4: #{vanila_conv_forward.1} parent=1 // loop_header_branch
      %17 = sbr.rel (%p15) target = $region8
    $region5: #{vanila_conv_forward.1} parent=1 // loop_body
      %s19 = ssub.s32 %s14, 1
      %s20 = ssub.s32 %s14, 2
      %s27 = sadd.s32 1, %s22
      %p28 = scmp.ge.s32.totalorder %s27, 2
      %s29 = scalar_select %p28, 0, %s27
      %s30 = sadd.s32 1, %s21
      %s31 = scalar_select %p28, %s30, %s21
      %p32 = scmp.ge.s32.totalorder %s31, 2
      %s33 = scalar_select %p32, 0, %s31
      %s34 = ssub.s32 %s22, 1
      %p35 = scmp.gt.s32.totalorder %s34, 0
      %s36 = scalar_select %p35, %s34, 0
      %s37 = ssub.s32 %s29, 1
      %p38 = scmp.gt.s32.totalorder %s37, 0
      %s39 = scalar_select %p38, %s37, 0
      %s40 = ssub.s32 %s21, %s33
      %s41 = ssub.s32 %s36, %s39
      %s42 = sor.u32 %s40, %s41
      %p43 = scmp.eq.s32.totalorder %s42, 0
      %s45 = sadd.s32 %s44, 1
      %s46 = scalar_select %p43, %s44, %s45
      %p49 = pneg %p43
      %p50 = scmp.eq.s32.totalorder %s14, 3
      %p51 = por %p49, %p50
      %p52 = scmp.ne.s32.totalorder %s44, %s47
      %p53 = scmp.eq.s32.totalorder %s14, 0
      %p54 = por %p52, %p53
      %p55 = scmp.ne.s32.totalorder %s44, %s47
      %p56 = scmp.eq.s32.totalorder %s19, 3
      %p57 = por %p55, %p56
      %p58 = scmp.ne.s32.totalorder %s47, %s48
      %p59 = scmp.eq.s32.totalorder %s19, 0
      %p60 = por %p58, %p59
      %p61 = scmp.ne.s32.totalorder %s47, %s48
      %p62 = scmp.eq.s32.totalorder %s20, 3
      %p63 = por %p61, %p62
      %p65 = scmp.ne.s32.totalorder %s48, %s64
      %p66 = scmp.eq.s32.totalorder %s20, 0
      %p67 = por %p65, %p66
      %s68 = ssub.s32 %s21, %s33
      %s69 = ssub.s32 %s22, %s29
      %s70 = sor.u32 %s68, %s69
      %p71 = scmp.eq.s32.totalorder %s70, 0
      %s73 = sadd.s32 %s72, 1
      %s74 = scalar_select %p71, %s72, %s73
      %p77 = pneg %p71
      %p78 = scmp.eq.s32.totalorder %s14, 3
      %p79 = por %p77, %p78
      %p80 = scmp.ne.s32.totalorder %s72, %s75
      %p81 = scmp.eq.s32.totalorder %s14, 0
      %p82 = por %p80, %p81
      %p83 = scmp.ne.s32.totalorder %s72, %s75
      %p84 = scmp.eq.s32.totalorder %s19, 3
      %p85 = por %p83, %p84
      %p86 = scmp.ne.s32.totalorder %s75, %s76
      %p87 = scmp.eq.s32.totalorder %s19, 0
      %p88 = por %p86, %p87
      %p89 = scmp.ne.s32.totalorder %s75, %s76
      %p90 = scmp.eq.s32.totalorder %s20, 3
      %p91 = por %p89, %p90
      %p93 = scmp.ne.s32.totalorder %s76, %s92
      %p94 = scmp.eq.s32.totalorder %s20, 0
      %p95 = por %p93, %p94
      %s96 = sadd.s32 %s22, 1
      %p97 = scmp.lt.s32.totalorder %s96, 1
      %s98 = scalar_select %p97, %s96, 1
      %s99 = sadd.s32 %s29, 1
      %p100 = scmp.lt.s32.totalorder %s99, 1
      %s101 = scalar_select %p100, %s99, 1
      %s102 = ssub.s32 %s21, %s33
      %s103 = ssub.s32 %s98, %s101
      %s104 = sor.u32 %s102, %s103
      %p105 = scmp.eq.s32.totalorder %s104, 0
      %s107 = sadd.s32 %s106, 1
      %s108 = scalar_select %p105, %s106, %s107
      %p111 = pneg %p105
      %p112 = scmp.eq.s32.totalorder %s14, 3
      %p113 = por %p111, %p112
      %p114 = scmp.ne.s32.totalorder %s106, %s109
      %p115 = scmp.eq.s32.totalorder %s14, 0
      %p116 = por %p114, %p115
      %p117 = scmp.ne.s32.totalorder %s106, %s109
      %p118 = scmp.eq.s32.totalorder %s19, 3
      %p119 = por %p117, %p118
      %p120 = scmp.ne.s32.totalorder %s109, %s110
      %p121 = scmp.eq.s32.totalorder %s19, 0
      %p122 = por %p120, %p121
      %p123 = scmp.ne.s32.totalorder %s109, %s110
      %p124 = scmp.eq.s32.totalorder %s20, 3
      %p125 = por %p123, %p124
      %p127 = scmp.ne.s32.totalorder %s110, %s126
      %p128 = scmp.eq.s32.totalorder %s20, 0
      %p129 = por %p127, %p128
      %s131 = sadd.s32 %s130, 1
      %p134 = scmp.eq.s32.totalorder %s14, 3
      %p135 = scmp.ne.s32.totalorder %s130, %s132
      %p136 = scmp.eq.s32.totalorder %s14, 0
      %p137 = por %p135, %p136
      %p138 = scmp.ne.s32.totalorder %s130, %s132
      %p139 = scmp.eq.s32.totalorder %s19, 3
      %p140 = por %p138, %p139
      %p141 = scmp.ne.s32.totalorder %s132, %s133
      %p142 = scmp.eq.s32.totalorder %s19, 0
      %p143 = por %p141, %p142
      %p144 = scmp.ne.s32.totalorder %s132, %s133
      %p145 = scmp.eq.s32.totalorder %s20, 3
      %p146 = por %p144, %p145
      %p148 = scmp.ne.s32.totalorder %s133, %s147
      %p149 = scmp.eq.s32.totalorder %s20, 0
      %p150 = por %p148, %p149
      %s152 = sadd.s32 %s151, 1
      %p155 = scmp.eq.s32.totalorder %s14, 3
      %p156 = scmp.ne.s32.totalorder %s151, %s153
      %p157 = scmp.eq.s32.totalorder %s14, 0
      %p158 = por %p156, %p157
      %p159 = scmp.ne.s32.totalorder %s151, %s153
      %p160 = scmp.eq.s32.totalorder %s19, 3
      %p161 = por %p159, %p160
      %p162 = scmp.ne.s32.totalorder %s153, %s154
      %p163 = scmp.eq.s32.totalorder %s19, 0
      %p164 = por %p162, %p163
      %p165 = scmp.ne.s32.totalorder %s153, %s154
      %p166 = scmp.eq.s32.totalorder %s20, 3
      %p167 = por %p165, %p166
      %p169 = scmp.ne.s32.totalorder %s154, %s168
      %p170 = scmp.eq.s32.totalorder %s20, 0
      %p171 = por %p169, %p170
      %s173 = sadd.s32 %s172, 1
      %p176 = scmp.eq.s32.totalorder %s14, 3
      %p177 = scmp.ne.s32.totalorder %s172, %s174
      %p178 = scmp.eq.s32.totalorder %s14, 0
      %p179 = por %p177, %p178
      %p180 = scmp.ne.s32.totalorder %s172, %s174
      %p181 = scmp.eq.s32.totalorder %s19, 3
      %p182 = por %p180, %p181
      %p183 = scmp.ne.s32.totalorder %s174, %s175
      %p184 = scmp.eq.s32.totalorder %s19, 0
      %p185 = por %p183, %p184
      %p186 = scmp.ne.s32.totalorder %s174, %s175
      %p187 = scmp.eq.s32.totalorder %s20, 3
      %p188 = por %p186, %p187
      %p190 = scmp.ne.s32.totalorder %s175, %s189
      %p191 = scmp.eq.s32.totalorder %s20, 0
      %p192 = por %p190, %p191
      %s194 = sadd.s32 %s193, 1
      %p197 = scmp.eq.s32.totalorder %s14, 3
      %p198 = scmp.ne.s32.totalorder %s193, %s195
      %p199 = scmp.eq.s32.totalorder %s14, 0
      %p200 = por %p198, %p199
      %p201 = scmp.ne.s32.totalorder %s193, %s195
      %p202 = scmp.eq.s32.totalorder %s19, 3
      %p203 = por %p201, %p202
      %p204 = scmp.ne.s32.totalorder %s195, %s196
      %p205 = scmp.eq.s32.totalorder %s19, 0
      %p206 = por %p204, %p205
      %p207 = scmp.ne.s32.totalorder %s195, %s196
      %p208 = scmp.eq.s32.totalorder %s20, 3
      %p209 = por %p207, %p208
      %p211 = scmp.ne.s32.totalorder %s196, %s210
      %p212 = scmp.eq.s32.totalorder %s20, 0
      %p213 = por %p211, %p212
      %s215 = sadd.s32 %s214, 1
      %p218 = scmp.eq.s32.totalorder %s14, 3
      %p219 = scmp.ne.s32.totalorder %s214, %s216
      %p220 = scmp.eq.s32.totalorder %s14, 0
      %p221 = por %p219, %p220
      %p222 = scmp.ne.s32.totalorder %s214, %s216
      %p223 = scmp.eq.s32.totalorder %s19, 3
      %p224 = por %p222, %p223
      %p225 = scmp.ne.s32.totalorder %s216, %s217
      %p226 = scmp.eq.s32.totalorder %s19, 0
      %p227 = por %p225, %p226
      %p228 = scmp.ne.s32.totalorder %s216, %s217
      %p229 = scmp.eq.s32.totalorder %s20, 3
      %p230 = por %p228, %p229
      %p232 = scmp.ne.s32.totalorder %s217, %s231
      %p233 = scmp.eq.s32.totalorder %s20, 0
      %p234 = por %p232, %p233
      %s235 = ssub.s32 %s21, %s33
      %s236 = ssub.s32 %s22, %s29
      %s237 = sor.u32 %s235, %s236
      %p238 = scmp.eq.s32.totalorder %s237, 0
      %s240 = sadd.s32 %s239, 1
      %s241 = scalar_select %p238, %s239, %s240
      %p244 = pneg %p238
      %p245 = scmp.eq.s32.totalorder %s14, 3
      %p246 = por %p244, %p245
      %p247 = scmp.ne.s32.totalorder %s239, %s242
      %p248 = scmp.eq.s32.totalorder %s14, 0
      %p249 = por %p247, %p248
      %p250 = scmp.ne.s32.totalorder %s239, %s242
      %p251 = scmp.eq.s32.totalorder %s19, 3
      %p252 = por %p250, %p251
      %p253 = scmp.ne.s32.totalorder %s242, %s243
      %p254 = scmp.eq.s32.totalorder %s19, 0
      %p255 = por %p253, %p254
      %p256 = scmp.ne.s32.totalorder %s242, %s243
      %p257 = scmp.eq.s32.totalorder %s20, 3
      %p258 = por %p256, %p257
      %p260 = scmp.ne.s32.totalorder %s243, %s259
      %p261 = scmp.eq.s32.totalorder %s20, 0
      %p262 = por %p260, %p261
      %p263 = scmp.le.s32.totalorder 1, %s14
      %p264 = scmp.lt.s32.totalorder %s14, 5
      %p265 = pnand %p263, %p264
      %p266 = pneg %p265
      // Predicated region
      $region9: #{vanila_conv_forward.1} parent=5 // pred_check
        _
      $region10: #{vanila_conv_forward.1} parent=5 // pred_check_branch
        %268 = sbr.rel (%p265) target = $region12
      $region11: #{vanila_conv_forward.1} parent=5 // pred_region
        %s269 = ssub.s32 %s14, 1
        // Predicated region
        $region13: #{vanila_conv_forward.1} parent=11 // pred_check
          %p270 = pneg %p143
        $region14: #{vanila_conv_forward.1} parent=11 // pred_check_branch
          %272 = sbr.rel (%p270) target = $region16
        $region15: #{vanila_conv_forward.1} parent=11 // pred_region
          _
        $region16: #{vanila_conv_forward.1} parent=11 // pred_fallthru
          _
        // Predicated region
        $region17: #{vanila_conv_forward.1} parent=11 // pred_check
          %p273 = pneg %p164
        $region18: #{vanila_conv_forward.1} parent=11 // pred_check_branch
          %275 = sbr.rel (%p273) target = $region20
        $region19: #{vanila_conv_forward.1} parent=11 // pred_region
          _
        $region20: #{vanila_conv_forward.1} parent=11 // pred_fallthru
          _
        // Predicated region
        $region21: #{vanila_conv_forward.1} parent=11 // pred_check
          %p276 = pneg %p185
        $region22: #{vanila_conv_forward.1} parent=11 // pred_check_branch
          %278 = sbr.rel (%p276) target = $region24
        $region23: #{vanila_conv_forward.1} parent=11 // pred_region
          _
        $region24: #{vanila_conv_forward.1} parent=11 // pred_fallthru
          _
        // Predicated region
        $region25: #{vanila_conv_forward.1} parent=11 // pred_check
          %p279 = pneg %p206
        $region26: #{vanila_conv_forward.1} parent=11 // pred_check_branch
          %281 = sbr.rel (%p279) target = $region28
        $region27: #{vanila_conv_forward.1} parent=11 // pred_region
          _
        $region28: #{vanila_conv_forward.1} parent=11 // pred_fallthru
          _
        // Predicated region
        $region29: #{vanila_conv_forward.1} parent=11 // pred_check
          %p282 = pneg %p227
        $region30: #{vanila_conv_forward.1} parent=11 // pred_check_branch
          %284 = sbr.rel (%p282) target = $region32
        $region31: #{vanila_conv_forward.1} parent=11 // pred_region
          _
        $region32: #{vanila_conv_forward.1} parent=11 // pred_fallthru
          _
      $region12: #{vanila_conv_forward.1} parent=5 // pred_fallthru
        _
      %p285 = scmp.lt.s32.totalorder %s14, 4
      // Predicated region
      $region33: #{vanila_conv_forward.1} parent=5 // pred_check
        %p286 = pneg %p285
      $region34: #{vanila_conv_forward.1} parent=5 // pred_check_branch
        %288 = sbr.rel (%p286) target = $region36
      $region35: #{vanila_conv_forward.1} parent=5 // pred_region
        // Predicated region
        $region37: #{vanila_conv_forward.1} parent=35 // pred_check
          %p289 = pneg %p54
        $region38: #{vanila_conv_forward.1} parent=35 // pred_check_branch
          %291 = sbr.rel (%p289) target = $region40
        $region39: #{vanila_conv_forward.1} parent=35 // pred_region
          %s292 = sand.u32 %s44, 1
          %s293 = sand.u32 %s44, 1
          %s294 = smul.addr %s293, 128
          %s295 = scalar_lea.vmem [#allocation4], %s294
          %s296 = ssub.s32 %s22, 1
          %p297 = scmp.gt.s32.totalorder %s296, 0
          %s298 = scalar_select %p297, %s296, 0
          %s299 = smul.u32 4, %s298
          %s300 = smul.addr %s21, 32
          %s301 = sadd.s32 %s299, %s300
          %s302 = smul.addr %s301, 8
          %s303 = scalar_lea.vmem %s0, %s302
          // Predicated region
          $region41: #{vanila_conv_forward.1} parent=39 // pred_check
            _
          $region42: #{vanila_conv_forward.1} parent=39 // pred_check_branch
            %305 = sbr.rel (0) target = $region44
          $region43: #{vanila_conv_forward.1} parent=39 // pred_region
            // Predicated region
            $region45: #{vanila_conv_forward.1} parent=43 // pred_check
              _
            $region46: #{vanila_conv_forward.1} parent=43 // pred_check_branch
              %307 = sbr.rel (0) target = $region48
            $region47: #{vanila_conv_forward.1} parent=43 // pred_region
              // Predicated region
              $region60: #{vanila_conv_forward.1} parent=47 // pred_check
                _
              $region61: #{vanila_conv_forward.1} parent=47 // pred_check_branch
                %353 = sbr.rel (0) target = $region63
              $region62: #{vanila_conv_forward.1} parent=47 // pred_region
                loop: start=0, step=1, limit=1
                $region64: #{vanila_conv_forward.1} parent=62 // loop_pre_header
                  _
                $region65: #{vanila_conv_forward.1} parent=62 // loop_header
                  %s355 = sphi 0, %s359
                  %p356 = scmp.ge.s32.totalorder %s355, 1
                  %s360 = sphi %s303, %s303
                  %s361 = sphi %s295, %s295
                $region66: #{vanila_conv_forward.1} parent=62 // loop_header_branch
                  %358 = sbr.rel (%p356) target = $region70
                $region67: #{vanila_conv_forward.1} parent=62 // loop_body
                  %v362 = vld [vmem:[%s360] sm:$0xff]
                  %363 = vst [vmem:[%s361] sm:$0xff] %v362
                  %v364 = vld [vmem:[%s360 + $0x8] sm:$0xff]
                  %365 = vst [vmem:[%s361 + $0x8] sm:$0xff] %v364
                  %v366 = vld [vmem:[%s360 + $0x10] sm:$0xff]
                  %367 = vst [vmem:[%s361 + $0x10] sm:$0xff] %v366
                  %v368 = vld [vmem:[%s360 + $0x18] sm:$0xff]
                  %369 = vst [vmem:[%s361 + $0x18] sm:$0xff] %v368
                  %v370 = vld [vmem:[%s360 + $0x40] sm:$0xff]
                  %371 = vst [vmem:[%s361 + $0x20] sm:$0xff] %v370
                  %v372 = vld [vmem:[%s360 + $0x48] sm:$0xff]
                  %373 = vst [vmem:[%s361 + $0x28] sm:$0xff] %v372
                  %v374 = vld [vmem:[%s360 + $0x50] sm:$0xff]
                  %375 = vst [vmem:[%s361 + $0x30] sm:$0xff] %v374
                  %v376 = vld [vmem:[%s360 + $0x58] sm:$0xff]
                  %377 = vst [vmem:[%s361 + $0x38] sm:$0xff] %v376
                  %v378 = vld [vmem:[%s360 + $0x80] sm:$0xff]
                  %379 = vst [vmem:[%s361 + $0x40] sm:$0xff] %v378
                  %v380 = vld [vmem:[%s360 + $0x88] sm:$0xff]
                  %381 = vst [vmem:[%s361 + $0x48] sm:$0xff] %v380
                  %v382 = vld [vmem:[%s360 + $0x90] sm:$0xff]
                  %383 = vst [vmem:[%s361 + $0x50] sm:$0xff] %v382
                  %v384 = vld [vmem:[%s360 + $0x98] sm:$0xff]
                  %385 = vst [vmem:[%s361 + $0x58] sm:$0xff] %v384
                  %v386 = vld [vmem:[%s360 + $0xc0] sm:$0xff]
                  %387 = vst [vmem:[%s361 + $0x60] sm:$0xff] %v386
                  %v388 = vld [vmem:[%s360 + $0xc8] sm:$0xff]
                  %389 = vst [vmem:[%s361 + $0x68] sm:$0xff] %v388
                  %v390 = vld [vmem:[%s360 + $0xd0] sm:$0xff]
                  %391 = vst [vmem:[%s361 + $0x70] sm:$0xff] %v390
                  %v392 = vld [vmem:[%s360 + $0xd8] sm:$0xff]
                  %393 = vst [vmem:[%s361 + $0x78] sm:$0xff] %v392
                $region68: #{vanila_conv_forward.1} parent=62 // loop_footer
                  %s359 = sadd.s32 1, %s355
                $region69: #{vanila_conv_forward.1} parent=62 // loop_footer_branch
                  %354 = sbr.rel target = $region65
                $region70: #{vanila_conv_forward.1} parent=62 // loop_exit
                  _
              $region63: #{vanila_conv_forward.1} parent=47 // pred_fallthru
                _
              // Predicated region
              $region71: #{vanila_conv_forward.1} parent=47 // pred_check
                _
              $region72: #{vanila_conv_forward.1} parent=47 // pred_check_branch
                %395 = sbr.rel target = $region74
              $region73: #{vanila_conv_forward.1} parent=47 // pred_region
                _
              $region74: #{vanila_conv_forward.1} parent=47 // pred_fallthru
                _
            $region48: #{vanila_conv_forward.1} parent=43 // pred_fallthru
              _
            // Predicated region
            $region49: #{vanila_conv_forward.1} parent=43 // pred_check
              _
            $region50: #{vanila_conv_forward.1} parent=43 // pred_check_branch
              %309 = sbr.rel target = $region52
            $region51: #{vanila_conv_forward.1} parent=43 // pred_region
              %s311 = ssub.s32 256, 1
              loop: start=0, step=1, limit=1
              $region53: #{vanila_conv_forward.1} parent=51 // loop_pre_header
                _
              $region54: #{vanila_conv_forward.1} parent=51 // loop_header
                %s313 = sphi 0, %s317
                %p314 = scmp.ge.s32.totalorder %s313, 1
                %s318 = sphi %s303, %s303
                %s319 = sphi %s295, %s295
              $region55: #{vanila_conv_forward.1} parent=51 // loop_header_branch
                %316 = sbr.rel (%p314) target = $region59
              $region56: #{vanila_conv_forward.1} parent=51 // loop_body
                %v320 = vld [vmem:[%s318] sm:%s311]
                %321 = vst [vmem:[%s319] sm:%s311] %v320
                %v322 = vld [vmem:[%s318 + $0x8] sm:%s311]
                %323 = vst [vmem:[%s319 + $0x8] sm:%s311] %v322
                %v324 = vld [vmem:[%s318 + $0x10] sm:%s311]
                %325 = vst [vmem:[%s319 + $0x10] sm:%s311] %v324
                %v326 = vld [vmem:[%s318 + $0x18] sm:%s311]
                %327 = vst [vmem:[%s319 + $0x18] sm:%s311] %v326
                %v328 = vld [vmem:[%s318 + $0x40] sm:%s311]
                %329 = vst [vmem:[%s319 + $0x20] sm:%s311] %v328
                %v330 = vld [vmem:[%s318 + $0x48] sm:%s311]
                %331 = vst [vmem:[%s319 + $0x28] sm:%s311] %v330
                %v332 = vld [vmem:[%s318 + $0x50] sm:%s311]
                %333 = vst [vmem:[%s319 + $0x30] sm:%s311] %v332
                %v334 = vld [vmem:[%s318 + $0x58] sm:%s311]
                %335 = vst [vmem:[%s319 + $0x38] sm:%s311] %v334
                %v336 = vld [vmem:[%s318 + $0x80] sm:%s311]
                %337 = vst [vmem:[%s319 + $0x40] sm:%s311] %v336
                %v338 = vld [vmem:[%s318 + $0x88] sm:%s311]
                %339 = vst [vmem:[%s319 + $0x48] sm:%s311] %v338
                %v340 = vld [vmem:[%s318 + $0x90] sm:%s311]
                %341 = vst [vmem:[%s319 + $0x50] sm:%s311] %v340
                %v342 = vld [vmem:[%s318 + $0x98] sm:%s311]
                %343 = vst [vmem:[%s319 + $0x58] sm:%s311] %v342
                %v344 = vld [vmem:[%s318 + $0xc0] sm:%s311]
                %345 = vst [vmem:[%s319 + $0x60] sm:%s311] %v344
                %v346 = vld [vmem:[%s318 + $0xc8] sm:%s311]
                %347 = vst [vmem:[%s319 + $0x68] sm:%s311] %v346
                %v348 = vld [vmem:[%s318 + $0xd0] sm:%s311]
                %349 = vst [vmem:[%s319 + $0x70] sm:%s311] %v348
                %v350 = vld [vmem:[%s318 + $0xd8] sm:%s311]
                %351 = vst [vmem:[%s319 + $0x78] sm:%s311] %v350
              $region57: #{vanila_conv_forward.1} parent=51 // loop_footer
                %s317 = sadd.s32 1, %s313
              $region58: #{vanila_conv_forward.1} parent=51 // loop_footer_branch
                %312 = sbr.rel target = $region54
              $region59: #{vanila_conv_forward.1} parent=51 // loop_exit
                _
            $region52: #{vanila_conv_forward.1} parent=43 // pred_fallthru
              _
          $region44: #{vanila_conv_forward.1} parent=39 // pred_fallthru
            _
          %396 = vnop
        $region40: #{vanila_conv_forward.1} parent=35 // pred_fallthru
          _
        // Predicated region
        $region75: #{vanila_conv_forward.1} parent=35 // pred_check
          %p397 = pneg %p82
        $region76: #{vanila_conv_forward.1} parent=35 // pred_check_branch
          %399 = sbr.rel (%p397) target = $region78
        $region77: #{vanila_conv_forward.1} parent=35 // pred_region
          %s400 = sand.u32 %s72, 1
          %s401 = sand.u32 %s72, 1
          %s402 = smul.addr %s401, 128
          %s403 = scalar_lea.vmem [#allocation5], %s402
          %s404 = smul.u32 4, %s22
          %s405 = smul.addr %s21, 32
          %s406 = sadd.s32 %s404, %s405
          %s407 = smul.addr %s406, 8
          %s408 = scalar_lea.vmem %s1, %s407
          // Predicated region
          $region79: #{vanila_conv_forward.1} parent=77 // pred_check
            _
          $region80: #{vanila_conv_forward.1} parent=77 // pred_check_branch
            %410 = sbr.rel (0) target = $region82
          $region81: #{vanila_conv_forward.1} parent=77 // pred_region
            // Predicated region
            $region83: #{vanila_conv_forward.1} parent=81 // pred_check
              _
            $region84: #{vanila_conv_forward.1} parent=81 // pred_check_branch
              %412 = sbr.rel (0) target = $region86
            $region85: #{vanila_conv_forward.1} parent=81 // pred_region
              // Predicated region
              $region98: #{vanila_conv_forward.1} parent=85 // pred_check
                _
              $region99: #{vanila_conv_forward.1} parent=85 // pred_check_branch
                %458 = sbr.rel (0) target = $region101
              $region100: #{vanila_conv_forward.1} parent=85 // pred_region
                loop: start=0, step=1, limit=1
                $region102: #{vanila_conv_forward.1} parent=100 // loop_pre_header
                  _
                $region103: #{vanila_conv_forward.1} parent=100 // loop_header
                  %s460 = sphi 0, %s464
                  %p461 = scmp.ge.s32.totalorder %s460, 1
                  %s465 = sphi %s408, %s408
                  %s466 = sphi %s403, %s403
                $region104: #{vanila_conv_forward.1} parent=100 // loop_header_branch
                  %463 = sbr.rel (%p461) target = $region108
                $region105: #{vanila_conv_forward.1} parent=100 // loop_body
                  %v467 = vld [vmem:[%s465] sm:$0xff]
                  %468 = vst [vmem:[%s466] sm:$0xff] %v467
                  %v469 = vld [vmem:[%s465 + $0x8] sm:$0xff]
                  %470 = vst [vmem:[%s466 + $0x8] sm:$0xff] %v469
                  %v471 = vld [vmem:[%s465 + $0x10] sm:$0xff]
                  %472 = vst [vmem:[%s466 + $0x10] sm:$0xff] %v471
                  %v473 = vld [vmem:[%s465 + $0x18] sm:$0xff]
                  %474 = vst [vmem:[%s466 + $0x18] sm:$0xff] %v473
                  %v475 = vld [vmem:[%s465 + $0x40] sm:$0xff]
                  %476 = vst [vmem:[%s466 + $0x20] sm:$0xff] %v475
                  %v477 = vld [vmem:[%s465 + $0x48] sm:$0xff]
                  %478 = vst [vmem:[%s466 + $0x28] sm:$0xff] %v477
                  %v479 = vld [vmem:[%s465 + $0x50] sm:$0xff]
                  %480 = vst [vmem:[%s466 + $0x30] sm:$0xff] %v479
                  %v481 = vld [vmem:[%s465 + $0x58] sm:$0xff]
                  %482 = vst [vmem:[%s466 + $0x38] sm:$0xff] %v481
                  %v483 = vld [vmem:[%s465 + $0x80] sm:$0xff]
                  %484 = vst [vmem:[%s466 + $0x40] sm:$0xff] %v483
                  %v485 = vld [vmem:[%s465 + $0x88] sm:$0xff]
                  %486 = vst [vmem:[%s466 + $0x48] sm:$0xff] %v485
                  %v487 = vld [vmem:[%s465 + $0x90] sm:$0xff]
                  %488 = vst [vmem:[%s466 + $0x50] sm:$0xff] %v487
                  %v489 = vld [vmem:[%s465 + $0x98] sm:$0xff]
                  %490 = vst [vmem:[%s466 + $0x58] sm:$0xff] %v489
                  %v491 = vld [vmem:[%s465 + $0xc0] sm:$0xff]
                  %492 = vst [vmem:[%s466 + $0x60] sm:$0xff] %v491
                  %v493 = vld [vmem:[%s465 + $0xc8] sm:$0xff]
                  %494 = vst [vmem:[%s466 + $0x68] sm:$0xff] %v493
                  %v495 = vld [vmem:[%s465 + $0xd0] sm:$0xff]
                  %496 = vst [vmem:[%s466 + $0x70] sm:$0xff] %v495
                  %v497 = vld [vmem:[%s465 + $0xd8] sm:$0xff]
                  %498 = vst [vmem:[%s466 + $0x78] sm:$0xff] %v497
                $region106: #{vanila_conv_forward.1} parent=100 // loop_footer
                  %s464 = sadd.s32 1, %s460
                $region107: #{vanila_conv_forward.1} parent=100 // loop_footer_branch
                  %459 = sbr.rel target = $region103
                $region108: #{vanila_conv_forward.1} parent=100 // loop_exit
                  _
              $region101: #{vanila_conv_forward.1} parent=85 // pred_fallthru
                _
              // Predicated region
              $region109: #{vanila_conv_forward.1} parent=85 // pred_check
                _
              $region110: #{vanila_conv_forward.1} parent=85 // pred_check_branch
                %500 = sbr.rel target = $region112
              $region111: #{vanila_conv_forward.1} parent=85 // pred_region
                _
              $region112: #{vanila_conv_forward.1} parent=85 // pred_fallthru
                _
            $region86: #{vanila_conv_forward.1} parent=81 // pred_fallthru
              _
            // Predicated region
            $region87: #{vanila_conv_forward.1} parent=81 // pred_check
              _
            $region88: #{vanila_conv_forward.1} parent=81 // pred_check_branch
              %414 = sbr.rel target = $region90
            $region89: #{vanila_conv_forward.1} parent=81 // pred_region
              %s416 = ssub.s32 256, 1
              loop: start=0, step=1, limit=1
              $region91: #{vanila_conv_forward.1} parent=89 // loop_pre_header
                _
              $region92: #{vanila_conv_forward.1} parent=89 // loop_header
                %s418 = sphi 0, %s422
                %p419 = scmp.ge.s32.totalorder %s418, 1
                %s423 = sphi %s408, %s408
                %s424 = sphi %s403, %s403
              $region93: #{vanila_conv_forward.1} parent=89 // loop_header_branch
                %421 = sbr.rel (%p419) target = $region97
              $region94: #{vanila_conv_forward.1} parent=89 // loop_body
                %v425 = vld [vmem:[%s423] sm:%s416]
                %426 = vst [vmem:[%s424] sm:%s416] %v425
                %v427 = vld [vmem:[%s423 + $0x8] sm:%s416]
                %428 = vst [vmem:[%s424 + $0x8] sm:%s416] %v427
                %v429 = vld [vmem:[%s423 + $0x10] sm:%s416]
                %430 = vst [vmem:[%s424 + $0x10] sm:%s416] %v429
                %v431 = vld [vmem:[%s423 + $0x18] sm:%s416]
                %432 = vst [vmem:[%s424 + $0x18] sm:%s416] %v431
                %v433 = vld [vmem:[%s423 + $0x40] sm:%s416]
                %434 = vst [vmem:[%s424 + $0x20] sm:%s416] %v433
                %v435 = vld [vmem:[%s423 + $0x48] sm:%s416]
                %436 = vst [vmem:[%s424 + $0x28] sm:%s416] %v435
                %v437 = vld [vmem:[%s423 + $0x50] sm:%s416]
                %438 = vst [vmem:[%s424 + $0x30] sm:%s416] %v437
                %v439 = vld [vmem:[%s423 + $0x58] sm:%s416]
                %440 = vst [vmem:[%s424 + $0x38] sm:%s416] %v439
                %v441 = vld [vmem:[%s423 + $0x80] sm:%s416]
                %442 = vst [vmem:[%s424 + $0x40] sm:%s416] %v441
                %v443 = vld [vmem:[%s423 + $0x88] sm:%s416]
                %444 = vst [vmem:[%s424 + $0x48] sm:%s416] %v443
                %v445 = vld [vmem:[%s423 + $0x90] sm:%s416]
                %446 = vst [vmem:[%s424 + $0x50] sm:%s416] %v445
                %v447 = vld [vmem:[%s423 + $0x98] sm:%s416]
                %448 = vst [vmem:[%s424 + $0x58] sm:%s416] %v447
                %v449 = vld [vmem:[%s423 + $0xc0] sm:%s416]
                %450 = vst [vmem:[%s424 + $0x60] sm:%s416] %v449
                %v451 = vld [vmem:[%s423 + $0xc8] sm:%s416]
                %452 = vst [vmem:[%s424 + $0x68] sm:%s416] %v451
                %v453 = vld [vmem:[%s423 + $0xd0] sm:%s416]
                %454 = vst [vmem:[%s424 + $0x70] sm:%s416] %v453
                %v455 = vld [vmem:[%s423 + $0xd8] sm:%s416]
                %456 = vst [vmem:[%s424 + $0x78] sm:%s416] %v455
              $region95: #{vanila_conv_forward.1} parent=89 // loop_footer
                %s422 = sadd.s32 1, %s418
              $region96: #{vanila_conv_forward.1} parent=89 // loop_footer_branch
                %417 = sbr.rel target = $region92
              $region97: #{vanila_conv_forward.1} parent=89 // loop_exit
                _
            $region90: #{vanila_conv_forward.1} parent=81 // pred_fallthru
              _
          $region82: #{vanila_conv_forward.1} parent=77 // pred_fallthru
            _
          %501 = vnop
        $region78: #{vanila_conv_forward.1} parent=35 // pred_fallthru
          _
        // Predicated region
        $region113: #{vanila_conv_forward.1} parent=35 // pred_check
          %p502 = pneg %p116
        $region114: #{vanila_conv_forward.1} parent=35 // pred_check_branch
          %504 = sbr.rel (%p502) target = $region116
        $region115: #{vanila_conv_forward.1} parent=35 // pred_region
          %s505 = sand.u32 %s106, 1
          %s506 = sand.u32 %s106, 1
          %s507 = smul.addr %s506, 128
          %s508 = scalar_lea.vmem [#allocation6], %s507
          %s509 = sadd.s32 %s22, 1
          %p510 = scmp.lt.s32.totalorder %s509, 1
          %s511 = scalar_select %p510, %s509, 1
          %s512 = smul.u32 4, %s511
          %s513 = smul.addr %s21, 32
          %s514 = sadd.s32 %s512, %s513
          %s515 = smul.addr %s514, 8
          %s516 = scalar_lea.vmem %s2, %s515
          // Predicated region
          $region117: #{vanila_conv_forward.1} parent=115 // pred_check
            _
          $region118: #{vanila_conv_forward.1} parent=115 // pred_check_branch
            %518 = sbr.rel (0) target = $region120
          $region119: #{vanila_conv_forward.1} parent=115 // pred_region
            // Predicated region
            $region121: #{vanila_conv_forward.1} parent=119 // pred_check
              _
            $region122: #{vanila_conv_forward.1} parent=119 // pred_check_branch
              %520 = sbr.rel (0) target = $region124
            $region123: #{vanila_conv_forward.1} parent=119 // pred_region
              // Predicated region
              $region136: #{vanila_conv_forward.1} parent=123 // pred_check
                _
              $region137: #{vanila_conv_forward.1} parent=123 // pred_check_branch
                %566 = sbr.rel (0) target = $region139
              $region138: #{vanila_conv_forward.1} parent=123 // pred_region
                loop: start=0, step=1, limit=1
                $region140: #{vanila_conv_forward.1} parent=138 // loop_pre_header
                  _
                $region141: #{vanila_conv_forward.1} parent=138 // loop_header
                  %s568 = sphi 0, %s572
                  %p569 = scmp.ge.s32.totalorder %s568, 1
                  %s573 = sphi %s516, %s516
                  %s574 = sphi %s508, %s508
                $region142: #{vanila_conv_forward.1} parent=138 // loop_header_branch
                  %571 = sbr.rel (%p569) target = $region146
                $region143: #{vanila_conv_forward.1} parent=138 // loop_body
                  %v575 = vld [vmem:[%s573] sm:$0xff]
                  %576 = vst [vmem:[%s574] sm:$0xff] %v575
                  %v577 = vld [vmem:[%s573 + $0x8] sm:$0xff]
                  %578 = vst [vmem:[%s574 + $0x8] sm:$0xff] %v577
                  %v579 = vld [vmem:[%s573 + $0x10] sm:$0xff]
                  %580 = vst [vmem:[%s574 + $0x10] sm:$0xff] %v579
                  %v581 = vld [vmem:[%s573 + $0x18] sm:$0xff]
                  %582 = vst [vmem:[%s574 + $0x18] sm:$0xff] %v581
                  %v583 = vld [vmem:[%s573 + $0x40] sm:$0xff]
                  %584 = vst [vmem:[%s574 + $0x20] sm:$0xff] %v583
                  %v585 = vld [vmem:[%s573 + $0x48] sm:$0xff]
                  %586 = vst [vmem:[%s574 + $0x28] sm:$0xff] %v585
                  %v587 = vld [vmem:[%s573 + $0x50] sm:$0xff]
                  %588 = vst [vmem:[%s574 + $0x30] sm:$0xff] %v587
                  %v589 = vld [vmem:[%s573 + $0x58] sm:$0xff]
                  %590 = vst [vmem:[%s574 + $0x38] sm:$0xff] %v589
                  %v591 = vld [vmem:[%s573 + $0x80] sm:$0xff]
                  %592 = vst [vmem:[%s574 + $0x40] sm:$0xff] %v591
                  %v593 = vld [vmem:[%s573 + $0x88] sm:$0xff]
                  %594 = vst [vmem:[%s574 + $0x48] sm:$0xff] %v593
                  %v595 = vld [vmem:[%s573 + $0x90] sm:$0xff]
                  %596 = vst [vmem:[%s574 + $0x50] sm:$0xff] %v595
                  %v597 = vld [vmem:[%s573 + $0x98] sm:$0xff]
                  %598 = vst [vmem:[%s574 + $0x58] sm:$0xff] %v597
                  %v599 = vld [vmem:[%s573 + $0xc0] sm:$0xff]
                  %600 = vst [vmem:[%s574 + $0x60] sm:$0xff] %v599
                  %v601 = vld [vmem:[%s573 + $0xc8] sm:$0xff]
                  %602 = vst [vmem:[%s574 + $0x68] sm:$0xff] %v601
                  %v603 = vld [vmem:[%s573 + $0xd0] sm:$0xff]
                  %604 = vst [vmem:[%s574 + $0x70] sm:$0xff] %v603
                  %v605 = vld [vmem:[%s573 + $0xd8] sm:$0xff]
                  %606 = vst [vmem:[%s574 + $0x78] sm:$0xff] %v605
                $region144: #{vanila_conv_forward.1} parent=138 // loop_footer
                  %s572 = sadd.s32 1, %s568
                $region145: #{vanila_conv_forward.1} parent=138 // loop_footer_branch
                  %567 = sbr.rel target = $region141
                $region146: #{vanila_conv_forward.1} parent=138 // loop_exit
                  _
              $region139: #{vanila_conv_forward.1} parent=123 // pred_fallthru
                _
              // Predicated region
              $region147: #{vanila_conv_forward.1} parent=123 // pred_check
                _
              $region148: #{vanila_conv_forward.1} parent=123 // pred_check_branch
                %608 = sbr.rel target = $region150
              $region149: #{vanila_conv_forward.1} parent=123 // pred_region
                _
              $region150: #{vanila_conv_forward.1} parent=123 // pred_fallthru
                _
            $region124: #{vanila_conv_forward.1} parent=119 // pred_fallthru
              _
            // Predicated region
            $region125: #{vanila_conv_forward.1} parent=119 // pred_check
              _
            $region126: #{vanila_conv_forward.1} parent=119 // pred_check_branch
              %522 = sbr.rel target = $region128
            $region127: #{vanila_conv_forward.1} parent=119 // pred_region
              %s524 = ssub.s32 256, 1
              loop: start=0, step=1, limit=1
              $region129: #{vanila_conv_forward.1} parent=127 // loop_pre_header
                _
              $region130: #{vanila_conv_forward.1} parent=127 // loop_header
                %s526 = sphi 0, %s530
                %p527 = scmp.ge.s32.totalorder %s526, 1
                %s531 = sphi %s516, %s516
                %s532 = sphi %s508, %s508
              $region131: #{vanila_conv_forward.1} parent=127 // loop_header_branch
                %529 = sbr.rel (%p527) target = $region135
              $region132: #{vanila_conv_forward.1} parent=127 // loop_body
                %v533 = vld [vmem:[%s531] sm:%s524]
                %534 = vst [vmem:[%s532] sm:%s524] %v533
                %v535 = vld [vmem:[%s531 + $0x8] sm:%s524]
                %536 = vst [vmem:[%s532 + $0x8] sm:%s524] %v535
                %v537 = vld [vmem:[%s531 + $0x10] sm:%s524]
                %538 = vst [vmem:[%s532 + $0x10] sm:%s524] %v537
                %v539 = vld [vmem:[%s531 + $0x18] sm:%s524]
                %540 = vst [vmem:[%s532 + $0x18] sm:%s524] %v539
                %v541 = vld [vmem:[%s531 + $0x40] sm:%s524]
                %542 = vst [vmem:[%s532 + $0x20] sm:%s524] %v541
                %v543 = vld [vmem:[%s531 + $0x48] sm:%s524]
                %544 = vst [vmem:[%s532 + $0x28] sm:%s524] %v543
                %v545 = vld [vmem:[%s531 + $0x50] sm:%s524]
                %546 = vst [vmem:[%s532 + $0x30] sm:%s524] %v545
                %v547 = vld [vmem:[%s531 + $0x58] sm:%s524]
                %548 = vst [vmem:[%s532 + $0x38] sm:%s524] %v547
                %v549 = vld [vmem:[%s531 + $0x80] sm:%s524]
                %550 = vst [vmem:[%s532 + $0x40] sm:%s524] %v549
                %v551 = vld [vmem:[%s531 + $0x88] sm:%s524]
                %552 = vst [vmem:[%s532 + $0x48] sm:%s524] %v551
                %v553 = vld [vmem:[%s531 + $0x90] sm:%s524]
                %554 = vst [vmem:[%s532 + $0x50] sm:%s524] %v553
                %v555 = vld [vmem:[%s531 + $0x98] sm:%s524]
                %556 = vst [vmem:[%s532 + $0x58] sm:%s524] %v555
                %v557 = vld [vmem:[%s531 + $0xc0] sm:%s524]
                %558 = vst [vmem:[%s532 + $0x60] sm:%s524] %v557
                %v559 = vld [vmem:[%s531 + $0xc8] sm:%s524]
                %560 = vst [vmem:[%s532 + $0x68] sm:%s524] %v559
                %v561 = vld [vmem:[%s531 + $0xd0] sm:%s524]
                %562 = vst [vmem:[%s532 + $0x70] sm:%s524] %v561
                %v563 = vld [vmem:[%s531 + $0xd8] sm:%s524]
                %564 = vst [vmem:[%s532 + $0x78] sm:%s524] %v563
              $region133: #{vanila_conv_forward.1} parent=127 // loop_footer
                %s530 = sadd.s32 1, %s526
              $region134: #{vanila_conv_forward.1} parent=127 // loop_footer_branch
                %525 = sbr.rel target = $region130
              $region135: #{vanila_conv_forward.1} parent=127 // loop_exit
                _
            $region128: #{vanila_conv_forward.1} parent=119 // pred_fallthru
              _
          $region120: #{vanila_conv_forward.1} parent=115 // pred_fallthru
            _
          %609 = vnop
        $region116: #{vanila_conv_forward.1} parent=35 // pred_fallthru
          _
      $region36: #{vanila_conv_forward.1} parent=5 // pred_fallthru
        _
      %p610 = scmp.le.s32.totalorder 1, %s14
      %p611 = scmp.lt.s32.totalorder %s14, 5
      %p612 = pnand %p610, %p611
      %p613 = pneg %p612
      // Predicated region
      $region151: #{vanila_conv_forward.1} parent=5 // pred_check
        _
      $region152: #{vanila_conv_forward.1} parent=5 // pred_check_branch
        %615 = sbr.rel (%p612) target = $region154
      $region153: #{vanila_conv_forward.1} parent=5 // pred_region
        %s616 = ssub.s32 %s14, 1
        %s617 = sand.u32 %s47, 1
        %s618 = sand.u32 %s47, 1
        %s619 = smul.addr %s618, 128
        %s620 = scalar_lea.vmem [#allocation4], %s619
        // Predicated region
        $region155: #{vanila_conv_forward.1} parent=153 // pred_check
          %p621 = pneg %p60
        $region156: #{vanila_conv_forward.1} parent=153 // pred_check_branch
          %623 = sbr.rel (%p621) target = $region158
        $region157: #{vanila_conv_forward.1} parent=153 // pred_region
          _
        $region158: #{vanila_conv_forward.1} parent=153 // pred_fallthru
          _
        %s624 = sand.u32 %s75, 1
        %s625 = sand.u32 %s75, 1
        %s626 = smul.addr %s625, 128
        %s627 = scalar_lea.vmem [#allocation5], %s626
        // Predicated region
        $region159: #{vanila_conv_forward.1} parent=153 // pred_check
          %p628 = pneg %p88
        $region160: #{vanila_conv_forward.1} parent=153 // pred_check_branch
          %630 = sbr.rel (%p628) target = $region162
        $region161: #{vanila_conv_forward.1} parent=153 // pred_region
          _
        $region162: #{vanila_conv_forward.1} parent=153 // pred_fallthru
          _
        %s631 = sand.u32 %s109, 1
        %s632 = sand.u32 %s109, 1
        %s633 = smul.addr %s632, 128
        %s634 = scalar_lea.vmem [#allocation6], %s633
        // Predicated region
        $region163: #{vanila_conv_forward.1} parent=153 // pred_check
          %p635 = pneg %p122
        $region164: #{vanila_conv_forward.1} parent=153 // pred_check_branch
          %637 = sbr.rel (%p635) target = $region166
        $region165: #{vanila_conv_forward.1} parent=153 // pred_region
          _
        $region166: #{vanila_conv_forward.1} parent=153 // pred_fallthru
          _
        %s638 = sand.u32 %s47, 1
        %s639 = sand.u32 %s47, 1
        %s640 = smul.addr %s639, 128
        %s641 = scalar_lea.vmem [#allocation4], %s640
        %p642 = pneg %p60
        %p643 = pneg %p57
        %s644 = sand.u32 %s75, 1
        %s645 = sand.u32 %s75, 1
        %s646 = smul.addr %s645, 128
        %s647 = scalar_lea.vmem [#allocation5], %s646
        %p648 = pneg %p88
        %p649 = pneg %p85
        %s650 = sand.u32 %s109, 1
        %s651 = sand.u32 %s109, 1
        %s652 = smul.addr %s651, 128
        %s653 = scalar_lea.vmem [#allocation6], %s652
        %p654 = pneg %p122
        %p655 = pneg %p119
        %p656 = pneg %p143
        %p657 = pneg %p140
        %p658 = pneg %p164
        %p659 = pneg %p161
        %p660 = pneg %p185
        %p661 = pneg %p182
        %p662 = pneg %p206
        %p663 = pneg %p203
        %p664 = pneg %p227
        %p665 = pneg %p224
        %p666 = pneg %p255
        %p667 = pneg %p252
        %s668 = smul.u32 4, %s24
        %p669 = scmp.lt.s32.totalorder %s23, 1
        %s670 = scalar_select %p669, %s23, 1
        %p671 = scmp.lt.s32.totalorder %s668, 7
        %s672 = scalar_select %p671, %s668, 7
        %s673 = smul.addr %s670, 8
        %s674 = sadd.s32 %s672, %s673
        %s675 = smul.addr %s674, 8
        %s676 = scalar_lea.vmem %s8, %s675
        %s677 = ssub.s32 %s24, 1
        %p678 = scmp.gt.s32.totalorder %s677, 0
        %s679 = scalar_select %p678, %s677, 0
        %s680 = smul.u32 4, %s679
        %s681 = smul.u32 4, %s24
        %s682 = sadd.s32 %s24, 1
        %p683 = scmp.lt.s32.totalorder %s682, 1
        %s684 = scalar_select %p683, %s682, 1
        %s685 = smul.u32 4, %s684
        %s686 = smul.u32 4, %s24
        %p687 = scmp.lt.s32.totalorder %s23, 1
        %s688 = scalar_select %p687, %s23, 1
        %p689 = scmp.lt.s32.totalorder %s686, 7
        %s690 = scalar_select %p689, %s686, 7
        %s691 = smul.addr %s688, 8
        %s692 = sadd.s32 %s690, %s691
        %s693 = smul.addr %s692, 8
        %s694 = scalar_lea.vmem %s8, %s693
        %s695 = smul.u32 4, %s24
        %p696 = scmp.gt.s32.totalorder %s24, 0
        %p697 = scmp.lt.s32.totalorder %s24, 1
        %v698 = vld [vmem:[%s3] sm:$0xf]
        %v699 = vld [vmem:[%s4] sm:$0x1]
        %v700 = vld [vmem:[%s5] sm:$0x7f]
        %v701 = vld [vmem:[%s5 + $0x8] sm:$0x7f]
        %v702 = vld [vmem:[%s5 + $0x10] sm:$0x7f]
        %v703 = vld [vmem:[%s5 + $0x18] sm:$0x7f]
        %v704 = vld [vmem:[%s5 + $0x20] sm:$0x7f]
        %v705 = vld [vmem:[%s5 + $0x28] sm:$0x7f]
        %v706 = vld [vmem:[%s5 + $0x30] sm:$0x7f]
        %v707 = vld [vmem:[%s6] sm:$0xff]
        %v708 = vld [vmem:[%s6 + $0x8] sm:$0xff]
        %v709 = vld [vmem:[%s6 + $0x10] sm:$0xff]
        %v710 = vld [vmem:[%s6 + $0x18] sm:$0xff]
        %v711 = vld [vmem:[%s6 + $0x20] sm:$0xff]
        %v712 = vld [vmem:[%s7] sm:$0x1]
        %vm713 = vcmask 58368
        %714 = vst.msk [vmem:[#allocation2] sm:$0x3] %vm713, 0.0
        %715 = vst.msk [vmem:[#allocation2 + $0x10] sm:$0x3] %vm713, 0.0
        %716 = vst.msk [vmem:[#allocation2 + $0x20] sm:$0x3] %vm713, 0.0
        %717 = vst.msk [vmem:[#allocation2 + $0x30] sm:$0x3] %vm713, 0.0
        %718 = vst.msk [vmem:[#allocation2 + $0x40] sm:$0x3] %vm713, 0.0
        %719 = vst.msk [vmem:[#allocation2 + $0x50] sm:$0x3] %vm713, 0.0
        %720 = vst.msk [vmem:[#allocation2 + $0x60] sm:$0x3] %vm713, 0.0
        %721 = vst.msk [vmem:[#allocation2 + $0x70] sm:$0x3] %vm713, 0.0
        %722 = vst.msk [vmem:[#allocation2 + $0x80] sm:$0x3] %vm713, 0.0
        %723 = vst.msk [vmem:[#allocation2 + $0x90] sm:$0x3] %vm713, 0.0
        %724 = vst.msk [vmem:[#allocation2 + $0xa0] sm:$0x3] %vm713, 0.0
        %725 = vst.msk [vmem:[#allocation2 + $0xb0] sm:$0x3] %vm713, 0.0
        %726 = vst.msk [vmem:[#allocation2 + $0xc0] sm:$0x3] %vm713, 0.0
        %727 = vst.msk [vmem:[#allocation2 + $0xd0] sm:$0x3] %vm713, 0.0
        %728 = vst.msk [vmem:[#allocation2 + $0xe0] sm:$0x3] %vm713, 0.0
        %729 = vst.msk [vmem:[#allocation2 + $0xf0] sm:$0x3] %vm713, 0.0
        %730 = vst.msk [vmem:[#allocation2 + $0x100] sm:$0x3] %vm713, 0.0
        %731 = vst.msk [vmem:[#allocation2 + $0x110] sm:$0x3] %vm713, 0.0
        %732 = vst.msk [vmem:[#allocation2 + $0x120] sm:$0x3] %vm713, 0.0
        %733 = vst.msk [vmem:[#allocation2 + $0x130] sm:$0x3] %vm713, 0.0
        %734 = vst.msk [vmem:[#allocation2 + $0x140] sm:$0x3] %vm713, 0.0
        %735 = vst.msk [vmem:[#allocation2 + $0x150] sm:$0x3] %vm713, 0.0
        %736 = vst.msk [vmem:[#allocation2 + $0x160] sm:$0x3] %vm713, 0.0
        %737 = vst.msk [vmem:[#allocation2 + $0x170] sm:$0x3] %vm713, 0.0
        %738 = vst.msk [vmem:[#allocation2 + $0x180] sm:$0x3] %vm713, 0.0
        %739 = vst.msk [vmem:[#allocation2 + $0x190] sm:$0x3] %vm713, 0.0
        %740 = vst.msk [vmem:[#allocation2 + $0x1a0] sm:$0x3] %vm713, 0.0
        %741 = vst.msk [vmem:[#allocation2 + $0x1b0] sm:$0x3] %vm713, 0.0
        %742 = vst.msk [vmem:[#allocation2 + $0x1c0] sm:$0x3] %vm713, 0.0
        %743 = vst.msk [vmem:[#allocation2 + $0x1d0] sm:$0x3] %vm713, 0.0
        %744 = vst.msk [vmem:[#allocation2 + $0x1e0] sm:$0x3] %vm713, 0.0
        %745 = vst.msk [vmem:[#allocation2 + $0x1f0] sm:$0x3] %vm713, 0.0
        %746 = vst.msk [vmem:[#allocation2 + $0x200] sm:$0x3] %vm713, 0.0
        %747 = vst.msk [vmem:[#allocation2 + $0x210] sm:$0x3] %vm713, 0.0
        %748 = vst.msk [vmem:[#allocation2 + $0x220] sm:$0x3] %vm713, 0.0
        %749 = vst.msk [vmem:[#allocation2 + $0x230] sm:$0x3] %vm713, 0.0
        %750 = vst.msk [vmem:[#allocation2 + $0x9] sm:$0x3] %vm713, 0.0
        %751 = vst.msk [vmem:[#allocation2 + $0x19] sm:$0x3] %vm713, 0.0
        %752 = vst.msk [vmem:[#allocation2 + $0x29] sm:$0x3] %vm713, 0.0
        %753 = vst.msk [vmem:[#allocation2 + $0x39] sm:$0x3] %vm713, 0.0
        %754 = vst.msk [vmem:[#allocation2 + $0x49] sm:$0x3] %vm713, 0.0
        %755 = vst.msk [vmem:[#allocation2 + $0x59] sm:$0x3] %vm713, 0.0
        %756 = vst.msk [vmem:[#allocation2 + $0x69] sm:$0x3] %vm713, 0.0
        %757 = vst.msk [vmem:[#allocation2 + $0x79] sm:$0x3] %vm713, 0.0
        %758 = vst.msk [vmem:[#allocation2 + $0x89] sm:$0x3] %vm713, 0.0
        %759 = vst.msk [vmem:[#allocation2 + $0x99] sm:$0x3] %vm713, 0.0
        %760 = vst.msk [vmem:[#allocation2 + $0xa9] sm:$0x3] %vm713, 0.0
        %761 = vst.msk [vmem:[#allocation2 + $0xb9] sm:$0x3] %vm713, 0.0
        %762 = vst.msk [vmem:[#allocation2 + $0xc9] sm:$0x3] %vm713, 0.0
        %763 = vst.msk [vmem:[#allocation2 + $0xd9] sm:$0x3] %vm713, 0.0
        %764 = vst.msk [vmem:[#allocation2 + $0xe9] sm:$0x3] %vm713, 0.0
        %765 = vst.msk [vmem:[#allocation2 + $0xf9] sm:$0x3] %vm713, 0.0
        %766 = vst.msk [vmem:[#allocation2 + $0x109] sm:$0x3] %vm713, 0.0
        %767 = vst.msk [vmem:[#allocation2 + $0x119] sm:$0x3] %vm713, 0.0
        %768 = vst.msk [vmem:[#allocation2 + $0x129] sm:$0x3] %vm713, 0.0
        %769 = vst.msk [vmem:[#allocation2 + $0x139] sm:$0x3] %vm713, 0.0
        %770 = vst.msk [vmem:[#allocation2 + $0x149] sm:$0x3] %vm713, 0.0
        %771 = vst.msk [vmem:[#allocation2 + $0x159] sm:$0x3] %vm713, 0.0
        %772 = vst.msk [vmem:[#allocation2 + $0x169] sm:$0x3] %vm713, 0.0
        %773 = vst.msk [vmem:[#allocation2 + $0x179] sm:$0x3] %vm713, 0.0
        %774 = vst.msk [vmem:[#allocation2 + $0x189] sm:$0x3] %vm713, 0.0
        %775 = vst.msk [vmem:[#allocation2 + $0x199] sm:$0x3] %vm713, 0.0
        %776 = vst.msk [vmem:[#allocation2 + $0x1a9] sm:$0x3] %vm713, 0.0
        %777 = vst.msk [vmem:[#allocation2 + $0x1b9] sm:$0x3] %vm713, 0.0
        %778 = vst.msk [vmem:[#allocation2 + $0x1c9] sm:$0x3] %vm713, 0.0
        %779 = vst.msk [vmem:[#allocation2 + $0x1d9] sm:$0x3] %vm713, 0.0
        %780 = vst.msk [vmem:[#allocation2 + $0x1e9] sm:$0x3] %vm713, 0.0
        %781 = vst.msk [vmem:[#allocation2 + $0x1f9] sm:$0x3] %vm713, 0.0
        %782 = vst.msk [vmem:[#allocation2 + $0x209] sm:$0x3] %vm713, 0.0
        %783 = vst.msk [vmem:[#allocation2 + $0x219] sm:$0x3] %vm713, 0.0
        %784 = vst.msk [vmem:[#allocation2 + $0x229] sm:$0x3] %vm713, 0.0
        %785 = vst.msk [vmem:[#allocation2 + $0x239] sm:$0x3] %vm713, 0.0
        %vm786 = vcmask 57344
        %787 = vst.msk [vmem:[#allocation3] sm:$0x1] %vm786, -inf
        %788 = vst.msk [vmem:[#allocation3 + $0x10] sm:$0x1] %vm786, -inf
        %789 = vst.msk [vmem:[#allocation3 + $0x20] sm:$0x1] %vm786, -inf
        %790 = vst.msk [vmem:[#allocation3 + $0x30] sm:$0x1] %vm786, -inf
        %791 = vst.msk [vmem:[#allocation3 + $0x40] sm:$0x1] %vm786, -inf
        %792 = vst.msk [vmem:[#allocation3 + $0x50] sm:$0x1] %vm786, -inf
        %793 = vst.msk [vmem:[#allocation3 + $0x60] sm:$0x1] %vm786, -inf
        %794 = vst.msk [vmem:[#allocation3 + $0x70] sm:$0x1] %vm786, -inf
        %795 = vst.msk [vmem:[#allocation3 + $0x80] sm:$0x1] %vm786, -inf
        %796 = vst.msk [vmem:[#allocation3 + $0x90] sm:$0x1] %vm786, -inf
        %797 = vst.msk [vmem:[#allocation3 + $0xa0] sm:$0x1] %vm786, -inf
        %798 = vst.msk [vmem:[#allocation3 + $0xb0] sm:$0x1] %vm786, -inf
        %799 = vst.msk [vmem:[#allocation3 + $0xc0] sm:$0x1] %vm786, -inf
        %800 = vst.msk [vmem:[#allocation3 + $0xd0] sm:$0x1] %vm786, -inf
        %801 = vst.msk [vmem:[#allocation3 + $0xe0] sm:$0x1] %vm786, -inf
        %802 = vst.msk [vmem:[#allocation3 + $0xf0] sm:$0x1] %vm786, -inf
        %803 = vst.msk [vmem:[#allocation3 + $0x100] sm:$0x1] %vm786, -inf
        %804 = vst.msk [vmem:[#allocation3 + $0x110] sm:$0x1] %vm786, -inf
        %805 = vst.msk [vmem:[#allocation3 + $0x120] sm:$0x1] %vm786, -inf
        %806 = vst.msk [vmem:[#allocation3 + $0x130] sm:$0x1] %vm786, -inf
        %s807 = scalar_lea.vmem %s620, 8 [#allocation4]
        %v808 = vld [vmem:[%s807] sm:$0xff]
        %v809 = vld [vmem:[%s807 + $0x8] sm:$0xff]
        %v810 = vld [vmem:[%s807 + $0x10] sm:$0xff]
        %v811 = vld [vmem:[%s807 + $0x20] sm:$0xff]
        %v812 = vld [vmem:[%s807 + $0x28] sm:$0xff]
        %v813 = vld [vmem:[%s807 + $0x30] sm:$0xff]
        %v814 = vld [vmem:[%s807 + $0x40] sm:$0xff]
        %v815 = vld [vmem:[%s807 + $0x48] sm:$0xff]
        %v816 = vld [vmem:[%s807 + $0x50] sm:$0xff]
        %v817 = vld [vmem:[%s807 + $0x60] sm:$0xff]
        %v818 = vld [vmem:[%s807 + $0x68] sm:$0xff]
        %v819 = vld [vmem:[%s807 + $0x70] sm:$0xff]
        %v821 = vperm.slane %v699, 0
        %vm823 = vcmask 31744
        %v825 = vsel %vm823, %v808, 0
        %v828 = vsel %vm823, %v809, 0
        %v831 = vsel %vm823, %v810, 0
        %v834 = vsel %vm823, %v811, 0
        %v837 = vsel %vm823, %v812, 0
        %v840 = vsel %vm823, %v813, 0
        %v843 = vsel %vm823, %v814, 0
        %v846 = vsel %vm823, %v815, 0
        %v849 = vsel %vm823, %v816, 0
        %v852 = vsel %vm823, %v817, 0
        %v855 = vsel %vm823, %v818, 0
        %v858 = vsel %vm823, %v819, 0
        %vm860 = vcmask 1043456
        %v862 = vsel %vm860, %v698, 0
        %864 = vmatpush.msra.mxu0 0.0
        %865 = vmatpush.msra.mxu0 0.0
        %866 = vmatpush.msra.mxu0 0.0
        %867 = vmatpush.msra.mxu0 0.0
        %868 = vmatpush.msra.mxu0 0.0
        %869 = vmatpush.msra.mxu0 0.0
        %870 = vmatpush.msra.mxu0 0.0
        %871 = vmatpush.msra.mxu0 0.0
        %872 = vmatpush.msra.mxu0 0.0
        %873 = vmatpush.msra.mxu0 0.0
        %874 = vmatpush.msra.mxu0 0.0
        %875 = vmatpush.msra.mxu0 0.0
        %876 = vmatpush.msra.mxu0 0.0
        %877 = vmatpush.msra.mxu0 0.0
        %878 = vmatpush.msra.mxu0 0.0
        %879 = vmatpush.msra.mxu0 %v862
        %880 = vmatmul.f32.gmra.mxu0 %v825
        %v881 = vpop.f32.mrf.mxu0
        %v882 = vadd.f32 %v821, %v881
        %883 = vmatmul.f32.gmra.mxu0 %v828
        %v884 = vpop.f32.mrf.mxu0
        %v885 = vadd.f32 %v821, %v884
        %886 = vmatmul.f32.gmra.mxu0 %v831
        %v887 = vpop.f32.mrf.mxu0
        %v888 = vadd.f32 %v821, %v887
        %889 = vmatmul.f32.gmra.mxu0 %v834
        %v890 = vpop.f32.mrf.mxu0
        %v891 = vadd.f32 %v821, %v890
        %892 = vmatmul.f32.gmra.mxu0 %v837
        %v893 = vpop.f32.mrf.mxu0
        %v894 = vadd.f32 %v821, %v893
        %895 = vmatmul.f32.gmra.mxu0 %v840
        %v896 = vpop.f32.mrf.mxu0
        %v897 = vadd.f32 %v821, %v896
        %898 = vmatmul.f32.gmra.mxu0 %v843
        %v899 = vpop.f32.mrf.mxu0
        %v900 = vadd.f32 %v821, %v899
        %901 = vmatmul.f32.gmra.mxu0 %v846
        %v902 = vpop.f32.mrf.mxu0
        %v903 = vadd.f32 %v821, %v902
        %904 = vmatmul.f32.gmra.mxu0 %v849
        %v905 = vpop.f32.mrf.mxu0
        %v906 = vadd.f32 %v821, %v905
        %907 = vmatmul.f32.gmra.mxu0 %v852
        %v908 = vpop.f32.mrf.mxu0
        %v909 = vadd.f32 %v821, %v908
        %910 = vmatmul.f32.gmra.mxu0 %v855
        %v911 = vpop.f32.mrf.mxu0
        %v912 = vadd.f32 %v821, %v911
        %913 = vmatmul.f32.gmra.mxu0 %v858
        %v914 = vpop.f32.mrf.mxu0
        %v915 = vadd.f32 %v821, %v914
        %916 = vdwg.mxu0
        %v917 = vmax.f32 %v882, 0.0
        %v918 = vmax.f32 %v885, 0.0
        %v919 = vmax.f32 %v888, 0.0
        %v920 = vmax.f32 %v891, 0.0
        %v921 = vmax.f32 %v894, 0.0
        %v922 = vmax.f32 %v897, 0.0
        %v923 = vmax.f32 %v900, 0.0
        %v924 = vmax.f32 %v903, 0.0
        %v925 = vmax.f32 %v906, 0.0
        %v926 = vmax.f32 %v909, 0.0
        %v927 = vmax.f32 %v912, 0.0
        %v928 = vmax.f32 %v915, 0.0
        %s929 = scalar_select %p696, 1, 0
        %v930 = vstv %s929
        %vm931 = vcmp.eq.s32.totalorder %v930, 1
        %v932 = vsel %vm931, %v917, 0.0
        %v933 = vsel %vm931, %v918, 0.0
        %v934 = vsel %vm931, %v919, 0.0
        %v935 = vsel %vm931, %v920, 0.0
        %v936 = vsel %vm931, %v921, 0.0
        %v937 = vsel %vm931, %v922, 0.0
        %v938 = vsel %vm931, %v923, 0.0
        %v939 = vsel %vm931, %v924, 0.0
        %v940 = vsel %vm931, %v925, 0.0
        %v941 = vsel %vm931, %v926, 0.0
        %v942 = vsel %vm931, %v927, 0.0
        %v943 = vsel %vm931, %v928, 0.0
        %v944 = vld [vmem:[%s627] sm:$0xff]
        %v945 = vld [vmem:[%s627 + $0x8] sm:$0xff]
        %v946 = vld [vmem:[%s627 + $0x10] sm:$0xff]
        %v947 = vld [vmem:[%s627 + $0x18] sm:$0xff]
        %v948 = vld [vmem:[%s627 + $0x20] sm:$0xff]
        %v949 = vld [vmem:[%s627 + $0x28] sm:$0xff]
        %v950 = vld [vmem:[%s627 + $0x30] sm:$0xff]
        %v951 = vld [vmem:[%s627 + $0x38] sm:$0xff]
        %v952 = vld [vmem:[%s627 + $0x40] sm:$0xff]
        %v953 = vld [vmem:[%s627 + $0x48] sm:$0xff]
        %v954 = vld [vmem:[%s627 + $0x50] sm:$0xff]
        %v955 = vld [vmem:[%s627 + $0x58] sm:$0xff]
        %v956 = vld [vmem:[%s627 + $0x60] sm:$0xff]
        %v957 = vld [vmem:[%s627 + $0x68] sm:$0xff]
        %v958 = vld [vmem:[%s627 + $0x70] sm:$0xff]
        %v959 = vld [vmem:[%s627 + $0x78] sm:$0xff]
        %v961 = vsel %vm823, %v944, 0
        %v964 = vsel %vm823, %v945, 0
        %v967 = vsel %vm823, %v946, 0
        %v970 = vsel %vm823, %v947, 0
        %v973 = vsel %vm823, %v948, 0
        %v976 = vsel %vm823, %v949, 0
        %v979 = vsel %vm823, %v950, 0
        %v982 = vsel %vm823, %v951, 0
        %v985 = vsel %vm823, %v952, 0
        %v988 = vsel %vm823, %v953, 0
        %v991 = vsel %vm823, %v954, 0
        %v994 = vsel %vm823, %v955, 0
        %v997 = vsel %vm823, %v956, 0
        %v1000 = vsel %vm823, %v957, 0
        %v1003 = vsel %vm823, %v958, 0
        %v1006 = vsel %vm823, %v959, 0
        %1008 = vmatpush.msra.mxu0 0.0
        %1009 = vmatpush.msra.mxu0 0.0
        %1010 = vmatpush.msra.mxu0 0.0
        %1011 = vmatpush.msra.mxu0 0.0
        %1012 = vmatpush.msra.mxu0 0.0
        %1013 = vmatpush.msra.mxu0 0.0
        %1014 = vmatpush.msra.mxu0 0.0
        %1015 = vmatpush.msra.mxu0 0.0
        %1016 = vmatpush.msra.mxu0 0.0
        %1017 = vmatpush.msra.mxu0 0.0
        %1018 = vmatpush.msra.mxu0 0.0
        %1019 = vmatpush.msra.mxu0 0.0
        %1020 = vmatpush.msra.mxu0 0.0
        %1021 = vmatpush.msra.mxu0 0.0
        %1022 = vmatpush.msra.mxu0 0.0
        %1023 = vmatpush.msra.mxu0 %v862
        %1024 = vmatmul.f32.gmra.mxu0 %v961
        %v1025 = vpop.f32.mrf.mxu0
        %v1026 = vadd.f32 %v821, %v1025
        %1027 = vmatmul.f32.gmra.mxu0 %v964
        %v1028 = vpop.f32.mrf.mxu0
        %v1029 = vadd.f32 %v821, %v1028
        %1030 = vmatmul.f32.gmra.mxu0 %v967
        %v1031 = vpop.f32.mrf.mxu0
        %v1032 = vadd.f32 %v821, %v1031
        %1033 = vmatmul.f32.gmra.mxu0 %v970
        %v1034 = vpop.f32.mrf.mxu0
        %v1035 = vadd.f32 %v821, %v1034
        %1036 = vmatmul.f32.gmra.mxu0 %v973
        %v1037 = vpop.f32.mrf.mxu0
        %v1038 = vadd.f32 %v821, %v1037
        %1039 = vmatmul.f32.gmra.mxu0 %v976
        %v1040 = vpop.f32.mrf.mxu0
        %v1041 = vadd.f32 %v821, %v1040
        %1042 = vmatmul.f32.gmra.mxu0 %v979
        %v1043 = vpop.f32.mrf.mxu0
        %v1044 = vadd.f32 %v821, %v1043
        %1045 = vmatmul.f32.gmra.mxu0 %v982
        %v1046 = vpop.f32.mrf.mxu0
        %v1047 = vadd.f32 %v821, %v1046
        %1048 = vmatmul.f32.gmra.mxu0 %v985
        %v1049 = vpop.f32.mrf.mxu0
        %v1050 = vadd.f32 %v821, %v1049
        %1051 = vmatmul.f32.gmra.mxu0 %v988
        %v1052 = vpop.f32.mrf.mxu0
        %v1053 = vadd.f32 %v821, %v1052
        %1054 = vmatmul.f32.gmra.mxu0 %v991
        %v1055 = vpop.f32.mrf.mxu0
        %v1056 = vadd.f32 %v821, %v1055
        %1057 = vmatmul.f32.gmra.mxu0 %v994
        %v1058 = vpop.f32.mrf.mxu0
        %v1059 = vadd.f32 %v821, %v1058
        %1060 = vmatmul.f32.gmra.mxu0 %v997
        %v1061 = vpop.f32.mrf.mxu0
        %v1062 = vadd.f32 %v821, %v1061
        %1063 = vmatmul.f32.gmra.mxu0 %v1000
        %v1064 = vpop.f32.mrf.mxu0
        %v1065 = vadd.f32 %v821, %v1064
        %1066 = vmatmul.f32.gmra.mxu0 %v1003
        %v1067 = vpop.f32.mrf.mxu0
        %v1068 = vadd.f32 %v821, %v1067
        %1069 = vmatmul.f32.gmra.mxu0 %v1006
        %v1070 = vpop.f32.mrf.mxu0
        %v1071 = vadd.f32 %v821, %v1070
        %1072 = vdwg.mxu0
        %v1073 = vmax.f32 %v1026, 0.0
        %v1074 = vmax.f32 %v1029, 0.0
        %v1075 = vmax.f32 %v1032, 0.0
        %v1076 = vmax.f32 %v1035, 0.0
        %v1077 = vmax.f32 %v1038, 0.0
        %v1078 = vmax.f32 %v1041, 0.0
        %v1079 = vmax.f32 %v1044, 0.0
        %v1080 = vmax.f32 %v1047, 0.0
        %v1081 = vmax.f32 %v1050, 0.0
        %v1082 = vmax.f32 %v1053, 0.0
        %v1083 = vmax.f32 %v1056, 0.0
        %v1084 = vmax.f32 %v1059, 0.0
        %v1085 = vmax.f32 %v1062, 0.0
        %v1086 = vmax.f32 %v1065, 0.0
        %v1087 = vmax.f32 %v1068, 0.0
        %v1088 = vmax.f32 %v1071, 0.0
        %v1089 = vld [vmem:[%s634] sm:$0xff]
        %v1090 = vld [vmem:[%s634 + $0x8] sm:$0xff]
        %v1091 = vld [vmem:[%s634 + $0x20] sm:$0xff]
        %v1092 = vld [vmem:[%s634 + $0x28] sm:$0xff]
        %v1093 = vld [vmem:[%s634 + $0x40] sm:$0xff]
        %v1094 = vld [vmem:[%s634 + $0x48] sm:$0xff]
        %v1095 = vld [vmem:[%s634 + $0x60] sm:$0xff]
        %v1096 = vld [vmem:[%s634 + $0x68] sm:$0xff]
        %v1098 = vsel %vm823, %v1089, 0
        %v1101 = vsel %vm823, %v1090, 0
        %v1104 = vsel %vm823, %v1091, 0
        %v1107 = vsel %vm823, %v1092, 0
        %v1110 = vsel %vm823, %v1093, 0
        %v1113 = vsel %vm823, %v1094, 0
        %v1116 = vsel %vm823, %v1095, 0
        %v1119 = vsel %vm823, %v1096, 0
        %1121 = vmatpush.msra.mxu0 0.0
        %1122 = vmatpush.msra.mxu0 0.0
        %1123 = vmatpush.msra.mxu0 0.0
        %1124 = vmatpush.msra.mxu0 0.0
        %1125 = vmatpush.msra.mxu0 0.0
        %1126 = vmatpush.msra.mxu0 0.0
        %1127 = vmatpush.msra.mxu0 0.0
        %1128 = vmatpush.msra.mxu0 0.0
        %1129 = vmatpush.msra.mxu0 0.0
        %1130 = vmatpush.msra.mxu0 0.0
        %1131 = vmatpush.msra.mxu0 0.0
        %1132 = vmatpush.msra.mxu0 0.0
        %1133 = vmatpush.msra.mxu0 0.0
        %1134 = vmatpush.msra.mxu0 0.0
        %1135 = vmatpush.msra.mxu0 0.0
        %1136 = vmatpush.msra.mxu0 %v862
        %1137 = vmatmul.f32.gmra.mxu0 %v1098
        %v1138 = vpop.f32.mrf.mxu0
        %v1139 = vadd.f32 %v821, %v1138
        %1140 = vmatmul.f32.gmra.mxu0 %v1101
        %v1141 = vpop.f32.mrf.mxu0
        %v1142 = vadd.f32 %v821, %v1141
        %1143 = vmatmul.f32.gmra.mxu0 %v1104
        %v1144 = vpop.f32.mrf.mxu0
        %v1145 = vadd.f32 %v821, %v1144
        %1146 = vmatmul.f32.gmra.mxu0 %v1107
        %v1147 = vpop.f32.mrf.mxu0
        %v1148 = vadd.f32 %v821, %v1147
        %1149 = vmatmul.f32.gmra.mxu0 %v1110
        %v1150 = vpop.f32.mrf.mxu0
        %v1151 = vadd.f32 %v821, %v1150
        %1152 = vmatmul.f32.gmra.mxu0 %v1113
        %v1153 = vpop.f32.mrf.mxu0
        %v1154 = vadd.f32 %v821, %v1153
        %1155 = vmatmul.f32.gmra.mxu0 %v1116
        %v1156 = vpop.f32.mrf.mxu0
        %v1157 = vadd.f32 %v821, %v1156
        %1158 = vmatmul.f32.gmra.mxu0 %v1119
        %v1159 = vpop.f32.mrf.mxu0
        %v1160 = vadd.f32 %v821, %v1159
        %1161 = vdwg.mxu0
        %v1162 = vmax.f32 %v1139, 0.0
        %v1163 = vmax.f32 %v1142, 0.0
        %v1164 = vmax.f32 %v1145, 0.0
        %v1165 = vmax.f32 %v1148, 0.0
        %v1166 = vmax.f32 %v1151, 0.0
        %v1167 = vmax.f32 %v1154, 0.0
        %v1168 = vmax.f32 %v1157, 0.0
        %v1169 = vmax.f32 %v1160, 0.0
        %s1170 = scalar_select %p697, 1, 0
        %v1171 = vstv %s1170
        %vm1172 = vcmp.eq.s32.totalorder %v1171, 1
        %v1173 = vsel %vm1172, %v1162, 0.0
        %v1174 = vsel %vm1172, %v1163, 0.0
        %v1175 = vsel %vm1172, %v1164, 0.0
        %v1176 = vsel %vm1172, %v1165, 0.0
        %v1177 = vsel %vm1172, %v1166, 0.0
        %v1178 = vsel %vm1172, %v1167, 0.0
        %v1179 = vsel %vm1172, %v1168, 0.0
        %v1180 = vsel %vm1172, %v1169, 0.0
        %s1181 = scalar_lea.vmem [#allocation2], 432
        %vm1182 = vcmask 64512
        %1183 = vst.msk [vmem:[%s1181 + $0x1] sm:$0xff] %vm1182, %v932
        %1184 = vst.msk [vmem:[%s1181 + $0x11] sm:$0xff] %vm1182, %v933
        %1185 = vst.msk [vmem:[%s1181 + $0x21] sm:$0xff] %vm1182, %v934
        %s1186 = scalar_lea.vmem [#allocation2], 480
        %1187 = vst.msk [vmem:[%s1186 + $0x1] sm:$0xff] %vm1182, %v1073
        %1188 = vst.msk [vmem:[%s1186 + $0x11] sm:$0xff] %vm1182, %v1074
        %1189 = vst.msk [vmem:[%s1186 + $0x21] sm:$0xff] %vm1182, %v1075
        %1190 = vst.msk [vmem:[%s1186 + $0x31] sm:$0xff] %vm1182, %v1076
        %s1191 = scalar_lea.vmem [#allocation2], 544
        %1192 = vst.msk [vmem:[%s1191 + $0x1] sm:$0xff] %vm1182, %v1173
        %1193 = vst.msk [vmem:[%s1191 + $0x11] sm:$0xff] %vm1182, %v1174
        %s1194 = scalar_lea.vmem [#allocation2], 288
        %1195 = vst.msk [vmem:[%s1194 + $0x2] sm:$0xff] %vm1182, %v935
        %1196 = vst.msk [vmem:[%s1194 + $0x12] sm:$0xff] %vm1182, %v936
        %1197 = vst.msk [vmem:[%s1194 + $0x22] sm:$0xff] %vm1182, %v937
        %s1198 = scalar_lea.vmem [#allocation2], 336
        %1199 = vst.msk [vmem:[%s1198 + $0x2] sm:$0xff] %vm1182, %v1077
        %1200 = vst.msk [vmem:[%s1198 + $0x12] sm:$0xff] %vm1182, %v1078
        %1201 = vst.msk [vmem:[%s1198 + $0x22] sm:$0xff] %vm1182, %v1079
        %1202 = vst.msk [vmem:[%s1198 + $0x32] sm:$0xff] %vm1182, %v1080
        %s1203 = scalar_lea.vmem [#allocation2], 400
        %1204 = vst.msk [vmem:[%s1203 + $0x2] sm:$0xff] %vm1182, %v1175
        %1205 = vst.msk [vmem:[%s1203 + $0x12] sm:$0xff] %vm1182, %v1176
        %s1206 = scalar_lea.vmem [#allocation2], 144
        %1207 = vst.msk [vmem:[%s1206 + $0x1] sm:$0xff] %vm1182, %v938
        %1208 = vst.msk [vmem:[%s1206 + $0x11] sm:$0xff] %vm1182, %v939
        %1209 = vst.msk [vmem:[%s1206 + $0x21] sm:$0xff] %vm1182, %v940
        %s1210 = scalar_lea.vmem [#allocation2], 192
        %1211 = vst.msk [vmem:[%s1210 + $0x1] sm:$0xff] %vm1182, %v1081
        %1212 = vst.msk [vmem:[%s1210 + $0x11] sm:$0xff] %vm1182, %v1082
        %1213 = vst.msk [vmem:[%s1210 + $0x21] sm:$0xff] %vm1182, %v1083
        %1214 = vst.msk [vmem:[%s1210 + $0x31] sm:$0xff] %vm1182, %v1084
        %s1215 = scalar_lea.vmem [#allocation2], 256
        %1216 = vst.msk [vmem:[%s1215 + $0x1] sm:$0xff] %vm1182, %v1177
        %1217 = vst.msk [vmem:[%s1215 + $0x11] sm:$0xff] %vm1182, %v1178
        %1218 = vst.msk [vmem:[#allocation2 + $0x2] sm:$0xff] %vm1182, %v941
        %1219 = vst.msk [vmem:[#allocation2 + $0x12] sm:$0xff] %vm1182, %v942
        %1220 = vst.msk [vmem:[#allocation2 + $0x22] sm:$0xff] %vm1182, %v943
        %s1221 = scalar_lea.vmem [#allocation2], 48
        %1222 = vst.msk [vmem:[%s1221 + $0x2] sm:$0xff] %vm1182, %v1085
        %1223 = vst.msk [vmem:[%s1221 + $0x12] sm:$0xff] %vm1182, %v1086
        %1224 = vst.msk [vmem:[%s1221 + $0x22] sm:$0xff] %vm1182, %v1087
        %1225 = vst.msk [vmem:[%s1221 + $0x32] sm:$0xff] %vm1182, %v1088
        %s1226 = scalar_lea.vmem [#allocation2], 112
        %1227 = vst.msk [vmem:[%s1226 + $0x2] sm:$0xff] %vm1182, %v1179
        %1228 = vst.msk [vmem:[%s1226 + $0x12] sm:$0xff] %vm1182, %v1180
        %v1229 = vld [vmem:[#allocation2] sm:$0xff]
        %v1230 = vld [vmem:[#allocation2 + $0x10] sm:$0xff]
        %v1231 = vld [vmem:[#allocation2 + $0x20] sm:$0xff]
        %v1232 = vld [vmem:[#allocation2 + $0x30] sm:$0xff]
        %v1233 = vld [vmem:[#allocation2 + $0x40] sm:$0xff]
        %v1234 = vld [vmem:[#allocation2 + $0x50] sm:$0xff]
        %v1235 = vld [vmem:[#allocation2 + $0x60] sm:$0xff]
        %v1236 = vld [vmem:[#allocation2 + $0x70] sm:$0xff]
        %v1237 = vld [vmem:[%s1194 + $0x10] sm:$0xff]
        %v1238 = vld [vmem:[%s1194 + $0x20] sm:$0xff]
        %v1239 = vld [vmem:[%s1194 + $0x30] sm:$0xff]
        %v1240 = vld [vmem:[%s1194 + $0x40] sm:$0xff]
        %v1241 = vld [vmem:[%s1194 + $0x50] sm:$0xff]
        %v1242 = vld [vmem:[%s1194 + $0x60] sm:$0xff]
        %v1243 = vld [vmem:[%s1194 + $0x70] sm:$0xff]
        %v1244 = vld [vmem:[%s1194 + $0x80] sm:$0xff]
        %v1245 = vperm.slane %v700, 0
        %v1246 = vmul.f32 %v1229, %v1245
        %v1247 = vmul.f32 %v1230, %v1245
        %v1248 = vmul.f32 %v1231, %v1245
        %v1249 = vmul.f32 %v1232, %v1245
        %v1250 = vmul.f32 %v1233, %v1245
        %v1251 = vperm.slane %v701, 0
        %v1252 = vmul.f32 %v1237, %v1251
        %v1253 = vmul.f32 %v1238, %v1251
        %v1254 = vmul.f32 %v1239, %v1251
        %v1255 = vmul.f32 %v1240, %v1251
        %v1256 = vmul.f32 %v1241, %v1251
        %v1257 = vadd.f32 %v1246, %v1252
        %v1258 = vadd.f32 %v1247, %v1253
        %v1259 = vadd.f32 %v1248, %v1254
        %v1260 = vadd.f32 %v1249, %v1255
        %v1261 = vadd.f32 %v1250, %v1256
        %v1262 = vperm.slane %v702, 0
        %v1263 = vmul.f32 %v1230, %v1262
        %v1264 = vmul.f32 %v1231, %v1262
        %v1265 = vmul.f32 %v1232, %v1262
        %v1266 = vmul.f32 %v1233, %v1262
        %v1267 = vmul.f32 %v1234, %v1262
        %v1268 = vadd.f32 %v1257, %v1263
        %v1269 = vadd.f32 %v1258, %v1264
        %v1270 = vadd.f32 %v1259, %v1265
        %v1271 = vadd.f32 %v1260, %v1266
        %v1272 = vadd.f32 %v1261, %v1267
        %v1273 = vperm.slane %v703, 0
        %v1274 = vmul.f32 %v1238, %v1273
        %v1275 = vmul.f32 %v1239, %v1273
        %v1276 = vmul.f32 %v1240, %v1273
        %v1277 = vmul.f32 %v1241, %v1273
        %v1278 = vmul.f32 %v1242, %v1273
        %v1279 = vadd.f32 %v1268, %v1274
        %v1280 = vadd.f32 %v1269, %v1275
        %v1281 = vadd.f32 %v1270, %v1276
        %v1282 = vadd.f32 %v1271, %v1277
        %v1283 = vadd.f32 %v1272, %v1278
        %v1284 = vperm.slane %v704, 0
        %v1285 = vmul.f32 %v1231, %v1284
        %v1286 = vmul.f32 %v1232, %v1284
        %v1287 = vmul.f32 %v1233, %v1284
        %v1288 = vmul.f32 %v1234, %v1284
        %v1289 = vmul.f32 %v1235, %v1284
        %v1290 = vadd.f32 %v1279, %v1285
        %v1291 = vadd.f32 %v1280, %v1286
        %v1292 = vadd.f32 %v1281, %v1287
        %v1293 = vadd.f32 %v1282, %v1288
        %v1294 = vadd.f32 %v1283, %v1289
        %v1295 = vperm.slane %v705, 0
        %v1296 = vmul.f32 %v1239, %v1295
        %v1297 = vmul.f32 %v1240, %v1295
        %v1298 = vmul.f32 %v1241, %v1295
        %v1299 = vmul.f32 %v1242, %v1295
        %v1300 = vmul.f32 %v1243, %v1295
        %v1301 = vadd.f32 %v1290, %v1296
        %v1302 = vadd.f32 %v1291, %v1297
        %v1303 = vadd.f32 %v1292, %v1298
        %v1304 = vadd.f32 %v1293, %v1299
        %v1305 = vadd.f32 %v1294, %v1300
        %v1306 = vperm.slane %v706, 0
        %v1307 = vmul.f32 %v1232, %v1306
        %v1308 = vmul.f32 %v1233, %v1306
        %v1309 = vmul.f32 %v1234, %v1306
        %v1310 = vmul.f32 %v1235, %v1306
        %v1311 = vmul.f32 %v1236, %v1306
        %v1312 = vadd.f32 %v1301, %v1307
        %v1313 = vadd.f32 %v1302, %v1308
        %v1314 = vadd.f32 %v1303, %v1309
        %v1315 = vadd.f32 %v1304, %v1310
        %v1316 = vadd.f32 %v1305, %v1311
        %v1317 = vmul.f32 %v1237, %v1245
        %v1318 = vmul.f32 %v1238, %v1245
        %v1319 = vmul.f32 %v1239, %v1245
        %v1320 = vmul.f32 %v1240, %v1245
        %v1321 = vmul.f32 %v1241, %v1245
        %v1322 = vmul.f32 %v1230, %v1251
        %v1323 = vmul.f32 %v1231, %v1251
        %v1324 = vmul.f32 %v1232, %v1251
        %v1325 = vmul.f32 %v1233, %v1251
        %v1326 = vmul.f32 %v1234, %v1251
        %v1327 = vadd.f32 %v1317, %v1322
        %v1328 = vadd.f32 %v1318, %v1323
        %v1329 = vadd.f32 %v1319, %v1324
        %v1330 = vadd.f32 %v1320, %v1325
        %v1331 = vadd.f32 %v1321, %v1326
        %v1332 = vmul.f32 %v1238, %v1262
        %v1333 = vmul.f32 %v1239, %v1262
        %v1334 = vmul.f32 %v1240, %v1262
        %v1335 = vmul.f32 %v1241, %v1262
        %v1336 = vmul.f32 %v1242, %v1262
        %v1337 = vadd.f32 %v1327, %v1332
        %v1338 = vadd.f32 %v1328, %v1333
        %v1339 = vadd.f32 %v1329, %v1334
        %v1340 = vadd.f32 %v1330, %v1335
        %v1341 = vadd.f32 %v1331, %v1336
        %v1342 = vmul.f32 %v1231, %v1273
        %v1343 = vmul.f32 %v1232, %v1273
        %v1344 = vmul.f32 %v1233, %v1273
        %v1345 = vmul.f32 %v1234, %v1273
        %v1346 = vmul.f32 %v1235, %v1273
        %v1347 = vadd.f32 %v1337, %v1342
        %v1348 = vadd.f32 %v1338, %v1343
        %v1349 = vadd.f32 %v1339, %v1344
        %v1350 = vadd.f32 %v1340, %v1345
        %v1351 = vadd.f32 %v1341, %v1346
        %v1352 = vmul.f32 %v1239, %v1284
        %v1353 = vmul.f32 %v1240, %v1284
        %v1354 = vmul.f32 %v1241, %v1284
        %v1355 = vmul.f32 %v1242, %v1284
        %v1356 = vmul.f32 %v1243, %v1284
        %v1357 = vadd.f32 %v1347, %v1352
        %v1358 = vadd.f32 %v1348, %v1353
        %v1359 = vadd.f32 %v1349, %v1354
        %v1360 = vadd.f32 %v1350, %v1355
        %v1361 = vadd.f32 %v1351, %v1356
        %v1362 = vmul.f32 %v1232, %v1295
        %v1363 = vmul.f32 %v1233, %v1295
        %v1364 = vmul.f32 %v1234, %v1295
        %v1365 = vmul.f32 %v1235, %v1295
        %v1366 = vmul.f32 %v1236, %v1295
        %v1367 = vadd.f32 %v1357, %v1362
        %v1368 = vadd.f32 %v1358, %v1363
        %v1369 = vadd.f32 %v1359, %v1364
        %v1370 = vadd.f32 %v1360, %v1365
        %v1371 = vadd.f32 %v1361, %v1366
        %v1372 = vmul.f32 %v1240, %v1306
        %v1373 = vmul.f32 %v1241, %v1306
        %v1374 = vmul.f32 %v1242, %v1306
        %v1375 = vmul.f32 %v1243, %v1306
        %v1376 = vmul.f32 %v1244, %v1306
        %v1377 = vadd.f32 %v1367, %v1372
        %v1378 = vadd.f32 %v1368, %v1373
        %v1379 = vadd.f32 %v1369, %v1374
        %v1380 = vadd.f32 %v1370, %v1375
        %v1381 = vadd.f32 %v1371, %v1376
        %v1382 = vld [vmem:[%s1206] sm:$0xff]
        %v1383 = vld [vmem:[%s1206 + $0x10] sm:$0xff]
        %v1384 = vld [vmem:[%s1206 + $0x20] sm:$0xff]
        %v1385 = vld [vmem:[%s1206 + $0x30] sm:$0xff]
        %v1386 = vld [vmem:[%s1206 + $0x40] sm:$0xff]
        %v1387 = vld [vmem:[%s1206 + $0x50] sm:$0xff]
        %v1388 = vld [vmem:[%s1206 + $0x60] sm:$0xff]
        %v1389 = vld [vmem:[%s1206 + $0x70] sm:$0xff]
        %v1390 = vld [vmem:[%s1181 + $0x10] sm:$0xff]
        %v1391 = vld [vmem:[%s1181 + $0x20] sm:$0xff]
        %v1392 = vld [vmem:[%s1181 + $0x30] sm:$0xff]
        %v1393 = vld [vmem:[%s1181 + $0x40] sm:$0xff]
        %v1394 = vld [vmem:[%s1181 + $0x50] sm:$0xff]
        %v1395 = vld [vmem:[%s1181 + $0x60] sm:$0xff]
        %v1396 = vld [vmem:[%s1181 + $0x70] sm:$0xff]
        %v1397 = vld [vmem:[%s1181 + $0x80] sm:$0xff]
        %v1398 = vperm.slane %v700, 1
        %v1399 = vmul.f32 %v1382, %v1398
        %v1400 = vmul.f32 %v1383, %v1398
        %v1401 = vmul.f32 %v1384, %v1398
        %v1402 = vmul.f32 %v1385, %v1398
        %v1403 = vmul.f32 %v1386, %v1398
        %v1404 = vadd.f32 %v1312, %v1399
        %v1405 = vadd.f32 %v1313, %v1400
        %v1406 = vadd.f32 %v1314, %v1401
        %v1407 = vadd.f32 %v1315, %v1402
        %v1408 = vadd.f32 %v1316, %v1403
        %v1409 = vperm.slane %v701, 1
        %v1410 = vmul.f32 %v1390, %v1409
        %v1411 = vmul.f32 %v1391, %v1409
        %v1412 = vmul.f32 %v1392, %v1409
        %v1413 = vmul.f32 %v1393, %v1409
        %v1414 = vmul.f32 %v1394, %v1409
        %v1415 = vadd.f32 %v1404, %v1410
        %v1416 = vadd.f32 %v1405, %v1411
        %v1417 = vadd.f32 %v1406, %v1412
        %v1418 = vadd.f32 %v1407, %v1413
        %v1419 = vadd.f32 %v1408, %v1414
        %v1420 = vperm.slane %v702, 1
        %v1421 = vmul.f32 %v1383, %v1420
        %v1422 = vmul.f32 %v1384, %v1420
        %v1423 = vmul.f32 %v1385, %v1420
        %v1424 = vmul.f32 %v1386, %v1420
        %v1425 = vmul.f32 %v1387, %v1420
        %v1426 = vadd.f32 %v1415, %v1421
        %v1427 = vadd.f32 %v1416, %v1422
        %v1428 = vadd.f32 %v1417, %v1423
        %v1429 = vadd.f32 %v1418, %v1424
        %v1430 = vadd.f32 %v1419, %v1425
        %v1431 = vperm.slane %v703, 1
        %v1432 = vmul.f32 %v1391, %v1431
        %v1433 = vmul.f32 %v1392, %v1431
        %v1434 = vmul.f32 %v1393, %v1431
        %v1435 = vmul.f32 %v1394, %v1431
        %v1436 = vmul.f32 %v1395, %v1431
        %v1437 = vadd.f32 %v1426, %v1432
        %v1438 = vadd.f32 %v1427, %v1433
        %v1439 = vadd.f32 %v1428, %v1434
        %v1440 = vadd.f32 %v1429, %v1435
        %v1441 = vadd.f32 %v1430, %v1436
        %v1442 = vperm.slane %v704, 1
        %v1443 = vmul.f32 %v1384, %v1442
        %v1444 = vmul.f32 %v1385, %v1442
        %v1445 = vmul.f32 %v1386, %v1442
        %v1446 = vmul.f32 %v1387, %v1442
        %v1447 = vmul.f32 %v1388, %v1442
        %v1448 = vadd.f32 %v1437, %v1443
        %v1449 = vadd.f32 %v1438, %v1444
        %v1450 = vadd.f32 %v1439, %v1445
        %v1451 = vadd.f32 %v1440, %v1446
        %v1452 = vadd.f32 %v1441, %v1447
        %v1453 = vperm.slane %v705, 1
        %v1454 = vmul.f32 %v1392, %v1453
        %v1455 = vmul.f32 %v1393, %v1453
        %v1456 = vmul.f32 %v1394, %v1453
        %v1457 = vmul.f32 %v1395, %v1453
        %v1458 = vmul.f32 %v1396, %v1453
        %v1459 = vadd.f32 %v1448, %v1454
        %v1460 = vadd.f32 %v1449, %v1455
        %v1461 = vadd.f32 %v1450, %v1456
        %v1462 = vadd.f32 %v1451, %v1457
        %v1463 = vadd.f32 %v1452, %v1458
        %v1464 = vperm.slane %v706, 1
        %v1465 = vmul.f32 %v1385, %v1464
        %v1466 = vmul.f32 %v1386, %v1464
        %v1467 = vmul.f32 %v1387, %v1464
        %v1468 = vmul.f32 %v1388, %v1464
        %v1469 = vmul.f32 %v1389, %v1464
        %v1470 = vadd.f32 %v1459, %v1465
        %v1471 = vadd.f32 %v1460, %v1466
        %v1472 = vadd.f32 %v1461, %v1467
        %v1473 = vadd.f32 %v1462, %v1468
        %v1474 = vadd.f32 %v1463, %v1469
        %v1475 = vmul.f32 %v1390, %v1398
        %v1476 = vmul.f32 %v1391, %v1398
        %v1477 = vmul.f32 %v1392, %v1398
        %v1478 = vmul.f32 %v1393, %v1398
        %v1479 = vmul.f32 %v1394, %v1398
        %v1480 = vadd.f32 %v1377, %v1475
        %v1481 = vadd.f32 %v1378, %v1476
        %v1482 = vadd.f32 %v1379, %v1477
        %v1483 = vadd.f32 %v1380, %v1478
        %v1484 = vadd.f32 %v1381, %v1479
        %v1485 = vmul.f32 %v1383, %v1409
        %v1486 = vmul.f32 %v1384, %v1409
        %v1487 = vmul.f32 %v1385, %v1409
        %v1488 = vmul.f32 %v1386, %v1409
        %v1489 = vmul.f32 %v1387, %v1409
        %v1490 = vadd.f32 %v1480, %v1485
        %v1491 = vadd.f32 %v1481, %v1486
        %v1492 = vadd.f32 %v1482, %v1487
        %v1493 = vadd.f32 %v1483, %v1488
        %v1494 = vadd.f32 %v1484, %v1489
        %v1495 = vmul.f32 %v1391, %v1420
        %v1496 = vmul.f32 %v1392, %v1420
        %v1497 = vmul.f32 %v1393, %v1420
        %v1498 = vmul.f32 %v1394, %v1420
        %v1499 = vmul.f32 %v1395, %v1420
        %v1500 = vadd.f32 %v1490, %v1495
        %v1501 = vadd.f32 %v1491, %v1496
        %v1502 = vadd.f32 %v1492, %v1497
        %v1503 = vadd.f32 %v1493, %v1498
        %v1504 = vadd.f32 %v1494, %v1499
        %v1505 = vmul.f32 %v1384, %v1431
        %v1506 = vmul.f32 %v1385, %v1431
        %v1507 = vmul.f32 %v1386, %v1431
        %v1508 = vmul.f32 %v1387, %v1431
        %v1509 = vmul.f32 %v1388, %v1431
        %v1510 = vadd.f32 %v1500, %v1505
        %v1511 = vadd.f32 %v1501, %v1506
        %v1512 = vadd.f32 %v1502, %v1507
        %v1513 = vadd.f32 %v1503, %v1508
        %v1514 = vadd.f32 %v1504, %v1509
        %v1515 = vmul.f32 %v1392, %v1442
        %v1516 = vmul.f32 %v1393, %v1442
        %v1517 = vmul.f32 %v1394, %v1442
        %v1518 = vmul.f32 %v1395, %v1442
        %v1519 = vmul.f32 %v1396, %v1442
        %v1520 = vadd.f32 %v1510, %v1515
        %v1521 = vadd.f32 %v1511, %v1516
        %v1522 = vadd.f32 %v1512, %v1517
        %v1523 = vadd.f32 %v1513, %v1518
        %v1524 = vadd.f32 %v1514, %v1519
        %v1525 = vmul.f32 %v1385, %v1453
        %v1526 = vmul.f32 %v1386, %v1453
        %v1527 = vmul.f32 %v1387, %v1453
        %v1528 = vmul.f32 %v1388, %v1453
        %v1529 = vmul.f32 %v1389, %v1453
        %v1530 = vadd.f32 %v1520, %v1525
        %v1531 = vadd.f32 %v1521, %v1526
        %v1532 = vadd.f32 %v1522, %v1527
        %v1533 = vadd.f32 %v1523, %v1528
        %v1534 = vadd.f32 %v1524, %v1529
        %v1535 = vmul.f32 %v1393, %v1464
        %v1536 = vmul.f32 %v1394, %v1464
        %v1537 = vmul.f32 %v1395, %v1464
        %v1538 = vmul.f32 %v1396, %v1464
        %v1539 = vmul.f32 %v1397, %v1464
        %v1540 = vadd.f32 %v1530, %v1535
        %v1541 = vadd.f32 %v1531, %v1536
        %v1542 = vadd.f32 %v1532, %v1537
        %v1543 = vadd.f32 %v1533, %v1538
        %v1544 = vadd.f32 %v1534, %v1539
        %v1545 = vld [vmem:[#allocation2 + $0x1] sm:$0xff]
        %v1546 = vld [vmem:[#allocation2 + $0x11] sm:$0xff]
        %v1547 = vld [vmem:[#allocation2 + $0x21] sm:$0xff]
        %v1548 = vld [vmem:[#allocation2 + $0x31] sm:$0xff]
        %v1549 = vld [vmem:[#allocation2 + $0x41] sm:$0xff]
        %v1550 = vld [vmem:[#allocation2 + $0x51] sm:$0xff]
        %v1551 = vld [vmem:[#allocation2 + $0x61] sm:$0xff]
        %v1552 = vld [vmem:[#allocation2 + $0x71] sm:$0xff]
        %v1553 = vld [vmem:[%s1194 + $0x11] sm:$0xff]
        %v1554 = vld [vmem:[%s1194 + $0x21] sm:$0xff]
        %v1555 = vld [vmem:[%s1194 + $0x31] sm:$0xff]
        %v1556 = vld [vmem:[%s1194 + $0x41] sm:$0xff]
        %v1557 = vld [vmem:[%s1194 + $0x51] sm:$0xff]
        %v1558 = vld [vmem:[%s1194 + $0x61] sm:$0xff]
        %v1559 = vld [vmem:[%s1194 + $0x71] sm:$0xff]
        %v1560 = vld [vmem:[%s1194 + $0x81] sm:$0xff]
        %v1561 = vperm.slane %v700, 2
        %v1562 = vmul.f32 %v1545, %v1561
        %v1563 = vmul.f32 %v1546, %v1561
        %v1564 = vmul.f32 %v1547, %v1561
        %v1565 = vmul.f32 %v1548, %v1561
        %v1566 = vmul.f32 %v1549, %v1561
        %v1567 = vadd.f32 %v1470, %v1562
        %v1568 = vadd.f32 %v1471, %v1563
        %v1569 = vadd.f32 %v1472, %v1564
        %v1570 = vadd.f32 %v1473, %v1565
        %v1571 = vadd.f32 %v1474, %v1566
        %v1572 = vperm.slane %v701, 2
        %v1573 = vmul.f32 %v1553, %v1572
        %v1574 = vmul.f32 %v1554, %v1572
        %v1575 = vmul.f32 %v1555, %v1572
        %v1576 = vmul.f32 %v1556, %v1572
        %v1577 = vmul.f32 %v1557, %v1572
        %v1578 = vadd.f32 %v1567, %v1573
        %v1579 = vadd.f32 %v1568, %v1574
        %v1580 = vadd.f32 %v1569, %v1575
        %v1581 = vadd.f32 %v1570, %v1576
        %v1582 = vadd.f32 %v1571, %v1577
        %v1583 = vperm.slane %v702, 2
        %v1584 = vmul.f32 %v1546, %v1583
        %v1585 = vmul.f32 %v1547, %v1583
        %v1586 = vmul.f32 %v1548, %v1583
        %v1587 = vmul.f32 %v1549, %v1583
        %v1588 = vmul.f32 %v1550, %v1583
        %v1589 = vadd.f32 %v1578, %v1584
        %v1590 = vadd.f32 %v1579, %v1585
        %v1591 = vadd.f32 %v1580, %v1586
        %v1592 = vadd.f32 %v1581, %v1587
        %v1593 = vadd.f32 %v1582, %v1588
        %v1594 = vperm.slane %v703, 2
        %v1595 = vmul.f32 %v1554, %v1594
        %v1596 = vmul.f32 %v1555, %v1594
        %v1597 = vmul.f32 %v1556, %v1594
        %v1598 = vmul.f32 %v1557, %v1594
        %v1599 = vmul.f32 %v1558, %v1594
        %v1600 = vadd.f32 %v1589, %v1595
        %v1601 = vadd.f32 %v1590, %v1596
        %v1602 = vadd.f32 %v1591, %v1597
        %v1603 = vadd.f32 %v1592, %v1598
        %v1604 = vadd.f32 %v1593, %v1599
        %v1605 = vperm.slane %v704, 2
        %v1606 = vmul.f32 %v1547, %v1605
        %v1607 = vmul.f32 %v1548, %v1605
        %v1608 = vmul.f32 %v1549, %v1605
        %v1609 = vmul.f32 %v1550, %v1605
        %v1610 = vmul.f32 %v1551, %v1605
        %v1611 = vadd.f32 %v1600, %v1606
        %v1612 = vadd.f32 %v1601, %v1607
        %v1613 = vadd.f32 %v1602, %v1608
        %v1614 = vadd.f32 %v1603, %v1609
        %v1615 = vadd.f32 %v1604, %v1610
        %v1616 = vperm.slane %v705, 2
        %v1617 = vmul.f32 %v1555, %v1616
        %v1618 = vmul.f32 %v1556, %v1616
        %v1619 = vmul.f32 %v1557, %v1616
        %v1620 = vmul.f32 %v1558, %v1616
        %v1621 = vmul.f32 %v1559, %v1616
        %v1622 = vadd.f32 %v1611, %v1617
        %v1623 = vadd.f32 %v1612, %v1618
        %v1624 = vadd.f32 %v1613, %v1619
        %v1625 = vadd.f32 %v1614, %v1620
        %v1626 = vadd.f32 %v1615, %v1621
        %v1627 = vperm.slane %v706, 2
        %v1628 = vmul.f32 %v1548, %v1627
        %v1629 = vmul.f32 %v1549, %v1627
        %v1630 = vmul.f32 %v1550, %v1627
        %v1631 = vmul.f32 %v1551, %v1627
        %v1632 = vmul.f32 %v1552, %v1627
        %v1633 = vadd.f32 %v1622, %v1628
        %v1634 = vadd.f32 %v1623, %v1629
        %v1635 = vadd.f32 %v1624, %v1630
        %v1636 = vadd.f32 %v1625, %v1631
        %v1637 = vadd.f32 %v1626, %v1632
        %v1638 = vmul.f32 %v1553, %v1561
        %v1639 = vmul.f32 %v1554, %v1561
        %v1640 = vmul.f32 %v1555, %v1561
        %v1641 = vmul.f32 %v1556, %v1561
        %v1642 = vmul.f32 %v1557, %v1561
        %v1643 = vadd.f32 %v1540, %v1638
        %v1644 = vadd.f32 %v1541, %v1639
        %v1645 = vadd.f32 %v1542, %v1640
        %v1646 = vadd.f32 %v1543, %v1641
        %v1647 = vadd.f32 %v1544, %v1642
        %v1648 = vmul.f32 %v1546, %v1572
        %v1649 = vmul.f32 %v1547, %v1572
        %v1650 = vmul.f32 %v1548, %v1572
        %v1651 = vmul.f32 %v1549, %v1572
        %v1652 = vmul.f32 %v1550, %v1572
        %v1653 = vadd.f32 %v1643, %v1648
        %v1654 = vadd.f32 %v1644, %v1649
        %v1655 = vadd.f32 %v1645, %v1650
        %v1656 = vadd.f32 %v1646, %v1651
        %v1657 = vadd.f32 %v1647, %v1652
        %v1658 = vmul.f32 %v1554, %v1583
        %v1659 = vmul.f32 %v1555, %v1583
        %v1660 = vmul.f32 %v1556, %v1583
        %v1661 = vmul.f32 %v1557, %v1583
        %v1662 = vmul.f32 %v1558, %v1583
        %v1663 = vadd.f32 %v1653, %v1658
        %v1664 = vadd.f32 %v1654, %v1659
        %v1665 = vadd.f32 %v1655, %v1660
        %v1666 = vadd.f32 %v1656, %v1661
        %v1667 = vadd.f32 %v1657, %v1662
        %v1668 = vmul.f32 %v1547, %v1594
        %v1669 = vmul.f32 %v1548, %v1594
        %v1670 = vmul.f32 %v1549, %v1594
        %v1671 = vmul.f32 %v1550, %v1594
        %v1672 = vmul.f32 %v1551, %v1594
        %v1673 = vadd.f32 %v1663, %v1668
        %v1674 = vadd.f32 %v1664, %v1669
        %v1675 = vadd.f32 %v1665, %v1670
        %v1676 = vadd.f32 %v1666, %v1671
        %v1677 = vadd.f32 %v1667, %v1672
        %v1678 = vmul.f32 %v1555, %v1605
        %v1679 = vmul.f32 %v1556, %v1605
        %v1680 = vmul.f32 %v1557, %v1605
        %v1681 = vmul.f32 %v1558, %v1605
        %v1682 = vmul.f32 %v1559, %v1605
        %v1683 = vadd.f32 %v1673, %v1678
        %v1684 = vadd.f32 %v1674, %v1679
        %v1685 = vadd.f32 %v1675, %v1680
        %v1686 = vadd.f32 %v1676, %v1681
        %v1687 = vadd.f32 %v1677, %v1682
        %v1688 = vmul.f32 %v1548, %v1616
        %v1689 = vmul.f32 %v1549, %v1616
        %v1690 = vmul.f32 %v1550, %v1616
        %v1691 = vmul.f32 %v1551, %v1616
        %v1692 = vmul.f32 %v1552, %v1616
        %v1693 = vadd.f32 %v1683, %v1688
        %v1694 = vadd.f32 %v1684, %v1689
        %v1695 = vadd.f32 %v1685, %v1690
        %v1696 = vadd.f32 %v1686, %v1691
        %v1697 = vadd.f32 %v1687, %v1692
        %v1698 = vmul.f32 %v1556, %v1627
        %v1699 = vmul.f32 %v1557, %v1627
        %v1700 = vmul.f32 %v1558, %v1627
        %v1701 = vmul.f32 %v1559, %v1627
        %v1702 = vmul.f32 %v1560, %v1627
        %v1703 = vadd.f32 %v1693, %v1698
        %v1704 = vadd.f32 %v1694, %v1699
        %v1705 = vadd.f32 %v1695, %v1700
        %v1706 = vadd.f32 %v1696, %v1701
        %v1707 = vadd.f32 %v1697, %v1702
        %v1708 = vld [vmem:[%s1206 + $0x1] sm:$0xff]
        %v1709 = vld [vmem:[%s1206 + $0x11] sm:$0xff]
        %v1710 = vld [vmem:[%s1206 + $0x21] sm:$0xff]
        %v1711 = vld [vmem:[%s1206 + $0x31] sm:$0xff]
        %v1712 = vld [vmem:[%s1206 + $0x41] sm:$0xff]
        %v1713 = vld [vmem:[%s1206 + $0x51] sm:$0xff]
        %v1714 = vld [vmem:[%s1206 + $0x61] sm:$0xff]
        %v1715 = vld [vmem:[%s1206 + $0x71] sm:$0xff]
        %v1716 = vld [vmem:[%s1181 + $0x11] sm:$0xff]
        %v1717 = vld [vmem:[%s1181 + $0x21] sm:$0xff]
        %v1718 = vld [vmem:[%s1181 + $0x31] sm:$0xff]
        %v1719 = vld [vmem:[%s1181 + $0x41] sm:$0xff]
        %v1720 = vld [vmem:[%s1181 + $0x51] sm:$0xff]
        %v1721 = vld [vmem:[%s1181 + $0x61] sm:$0xff]
        %v1722 = vld [vmem:[%s1181 + $0x71] sm:$0xff]
        %v1723 = vld [vmem:[%s1181 + $0x81] sm:$0xff]
        %v1724 = vperm.slane %v700, 3
        %v1725 = vmul.f32 %v1708, %v1724
        %v1726 = vmul.f32 %v1709, %v1724
        %v1727 = vmul.f32 %v1710, %v1724
        %v1728 = vmul.f32 %v1711, %v1724
        %v1729 = vmul.f32 %v1712, %v1724
        %v1730 = vadd.f32 %v1633, %v1725
        %v1731 = vadd.f32 %v1634, %v1726
        %v1732 = vadd.f32 %v1635, %v1727
        %v1733 = vadd.f32 %v1636, %v1728
        %v1734 = vadd.f32 %v1637, %v1729
        %v1735 = vperm.slane %v701, 3
        %v1736 = vmul.f32 %v1716, %v1735
        %v1737 = vmul.f32 %v1717, %v1735
        %v1738 = vmul.f32 %v1718, %v1735
        %v1739 = vmul.f32 %v1719, %v1735
        %v1740 = vmul.f32 %v1720, %v1735
        %v1741 = vadd.f32 %v1730, %v1736
        %v1742 = vadd.f32 %v1731, %v1737
        %v1743 = vadd.f32 %v1732, %v1738
        %v1744 = vadd.f32 %v1733, %v1739
        %v1745 = vadd.f32 %v1734, %v1740
        %v1746 = vperm.slane %v702, 3
        %v1747 = vmul.f32 %v1709, %v1746
        %v1748 = vmul.f32 %v1710, %v1746
        %v1749 = vmul.f32 %v1711, %v1746
        %v1750 = vmul.f32 %v1712, %v1746
        %v1751 = vmul.f32 %v1713, %v1746
        %v1752 = vadd.f32 %v1741, %v1747
        %v1753 = vadd.f32 %v1742, %v1748
        %v1754 = vadd.f32 %v1743, %v1749
        %v1755 = vadd.f32 %v1744, %v1750
        %v1756 = vadd.f32 %v1745, %v1751
        %v1757 = vperm.slane %v703, 3
        %v1758 = vmul.f32 %v1717, %v1757
        %v1759 = vmul.f32 %v1718, %v1757
        %v1760 = vmul.f32 %v1719, %v1757
        %v1761 = vmul.f32 %v1720, %v1757
        %v1762 = vmul.f32 %v1721, %v1757
        %v1763 = vadd.f32 %v1752, %v1758
        %v1764 = vadd.f32 %v1753, %v1759
        %v1765 = vadd.f32 %v1754, %v1760
        %v1766 = vadd.f32 %v1755, %v1761
        %v1767 = vadd.f32 %v1756, %v1762
        %v1768 = vperm.slane %v704, 3
        %v1769 = vmul.f32 %v1710, %v1768
        %v1770 = vmul.f32 %v1711, %v1768
        %v1771 = vmul.f32 %v1712, %v1768
        %v1772 = vmul.f32 %v1713, %v1768
        %v1773 = vmul.f32 %v1714, %v1768
        %v1774 = vadd.f32 %v1763, %v1769
        %v1775 = vadd.f32 %v1764, %v1770
        %v1776 = vadd.f32 %v1765, %v1771
        %v1777 = vadd.f32 %v1766, %v1772
        %v1778 = vadd.f32 %v1767, %v1773
        %v1779 = vperm.slane %v705, 3
        %v1780 = vmul.f32 %v1718, %v1779
        %v1781 = vmul.f32 %v1719, %v1779
        %v1782 = vmul.f32 %v1720, %v1779
        %v1783 = vmul.f32 %v1721, %v1779
        %v1784 = vmul.f32 %v1722, %v1779
        %v1785 = vadd.f32 %v1774, %v1780
        %v1786 = vadd.f32 %v1775, %v1781
        %v1787 = vadd.f32 %v1776, %v1782
        %v1788 = vadd.f32 %v1777, %v1783
        %v1789 = vadd.f32 %v1778, %v1784
        %v1790 = vperm.slane %v706, 3
        %v1791 = vmul.f32 %v1711, %v1790
        %v1792 = vmul.f32 %v1712, %v1790
        %v1793 = vmul.f32 %v1713, %v1790
        %v1794 = vmul.f32 %v1714, %v1790
        %v1795 = vmul.f32 %v1715, %v1790
        %v1796 = vadd.f32 %v1785, %v1791
        %v1797 = vadd.f32 %v1786, %v1792
        %v1798 = vadd.f32 %v1787, %v1793
        %v1799 = vadd.f32 %v1788, %v1794
        %v1800 = vadd.f32 %v1789, %v1795
        %v1801 = vmul.f32 %v1716, %v1724
        %v1802 = vmul.f32 %v1717, %v1724
        %v1803 = vmul.f32 %v1718, %v1724
        %v1804 = vmul.f32 %v1719, %v1724
        %v1805 = vmul.f32 %v1720, %v1724
        %v1806 = vadd.f32 %v1703, %v1801
        %v1807 = vadd.f32 %v1704, %v1802
        %v1808 = vadd.f32 %v1705, %v1803
        %v1809 = vadd.f32 %v1706, %v1804
        %v1810 = vadd.f32 %v1707, %v1805
        %v1811 = vmul.f32 %v1709, %v1735
        %v1812 = vmul.f32 %v1710, %v1735
        %v1813 = vmul.f32 %v1711, %v1735
        %v1814 = vmul.f32 %v1712, %v1735
        %v1815 = vmul.f32 %v1713, %v1735
        %v1816 = vadd.f32 %v1806, %v1811
        %v1817 = vadd.f32 %v1807, %v1812
        %v1818 = vadd.f32 %v1808, %v1813
        %v1819 = vadd.f32 %v1809, %v1814
        %v1820 = vadd.f32 %v1810, %v1815
        %v1821 = vmul.f32 %v1717, %v1746
        %v1822 = vmul.f32 %v1718, %v1746
        %v1823 = vmul.f32 %v1719, %v1746
        %v1824 = vmul.f32 %v1720, %v1746
        %v1825 = vmul.f32 %v1721, %v1746
        %v1826 = vadd.f32 %v1816, %v1821
        %v1827 = vadd.f32 %v1817, %v1822
        %v1828 = vadd.f32 %v1818, %v1823
        %v1829 = vadd.f32 %v1819, %v1824
        %v1830 = vadd.f32 %v1820, %v1825
        %v1831 = vmul.f32 %v1710, %v1757
        %v1832 = vmul.f32 %v1711, %v1757
        %v1833 = vmul.f32 %v1712, %v1757
        %v1834 = vmul.f32 %v1713, %v1757
        %v1835 = vmul.f32 %v1714, %v1757
        %v1836 = vadd.f32 %v1826, %v1831
        %v1837 = vadd.f32 %v1827, %v1832
        %v1838 = vadd.f32 %v1828, %v1833
        %v1839 = vadd.f32 %v1829, %v1834
        %v1840 = vadd.f32 %v1830, %v1835
        %v1841 = vmul.f32 %v1718, %v1768
        %v1842 = vmul.f32 %v1719, %v1768
        %v1843 = vmul.f32 %v1720, %v1768
        %v1844 = vmul.f32 %v1721, %v1768
        %v1845 = vmul.f32 %v1722, %v1768
        %v1846 = vadd.f32 %v1836, %v1841
        %v1847 = vadd.f32 %v1837, %v1842
        %v1848 = vadd.f32 %v1838, %v1843
        %v1849 = vadd.f32 %v1839, %v1844
        %v1850 = vadd.f32 %v1840, %v1845
        %v1851 = vmul.f32 %v1711, %v1779
        %v1852 = vmul.f32 %v1712, %v1779
        %v1853 = vmul.f32 %v1713, %v1779
        %v1854 = vmul.f32 %v1714, %v1779
        %v1855 = vmul.f32 %v1715, %v1779
        %v1856 = vadd.f32 %v1846, %v1851
        %v1857 = vadd.f32 %v1847, %v1852
        %v1858 = vadd.f32 %v1848, %v1853
        %v1859 = vadd.f32 %v1849, %v1854
        %v1860 = vadd.f32 %v1850, %v1855
        %v1861 = vmul.f32 %v1719, %v1790
        %v1862 = vmul.f32 %v1720, %v1790
        %v1863 = vmul.f32 %v1721, %v1790
        %v1864 = vmul.f32 %v1722, %v1790
        %v1865 = vmul.f32 %v1723, %v1790
        %v1866 = vadd.f32 %v1856, %v1861
        %v1867 = vadd.f32 %v1857, %v1862
        %v1868 = vadd.f32 %v1858, %v1863
        %v1869 = vadd.f32 %v1859, %v1864
        %v1870 = vadd.f32 %v1860, %v1865
        %v1871 = vld [vmem:[#allocation2 + $0x2] sm:$0xff]
        %v1872 = vld [vmem:[#allocation2 + $0x12] sm:$0xff]
        %v1873 = vld [vmem:[#allocation2 + $0x22] sm:$0xff]
        %v1874 = vld [vmem:[#allocation2 + $0x32] sm:$0xff]
        %v1875 = vld [vmem:[#allocation2 + $0x42] sm:$0xff]
        %v1876 = vld [vmem:[#allocation2 + $0x52] sm:$0xff]
        %v1877 = vld [vmem:[#allocation2 + $0x62] sm:$0xff]
        %v1878 = vld [vmem:[#allocation2 + $0x72] sm:$0xff]
        %v1879 = vld [vmem:[%s1194 + $0x12] sm:$0xff]
        %v1880 = vld [vmem:[%s1194 + $0x22] sm:$0xff]
        %v1881 = vld [vmem:[%s1194 + $0x32] sm:$0xff]
        %v1882 = vld [vmem:[%s1194 + $0x42] sm:$0xff]
        %v1883 = vld [vmem:[%s1194 + $0x52] sm:$0xff]
        %v1884 = vld [vmem:[%s1194 + $0x62] sm:$0xff]
        %v1885 = vld [vmem:[%s1194 + $0x72] sm:$0xff]
        %v1886 = vld [vmem:[%s1194 + $0x82] sm:$0xff]
        %v1887 = vperm.slane %v700, 4
        %v1888 = vmul.f32 %v1871, %v1887
        %v1889 = vmul.f32 %v1872, %v1887
        %v1890 = vmul.f32 %v1873, %v1887
        %v1891 = vmul.f32 %v1874, %v1887
        %v1892 = vmul.f32 %v1875, %v1887
        %v1893 = vadd.f32 %v1796, %v1888
        %v1894 = vadd.f32 %v1797, %v1889
        %v1895 = vadd.f32 %v1798, %v1890
        %v1896 = vadd.f32 %v1799, %v1891
        %v1897 = vadd.f32 %v1800, %v1892
        %v1898 = vperm.slane %v701, 4
        %v1899 = vmul.f32 %v1879, %v1898
        %v1900 = vmul.f32 %v1880, %v1898
        %v1901 = vmul.f32 %v1881, %v1898
        %v1902 = vmul.f32 %v1882, %v1898
        %v1903 = vmul.f32 %v1883, %v1898
        %v1904 = vadd.f32 %v1893, %v1899
        %v1905 = vadd.f32 %v1894, %v1900
        %v1906 = vadd.f32 %v1895, %v1901
        %v1907 = vadd.f32 %v1896, %v1902
        %v1908 = vadd.f32 %v1897, %v1903
        %v1909 = vperm.slane %v702, 4
        %v1910 = vmul.f32 %v1872, %v1909
        %v1911 = vmul.f32 %v1873, %v1909
        %v1912 = vmul.f32 %v1874, %v1909
        %v1913 = vmul.f32 %v1875, %v1909
        %v1914 = vmul.f32 %v1876, %v1909
        %v1915 = vadd.f32 %v1904, %v1910
        %v1916 = vadd.f32 %v1905, %v1911
        %v1917 = vadd.f32 %v1906, %v1912
        %v1918 = vadd.f32 %v1907, %v1913
        %v1919 = vadd.f32 %v1908, %v1914
        %v1920 = vperm.slane %v703, 4
        %v1921 = vmul.f32 %v1880, %v1920
        %v1922 = vmul.f32 %v1881, %v1920
        %v1923 = vmul.f32 %v1882, %v1920
        %v1924 = vmul.f32 %v1883, %v1920
        %v1925 = vmul.f32 %v1884, %v1920
        %v1926 = vadd.f32 %v1915, %v1921
        %v1927 = vadd.f32 %v1916, %v1922
        %v1928 = vadd.f32 %v1917, %v1923
        %v1929 = vadd.f32 %v1918, %v1924
        %v1930 = vadd.f32 %v1919, %v1925
        %v1931 = vperm.slane %v704, 4
        %v1932 = vmul.f32 %v1873, %v1931
        %v1933 = vmul.f32 %v1874, %v1931
        %v1934 = vmul.f32 %v1875, %v1931
        %v1935 = vmul.f32 %v1876, %v1931
        %v1936 = vmul.f32 %v1877, %v1931
        %v1937 = vadd.f32 %v1926, %v1932
        %v1938 = vadd.f32 %v1927, %v1933
        %v1939 = vadd.f32 %v1928, %v1934
        %v1940 = vadd.f32 %v1929, %v1935
        %v1941 = vadd.f32 %v1930, %v1936
        %v1942 = vperm.slane %v705, 4
        %v1943 = vmul.f32 %v1881, %v1942
        %v1944 = vmul.f32 %v1882, %v1942
        %v1945 = vmul.f32 %v1883, %v1942
        %v1946 = vmul.f32 %v1884, %v1942
        %v1947 = vmul.f32 %v1885, %v1942
        %v1948 = vadd.f32 %v1937, %v1943
        %v1949 = vadd.f32 %v1938, %v1944
        %v1950 = vadd.f32 %v1939, %v1945
        %v1951 = vadd.f32 %v1940, %v1946
        %v1952 = vadd.f32 %v1941, %v1947
        %v1953 = vperm.slane %v706, 4
        %v1954 = vmul.f32 %v1874, %v1953
        %v1955 = vmul.f32 %v1875, %v1953
        %v1956 = vmul.f32 %v1876, %v1953
        %v1957 = vmul.f32 %v1877, %v1953
        %v1958 = vmul.f32 %v1878, %v1953
        %v1959 = vadd.f32 %v1948, %v1954
        %v1960 = vadd.f32 %v1949, %v1955
        %v1961 = vadd.f32 %v1950, %v1956
        %v1962 = vadd.f32 %v1951, %v1957
        %v1963 = vadd.f32 %v1952, %v1958
        %v1964 = vmul.f32 %v1879, %v1887
        %v1965 = vmul.f32 %v1880, %v1887
        %v1966 = vmul.f32 %v1881, %v1887
        %v1967 = vmul.f32 %v1882, %v1887
        %v1968 = vmul.f32 %v1883, %v1887
        %v1969 = vadd.f32 %v1866, %v1964
        %v1970 = vadd.f32 %v1867, %v1965
        %v1971 = vadd.f32 %v1868, %v1966
        %v1972 = vadd.f32 %v1869, %v1967
        %v1973 = vadd.f32 %v1870, %v1968
        %v1974 = vmul.f32 %v1872, %v1898
        %v1975 = vmul.f32 %v1873, %v1898
        %v1976 = vmul.f32 %v1874, %v1898
        %v1977 = vmul.f32 %v1875, %v1898
        %v1978 = vmul.f32 %v1876, %v1898
        %v1979 = vadd.f32 %v1969, %v1974
        %v1980 = vadd.f32 %v1970, %v1975
        %v1981 = vadd.f32 %v1971, %v1976
        %v1982 = vadd.f32 %v1972, %v1977
        %v1983 = vadd.f32 %v1973, %v1978
        %v1984 = vmul.f32 %v1880, %v1909
        %v1985 = vmul.f32 %v1881, %v1909
        %v1986 = vmul.f32 %v1882, %v1909
        %v1987 = vmul.f32 %v1883, %v1909
        %v1988 = vmul.f32 %v1884, %v1909
        %v1989 = vadd.f32 %v1979, %v1984
        %v1990 = vadd.f32 %v1980, %v1985
        %v1991 = vadd.f32 %v1981, %v1986
        %v1992 = vadd.f32 %v1982, %v1987
        %v1993 = vadd.f32 %v1983, %v1988
        %v1994 = vmul.f32 %v1873, %v1920
        %v1995 = vmul.f32 %v1874, %v1920
        %v1996 = vmul.f32 %v1875, %v1920
        %v1997 = vmul.f32 %v1876, %v1920
        %v1998 = vmul.f32 %v1877, %v1920
        %v1999 = vadd.f32 %v1989, %v1994
        %v2000 = vadd.f32 %v1990, %v1995
        %v2001 = vadd.f32 %v1991, %v1996
        %v2002 = vadd.f32 %v1992, %v1997
        %v2003 = vadd.f32 %v1993, %v1998
        %v2004 = vmul.f32 %v1881, %v1931
        %v2005 = vmul.f32 %v1882, %v1931
        %v2006 = vmul.f32 %v1883, %v1931
        %v2007 = vmul.f32 %v1884, %v1931
        %v2008 = vmul.f32 %v1885, %v1931
        %v2009 = vadd.f32 %v1999, %v2004
        %v2010 = vadd.f32 %v2000, %v2005
        %v2011 = vadd.f32 %v2001, %v2006
        %v2012 = vadd.f32 %v2002, %v2007
        %v2013 = vadd.f32 %v2003, %v2008
        %v2014 = vmul.f32 %v1874, %v1942
        %v2015 = vmul.f32 %v1875, %v1942
        %v2016 = vmul.f32 %v1876, %v1942
        %v2017 = vmul.f32 %v1877, %v1942
        %v2018 = vmul.f32 %v1878, %v1942
        %v2019 = vadd.f32 %v2009, %v2014
        %v2020 = vadd.f32 %v2010, %v2015
        %v2021 = vadd.f32 %v2011, %v2016
        %v2022 = vadd.f32 %v2012, %v2017
        %v2023 = vadd.f32 %v2013, %v2018
        %v2024 = vmul.f32 %v1882, %v1953
        %v2025 = vmul.f32 %v1883, %v1953
        %v2026 = vmul.f32 %v1884, %v1953
        %v2027 = vmul.f32 %v1885, %v1953
        %v2028 = vmul.f32 %v1886, %v1953
        %v2029 = vadd.f32 %v2019, %v2024
        %v2030 = vadd.f32 %v2020, %v2025
        %v2031 = vadd.f32 %v2021, %v2026
        %v2032 = vadd.f32 %v2022, %v2027
        %v2033 = vadd.f32 %v2023, %v2028
        %v2034 = vld [vmem:[%s1206 + $0x2] sm:$0xff]
        %v2035 = vld [vmem:[%s1206 + $0x12] sm:$0xff]
        %v2036 = vld [vmem:[%s1206 + $0x22] sm:$0xff]
        %v2037 = vld [vmem:[%s1206 + $0x32] sm:$0xff]
        %v2038 = vld [vmem:[%s1206 + $0x42] sm:$0xff]
        %v2039 = vld [vmem:[%s1206 + $0x52] sm:$0xff]
        %v2040 = vld [vmem:[%s1206 + $0x62] sm:$0xff]
        %v2041 = vld [vmem:[%s1206 + $0x72] sm:$0xff]
        %v2042 = vld [vmem:[%s1181 + $0x12] sm:$0xff]
        %v2043 = vld [vmem:[%s1181 + $0x22] sm:$0xff]
        %v2044 = vld [vmem:[%s1181 + $0x32] sm:$0xff]
        %v2045 = vld [vmem:[%s1181 + $0x42] sm:$0xff]
        %v2046 = vld [vmem:[%s1181 + $0x52] sm:$0xff]
        %v2047 = vld [vmem:[%s1181 + $0x62] sm:$0xff]
        %v2048 = vld [vmem:[%s1181 + $0x72] sm:$0xff]
        %v2049 = vld [vmem:[%s1181 + $0x82] sm:$0xff]
        %v2050 = vperm.slane %v700, 5
        %v2051 = vmul.f32 %v2034, %v2050
        %v2052 = vmul.f32 %v2035, %v2050
        %v2053 = vmul.f32 %v2036, %v2050
        %v2054 = vmul.f32 %v2037, %v2050
        %v2055 = vmul.f32 %v2038, %v2050
        %v2056 = vadd.f32 %v1959, %v2051
        %v2057 = vadd.f32 %v1960, %v2052
        %v2058 = vadd.f32 %v1961, %v2053
        %v2059 = vadd.f32 %v1962, %v2054
        %v2060 = vadd.f32 %v1963, %v2055
        %v2061 = vperm.slane %v701, 5
        %v2062 = vmul.f32 %v2042, %v2061
        %v2063 = vmul.f32 %v2043, %v2061
        %v2064 = vmul.f32 %v2044, %v2061
        %v2065 = vmul.f32 %v2045, %v2061
        %v2066 = vmul.f32 %v2046, %v2061
        %v2067 = vadd.f32 %v2056, %v2062
        %v2068 = vadd.f32 %v2057, %v2063
        %v2069 = vadd.f32 %v2058, %v2064
        %v2070 = vadd.f32 %v2059, %v2065
        %v2071 = vadd.f32 %v2060, %v2066
        %v2072 = vperm.slane %v702, 5
        %v2073 = vmul.f32 %v2035, %v2072
        %v2074 = vmul.f32 %v2036, %v2072
        %v2075 = vmul.f32 %v2037, %v2072
        %v2076 = vmul.f32 %v2038, %v2072
        %v2077 = vmul.f32 %v2039, %v2072
        %v2078 = vadd.f32 %v2067, %v2073
        %v2079 = vadd.f32 %v2068, %v2074
        %v2080 = vadd.f32 %v2069, %v2075
        %v2081 = vadd.f32 %v2070, %v2076
        %v2082 = vadd.f32 %v2071, %v2077
        %v2083 = vperm.slane %v703, 5
        %v2084 = vmul.f32 %v2043, %v2083
        %v2085 = vmul.f32 %v2044, %v2083
        %v2086 = vmul.f32 %v2045, %v2083
        %v2087 = vmul.f32 %v2046, %v2083
        %v2088 = vmul.f32 %v2047, %v2083
        %v2089 = vadd.f32 %v2078, %v2084
        %v2090 = vadd.f32 %v2079, %v2085
        %v2091 = vadd.f32 %v2080, %v2086
        %v2092 = vadd.f32 %v2081, %v2087
        %v2093 = vadd.f32 %v2082, %v2088
        %v2094 = vperm.slane %v704, 5
        %v2095 = vmul.f32 %v2036, %v2094
        %v2096 = vmul.f32 %v2037, %v2094
        %v2097 = vmul.f32 %v2038, %v2094
        %v2098 = vmul.f32 %v2039, %v2094
        %v2099 = vmul.f32 %v2040, %v2094
        %v2100 = vadd.f32 %v2089, %v2095
        %v2101 = vadd.f32 %v2090, %v2096
        %v2102 = vadd.f32 %v2091, %v2097
        %v2103 = vadd.f32 %v2092, %v2098
        %v2104 = vadd.f32 %v2093, %v2099
        %v2105 = vperm.slane %v705, 5
        %v2106 = vmul.f32 %v2044, %v2105
        %v2107 = vmul.f32 %v2045, %v2105
        %v2108 = vmul.f32 %v2046, %v2105
        %v2109 = vmul.f32 %v2047, %v2105
        %v2110 = vmul.f32 %v2048, %v2105
        %v2111 = vadd.f32 %v2100, %v2106
        %v2112 = vadd.f32 %v2101, %v2107
        %v2113 = vadd.f32 %v2102, %v2108
        %v2114 = vadd.f32 %v2103, %v2109
        %v2115 = vadd.f32 %v2104, %v2110
        %v2116 = vperm.slane %v706, 5
        %v2117 = vmul.f32 %v2037, %v2116
        %v2118 = vmul.f32 %v2038, %v2116
        %v2119 = vmul.f32 %v2039, %v2116
        %v2120 = vmul.f32 %v2040, %v2116
        %v2121 = vmul.f32 %v2041, %v2116
        %v2122 = vadd.f32 %v2111, %v2117
        %v2123 = vadd.f32 %v2112, %v2118
        %v2124 = vadd.f32 %v2113, %v2119
        %v2125 = vadd.f32 %v2114, %v2120
        %v2126 = vadd.f32 %v2115, %v2121
        %v2127 = vmul.f32 %v2042, %v2050
        %v2128 = vmul.f32 %v2043, %v2050
        %v2129 = vmul.f32 %v2044, %v2050
        %v2130 = vmul.f32 %v2045, %v2050
        %v2131 = vmul.f32 %v2046, %v2050
        %v2132 = vadd.f32 %v2029, %v2127
        %v2133 = vadd.f32 %v2030, %v2128
        %v2134 = vadd.f32 %v2031, %v2129
        %v2135 = vadd.f32 %v2032, %v2130
        %v2136 = vadd.f32 %v2033, %v2131
        %v2137 = vmul.f32 %v2035, %v2061
        %v2138 = vmul.f32 %v2036, %v2061
        %v2139 = vmul.f32 %v2037, %v2061
        %v2140 = vmul.f32 %v2038, %v2061
        %v2141 = vmul.f32 %v2039, %v2061
        %v2142 = vadd.f32 %v2132, %v2137
        %v2143 = vadd.f32 %v2133, %v2138
        %v2144 = vadd.f32 %v2134, %v2139
        %v2145 = vadd.f32 %v2135, %v2140
        %v2146 = vadd.f32 %v2136, %v2141
        %v2147 = vmul.f32 %v2043, %v2072
        %v2148 = vmul.f32 %v2044, %v2072
        %v2149 = vmul.f32 %v2045, %v2072
        %v2150 = vmul.f32 %v2046, %v2072
        %v2151 = vmul.f32 %v2047, %v2072
        %v2152 = vadd.f32 %v2142, %v2147
        %v2153 = vadd.f32 %v2143, %v2148
        %v2154 = vadd.f32 %v2144, %v2149
        %v2155 = vadd.f32 %v2145, %v2150
        %v2156 = vadd.f32 %v2146, %v2151
        %v2157 = vmul.f32 %v2036, %v2083
        %v2158 = vmul.f32 %v2037, %v2083
        %v2159 = vmul.f32 %v2038, %v2083
        %v2160 = vmul.f32 %v2039, %v2083
        %v2161 = vmul.f32 %v2040, %v2083
        %v2162 = vadd.f32 %v2152, %v2157
        %v2163 = vadd.f32 %v2153, %v2158
        %v2164 = vadd.f32 %v2154, %v2159
        %v2165 = vadd.f32 %v2155, %v2160
        %v2166 = vadd.f32 %v2156, %v2161
        %v2167 = vmul.f32 %v2044, %v2094
        %v2168 = vmul.f32 %v2045, %v2094
        %v2169 = vmul.f32 %v2046, %v2094
        %v2170 = vmul.f32 %v2047, %v2094
        %v2171 = vmul.f32 %v2048, %v2094
        %v2172 = vadd.f32 %v2162, %v2167
        %v2173 = vadd.f32 %v2163, %v2168
        %v2174 = vadd.f32 %v2164, %v2169
        %v2175 = vadd.f32 %v2165, %v2170
        %v2176 = vadd.f32 %v2166, %v2171
        %v2177 = vmul.f32 %v2037, %v2105
        %v2178 = vmul.f32 %v2038, %v2105
        %v2179 = vmul.f32 %v2039, %v2105
        %v2180 = vmul.f32 %v2040, %v2105
        %v2181 = vmul.f32 %v2041, %v2105
        %v2182 = vadd.f32 %v2172, %v2177
        %v2183 = vadd.f32 %v2173, %v2178
        %v2184 = vadd.f32 %v2174, %v2179
        %v2185 = vadd.f32 %v2175, %v2180
        %v2186 = vadd.f32 %v2176, %v2181
        %v2187 = vmul.f32 %v2045, %v2116
        %v2188 = vmul.f32 %v2046, %v2116
        %v2189 = vmul.f32 %v2047, %v2116
        %v2190 = vmul.f32 %v2048, %v2116
        %v2191 = vmul.f32 %v2049, %v2116
        %v2192 = vadd.f32 %v2182, %v2187
        %v2193 = vadd.f32 %v2183, %v2188
        %v2194 = vadd.f32 %v2184, %v2189
        %v2195 = vadd.f32 %v2185, %v2190
        %v2196 = vadd.f32 %v2186, %v2191
        %v2197 = vld [vmem:[#allocation2 + $0x3] sm:$0xff]
        %v2198 = vld [vmem:[#allocation2 + $0x13] sm:$0xff]
        %v2199 = vld [vmem:[#allocation2 + $0x23] sm:$0xff]
        %v2200 = vld [vmem:[#allocation2 + $0x33] sm:$0xff]
        %v2201 = vld [vmem:[#allocation2 + $0x43] sm:$0xff]
        %v2202 = vld [vmem:[#allocation2 + $0x53] sm:$0xff]
        %v2203 = vld [vmem:[#allocation2 + $0x63] sm:$0xff]
        %v2204 = vld [vmem:[#allocation2 + $0x73] sm:$0xff]
        %v2205 = vld [vmem:[%s1194 + $0x13] sm:$0xff]
        %v2206 = vld [vmem:[%s1194 + $0x23] sm:$0xff]
        %v2207 = vld [vmem:[%s1194 + $0x33] sm:$0xff]
        %v2208 = vld [vmem:[%s1194 + $0x43] sm:$0xff]
        %v2209 = vld [vmem:[%s1194 + $0x53] sm:$0xff]
        %v2210 = vld [vmem:[%s1194 + $0x63] sm:$0xff]
        %v2211 = vld [vmem:[%s1194 + $0x73] sm:$0xff]
        %v2212 = vld [vmem:[%s1194 + $0x83] sm:$0xff]
        %v2213 = vperm.slane %v700, 6
        %v2214 = vmul.f32 %v2197, %v2213
        %v2215 = vmul.f32 %v2198, %v2213
        %v2216 = vmul.f32 %v2199, %v2213
        %v2217 = vmul.f32 %v2200, %v2213
        %v2218 = vmul.f32 %v2201, %v2213
        %v2219 = vadd.f32 %v2122, %v2214
        %v2220 = vadd.f32 %v2123, %v2215
        %v2221 = vadd.f32 %v2124, %v2216
        %v2222 = vadd.f32 %v2125, %v2217
        %v2223 = vadd.f32 %v2126, %v2218
        %v2224 = vperm.slane %v701, 6
        %v2225 = vmul.f32 %v2205, %v2224
        %v2226 = vmul.f32 %v2206, %v2224
        %v2227 = vmul.f32 %v2207, %v2224
        %v2228 = vmul.f32 %v2208, %v2224
        %v2229 = vmul.f32 %v2209, %v2224
        %v2230 = vadd.f32 %v2219, %v2225
        %v2231 = vadd.f32 %v2220, %v2226
        %v2232 = vadd.f32 %v2221, %v2227
        %v2233 = vadd.f32 %v2222, %v2228
        %v2234 = vadd.f32 %v2223, %v2229
        %v2235 = vperm.slane %v702, 6
        %v2236 = vmul.f32 %v2198, %v2235
        %v2237 = vmul.f32 %v2199, %v2235
        %v2238 = vmul.f32 %v2200, %v2235
        %v2239 = vmul.f32 %v2201, %v2235
        %v2240 = vmul.f32 %v2202, %v2235
        %v2241 = vadd.f32 %v2230, %v2236
        %v2242 = vadd.f32 %v2231, %v2237
        %v2243 = vadd.f32 %v2232, %v2238
        %v2244 = vadd.f32 %v2233, %v2239
        %v2245 = vadd.f32 %v2234, %v2240
        %v2246 = vperm.slane %v703, 6
        %v2247 = vmul.f32 %v2206, %v2246
        %v2248 = vmul.f32 %v2207, %v2246
        %v2249 = vmul.f32 %v2208, %v2246
        %v2250 = vmul.f32 %v2209, %v2246
        %v2251 = vmul.f32 %v2210, %v2246
        %v2252 = vadd.f32 %v2241, %v2247
        %v2253 = vadd.f32 %v2242, %v2248
        %v2254 = vadd.f32 %v2243, %v2249
        %v2255 = vadd.f32 %v2244, %v2250
        %v2256 = vadd.f32 %v2245, %v2251
        %v2257 = vperm.slane %v704, 6
        %v2258 = vmul.f32 %v2199, %v2257
        %v2259 = vmul.f32 %v2200, %v2257
        %v2260 = vmul.f32 %v2201, %v2257
        %v2261 = vmul.f32 %v2202, %v2257
        %v2262 = vmul.f32 %v2203, %v2257
        %v2263 = vadd.f32 %v2252, %v2258
        %v2264 = vadd.f32 %v2253, %v2259
        %v2265 = vadd.f32 %v2254, %v2260
        %v2266 = vadd.f32 %v2255, %v2261
        %v2267 = vadd.f32 %v2256, %v2262
        %v2268 = vperm.slane %v705, 6
        %v2269 = vmul.f32 %v2207, %v2268
        %v2270 = vmul.f32 %v2208, %v2268
        %v2271 = vmul.f32 %v2209, %v2268
        %v2272 = vmul.f32 %v2210, %v2268
        %v2273 = vmul.f32 %v2211, %v2268
        %v2274 = vadd.f32 %v2263, %v2269
        %v2275 = vadd.f32 %v2264, %v2270
        %v2276 = vadd.f32 %v2265, %v2271
        %v2277 = vadd.f32 %v2266, %v2272
        %v2278 = vadd.f32 %v2267, %v2273
        %v2279 = vperm.slane %v706, 6
        %v2280 = vmul.f32 %v2200, %v2279
        %v2281 = vmul.f32 %v2201, %v2279
        %v2282 = vmul.f32 %v2202, %v2279
        %v2283 = vmul.f32 %v2203, %v2279
        %v2284 = vmul.f32 %v2204, %v2279
        %v2285 = vadd.f32 %v2274, %v2280
        %v2286 = vadd.f32 %v2275, %v2281
        %v2287 = vadd.f32 %v2276, %v2282
        %v2288 = vadd.f32 %v2277, %v2283
        %v2289 = vadd.f32 %v2278, %v2284
        %v2290 = vmul.f32 %v2205, %v2213
        %v2291 = vmul.f32 %v2206, %v2213
        %v2292 = vmul.f32 %v2207, %v2213
        %v2293 = vmul.f32 %v2208, %v2213
        %v2294 = vmul.f32 %v2209, %v2213
        %v2295 = vadd.f32 %v2192, %v2290
        %v2296 = vadd.f32 %v2193, %v2291
        %v2297 = vadd.f32 %v2194, %v2292
        %v2298 = vadd.f32 %v2195, %v2293
        %v2299 = vadd.f32 %v2196, %v2294
        %v2300 = vmul.f32 %v2198, %v2224
        %v2301 = vmul.f32 %v2199, %v2224
        %v2302 = vmul.f32 %v2200, %v2224
        %v2303 = vmul.f32 %v2201, %v2224
        %v2304 = vmul.f32 %v2202, %v2224
        %v2305 = vadd.f32 %v2295, %v2300
        %v2306 = vadd.f32 %v2296, %v2301
        %v2307 = vadd.f32 %v2297, %v2302
        %v2308 = vadd.f32 %v2298, %v2303
        %v2309 = vadd.f32 %v2299, %v2304
        %v2310 = vmul.f32 %v2206, %v2235
        %v2311 = vmul.f32 %v2207, %v2235
        %v2312 = vmul.f32 %v2208, %v2235
        %v2313 = vmul.f32 %v2209, %v2235
        %v2314 = vmul.f32 %v2210, %v2235
        %v2315 = vadd.f32 %v2305, %v2310
        %v2316 = vadd.f32 %v2306, %v2311
        %v2317 = vadd.f32 %v2307, %v2312
        %v2318 = vadd.f32 %v2308, %v2313
        %v2319 = vadd.f32 %v2309, %v2314
        %v2320 = vmul.f32 %v2199, %v2246
        %v2321 = vmul.f32 %v2200, %v2246
        %v2322 = vmul.f32 %v2201, %v2246
        %v2323 = vmul.f32 %v2202, %v2246
        %v2324 = vmul.f32 %v2203, %v2246
        %v2325 = vadd.f32 %v2315, %v2320
        %v2326 = vadd.f32 %v2316, %v2321
        %v2327 = vadd.f32 %v2317, %v2322
        %v2328 = vadd.f32 %v2318, %v2323
        %v2329 = vadd.f32 %v2319, %v2324
        %v2330 = vmul.f32 %v2207, %v2257
        %v2331 = vmul.f32 %v2208, %v2257
        %v2332 = vmul.f32 %v2209, %v2257
        %v2333 = vmul.f32 %v2210, %v2257
        %v2334 = vmul.f32 %v2211, %v2257
        %v2335 = vadd.f32 %v2325, %v2330
        %v2336 = vadd.f32 %v2326, %v2331
        %v2337 = vadd.f32 %v2327, %v2332
        %v2338 = vadd.f32 %v2328, %v2333
        %v2339 = vadd.f32 %v2329, %v2334
        %v2340 = vmul.f32 %v2200, %v2268
        %v2341 = vmul.f32 %v2201, %v2268
        %v2342 = vmul.f32 %v2202, %v2268
        %v2343 = vmul.f32 %v2203, %v2268
        %v2344 = vmul.f32 %v2204, %v2268
        %v2345 = vadd.f32 %v2335, %v2340
        %v2346 = vadd.f32 %v2336, %v2341
        %v2347 = vadd.f32 %v2337, %v2342
        %v2348 = vadd.f32 %v2338, %v2343
        %v2349 = vadd.f32 %v2339, %v2344
        %v2350 = vmul.f32 %v2208, %v2279
        %v2351 = vmul.f32 %v2209, %v2279
        %v2352 = vmul.f32 %v2210, %v2279
        %v2353 = vmul.f32 %v2211, %v2279
        %v2354 = vmul.f32 %v2212, %v2279
        %v2355 = vadd.f32 %v2345, %v2350
        %v2356 = vadd.f32 %v2346, %v2351
        %v2357 = vadd.f32 %v2347, %v2352
        %v2358 = vadd.f32 %v2348, %v2353
        %v2359 = vadd.f32 %v2349, %v2354
        %v2360 = vsel %vm931, %v2285, -inf
        %2361 = vst.msk [vmem:[#allocation3 + $0x1] sm:$0xff] %vm1182, %v2360
        %s2362 = scalar_lea.vmem [#allocation3], 16
        %2363 = vst.msk [vmem:[%s2362 + $0x1] sm:$0xff] %vm1182, %v2286
        %2364 = vst.msk [vmem:[%s2362 + $0x11] sm:$0xff] %vm1182, %v2287
        %2365 = vst.msk [vmem:[%s2362 + $0x21] sm:$0xff] %vm1182, %v2288
        %2366 = vst.msk [vmem:[%s2362 + $0x31] sm:$0xff] %vm1182, %v2289
        %v2367 = vsel %vm931, %v2355, -inf
        %s2368 = scalar_lea.vmem [#allocation3], 160
        %2369 = vst.msk [vmem:[%s2368 + $0x1] sm:$0xff] %vm1182, %v2367
        %s2370 = scalar_lea.vmem [#allocation3], 176
        %2371 = vst.msk [vmem:[%s2370 + $0x1] sm:$0xff] %vm1182, %v2356
        %2372 = vst.msk [vmem:[%s2370 + $0x11] sm:$0xff] %vm1182, %v2357
        %2373 = vst.msk [vmem:[%s2370 + $0x21] sm:$0xff] %vm1182, %v2358
        %2374 = vst.msk [vmem:[%s2370 + $0x31] sm:$0xff] %vm1182, %v2359
        %v2376 = vsel %vm1182, %v2356, 0
        %v2379 = vsel %vm1182, %v2357, 0
        %v2382 = vsel %vm1182, %v2358, 0
        %v2385 = vsel %vm1182, %v2359, 0
        %2387 = vmatpush.msra.mxu0 0.0
        %2388 = vmatpush.msra.mxu0 0.0
        %2389 = vmatpush.msra.mxu0 0.0
        %2390 = vmatpush.msra.mxu0 0.0
        %2391 = vmatpush.msra.mxu0 0.0
        %2392 = vmatpush.msra.mxu0 0.0
        %2393 = vmatpush.msra.mxu0 0.0
        %2394 = vmatpush.msra.mxu0 0.0
        %2395 = vmatpush.msra.mxu0 0.0
        %2396 = vmatpush.msra.mxu0 0.0
        %2397 = vmatpush.msra.mxu0 0.0
        %2398 = vmatpush.msra.mxu0 0.0
        %2399 = vmatpush.msra.mxu0 0.0
        %2400 = vmatpush.msra.mxu0 0.0
        %2401 = vmatpush.msra.mxu0 0.0
        %2402 = vmatpush.msra.mxu0 %v708
        %2403 = vmatmul.f32.gmra.mxu0 %v2376
        %v2404 = vpop.f32.mrf.mxu0
        %v2405 = vadd.f32 0.0, %v2404
        %2406 = vmatmul.f32.gmra.mxu0 %v2379
        %v2407 = vpop.f32.mrf.mxu0
        %v2408 = vadd.f32 0.0, %v2407
        %2409 = vmatmul.f32.gmra.mxu0 %v2382
        %v2410 = vpop.f32.mrf.mxu0
        %v2411 = vadd.f32 0.0, %v2410
        %2412 = vmatmul.f32.gmra.mxu0 %v2385
        %v2413 = vpop.f32.mrf.mxu0
        %v2414 = vadd.f32 0.0, %v2413
        %2415 = vdwg.mxu0
        %v2417 = vsel %vm1182, %v2286, 0
        %v2420 = vsel %vm1182, %v2287, 0
        %v2423 = vsel %vm1182, %v2288, 0
        %v2426 = vsel %vm1182, %v2289, 0
        %2428 = vmatpush.msra.mxu0 0.0
        %2429 = vmatpush.msra.mxu0 0.0
        %2430 = vmatpush.msra.mxu0 0.0
        %2431 = vmatpush.msra.mxu0 0.0
        %2432 = vmatpush.msra.mxu0 0.0
        %2433 = vmatpush.msra.mxu0 0.0
        %2434 = vmatpush.msra.mxu0 0.0
        %2435 = vmatpush.msra.mxu0 0.0
        %2436 = vmatpush.msra.mxu0 0.0
        %2437 = vmatpush.msra.mxu0 0.0
        %2438 = vmatpush.msra.mxu0 0.0
        %2439 = vmatpush.msra.mxu0 0.0
        %2440 = vmatpush.msra.mxu0 0.0
        %2441 = vmatpush.msra.mxu0 0.0
        %2442 = vmatpush.msra.mxu0 0.0
        %2443 = vmatpush.msra.mxu0 %v707
        %2444 = vmatmul.f32.gmra.mxu0 %v2417
        %v2445 = vpop.f32.mrf.mxu0
        %v2446 = vadd.f32 %v2405, %v2445
        %2447 = vmatmul.f32.gmra.mxu0 %v2420
        %v2448 = vpop.f32.mrf.mxu0
        %v2449 = vadd.f32 %v2408, %v2448
        %2450 = vmatmul.f32.gmra.mxu0 %v2423
        %v2451 = vpop.f32.mrf.mxu0
        %v2452 = vadd.f32 %v2411, %v2451
        %2453 = vmatmul.f32.gmra.mxu0 %v2426
        %v2454 = vpop.f32.mrf.mxu0
        %v2455 = vadd.f32 %v2414, %v2454
        %2456 = vdwg.mxu0
        %v2457 = vld [vmem:[%s1206] sm:$0xff]
        %v2458 = vld [vmem:[%s1206 + $0x10] sm:$0xff]
        %v2459 = vld [vmem:[%s1206 + $0x20] sm:$0xff]
        %v2460 = vld [vmem:[%s1206 + $0x30] sm:$0xff]
        %v2461 = vld [vmem:[%s1206 + $0x40] sm:$0xff]
        %v2462 = vld [vmem:[%s1206 + $0x50] sm:$0xff]
        %v2463 = vld [vmem:[%s1206 + $0x60] sm:$0xff]
        %v2464 = vld [vmem:[%s1206 + $0x70] sm:$0xff]
        %v2465 = vld [vmem:[%s1181 + $0x10] sm:$0xff]
        %v2466 = vld [vmem:[%s1181 + $0x20] sm:$0xff]
        %v2467 = vld [vmem:[%s1181 + $0x30] sm:$0xff]
        %v2468 = vld [vmem:[%s1181 + $0x40] sm:$0xff]
        %v2469 = vld [vmem:[%s1181 + $0x50] sm:$0xff]
        %v2470 = vld [vmem:[%s1181 + $0x60] sm:$0xff]
        %v2471 = vld [vmem:[%s1181 + $0x70] sm:$0xff]
        %v2472 = vld [vmem:[%s1181 + $0x80] sm:$0xff]
        %v2473 = vmul.f32 %v2457, %v1245
        %v2474 = vmul.f32 %v2458, %v1245
        %v2475 = vmul.f32 %v2459, %v1245
        %v2476 = vmul.f32 %v2460, %v1245
        %v2477 = vmul.f32 %v2461, %v1245
        %v2478 = vmul.f32 %v2465, %v1251
        %v2479 = vmul.f32 %v2466, %v1251
        %v2480 = vmul.f32 %v2467, %v1251
        %v2481 = vmul.f32 %v2468, %v1251
        %v2482 = vmul.f32 %v2469, %v1251
        %v2483 = vadd.f32 %v2473, %v2478
        %v2484 = vadd.f32 %v2474, %v2479
        %v2485 = vadd.f32 %v2475, %v2480
        %v2486 = vadd.f32 %v2476, %v2481
        %v2487 = vadd.f32 %v2477, %v2482
        %v2488 = vmul.f32 %v2458, %v1262
        %v2489 = vmul.f32 %v2459, %v1262
        %v2490 = vmul.f32 %v2460, %v1262
        %v2491 = vmul.f32 %v2461, %v1262
        %v2492 = vmul.f32 %v2462, %v1262
        %v2493 = vadd.f32 %v2483, %v2488
        %v2494 = vadd.f32 %v2484, %v2489
        %v2495 = vadd.f32 %v2485, %v2490
        %v2496 = vadd.f32 %v2486, %v2491
        %v2497 = vadd.f32 %v2487, %v2492
        %v2498 = vmul.f32 %v2466, %v1273
        %v2499 = vmul.f32 %v2467, %v1273
        %v2500 = vmul.f32 %v2468, %v1273
        %v2501 = vmul.f32 %v2469, %v1273
        %v2502 = vmul.f32 %v2470, %v1273
        %v2503 = vadd.f32 %v2493, %v2498
        %v2504 = vadd.f32 %v2494, %v2499
        %v2505 = vadd.f32 %v2495, %v2500
        %v2506 = vadd.f32 %v2496, %v2501
        %v2507 = vadd.f32 %v2497, %v2502
        %v2508 = vmul.f32 %v2459, %v1284
        %v2509 = vmul.f32 %v2460, %v1284
        %v2510 = vmul.f32 %v2461, %v1284
        %v2511 = vmul.f32 %v2462, %v1284
        %v2512 = vmul.f32 %v2463, %v1284
        %v2513 = vadd.f32 %v2503, %v2508
        %v2514 = vadd.f32 %v2504, %v2509
        %v2515 = vadd.f32 %v2505, %v2510
        %v2516 = vadd.f32 %v2506, %v2511
        %v2517 = vadd.f32 %v2507, %v2512
        %v2518 = vmul.f32 %v2467, %v1295
        %v2519 = vmul.f32 %v2468, %v1295
        %v2520 = vmul.f32 %v2469, %v1295
        %v2521 = vmul.f32 %v2470, %v1295
        %v2522 = vmul.f32 %v2471, %v1295
        %v2523 = vadd.f32 %v2513, %v2518
        %v2524 = vadd.f32 %v2514, %v2519
        %v2525 = vadd.f32 %v2515, %v2520
        %v2526 = vadd.f32 %v2516, %v2521
        %v2527 = vadd.f32 %v2517, %v2522
        %v2528 = vmul.f32 %v2460, %v1306
        %v2529 = vmul.f32 %v2461, %v1306
        %v2530 = vmul.f32 %v2462, %v1306
        %v2531 = vmul.f32 %v2463, %v1306
        %v2532 = vmul.f32 %v2464, %v1306
        %v2533 = vadd.f32 %v2523, %v2528
        %v2534 = vadd.f32 %v2524, %v2529
        %v2535 = vadd.f32 %v2525, %v2530
        %v2536 = vadd.f32 %v2526, %v2531
        %v2537 = vadd.f32 %v2527, %v2532
        %v2538 = vmul.f32 %v2465, %v1245
        %v2539 = vmul.f32 %v2466, %v1245
        %v2540 = vmul.f32 %v2467, %v1245
        %v2541 = vmul.f32 %v2468, %v1245
        %v2542 = vmul.f32 %v2469, %v1245
        %v2543 = vmul.f32 %v2458, %v1251
        %v2544 = vmul.f32 %v2459, %v1251
        %v2545 = vmul.f32 %v2460, %v1251
        %v2546 = vmul.f32 %v2461, %v1251
        %v2547 = vmul.f32 %v2462, %v1251
        %v2548 = vadd.f32 %v2538, %v2543
        %v2549 = vadd.f32 %v2539, %v2544
        %v2550 = vadd.f32 %v2540, %v2545
        %v2551 = vadd.f32 %v2541, %v2546
        %v2552 = vadd.f32 %v2542, %v2547
        %v2553 = vmul.f32 %v2466, %v1262
        %v2554 = vmul.f32 %v2467, %v1262
        %v2555 = vmul.f32 %v2468, %v1262
        %v2556 = vmul.f32 %v2469, %v1262
        %v2557 = vmul.f32 %v2470, %v1262
        %v2558 = vadd.f32 %v2548, %v2553
        %v2559 = vadd.f32 %v2549, %v2554
        %v2560 = vadd.f32 %v2550, %v2555
        %v2561 = vadd.f32 %v2551, %v2556
        %v2562 = vadd.f32 %v2552, %v2557
        %v2563 = vmul.f32 %v2459, %v1273
        %v2564 = vmul.f32 %v2460, %v1273
        %v2565 = vmul.f32 %v2461, %v1273
        %v2566 = vmul.f32 %v2462, %v1273
        %v2567 = vmul.f32 %v2463, %v1273
        %v2568 = vadd.f32 %v2558, %v2563
        %v2569 = vadd.f32 %v2559, %v2564
        %v2570 = vadd.f32 %v2560, %v2565
        %v2571 = vadd.f32 %v2561, %v2566
        %v2572 = vadd.f32 %v2562, %v2567
        %v2573 = vmul.f32 %v2467, %v1284
        %v2574 = vmul.f32 %v2468, %v1284
        %v2575 = vmul.f32 %v2469, %v1284
        %v2576 = vmul.f32 %v2470, %v1284
        %v2577 = vmul.f32 %v2471, %v1284
        %v2578 = vadd.f32 %v2568, %v2573
        %v2579 = vadd.f32 %v2569, %v2574
        %v2580 = vadd.f32 %v2570, %v2575
        %v2581 = vadd.f32 %v2571, %v2576
        %v2582 = vadd.f32 %v2572, %v2577
        %v2583 = vmul.f32 %v2460, %v1295
        %v2584 = vmul.f32 %v2461, %v1295
        %v2585 = vmul.f32 %v2462, %v1295
        %v2586 = vmul.f32 %v2463, %v1295
        %v2587 = vmul.f32 %v2464, %v1295
        %v2588 = vadd.f32 %v2578, %v2583
        %v2589 = vadd.f32 %v2579, %v2584
        %v2590 = vadd.f32 %v2580, %v2585
        %v2591 = vadd.f32 %v2581, %v2586
        %v2592 = vadd.f32 %v2582, %v2587
        %v2593 = vmul.f32 %v2468, %v1306
        %v2594 = vmul.f32 %v2469, %v1306
        %v2595 = vmul.f32 %v2470, %v1306
        %v2596 = vmul.f32 %v2471, %v1306
        %v2597 = vmul.f32 %v2472, %v1306
        %v2598 = vadd.f32 %v2588, %v2593
        %v2599 = vadd.f32 %v2589, %v2594
        %v2600 = vadd.f32 %v2590, %v2595
        %v2601 = vadd.f32 %v2591, %v2596
        %v2602 = vadd.f32 %v2592, %v2597
        %v2603 = vld [vmem:[#allocation2 + $0x1] sm:$0xff]
        %v2604 = vld [vmem:[#allocation2 + $0x11] sm:$0xff]
        %v2605 = vld [vmem:[#allocation2 + $0x21] sm:$0xff]
        %v2606 = vld [vmem:[#allocation2 + $0x31] sm:$0xff]
        %v2607 = vld [vmem:[#allocation2 + $0x41] sm:$0xff]
        %v2608 = vld [vmem:[#allocation2 + $0x51] sm:$0xff]
        %v2609 = vld [vmem:[#allocation2 + $0x61] sm:$0xff]
        %v2610 = vld [vmem:[#allocation2 + $0x71] sm:$0xff]
        %v2611 = vld [vmem:[%s1194 + $0x11] sm:$0xff]
        %v2612 = vld [vmem:[%s1194 + $0x21] sm:$0xff]
        %v2613 = vld [vmem:[%s1194 + $0x31] sm:$0xff]
        %v2614 = vld [vmem:[%s1194 + $0x41] sm:$0xff]
        %v2615 = vld [vmem:[%s1194 + $0x51] sm:$0xff]
        %v2616 = vld [vmem:[%s1194 + $0x61] sm:$0xff]
        %v2617 = vld [vmem:[%s1194 + $0x71] sm:$0xff]
        %v2618 = vld [vmem:[%s1194 + $0x81] sm:$0xff]
        %v2619 = vmul.f32 %v2603, %v1398
        %v2620 = vmul.f32 %v2604, %v1398
        %v2621 = vmul.f32 %v2605, %v1398
        %v2622 = vmul.f32 %v2606, %v1398
        %v2623 = vmul.f32 %v2607, %v1398
        %v2624 = vadd.f32 %v2533, %v2619
        %v2625 = vadd.f32 %v2534, %v2620
        %v2626 = vadd.f32 %v2535, %v2621
        %v2627 = vadd.f32 %v2536, %v2622
        %v2628 = vadd.f32 %v2537, %v2623
        %v2629 = vmul.f32 %v2611, %v1409
        %v2630 = vmul.f32 %v2612, %v1409
        %v2631 = vmul.f32 %v2613, %v1409
        %v2632 = vmul.f32 %v2614, %v1409
        %v2633 = vmul.f32 %v2615, %v1409
        %v2634 = vadd.f32 %v2624, %v2629
        %v2635 = vadd.f32 %v2625, %v2630
        %v2636 = vadd.f32 %v2626, %v2631
        %v2637 = vadd.f32 %v2627, %v2632
        %v2638 = vadd.f32 %v2628, %v2633
        %v2639 = vmul.f32 %v2604, %v1420
        %v2640 = vmul.f32 %v2605, %v1420
        %v2641 = vmul.f32 %v2606, %v1420
        %v2642 = vmul.f32 %v2607, %v1420
        %v2643 = vmul.f32 %v2608, %v1420
        %v2644 = vadd.f32 %v2634, %v2639
        %v2645 = vadd.f32 %v2635, %v2640
        %v2646 = vadd.f32 %v2636, %v2641
        %v2647 = vadd.f32 %v2637, %v2642
        %v2648 = vadd.f32 %v2638, %v2643
        %v2649 = vmul.f32 %v2612, %v1431
        %v2650 = vmul.f32 %v2613, %v1431
        %v2651 = vmul.f32 %v2614, %v1431
        %v2652 = vmul.f32 %v2615, %v1431
        %v2653 = vmul.f32 %v2616, %v1431
        %v2654 = vadd.f32 %v2644, %v2649
        %v2655 = vadd.f32 %v2645, %v2650
        %v2656 = vadd.f32 %v2646, %v2651
        %v2657 = vadd.f32 %v2647, %v2652
        %v2658 = vadd.f32 %v2648, %v2653
        %v2659 = vmul.f32 %v2605, %v1442
        %v2660 = vmul.f32 %v2606, %v1442
        %v2661 = vmul.f32 %v2607, %v1442
        %v2662 = vmul.f32 %v2608, %v1442
        %v2663 = vmul.f32 %v2609, %v1442
        %v2664 = vadd.f32 %v2654, %v2659
        %v2665 = vadd.f32 %v2655, %v2660
        %v2666 = vadd.f32 %v2656, %v2661
        %v2667 = vadd.f32 %v2657, %v2662
        %v2668 = vadd.f32 %v2658, %v2663
        %v2669 = vmul.f32 %v2613, %v1453
        %v2670 = vmul.f32 %v2614, %v1453
        %v2671 = vmul.f32 %v2615, %v1453
        %v2672 = vmul.f32 %v2616, %v1453
        %v2673 = vmul.f32 %v2617, %v1453
        %v2674 = vadd.f32 %v2664, %v2669
        %v2675 = vadd.f32 %v2665, %v2670
        %v2676 = vadd.f32 %v2666, %v2671
        %v2677 = vadd.f32 %v2667, %v2672
        %v2678 = vadd.f32 %v2668, %v2673
        %v2679 = vmul.f32 %v2606, %v1464
        %v2680 = vmul.f32 %v2607, %v1464
        %v2681 = vmul.f32 %v2608, %v1464
        %v2682 = vmul.f32 %v2609, %v1464
        %v2683 = vmul.f32 %v2610, %v1464
        %v2684 = vadd.f32 %v2674, %v2679
        %v2685 = vadd.f32 %v2675, %v2680
        %v2686 = vadd.f32 %v2676, %v2681
        %v2687 = vadd.f32 %v2677, %v2682
        %v2688 = vadd.f32 %v2678, %v2683
        %v2689 = vmul.f32 %v2611, %v1398
        %v2690 = vmul.f32 %v2612, %v1398
        %v2691 = vmul.f32 %v2613, %v1398
        %v2692 = vmul.f32 %v2614, %v1398
        %v2693 = vmul.f32 %v2615, %v1398
        %v2694 = vadd.f32 %v2598, %v2689
        %v2695 = vadd.f32 %v2599, %v2690
        %v2696 = vadd.f32 %v2600, %v2691
        %v2697 = vadd.f32 %v2601, %v2692
        %v2698 = vadd.f32 %v2602, %v2693
        %v2699 = vmul.f32 %v2604, %v1409
        %v2700 = vmul.f32 %v2605, %v1409
        %v2701 = vmul.f32 %v2606, %v1409
        %v2702 = vmul.f32 %v2607, %v1409
        %v2703 = vmul.f32 %v2608, %v1409
        %v2704 = vadd.f32 %v2694, %v2699
        %v2705 = vadd.f32 %v2695, %v2700
        %v2706 = vadd.f32 %v2696, %v2701
        %v2707 = vadd.f32 %v2697, %v2702
        %v2708 = vadd.f32 %v2698, %v2703
        %v2709 = vmul.f32 %v2612, %v1420
        %v2710 = vmul.f32 %v2613, %v1420
        %v2711 = vmul.f32 %v2614, %v1420
        %v2712 = vmul.f32 %v2615, %v1420
        %v2713 = vmul.f32 %v2616, %v1420
        %v2714 = vadd.f32 %v2704, %v2709
        %v2715 = vadd.f32 %v2705, %v2710
        %v2716 = vadd.f32 %v2706, %v2711
        %v2717 = vadd.f32 %v2707, %v2712
        %v2718 = vadd.f32 %v2708, %v2713
        %v2719 = vmul.f32 %v2605, %v1431
        %v2720 = vmul.f32 %v2606, %v1431
        %v2721 = vmul.f32 %v2607, %v1431
        %v2722 = vmul.f32 %v2608, %v1431
        %v2723 = vmul.f32 %v2609, %v1431
        %v2724 = vadd.f32 %v2714, %v2719
        %v2725 = vadd.f32 %v2715, %v2720
        %v2726 = vadd.f32 %v2716, %v2721
        %v2727 = vadd.f32 %v2717, %v2722
        %v2728 = vadd.f32 %v2718, %v2723
        %v2729 = vmul.f32 %v2613, %v1442
        %v2730 = vmul.f32 %v2614, %v1442
        %v2731 = vmul.f32 %v2615, %v1442
        %v2732 = vmul.f32 %v2616, %v1442
        %v2733 = vmul.f32 %v2617, %v1442
        %v2734 = vadd.f32 %v2724, %v2729
        %v2735 = vadd.f32 %v2725, %v2730
        %v2736 = vadd.f32 %v2726, %v2731
        %v2737 = vadd.f32 %v2727, %v2732
        %v2738 = vadd.f32 %v2728, %v2733
        %v2739 = vmul.f32 %v2606, %v1453
        %v2740 = vmul.f32 %v2607, %v1453
        %v2741 = vmul.f32 %v2608, %v1453
        %v2742 = vmul.f32 %v2609, %v1453
        %v2743 = vmul.f32 %v2610, %v1453
        %v2744 = vadd.f32 %v2734, %v2739
        %v2745 = vadd.f32 %v2735, %v2740
        %v2746 = vadd.f32 %v2736, %v2741
        %v2747 = vadd.f32 %v2737, %v2742
        %v2748 = vadd.f32 %v2738, %v2743
        %v2749 = vmul.f32 %v2614, %v1464
        %v2750 = vmul.f32 %v2615, %v1464
        %v2751 = vmul.f32 %v2616, %v1464
        %v2752 = vmul.f32 %v2617, %v1464
        %v2753 = vmul.f32 %v2618, %v1464
        %v2754 = vadd.f32 %v2744, %v2749
        %v2755 = vadd.f32 %v2745, %v2750
        %v2756 = vadd.f32 %v2746, %v2751
        %v2757 = vadd.f32 %v2747, %v2752
        %v2758 = vadd.f32 %v2748, %v2753
        %v2759 = vld [vmem:[%s1206 + $0x1] sm:$0xff]
        %v2760 = vld [vmem:[%s1206 + $0x11] sm:$0xff]
        %v2761 = vld [vmem:[%s1206 + $0x21] sm:$0xff]
        %v2762 = vld [vmem:[%s1206 + $0x31] sm:$0xff]
        %v2763 = vld [vmem:[%s1206 + $0x41] sm:$0xff]
        %v2764 = vld [vmem:[%s1206 + $0x51] sm:$0xff]
        %v2765 = vld [vmem:[%s1206 + $0x61] sm:$0xff]
        %v2766 = vld [vmem:[%s1206 + $0x71] sm:$0xff]
        %v2767 = vld [vmem:[%s1181 + $0x11] sm:$0xff]
        %v2768 = vld [vmem:[%s1181 + $0x21] sm:$0xff]
        %v2769 = vld [vmem:[%s1181 + $0x31] sm:$0xff]
        %v2770 = vld [vmem:[%s1181 + $0x41] sm:$0xff]
        %v2771 = vld [vmem:[%s1181 + $0x51] sm:$0xff]
        %v2772 = vld [vmem:[%s1181 + $0x61] sm:$0xff]
        %v2773 = vld [vmem:[%s1181 + $0x71] sm:$0xff]
        %v2774 = vld [vmem:[%s1181 + $0x81] sm:$0xff]
        %v2775 = vmul.f32 %v2759, %v1561
        %v2776 = vmul.f32 %v2760, %v1561
        %v2777 = vmul.f32 %v2761, %v1561
        %v2778 = vmul.f32 %v2762, %v1561
        %v2779 = vmul.f32 %v2763, %v1561
        %v2780 = vadd.f32 %v2684, %v2775
        %v2781 = vadd.f32 %v2685, %v2776
        %v2782 = vadd.f32 %v2686, %v2777
        %v2783 = vadd.f32 %v2687, %v2778
        %v2784 = vadd.f32 %v2688, %v2779
        %v2785 = vmul.f32 %v2767, %v1572
        %v2786 = vmul.f32 %v2768, %v1572
        %v2787 = vmul.f32 %v2769, %v1572
        %v2788 = vmul.f32 %v2770, %v1572
        %v2789 = vmul.f32 %v2771, %v1572
        %v2790 = vadd.f32 %v2780, %v2785
        %v2791 = vadd.f32 %v2781, %v2786
        %v2792 = vadd.f32 %v2782, %v2787
        %v2793 = vadd.f32 %v2783, %v2788
        %v2794 = vadd.f32 %v2784, %v2789
        %v2795 = vmul.f32 %v2760, %v1583
        %v2796 = vmul.f32 %v2761, %v1583
        %v2797 = vmul.f32 %v2762, %v1583
        %v2798 = vmul.f32 %v2763, %v1583
        %v2799 = vmul.f32 %v2764, %v1583
        %v2800 = vadd.f32 %v2790, %v2795
        %v2801 = vadd.f32 %v2791, %v2796
        %v2802 = vadd.f32 %v2792, %v2797
        %v2803 = vadd.f32 %v2793, %v2798
        %v2804 = vadd.f32 %v2794, %v2799
        %v2805 = vmul.f32 %v2768, %v1594
        %v2806 = vmul.f32 %v2769, %v1594
        %v2807 = vmul.f32 %v2770, %v1594
        %v2808 = vmul.f32 %v2771, %v1594
        %v2809 = vmul.f32 %v2772, %v1594
        %v2810 = vadd.f32 %v2800, %v2805
        %v2811 = vadd.f32 %v2801, %v2806
        %v2812 = vadd.f32 %v2802, %v2807
        %v2813 = vadd.f32 %v2803, %v2808
        %v2814 = vadd.f32 %v2804, %v2809
        %v2815 = vmul.f32 %v2761, %v1605
        %v2816 = vmul.f32 %v2762, %v1605
        %v2817 = vmul.f32 %v2763, %v1605
        %v2818 = vmul.f32 %v2764, %v1605
        %v2819 = vmul.f32 %v2765, %v1605
        %v2820 = vadd.f32 %v2810, %v2815
        %v2821 = vadd.f32 %v2811, %v2816
        %v2822 = vadd.f32 %v2812, %v2817
        %v2823 = vadd.f32 %v2813, %v2818
        %v2824 = vadd.f32 %v2814, %v2819
        %v2825 = vmul.f32 %v2769, %v1616
        %v2826 = vmul.f32 %v2770, %v1616
        %v2827 = vmul.f32 %v2771, %v1616
        %v2828 = vmul.f32 %v2772, %v1616
        %v2829 = vmul.f32 %v2773, %v1616
        %v2830 = vadd.f32 %v2820, %v2825
        %v2831 = vadd.f32 %v2821, %v2826
        %v2832 = vadd.f32 %v2822, %v2827
        %v2833 = vadd.f32 %v2823, %v2828
        %v2834 = vadd.f32 %v2824, %v2829
        %v2835 = vmul.f32 %v2762, %v1627
        %v2836 = vmul.f32 %v2763, %v1627
        %v2837 = vmul.f32 %v2764, %v1627
        %v2838 = vmul.f32 %v2765, %v1627
        %v2839 = vmul.f32 %v2766, %v1627
        %v2840 = vadd.f32 %v2830, %v2835
        %v2841 = vadd.f32 %v2831, %v2836
        %v2842 = vadd.f32 %v2832, %v2837
        %v2843 = vadd.f32 %v2833, %v2838
        %v2844 = vadd.f32 %v2834, %v2839
        %v2845 = vmul.f32 %v2767, %v1561
        %v2846 = vmul.f32 %v2768, %v1561
        %v2847 = vmul.f32 %v2769, %v1561
        %v2848 = vmul.f32 %v2770, %v1561
        %v2849 = vmul.f32 %v2771, %v1561
        %v2850 = vadd.f32 %v2754, %v2845
        %v2851 = vadd.f32 %v2755, %v2846
        %v2852 = vadd.f32 %v2756, %v2847
        %v2853 = vadd.f32 %v2757, %v2848
        %v2854 = vadd.f32 %v2758, %v2849
        %v2855 = vmul.f32 %v2760, %v1572
        %v2856 = vmul.f32 %v2761, %v1572
        %v2857 = vmul.f32 %v2762, %v1572
        %v2858 = vmul.f32 %v2763, %v1572
        %v2859 = vmul.f32 %v2764, %v1572
        %v2860 = vadd.f32 %v2850, %v2855
        %v2861 = vadd.f32 %v2851, %v2856
        %v2862 = vadd.f32 %v2852, %v2857
        %v2863 = vadd.f32 %v2853, %v2858
        %v2864 = vadd.f32 %v2854, %v2859
        %v2865 = vmul.f32 %v2768, %v1583
        %v2866 = vmul.f32 %v2769, %v1583
        %v2867 = vmul.f32 %v2770, %v1583
        %v2868 = vmul.f32 %v2771, %v1583
        %v2869 = vmul.f32 %v2772, %v1583
        %v2870 = vadd.f32 %v2860, %v2865
        %v2871 = vadd.f32 %v2861, %v2866
        %v2872 = vadd.f32 %v2862, %v2867
        %v2873 = vadd.f32 %v2863, %v2868
        %v2874 = vadd.f32 %v2864, %v2869
        %v2875 = vmul.f32 %v2761, %v1594
        %v2876 = vmul.f32 %v2762, %v1594
        %v2877 = vmul.f32 %v2763, %v1594
        %v2878 = vmul.f32 %v2764, %v1594
        %v2879 = vmul.f32 %v2765, %v1594
        %v2880 = vadd.f32 %v2870, %v2875
        %v2881 = vadd.f32 %v2871, %v2876
        %v2882 = vadd.f32 %v2872, %v2877
        %v2883 = vadd.f32 %v2873, %v2878
        %v2884 = vadd.f32 %v2874, %v2879
        %v2885 = vmul.f32 %v2769, %v1605
        %v2886 = vmul.f32 %v2770, %v1605
        %v2887 = vmul.f32 %v2771, %v1605
        %v2888 = vmul.f32 %v2772, %v1605
        %v2889 = vmul.f32 %v2773, %v1605
        %v2890 = vadd.f32 %v2880, %v2885
        %v2891 = vadd.f32 %v2881, %v2886
        %v2892 = vadd.f32 %v2882, %v2887
        %v2893 = vadd.f32 %v2883, %v2888
        %v2894 = vadd.f32 %v2884, %v2889
        %v2895 = vmul.f32 %v2762, %v1616
        %v2896 = vmul.f32 %v2763, %v1616
        %v2897 = vmul.f32 %v2764, %v1616
        %v2898 = vmul.f32 %v2765, %v1616
        %v2899 = vmul.f32 %v2766, %v1616
        %v2900 = vadd.f32 %v2890, %v2895
        %v2901 = vadd.f32 %v2891, %v2896
        %v2902 = vadd.f32 %v2892, %v2897
        %v2903 = vadd.f32 %v2893, %v2898
        %v2904 = vadd.f32 %v2894, %v2899
        %v2905 = vmul.f32 %v2770, %v1627
        %v2906 = vmul.f32 %v2771, %v1627
        %v2907 = vmul.f32 %v2772, %v1627
        %v2908 = vmul.f32 %v2773, %v1627
        %v2909 = vmul.f32 %v2774, %v1627
        %v2910 = vadd.f32 %v2900, %v2905
        %v2911 = vadd.f32 %v2901, %v2906
        %v2912 = vadd.f32 %v2902, %v2907
        %v2913 = vadd.f32 %v2903, %v2908
        %v2914 = vadd.f32 %v2904, %v2909
        %v2915 = vld [vmem:[#allocation2 + $0x2] sm:$0xff]
        %v2916 = vld [vmem:[#allocation2 + $0x12] sm:$0xff]
        %v2917 = vld [vmem:[#allocation2 + $0x22] sm:$0xff]
        %v2918 = vld [vmem:[#allocation2 + $0x32] sm:$0xff]
        %v2919 = vld [vmem:[#allocation2 + $0x42] sm:$0xff]
        %v2920 = vld [vmem:[#allocation2 + $0x52] sm:$0xff]
        %v2921 = vld [vmem:[#allocation2 + $0x62] sm:$0xff]
        %v2922 = vld [vmem:[#allocation2 + $0x72] sm:$0xff]
        %v2923 = vld [vmem:[%s1194 + $0x12] sm:$0xff]
        %v2924 = vld [vmem:[%s1194 + $0x22] sm:$0xff]
        %v2925 = vld [vmem:[%s1194 + $0x32] sm:$0xff]
        %v2926 = vld [vmem:[%s1194 + $0x42] sm:$0xff]
        %v2927 = vld [vmem:[%s1194 + $0x52] sm:$0xff]
        %v2928 = vld [vmem:[%s1194 + $0x62] sm:$0xff]
        %v2929 = vld [vmem:[%s1194 + $0x72] sm:$0xff]
        %v2930 = vld [vmem:[%s1194 + $0x82] sm:$0xff]
        %v2931 = vmul.f32 %v2915, %v1724
        %v2932 = vmul.f32 %v2916, %v1724
        %v2933 = vmul.f32 %v2917, %v1724
        %v2934 = vmul.f32 %v2918, %v1724
        %v2935 = vmul.f32 %v2919, %v1724
        %v2936 = vadd.f32 %v2840, %v2931
        %v2937 = vadd.f32 %v2841, %v2932
        %v2938 = vadd.f32 %v2842, %v2933
        %v2939 = vadd.f32 %v2843, %v2934
        %v2940 = vadd.f32 %v2844, %v2935
        %v2941 = vmul.f32 %v2923, %v1735
        %v2942 = vmul.f32 %v2924, %v1735
        %v2943 = vmul.f32 %v2925, %v1735
        %v2944 = vmul.f32 %v2926, %v1735
        %v2945 = vmul.f32 %v2927, %v1735
        %v2946 = vadd.f32 %v2936, %v2941
        %v2947 = vadd.f32 %v2937, %v2942
        %v2948 = vadd.f32 %v2938, %v2943
        %v2949 = vadd.f32 %v2939, %v2944
        %v2950 = vadd.f32 %v2940, %v2945
        %v2951 = vmul.f32 %v2916, %v1746
        %v2952 = vmul.f32 %v2917, %v1746
        %v2953 = vmul.f32 %v2918, %v1746
        %v2954 = vmul.f32 %v2919, %v1746
        %v2955 = vmul.f32 %v2920, %v1746
        %v2956 = vadd.f32 %v2946, %v2951
        %v2957 = vadd.f32 %v2947, %v2952
        %v2958 = vadd.f32 %v2948, %v2953
        %v2959 = vadd.f32 %v2949, %v2954
        %v2960 = vadd.f32 %v2950, %v2955
        %v2961 = vmul.f32 %v2924, %v1757
        %v2962 = vmul.f32 %v2925, %v1757
        %v2963 = vmul.f32 %v2926, %v1757
        %v2964 = vmul.f32 %v2927, %v1757
        %v2965 = vmul.f32 %v2928, %v1757
        %v2966 = vadd.f32 %v2956, %v2961
        %v2967 = vadd.f32 %v2957, %v2962
        %v2968 = vadd.f32 %v2958, %v2963
        %v2969 = vadd.f32 %v2959, %v2964
        %v2970 = vadd.f32 %v2960, %v2965
        %v2971 = vmul.f32 %v2917, %v1768
        %v2972 = vmul.f32 %v2918, %v1768
        %v2973 = vmul.f32 %v2919, %v1768
        %v2974 = vmul.f32 %v2920, %v1768
        %v2975 = vmul.f32 %v2921, %v1768
        %v2976 = vadd.f32 %v2966, %v2971
        %v2977 = vadd.f32 %v2967, %v2972
        %v2978 = vadd.f32 %v2968, %v2973
        %v2979 = vadd.f32 %v2969, %v2974
        %v2980 = vadd.f32 %v2970, %v2975
        %v2981 = vmul.f32 %v2925, %v1779
        %v2982 = vmul.f32 %v2926, %v1779
        %v2983 = vmul.f32 %v2927, %v1779
        %v2984 = vmul.f32 %v2928, %v1779
        %v2985 = vmul.f32 %v2929, %v1779
        %v2986 = vadd.f32 %v2976, %v2981
        %v2987 = vadd.f32 %v2977, %v2982
        %v2988 = vadd.f32 %v2978, %v2983
        %v2989 = vadd.f32 %v2979, %v2984
        %v2990 = vadd.f32 %v2980, %v2985
        %v2991 = vmul.f32 %v2918, %v1790
        %v2992 = vmul.f32 %v2919, %v1790
        %v2993 = vmul.f32 %v2920, %v1790
        %v2994 = vmul.f32 %v2921, %v1790
        %v2995 = vmul.f32 %v2922, %v1790
        %v2996 = vadd.f32 %v2986, %v2991
        %v2997 = vadd.f32 %v2987, %v2992
        %v2998 = vadd.f32 %v2988, %v2993
        %v2999 = vadd.f32 %v2989, %v2994
        %v3000 = vadd.f32 %v2990, %v2995
        %v3001 = vmul.f32 %v2923, %v1724
        %v3002 = vmul.f32 %v2924, %v1724
        %v3003 = vmul.f32 %v2925, %v1724
        %v3004 = vmul.f32 %v2926, %v1724
        %v3005 = vmul.f32 %v2927, %v1724
        %v3006 = vadd.f32 %v2910, %v3001
        %v3007 = vadd.f32 %v2911, %v3002
        %v3008 = vadd.f32 %v2912, %v3003
        %v3009 = vadd.f32 %v2913, %v3004
        %v3010 = vadd.f32 %v2914, %v3005
        %v3011 = vmul.f32 %v2916, %v1735
        %v3012 = vmul.f32 %v2917, %v1735
        %v3013 = vmul.f32 %v2918, %v1735
        %v3014 = vmul.f32 %v2919, %v1735
        %v3015 = vmul.f32 %v2920, %v1735
        %v3016 = vadd.f32 %v3006, %v3011
        %v3017 = vadd.f32 %v3007, %v3012
        %v3018 = vadd.f32 %v3008, %v3013
        %v3019 = vadd.f32 %v3009, %v3014
        %v3020 = vadd.f32 %v3010, %v3015
        %v3021 = vmul.f32 %v2924, %v1746
        %v3022 = vmul.f32 %v2925, %v1746
        %v3023 = vmul.f32 %v2926, %v1746
        %v3024 = vmul.f32 %v2927, %v1746
        %v3025 = vmul.f32 %v2928, %v1746
        %v3026 = vadd.f32 %v3016, %v3021
        %v3027 = vadd.f32 %v3017, %v3022
        %v3028 = vadd.f32 %v3018, %v3023
        %v3029 = vadd.f32 %v3019, %v3024
        %v3030 = vadd.f32 %v3020, %v3025
        %v3031 = vmul.f32 %v2917, %v1757
        %v3032 = vmul.f32 %v2918, %v1757
        %v3033 = vmul.f32 %v2919, %v1757
        %v3034 = vmul.f32 %v2920, %v1757
        %v3035 = vmul.f32 %v2921, %v1757
        %v3036 = vadd.f32 %v3026, %v3031
        %v3037 = vadd.f32 %v3027, %v3032
        %v3038 = vadd.f32 %v3028, %v3033
        %v3039 = vadd.f32 %v3029, %v3034
        %v3040 = vadd.f32 %v3030, %v3035
        %v3041 = vmul.f32 %v2925, %v1768
        %v3042 = vmul.f32 %v2926, %v1768
        %v3043 = vmul.f32 %v2927, %v1768
        %v3044 = vmul.f32 %v2928, %v1768
        %v3045 = vmul.f32 %v2929, %v1768
        %v3046 = vadd.f32 %v3036, %v3041
        %v3047 = vadd.f32 %v3037, %v3042
        %v3048 = vadd.f32 %v3038, %v3043
        %v3049 = vadd.f32 %v3039, %v3044
        %v3050 = vadd.f32 %v3040, %v3045
        %v3051 = vmul.f32 %v2918, %v1779
        %v3052 = vmul.f32 %v2919, %v1779
        %v3053 = vmul.f32 %v2920, %v1779
        %v3054 = vmul.f32 %v2921, %v1779
        %v3055 = vmul.f32 %v2922, %v1779
        %v3056 = vadd.f32 %v3046, %v3051
        %v3057 = vadd.f32 %v3047, %v3052
        %v3058 = vadd.f32 %v3048, %v3053
        %v3059 = vadd.f32 %v3049, %v3054
        %v3060 = vadd.f32 %v3050, %v3055
        %v3061 = vmul.f32 %v2926, %v1790
        %v3062 = vmul.f32 %v2927, %v1790
        %v3063 = vmul.f32 %v2928, %v1790
        %v3064 = vmul.f32 %v2929, %v1790
        %v3065 = vmul.f32 %v2930, %v1790
        %v3066 = vadd.f32 %v3056, %v3061
        %v3067 = vadd.f32 %v3057, %v3062
        %v3068 = vadd.f32 %v3058, %v3063
        %v3069 = vadd.f32 %v3059, %v3064
        %v3070 = vadd.f32 %v3060, %v3065
        %v3071 = vld [vmem:[%s1206 + $0x2] sm:$0xff]
        %v3072 = vld [vmem:[%s1206 + $0x12] sm:$0xff]
        %v3073 = vld [vmem:[%s1206 + $0x22] sm:$0xff]
        %v3074 = vld [vmem:[%s1206 + $0x32] sm:$0xff]
        %v3075 = vld [vmem:[%s1206 + $0x42] sm:$0xff]
        %v3076 = vld [vmem:[%s1206 + $0x52] sm:$0xff]
        %v3077 = vld [vmem:[%s1206 + $0x62] sm:$0xff]
        %v3078 = vld [vmem:[%s1206 + $0x72] sm:$0xff]
        %v3079 = vld [vmem:[%s1181 + $0x12] sm:$0xff]
        %v3080 = vld [vmem:[%s1181 + $0x22] sm:$0xff]
        %v3081 = vld [vmem:[%s1181 + $0x32] sm:$0xff]
        %v3082 = vld [vmem:[%s1181 + $0x42] sm:$0xff]
        %v3083 = vld [vmem:[%s1181 + $0x52] sm:$0xff]
        %v3084 = vld [vmem:[%s1181 + $0x62] sm:$0xff]
        %v3085 = vld [vmem:[%s1181 + $0x72] sm:$0xff]
        %v3086 = vld [vmem:[%s1181 + $0x82] sm:$0xff]
        %v3087 = vmul.f32 %v3071, %v1887
        %v3088 = vmul.f32 %v3072, %v1887
        %v3089 = vmul.f32 %v3073, %v1887
        %v3090 = vmul.f32 %v3074, %v1887
        %v3091 = vmul.f32 %v3075, %v1887
        %v3092 = vadd.f32 %v2996, %v3087
        %v3093 = vadd.f32 %v2997, %v3088
        %v3094 = vadd.f32 %v2998, %v3089
        %v3095 = vadd.f32 %v2999, %v3090
        %v3096 = vadd.f32 %v3000, %v3091
        %v3097 = vmul.f32 %v3079, %v1898
        %v3098 = vmul.f32 %v3080, %v1898
        %v3099 = vmul.f32 %v3081, %v1898
        %v3100 = vmul.f32 %v3082, %v1898
        %v3101 = vmul.f32 %v3083, %v1898
        %v3102 = vadd.f32 %v3092, %v3097
        %v3103 = vadd.f32 %v3093, %v3098
        %v3104 = vadd.f32 %v3094, %v3099
        %v3105 = vadd.f32 %v3095, %v3100
        %v3106 = vadd.f32 %v3096, %v3101
        %v3107 = vmul.f32 %v3072, %v1909
        %v3108 = vmul.f32 %v3073, %v1909
        %v3109 = vmul.f32 %v3074, %v1909
        %v3110 = vmul.f32 %v3075, %v1909
        %v3111 = vmul.f32 %v3076, %v1909
        %v3112 = vadd.f32 %v3102, %v3107
        %v3113 = vadd.f32 %v3103, %v3108
        %v3114 = vadd.f32 %v3104, %v3109
        %v3115 = vadd.f32 %v3105, %v3110
        %v3116 = vadd.f32 %v3106, %v3111
        %v3117 = vmul.f32 %v3080, %v1920
        %v3118 = vmul.f32 %v3081, %v1920
        %v3119 = vmul.f32 %v3082, %v1920
        %v3120 = vmul.f32 %v3083, %v1920
        %v3121 = vmul.f32 %v3084, %v1920
        %v3122 = vadd.f32 %v3112, %v3117
        %v3123 = vadd.f32 %v3113, %v3118
        %v3124 = vadd.f32 %v3114, %v3119
        %v3125 = vadd.f32 %v3115, %v3120
        %v3126 = vadd.f32 %v3116, %v3121
        %v3127 = vmul.f32 %v3073, %v1931
        %v3128 = vmul.f32 %v3074, %v1931
        %v3129 = vmul.f32 %v3075, %v1931
        %v3130 = vmul.f32 %v3076, %v1931
        %v3131 = vmul.f32 %v3077, %v1931
        %v3132 = vadd.f32 %v3122, %v3127
        %v3133 = vadd.f32 %v3123, %v3128
        %v3134 = vadd.f32 %v3124, %v3129
        %v3135 = vadd.f32 %v3125, %v3130
        %v3136 = vadd.f32 %v3126, %v3131
        %v3137 = vmul.f32 %v3081, %v1942
        %v3138 = vmul.f32 %v3082, %v1942
        %v3139 = vmul.f32 %v3083, %v1942
        %v3140 = vmul.f32 %v3084, %v1942
        %v3141 = vmul.f32 %v3085, %v1942
        %v3142 = vadd.f32 %v3132, %v3137
        %v3143 = vadd.f32 %v3133, %v3138
        %v3144 = vadd.f32 %v3134, %v3139
        %v3145 = vadd.f32 %v3135, %v3140
        %v3146 = vadd.f32 %v3136, %v3141
        %v3147 = vmul.f32 %v3074, %v1953
        %v3148 = vmul.f32 %v3075, %v1953
        %v3149 = vmul.f32 %v3076, %v1953
        %v3150 = vmul.f32 %v3077, %v1953
        %v3151 = vmul.f32 %v3078, %v1953
        %v3152 = vadd.f32 %v3142, %v3147
        %v3153 = vadd.f32 %v3143, %v3148
        %v3154 = vadd.f32 %v3144, %v3149
        %v3155 = vadd.f32 %v3145, %v3150
        %v3156 = vadd.f32 %v3146, %v3151
        %v3157 = vmul.f32 %v3079, %v1887
        %v3158 = vmul.f32 %v3080, %v1887
        %v3159 = vmul.f32 %v3081, %v1887
        %v3160 = vmul.f32 %v3082, %v1887
        %v3161 = vmul.f32 %v3083, %v1887
        %v3162 = vadd.f32 %v3066, %v3157
        %v3163 = vadd.f32 %v3067, %v3158
        %v3164 = vadd.f32 %v3068, %v3159
        %v3165 = vadd.f32 %v3069, %v3160
        %v3166 = vadd.f32 %v3070, %v3161
        %v3167 = vmul.f32 %v3072, %v1898
        %v3168 = vmul.f32 %v3073, %v1898
        %v3169 = vmul.f32 %v3074, %v1898
        %v3170 = vmul.f32 %v3075, %v1898
        %v3171 = vmul.f32 %v3076, %v1898
        %v3172 = vadd.f32 %v3162, %v3167
        %v3173 = vadd.f32 %v3163, %v3168
        %v3174 = vadd.f32 %v3164, %v3169
        %v3175 = vadd.f32 %v3165, %v3170
        %v3176 = vadd.f32 %v3166, %v3171
        %v3177 = vmul.f32 %v3080, %v1909
        %v3178 = vmul.f32 %v3081, %v1909
        %v3179 = vmul.f32 %v3082, %v1909
        %v3180 = vmul.f32 %v3083, %v1909
        %v3181 = vmul.f32 %v3084, %v1909
        %v3182 = vadd.f32 %v3172, %v3177
        %v3183 = vadd.f32 %v3173, %v3178
        %v3184 = vadd.f32 %v3174, %v3179
        %v3185 = vadd.f32 %v3175, %v3180
        %v3186 = vadd.f32 %v3176, %v3181
        %v3187 = vmul.f32 %v3073, %v1920
        %v3188 = vmul.f32 %v3074, %v1920
        %v3189 = vmul.f32 %v3075, %v1920
        %v3190 = vmul.f32 %v3076, %v1920
        %v3191 = vmul.f32 %v3077, %v1920
        %v3192 = vadd.f32 %v3182, %v3187
        %v3193 = vadd.f32 %v3183, %v3188
        %v3194 = vadd.f32 %v3184, %v3189
        %v3195 = vadd.f32 %v3185, %v3190
        %v3196 = vadd.f32 %v3186, %v3191
        %v3197 = vmul.f32 %v3081, %v1931
        %v3198 = vmul.f32 %v3082, %v1931
        %v3199 = vmul.f32 %v3083, %v1931
        %v3200 = vmul.f32 %v3084, %v1931
        %v3201 = vmul.f32 %v3085, %v1931
        %v3202 = vadd.f32 %v3192, %v3197
        %v3203 = vadd.f32 %v3193, %v3198
        %v3204 = vadd.f32 %v3194, %v3199
        %v3205 = vadd.f32 %v3195, %v3200
        %v3206 = vadd.f32 %v3196, %v3201
        %v3207 = vmul.f32 %v3074, %v1942
        %v3208 = vmul.f32 %v3075, %v1942
        %v3209 = vmul.f32 %v3076, %v1942
        %v3210 = vmul.f32 %v3077, %v1942
        %v3211 = vmul.f32 %v3078, %v1942
        %v3212 = vadd.f32 %v3202, %v3207
        %v3213 = vadd.f32 %v3203, %v3208
        %v3214 = vadd.f32 %v3204, %v3209
        %v3215 = vadd.f32 %v3205, %v3210
        %v3216 = vadd.f32 %v3206, %v3211
        %v3217 = vmul.f32 %v3082, %v1953
        %v3218 = vmul.f32 %v3083, %v1953
        %v3219 = vmul.f32 %v3084, %v1953
        %v3220 = vmul.f32 %v3085, %v1953
        %v3221 = vmul.f32 %v3086, %v1953
        %v3222 = vadd.f32 %v3212, %v3217
        %v3223 = vadd.f32 %v3213, %v3218
        %v3224 = vadd.f32 %v3214, %v3219
        %v3225 = vadd.f32 %v3215, %v3220
        %v3226 = vadd.f32 %v3216, %v3221
        %v3227 = vld [vmem:[#allocation2 + $0x3] sm:$0xff]
        %v3228 = vld [vmem:[#allocation2 + $0x13] sm:$0xff]
        %v3229 = vld [vmem:[#allocation2 + $0x23] sm:$0xff]
        %v3230 = vld [vmem:[#allocation2 + $0x33] sm:$0xff]
        %v3231 = vld [vmem:[#allocation2 + $0x43] sm:$0xff]
        %v3232 = vld [vmem:[#allocation2 + $0x53] sm:$0xff]
        %v3233 = vld [vmem:[#allocation2 + $0x63] sm:$0xff]
        %v3234 = vld [vmem:[#allocation2 + $0x73] sm:$0xff]
        %v3235 = vld [vmem:[%s1194 + $0x13] sm:$0xff]
        %v3236 = vld [vmem:[%s1194 + $0x23] sm:$0xff]
        %v3237 = vld [vmem:[%s1194 + $0x33] sm:$0xff]
        %v3238 = vld [vmem:[%s1194 + $0x43] sm:$0xff]
        %v3239 = vld [vmem:[%s1194 + $0x53] sm:$0xff]
        %v3240 = vld [vmem:[%s1194 + $0x63] sm:$0xff]
        %v3241 = vld [vmem:[%s1194 + $0x73] sm:$0xff]
        %v3242 = vld [vmem:[%s1194 + $0x83] sm:$0xff]
        %v3243 = vmul.f32 %v3227, %v2050
        %v3244 = vmul.f32 %v3228, %v2050
        %v3245 = vmul.f32 %v3229, %v2050
        %v3246 = vmul.f32 %v3230, %v2050
        %v3247 = vmul.f32 %v3231, %v2050
        %v3248 = vadd.f32 %v3152, %v3243
        %v3249 = vadd.f32 %v3153, %v3244
        %v3250 = vadd.f32 %v3154, %v3245
        %v3251 = vadd.f32 %v3155, %v3246
        %v3252 = vadd.f32 %v3156, %v3247
        %v3253 = vmul.f32 %v3235, %v2061
        %v3254 = vmul.f32 %v3236, %v2061
        %v3255 = vmul.f32 %v3237, %v2061
        %v3256 = vmul.f32 %v3238, %v2061
        %v3257 = vmul.f32 %v3239, %v2061
        %v3258 = vadd.f32 %v3248, %v3253
        %v3259 = vadd.f32 %v3249, %v3254
        %v3260 = vadd.f32 %v3250, %v3255
        %v3261 = vadd.f32 %v3251, %v3256
        %v3262 = vadd.f32 %v3252, %v3257
        %v3263 = vmul.f32 %v3228, %v2072
        %v3264 = vmul.f32 %v3229, %v2072
        %v3265 = vmul.f32 %v3230, %v2072
        %v3266 = vmul.f32 %v3231, %v2072
        %v3267 = vmul.f32 %v3232, %v2072
        %v3268 = vadd.f32 %v3258, %v3263
        %v3269 = vadd.f32 %v3259, %v3264
        %v3270 = vadd.f32 %v3260, %v3265
        %v3271 = vadd.f32 %v3261, %v3266
        %v3272 = vadd.f32 %v3262, %v3267
        %v3273 = vmul.f32 %v3236, %v2083
        %v3274 = vmul.f32 %v3237, %v2083
        %v3275 = vmul.f32 %v3238, %v2083
        %v3276 = vmul.f32 %v3239, %v2083
        %v3277 = vmul.f32 %v3240, %v2083
        %v3278 = vadd.f32 %v3268, %v3273
        %v3279 = vadd.f32 %v3269, %v3274
        %v3280 = vadd.f32 %v3270, %v3275
        %v3281 = vadd.f32 %v3271, %v3276
        %v3282 = vadd.f32 %v3272, %v3277
        %v3283 = vmul.f32 %v3229, %v2094
        %v3284 = vmul.f32 %v3230, %v2094
        %v3285 = vmul.f32 %v3231, %v2094
        %v3286 = vmul.f32 %v3232, %v2094
        %v3287 = vmul.f32 %v3233, %v2094
        %v3288 = vadd.f32 %v3278, %v3283
        %v3289 = vadd.f32 %v3279, %v3284
        %v3290 = vadd.f32 %v3280, %v3285
        %v3291 = vadd.f32 %v3281, %v3286
        %v3292 = vadd.f32 %v3282, %v3287
        %v3293 = vmul.f32 %v3237, %v2105
        %v3294 = vmul.f32 %v3238, %v2105
        %v3295 = vmul.f32 %v3239, %v2105
        %v3296 = vmul.f32 %v3240, %v2105
        %v3297 = vmul.f32 %v3241, %v2105
        %v3298 = vadd.f32 %v3288, %v3293
        %v3299 = vadd.f32 %v3289, %v3294
        %v3300 = vadd.f32 %v3290, %v3295
        %v3301 = vadd.f32 %v3291, %v3296
        %v3302 = vadd.f32 %v3292, %v3297
        %v3303 = vmul.f32 %v3230, %v2116
        %v3304 = vmul.f32 %v3231, %v2116
        %v3305 = vmul.f32 %v3232, %v2116
        %v3306 = vmul.f32 %v3233, %v2116
        %v3307 = vmul.f32 %v3234, %v2116
        %v3308 = vadd.f32 %v3298, %v3303
        %v3309 = vadd.f32 %v3299, %v3304
        %v3310 = vadd.f32 %v3300, %v3305
        %v3311 = vadd.f32 %v3301, %v3306
        %v3312 = vadd.f32 %v3302, %v3307
        %v3313 = vmul.f32 %v3235, %v2050
        %v3314 = vmul.f32 %v3236, %v2050
        %v3315 = vmul.f32 %v3237, %v2050
        %v3316 = vmul.f32 %v3238, %v2050
        %v3317 = vmul.f32 %v3239, %v2050
        %v3318 = vadd.f32 %v3222, %v3313
        %v3319 = vadd.f32 %v3223, %v3314
        %v3320 = vadd.f32 %v3224, %v3315
        %v3321 = vadd.f32 %v3225, %v3316
        %v3322 = vadd.f32 %v3226, %v3317
        %v3323 = vmul.f32 %v3228, %v2061
        %v3324 = vmul.f32 %v3229, %v2061
        %v3325 = vmul.f32 %v3230, %v2061
        %v3326 = vmul.f32 %v3231, %v2061
        %v3327 = vmul.f32 %v3232, %v2061
        %v3328 = vadd.f32 %v3318, %v3323
        %v3329 = vadd.f32 %v3319, %v3324
        %v3330 = vadd.f32 %v3320, %v3325
        %v3331 = vadd.f32 %v3321, %v3326
        %v3332 = vadd.f32 %v3322, %v3327
        %v3333 = vmul.f32 %v3236, %v2072
        %v3334 = vmul.f32 %v3237, %v2072
        %v3335 = vmul.f32 %v3238, %v2072
        %v3336 = vmul.f32 %v3239, %v2072
        %v3337 = vmul.f32 %v3240, %v2072
        %v3338 = vadd.f32 %v3328, %v3333
        %v3339 = vadd.f32 %v3329, %v3334
        %v3340 = vadd.f32 %v3330, %v3335
        %v3341 = vadd.f32 %v3331, %v3336
        %v3342 = vadd.f32 %v3332, %v3337
        %v3343 = vmul.f32 %v3229, %v2083
        %v3344 = vmul.f32 %v3230, %v2083
        %v3345 = vmul.f32 %v3231, %v2083
        %v3346 = vmul.f32 %v3232, %v2083
        %v3347 = vmul.f32 %v3233, %v2083
        %v3348 = vadd.f32 %v3338, %v3343
        %v3349 = vadd.f32 %v3339, %v3344
        %v3350 = vadd.f32 %v3340, %v3345
        %v3351 = vadd.f32 %v3341, %v3346
        %v3352 = vadd.f32 %v3342, %v3347
        %v3353 = vmul.f32 %v3237, %v2094
        %v3354 = vmul.f32 %v3238, %v2094
        %v3355 = vmul.f32 %v3239, %v2094
        %v3356 = vmul.f32 %v3240, %v2094
        %v3357 = vmul.f32 %v3241, %v2094
        %v3358 = vadd.f32 %v3348, %v3353
        %v3359 = vadd.f32 %v3349, %v3354
        %v3360 = vadd.f32 %v3350, %v3355
        %v3361 = vadd.f32 %v3351, %v3356
        %v3362 = vadd.f32 %v3352, %v3357
        %v3363 = vmul.f32 %v3230, %v2105
        %v3364 = vmul.f32 %v3231, %v2105
        %v3365 = vmul.f32 %v3232, %v2105
        %v3366 = vmul.f32 %v3233, %v2105
        %v3367 = vmul.f32 %v3234, %v2105
        %v3368 = vadd.f32 %v3358, %v3363
        %v3369 = vadd.f32 %v3359, %v3364
        %v3370 = vadd.f32 %v3360, %v3365
        %v3371 = vadd.f32 %v3361, %v3366
        %v3372 = vadd.f32 %v3362, %v3367
        %v3373 = vmul.f32 %v3238, %v2116
        %v3374 = vmul.f32 %v3239, %v2116
        %v3375 = vmul.f32 %v3240, %v2116
        %v3376 = vmul.f32 %v3241, %v2116
        %v3377 = vmul.f32 %v3242, %v2116
        %v3378 = vadd.f32 %v3368, %v3373
        %v3379 = vadd.f32 %v3369, %v3374
        %v3380 = vadd.f32 %v3370, %v3375
        %v3381 = vadd.f32 %v3371, %v3376
        %v3382 = vadd.f32 %v3372, %v3377
        %v3383 = vld [vmem:[%s1206 + $0x3] sm:$0xff]
        %v3384 = vld [vmem:[%s1206 + $0x13] sm:$0xff]
        %v3385 = vld [vmem:[%s1206 + $0x23] sm:$0xff]
        %v3386 = vld [vmem:[%s1206 + $0x33] sm:$0xff]
        %v3387 = vld [vmem:[%s1206 + $0x43] sm:$0xff]
        %v3388 = vld [vmem:[%s1206 + $0x53] sm:$0xff]
        %v3389 = vld [vmem:[%s1206 + $0x63] sm:$0xff]
        %v3390 = vld [vmem:[%s1206 + $0x73] sm:$0xff]
        %v3391 = vld [vmem:[%s1181 + $0x13] sm:$0xff]
        %v3392 = vld [vmem:[%s1181 + $0x23] sm:$0xff]
        %v3393 = vld [vmem:[%s1181 + $0x33] sm:$0xff]
        %v3394 = vld [vmem:[%s1181 + $0x43] sm:$0xff]
        %v3395 = vld [vmem:[%s1181 + $0x53] sm:$0xff]
        %v3396 = vld [vmem:[%s1181 + $0x63] sm:$0xff]
        %v3397 = vld [vmem:[%s1181 + $0x73] sm:$0xff]
        %v3398 = vld [vmem:[%s1181 + $0x83] sm:$0xff]
        %v3399 = vmul.f32 %v3383, %v2213
        %v3400 = vmul.f32 %v3384, %v2213
        %v3401 = vmul.f32 %v3385, %v2213
        %v3402 = vmul.f32 %v3386, %v2213
        %v3403 = vmul.f32 %v3387, %v2213
        %v3404 = vadd.f32 %v3308, %v3399
        %v3405 = vadd.f32 %v3309, %v3400
        %v3406 = vadd.f32 %v3310, %v3401
        %v3407 = vadd.f32 %v3311, %v3402
        %v3408 = vadd.f32 %v3312, %v3403
        %v3409 = vmul.f32 %v3391, %v2224
        %v3410 = vmul.f32 %v3392, %v2224
        %v3411 = vmul.f32 %v3393, %v2224
        %v3412 = vmul.f32 %v3394, %v2224
        %v3413 = vmul.f32 %v3395, %v2224
        %v3414 = vadd.f32 %v3404, %v3409
        %v3415 = vadd.f32 %v3405, %v3410
        %v3416 = vadd.f32 %v3406, %v3411
        %v3417 = vadd.f32 %v3407, %v3412
        %v3418 = vadd.f32 %v3408, %v3413
        %v3419 = vmul.f32 %v3384, %v2235
        %v3420 = vmul.f32 %v3385, %v2235
        %v3421 = vmul.f32 %v3386, %v2235
        %v3422 = vmul.f32 %v3387, %v2235
        %v3423 = vmul.f32 %v3388, %v2235
        %v3424 = vadd.f32 %v3414, %v3419
        %v3425 = vadd.f32 %v3415, %v3420
        %v3426 = vadd.f32 %v3416, %v3421
        %v3427 = vadd.f32 %v3417, %v3422
        %v3428 = vadd.f32 %v3418, %v3423
        %v3429 = vmul.f32 %v3392, %v2246
        %v3430 = vmul.f32 %v3393, %v2246
        %v3431 = vmul.f32 %v3394, %v2246
        %v3432 = vmul.f32 %v3395, %v2246
        %v3433 = vmul.f32 %v3396, %v2246
        %v3434 = vadd.f32 %v3424, %v3429
        %v3435 = vadd.f32 %v3425, %v3430
        %v3436 = vadd.f32 %v3426, %v3431
        %v3437 = vadd.f32 %v3427, %v3432
        %v3438 = vadd.f32 %v3428, %v3433
        %v3439 = vmul.f32 %v3385, %v2257
        %v3440 = vmul.f32 %v3386, %v2257
        %v3441 = vmul.f32 %v3387, %v2257
        %v3442 = vmul.f32 %v3388, %v2257
        %v3443 = vmul.f32 %v3389, %v2257
        %v3444 = vadd.f32 %v3434, %v3439
        %v3445 = vadd.f32 %v3435, %v3440
        %v3446 = vadd.f32 %v3436, %v3441
        %v3447 = vadd.f32 %v3437, %v3442
        %v3448 = vadd.f32 %v3438, %v3443
        %v3449 = vmul.f32 %v3393, %v2268
        %v3450 = vmul.f32 %v3394, %v2268
        %v3451 = vmul.f32 %v3395, %v2268
        %v3452 = vmul.f32 %v3396, %v2268
        %v3453 = vmul.f32 %v3397, %v2268
        %v3454 = vadd.f32 %v3444, %v3449
        %v3455 = vadd.f32 %v3445, %v3450
        %v3456 = vadd.f32 %v3446, %v3451
        %v3457 = vadd.f32 %v3447, %v3452
        %v3458 = vadd.f32 %v3448, %v3453
        %v3459 = vmul.f32 %v3386, %v2279
        %v3460 = vmul.f32 %v3387, %v2279
        %v3461 = vmul.f32 %v3388, %v2279
        %v3462 = vmul.f32 %v3389, %v2279
        %v3463 = vmul.f32 %v3390, %v2279
        %v3464 = vadd.f32 %v3454, %v3459
        %v3465 = vadd.f32 %v3455, %v3460
        %v3466 = vadd.f32 %v3456, %v3461
        %v3467 = vadd.f32 %v3457, %v3462
        %v3468 = vadd.f32 %v3458, %v3463
        %v3469 = vmul.f32 %v3391, %v2213
        %v3470 = vmul.f32 %v3392, %v2213
        %v3471 = vmul.f32 %v3393, %v2213
        %v3472 = vmul.f32 %v3394, %v2213
        %v3473 = vmul.f32 %v3395, %v2213
        %v3474 = vadd.f32 %v3378, %v3469
        %v3475 = vadd.f32 %v3379, %v3470
        %v3476 = vadd.f32 %v3380, %v3471
        %v3477 = vadd.f32 %v3381, %v3472
        %v3478 = vadd.f32 %v3382, %v3473
        %v3479 = vmul.f32 %v3384, %v2224
        %v3480 = vmul.f32 %v3385, %v2224
        %v3481 = vmul.f32 %v3386, %v2224
        %v3482 = vmul.f32 %v3387, %v2224
        %v3483 = vmul.f32 %v3388, %v2224
        %v3484 = vadd.f32 %v3474, %v3479
        %v3485 = vadd.f32 %v3475, %v3480
        %v3486 = vadd.f32 %v3476, %v3481
        %v3487 = vadd.f32 %v3477, %v3482
        %v3488 = vadd.f32 %v3478, %v3483
        %v3489 = vmul.f32 %v3392, %v2235
        %v3490 = vmul.f32 %v3393, %v2235
        %v3491 = vmul.f32 %v3394, %v2235
        %v3492 = vmul.f32 %v3395, %v2235
        %v3493 = vmul.f32 %v3396, %v2235
        %v3494 = vadd.f32 %v3484, %v3489
        %v3495 = vadd.f32 %v3485, %v3490
        %v3496 = vadd.f32 %v3486, %v3491
        %v3497 = vadd.f32 %v3487, %v3492
        %v3498 = vadd.f32 %v3488, %v3493
        %v3499 = vmul.f32 %v3385, %v2246
        %v3500 = vmul.f32 %v3386, %v2246
        %v3501 = vmul.f32 %v3387, %v2246
        %v3502 = vmul.f32 %v3388, %v2246
        %v3503 = vmul.f32 %v3389, %v2246
        %v3504 = vadd.f32 %v3494, %v3499
        %v3505 = vadd.f32 %v3495, %v3500
        %v3506 = vadd.f32 %v3496, %v3501
        %v3507 = vadd.f32 %v3497, %v3502
        %v3508 = vadd.f32 %v3498, %v3503
        %v3509 = vmul.f32 %v3393, %v2257
        %v3510 = vmul.f32 %v3394, %v2257
        %v3511 = vmul.f32 %v3395, %v2257
        %v3512 = vmul.f32 %v3396, %v2257
        %v3513 = vmul.f32 %v3397, %v2257
        %v3514 = vadd.f32 %v3504, %v3509
        %v3515 = vadd.f32 %v3505, %v3510
        %v3516 = vadd.f32 %v3506, %v3511
        %v3517 = vadd.f32 %v3507, %v3512
        %v3518 = vadd.f32 %v3508, %v3513
        %v3519 = vmul.f32 %v3386, %v2268
        %v3520 = vmul.f32 %v3387, %v2268
        %v3521 = vmul.f32 %v3388, %v2268
        %v3522 = vmul.f32 %v3389, %v2268
        %v3523 = vmul.f32 %v3390, %v2268
        %v3524 = vadd.f32 %v3514, %v3519
        %v3525 = vadd.f32 %v3515, %v3520
        %v3526 = vadd.f32 %v3516, %v3521
        %v3527 = vadd.f32 %v3517, %v3522
        %v3528 = vadd.f32 %v3518, %v3523
        %v3529 = vmul.f32 %v3394, %v2279
        %v3530 = vmul.f32 %v3395, %v2279
        %v3531 = vmul.f32 %v3396, %v2279
        %v3532 = vmul.f32 %v3397, %v2279
        %v3533 = vmul.f32 %v3398, %v2279
        %v3534 = vadd.f32 %v3524, %v3529
        %v3535 = vadd.f32 %v3525, %v3530
        %v3536 = vadd.f32 %v3526, %v3531
        %v3537 = vadd.f32 %v3527, %v3532
        %v3538 = vadd.f32 %v3528, %v3533
        %v3539 = vsel %vm931, %v3464, -inf
        %s3540 = scalar_lea.vmem [#allocation3], 80
        %3541 = vst.msk [vmem:[%s3540 + $0x1] sm:$0xff] %vm1182, %v3539
        %s3542 = scalar_lea.vmem [#allocation3], 96
        %3543 = vst.msk [vmem:[%s3542 + $0x1] sm:$0xff] %vm1182, %v3465
        %3544 = vst.msk [vmem:[%s3542 + $0x11] sm:$0xff] %vm1182, %v3466
        %3545 = vst.msk [vmem:[%s3542 + $0x21] sm:$0xff] %vm1182, %v3467
        %3546 = vst.msk [vmem:[%s3542 + $0x31] sm:$0xff] %vm1182, %v3468
        %v3548 = vsel %vm1182, %v3465, 0
        %v3551 = vsel %vm1182, %v3466, 0
        %v3554 = vsel %vm1182, %v3467, 0
        %v3557 = vsel %vm1182, %v3468, 0
        %3559 = vmatpush.msra.mxu0 0.0
        %3560 = vmatpush.msra.mxu0 0.0
        %3561 = vmatpush.msra.mxu0 0.0
        %3562 = vmatpush.msra.mxu0 0.0
        %3563 = vmatpush.msra.mxu0 0.0
        %3564 = vmatpush.msra.mxu0 0.0
        %3565 = vmatpush.msra.mxu0 0.0
        %3566 = vmatpush.msra.mxu0 0.0
        %3567 = vmatpush.msra.mxu0 0.0
        %3568 = vmatpush.msra.mxu0 0.0
        %3569 = vmatpush.msra.mxu0 0.0
        %3570 = vmatpush.msra.mxu0 0.0
        %3571 = vmatpush.msra.mxu0 0.0
        %3572 = vmatpush.msra.mxu0 0.0
        %3573 = vmatpush.msra.mxu0 0.0
        %3574 = vmatpush.msra.mxu0 %v709
        %3575 = vmatmul.f32.gmra.mxu0 %v3548
        %v3576 = vpop.f32.mrf.mxu0
        %v3577 = vadd.f32 0.0, %v3576
        %3578 = vmatmul.f32.gmra.mxu0 %v3551
        %v3579 = vpop.f32.mrf.mxu0
        %v3580 = vadd.f32 0.0, %v3579
        %3581 = vmatmul.f32.gmra.mxu0 %v3554
        %v3582 = vpop.f32.mrf.mxu0
        %v3583 = vadd.f32 0.0, %v3582
        %3584 = vmatmul.f32.gmra.mxu0 %v3557
        %v3585 = vpop.f32.mrf.mxu0
        %v3586 = vadd.f32 0.0, %v3585
        %3587 = vdwg.mxu0
        %v3588 = vadd.f32 %v2446, %v3577
        %v3589 = vadd.f32 %v2449, %v3580
        %v3590 = vadd.f32 %v2452, %v3583
        %v3591 = vadd.f32 %v2455, %v3586
        %v3592 = vsel %vm931, %v3534, -inf
        %s3593 = scalar_lea.vmem [#allocation3], 240
        %3594 = vst.msk [vmem:[%s3593 + $0x1] sm:$0xff] %vm1182, %v3592
        %s3595 = scalar_lea.vmem [#allocation3], 256
        %3596 = vst.msk [vmem:[%s3595 + $0x1] sm:$0xff] %vm1182, %v3535
        %3597 = vst.msk [vmem:[%s3595 + $0x11] sm:$0xff] %vm1182, %v3536
        %3598 = vst.msk [vmem:[%s3595 + $0x21] sm:$0xff] %vm1182, %v3537
        %3599 = vst.msk [vmem:[%s3595 + $0x31] sm:$0xff] %vm1182, %v3538
        %v3601 = vsel %vm1182, %v3535, 0
        %v3604 = vsel %vm1182, %v3536, 0
        %v3607 = vsel %vm1182, %v3537, 0
        %v3610 = vsel %vm1182, %v3538, 0
        %3612 = vmatpush.msra.mxu0 0.0
        %3613 = vmatpush.msra.mxu0 0.0
        %3614 = vmatpush.msra.mxu0 0.0
        %3615 = vmatpush.msra.mxu0 0.0
        %3616 = vmatpush.msra.mxu0 0.0
        %3617 = vmatpush.msra.mxu0 0.0
        %3618 = vmatpush.msra.mxu0 0.0
        %3619 = vmatpush.msra.mxu0 0.0
        %3620 = vmatpush.msra.mxu0 0.0
        %3621 = vmatpush.msra.mxu0 0.0
        %3622 = vmatpush.msra.mxu0 0.0
        %3623 = vmatpush.msra.mxu0 0.0
        %3624 = vmatpush.msra.mxu0 0.0
        %3625 = vmatpush.msra.mxu0 0.0
        %3626 = vmatpush.msra.mxu0 0.0
        %3627 = vmatpush.msra.mxu0 %v710
        %3628 = vmatmul.f32.gmra.mxu0 %v3601
        %v3629 = vpop.f32.mrf.mxu0
        %v3630 = vadd.f32 0.0, %v3629
        %3631 = vmatmul.f32.gmra.mxu0 %v3604
        %v3632 = vpop.f32.mrf.mxu0
        %v3633 = vadd.f32 0.0, %v3632
        %3634 = vmatmul.f32.gmra.mxu0 %v3607
        %v3635 = vpop.f32.mrf.mxu0
        %v3636 = vadd.f32 0.0, %v3635
        %3637 = vmatmul.f32.gmra.mxu0 %v3610
        %v3638 = vpop.f32.mrf.mxu0
        %v3639 = vadd.f32 0.0, %v3638
        %3640 = vdwg.mxu0
        %v3641 = vadd.f32 %v3588, %v3630
        %v3642 = vadd.f32 %v3589, %v3633
        %v3643 = vadd.f32 %v3590, %v3636
        %v3644 = vadd.f32 %v3591, %v3639
        %v3645 = vld [vmem:[%s3593] sm:$0xff]
        %v3646 = vld [vmem:[%s3593 + $0x10] sm:$0xff]
        %v3647 = vld [vmem:[%s3593 + $0x20] sm:$0xff]
        %v3648 = vld [vmem:[%s3593 + $0x30] sm:$0xff]
        %v3649 = vld [vmem:[%s2368 + $0x1] sm:$0xff]
        %v3650 = vld [vmem:[%s2368 + $0x11] sm:$0xff]
        %v3651 = vld [vmem:[%s2368 + $0x21] sm:$0xff]
        %v3652 = vld [vmem:[%s2368 + $0x31] sm:$0xff]
        %v3653 = vmax.f32 %v3645, %v3649
        %v3654 = vmax.f32 %v3646, %v3650
        %v3655 = vmax.f32 %v3647, %v3651
        %v3656 = vmax.f32 %v3648, %v3652
        %v3657 = vld [vmem:[%s3593 + $0x1] sm:$0xff]
        %v3658 = vld [vmem:[%s3593 + $0x11] sm:$0xff]
        %v3659 = vld [vmem:[%s3593 + $0x21] sm:$0xff]
        %v3660 = vld [vmem:[%s3593 + $0x31] sm:$0xff]
        %v3661 = vmax.f32 %v3653, %v3657
        %v3662 = vmax.f32 %v3654, %v3658
        %v3663 = vmax.f32 %v3655, %v3659
        %v3664 = vmax.f32 %v3656, %v3660
        %v3665 = vld [vmem:[%s3542] sm:$0xff]
        %v3666 = vld [vmem:[%s3542 + $0x10] sm:$0xff]
        %v3667 = vld [vmem:[%s3542 + $0x20] sm:$0xff]
        %v3668 = vld [vmem:[%s3542 + $0x30] sm:$0xff]
        %v3669 = vmax.f32 %v3661, %v3665
        %v3670 = vmax.f32 %v3662, %v3666
        %v3671 = vmax.f32 %v3663, %v3667
        %v3672 = vmax.f32 %v3664, %v3668
        %v3673 = vld [vmem:[%s2362 + $0x1] sm:$0xff]
        %v3674 = vld [vmem:[%s2362 + $0x11] sm:$0xff]
        %v3675 = vld [vmem:[%s2362 + $0x21] sm:$0xff]
        %v3676 = vld [vmem:[%s2362 + $0x31] sm:$0xff]
        %v3677 = vmax.f32 %v3669, %v3673
        %v3678 = vmax.f32 %v3670, %v3674
        %v3679 = vmax.f32 %v3671, %v3675
        %v3680 = vmax.f32 %v3672, %v3676
        %v3681 = vld [vmem:[%s3542 + $0x1] sm:$0xff]
        %v3682 = vld [vmem:[%s3542 + $0x11] sm:$0xff]
        %v3683 = vld [vmem:[%s3542 + $0x21] sm:$0xff]
        %v3684 = vld [vmem:[%s3542 + $0x31] sm:$0xff]
        %v3685 = vmax.f32 %v3677, %v3681
        %v3686 = vmax.f32 %v3678, %v3682
        %v3687 = vmax.f32 %v3679, %v3683
        %v3688 = vmax.f32 %v3680, %v3684
        %v3689 = vld [vmem:[%s3595] sm:$0xff]
        %v3690 = vld [vmem:[%s3595 + $0x10] sm:$0xff]
        %v3691 = vld [vmem:[%s3595 + $0x20] sm:$0xff]
        %v3692 = vld [vmem:[%s3595 + $0x30] sm:$0xff]
        %v3693 = vmax.f32 %v3685, %v3689
        %v3694 = vmax.f32 %v3686, %v3690
        %v3695 = vmax.f32 %v3687, %v3691
        %v3696 = vmax.f32 %v3688, %v3692
        %v3697 = vld [vmem:[%s2370 + $0x1] sm:$0xff]
        %v3698 = vld [vmem:[%s2370 + $0x11] sm:$0xff]
        %v3699 = vld [vmem:[%s2370 + $0x21] sm:$0xff]
        %v3700 = vld [vmem:[%s2370 + $0x31] sm:$0xff]
        %v3701 = vmax.f32 %v3693, %v3697
        %v3702 = vmax.f32 %v3694, %v3698
        %v3703 = vmax.f32 %v3695, %v3699
        %v3704 = vmax.f32 %v3696, %v3700
        %v3705 = vld [vmem:[%s3595 + $0x1] sm:$0xff]
        %v3706 = vld [vmem:[%s3595 + $0x11] sm:$0xff]
        %v3707 = vld [vmem:[%s3595 + $0x21] sm:$0xff]
        %v3708 = vld [vmem:[%s3595 + $0x31] sm:$0xff]
        %v3709 = vmax.f32 %v3701, %v3705
        %v3710 = vmax.f32 %v3702, %v3706
        %v3711 = vmax.f32 %v3703, %v3707
        %v3712 = vmax.f32 %v3704, %v3708
        %v3714 = vsel %vm1182, %v3709, 0
        %v3717 = vsel %vm1182, %v3710, 0
        %v3720 = vsel %vm1182, %v3711, 0
        %v3723 = vsel %vm1182, %v3712, 0
        %3725 = vmatpush.msra.mxu0 0.0
        %3726 = vmatpush.msra.mxu0 0.0
        %3727 = vmatpush.msra.mxu0 0.0
        %3728 = vmatpush.msra.mxu0 0.0
        %3729 = vmatpush.msra.mxu0 0.0
        %3730 = vmatpush.msra.mxu0 0.0
        %3731 = vmatpush.msra.mxu0 0.0
        %3732 = vmatpush.msra.mxu0 0.0
        %3733 = vmatpush.msra.mxu0 0.0
        %3734 = vmatpush.msra.mxu0 0.0
        %3735 = vmatpush.msra.mxu0 0.0
        %3736 = vmatpush.msra.mxu0 0.0
        %3737 = vmatpush.msra.mxu0 0.0
        %3738 = vmatpush.msra.mxu0 0.0
        %3739 = vmatpush.msra.mxu0 0.0
        %3740 = vmatpush.msra.mxu0 %v711
        %3741 = vmatmul.f32.gmra.mxu0 %v3714
        %v3742 = vpop.f32.mrf.mxu0
        %v3743 = vadd.f32 0.0, %v3742
        %3744 = vmatmul.f32.gmra.mxu0 %v3717
        %v3745 = vpop.f32.mrf.mxu0
        %v3746 = vadd.f32 0.0, %v3745
        %3747 = vmatmul.f32.gmra.mxu0 %v3720
        %v3748 = vpop.f32.mrf.mxu0
        %v3749 = vadd.f32 0.0, %v3748
        %3750 = vmatmul.f32.gmra.mxu0 %v3723
        %v3751 = vpop.f32.mrf.mxu0
        %v3752 = vadd.f32 0.0, %v3751
        %3753 = vdwg.mxu0
        %v3754 = vadd.f32 %v3641, %v3743
        %v3755 = vadd.f32 %v3642, %v3746
        %v3756 = vadd.f32 %v3643, %v3749
        %v3757 = vadd.f32 %v3644, %v3752
        %v3759 = vperm.slane %v712, 0
        %v3761 = vadd.f32 %v3754, %v3759
        %v3762 = vadd.f32 %v3755, %v3759
        %v3763 = vadd.f32 %v3756, %v3759
        %v3764 = vadd.f32 %v3757, %v3759
        %v3765 = vmax.f32 %v3761, 0.0
        %v3766 = vmax.f32 %v3762, 0.0
        %v3767 = vmax.f32 %v3763, 0.0
        %v3768 = vmax.f32 %v3764, 0.0
        %3769 = vst.msk [vmem:[%s694] sm:$0xff] %vm1182, %v3765
        %3770 = vst.msk [vmem:[%s694 + $0x8] sm:$0xff] %vm1182, %v3766
        %3771 = vst.msk [vmem:[%s694 + $0x10] sm:$0xff] %vm1182, %v3767
        %3772 = vst.msk [vmem:[%s694 + $0x18] sm:$0xff] %vm1182, %v3768
        %s3773 = smul.u32 4, %s24
        %p3774 = scmp.lt.s32.totalorder %s23, 1
        %s3775 = scalar_select %p3774, %s23, 1
        %p3776 = scmp.lt.s32.totalorder %s3773, 7
        %s3777 = scalar_select %p3776, %s3773, 7
        %s3778 = smul.addr %s3775, 8
        %s3779 = sadd.s32 %s3777, %s3778
        %s3780 = smul.addr %s3779, 8
        %s3781 = scalar_lea.vmem %s8, %s3780
        // Predicated region
        $region167: #{vanila_conv_forward.1} parent=153 // pred_check
          %p3782 = pneg %p252
        $region168: #{vanila_conv_forward.1} parent=153 // pred_check_branch
          %3784 = sbr.rel (%p3782) target = $region170
        $region169: #{vanila_conv_forward.1} parent=153 // pred_region
          %s3785 = smul.u32 4, %s24
        $region170: #{vanila_conv_forward.1} parent=153 // pred_fallthru
          _
      $region154: #{vanila_conv_forward.1} parent=5 // pred_fallthru
        _
      %p3786 = scmp.le.s32.totalorder 2, %s14
      // Predicated region
      $region171: #{vanila_conv_forward.1} parent=5 // pred_check
        %p3787 = pneg %p3786
      $region172: #{vanila_conv_forward.1} parent=5 // pred_check_branch
        %3789 = sbr.rel (%p3787) target = $region174
      $region173: #{vanila_conv_forward.1} parent=5 // pred_region
        %s3790 = ssub.s32 %s14, 2
        // Predicated region
        $region175: #{vanila_conv_forward.1} parent=173 // pred_check
          %p3791 = pneg %p258
        $region176: #{vanila_conv_forward.1} parent=173 // pred_check_branch
          %3793 = sbr.rel (%p3791) target = $region178
        $region177: #{vanila_conv_forward.1} parent=173 // pred_region
          %s3794 = smul.u32 4, %s26
          %p3795 = scmp.lt.s32.totalorder %s25, 1
          %s3796 = scalar_select %p3795, %s25, 1
          %p3797 = scmp.lt.s32.totalorder %s3794, 7
          %s3798 = scalar_select %p3797, %s3794, 7
          %s3799 = smul.addr %s3796, 8
          %s3800 = sadd.s32 %s3798, %s3799
          %s3801 = smul.addr %s3800, 8
          %s3802 = scalar_lea.vmem %s8, %s3801
        $region178: #{vanila_conv_forward.1} parent=173 // pred_fallthru
          _
      $region174: #{vanila_conv_forward.1} parent=5 // pred_fallthru
        _
    $region6: #{vanila_conv_forward.1} parent=1 // loop_footer
      %s18 = sadd.s32 1, %s14
    $region7: #{vanila_conv_forward.1} parent=1 // loop_footer_branch
      %13 = sbr.rel target = $region3
    $region8: #{vanila_conv_forward.1} parent=1 // loop_exit
      _

</llo_original>
